<compile_context>
chip_gen: v7x
topology: tpu7x:2x2x1
jax: 0.10.0
libtpu: 0.0.40
codegen_flags: <defaults>
</compile_context>

<pallas_src>
import functools

import jax
import jax.numpy as jnp
from jax import lax
from jax.experimental import pallas as pl
from jax.experimental.pallas import tpu as pltpu


def _round_up(x, m):
    return (x + m - 1) // m * m


# ------------------------------------------------------------------
# In-kernel helpers
# ------------------------------------------------------------------
def _project_bidir(inp2d, wp_ref, wq_ref, b_ref, xw_scr, *, T, N):
    """xw_scr[t] <- inp[t] @ W_P + inp[T-1-t] @ W_Q + bias (both directions' gates).

    W_P / W_Q are packed host-side so that the backward direction's time reversal
    (and, for layer 1, the reassembly of the previous layer's bidirectional
    output) is absorbed here, off the serial recurrence path.
    """
    G4 = xw_scr.shape[-1]
    inp = inp2d.astype(jnp.bfloat16)
    xp = jnp.dot(inp, wp_ref[...], preferred_element_type=jnp.float32)
    xq = jnp.dot(inp, wq_ref[...], preferred_element_type=jnp.float32)
    xp = (xp + b_ref[...]).reshape(T, N, G4)
    xq = xq.reshape(T, N, G4)
    # TODO(synk): for very long T replace this static pre-pass with a fori_loop.
    for t in range(T):
        xw_scr[t] = xp[t] + xq[T - 1 - t]


def _run_bidir_layer(xw_scr, whh_ref, hf_scr, h_scr, c_scr):
    """One bidirectional LSTM layer, both directions fused in a single time loop.

    xw_scr : (T, N, G4) precomputed gate pre-activations (fwd cols use input[t],
             bwd cols already use input[T-1-t]).
    whh_ref: (SB, G4)   block-diagonal combined hidden->gate weight (bf16).
    hf_scr : (T, N, SB) per-step state [h_fwd(t) | h_bwd(T-1-t) | pad/junk].
    h_scr, c_scr: (N, SB) recurrent state (f32), layout [fwd(H), bwd(H), pad].
    """
    T, N, G4 = xw_scr.shape
    SB = h_scr.shape[-1]
    packed = (G4 == 2 * SB)          # two gates per 128-lane block (4*H == 128)

    whh = whh_ref[...]               # loop-invariant bf16 load
    h_scr[...] = jnp.zeros_like(h_scr)
    c_scr[...] = jnp.zeros_like(c_scr)

    def step(t, carry):
        gates = xw_scr[t] + jnp.dot(h_scr[...].astype(jnp.bfloat16), whh,
                                    preferred_element_type=jnp.float32)
        if packed:
            # block A = [i_fwd|i_bwd|f_fwd|f_bwd], block B = [g_fwd|g_bwd|o_fwd|o_bwd]
            blk_a = gates[:, 0:SB]
            blk_b = gates[:, SB:2 * SB]
            s_a = jax.nn.sigmoid(blk_a)                    # i | f
            t_b = jnp.tanh(blk_b)                          # g | (junk)
            s_b = jax.nn.sigmoid(blk_b)                    # (junk) | o
            # half-block rotate -> shift convention irrelevant; aligns f/o with c.
            f_al = pltpu.roll(s_a, shift=SB // 2, axis=1)
            o_al = pltpu.roll(s_b, shift=SB // 2, axis=1)
            c_new = f_al * c_scr[...] + s_a * t_b          # valid in lanes [0, 2H)
            h_new = o_al * jnp.tanh(c_new)
        else:
            i_g = jax.nn.sigmoid(gates[:, 0 * SB:1 * SB])
            f_g = jax.nn.sigmoid(gates[:, 1 * SB:2 * SB])
            g_g = jnp.tanh(gates[:, 2 * SB:3 * SB])
            o_g = jax.nn.sigmoid(gates[:, 3 * SB:4 * SB])
            c_new = f_g * c_scr[...] + i_g * g_g
            h_new = o_g * jnp.tanh(c_new)
        h_scr[...] = h_new
        c_scr[...] = c_new
        hf_scr[t] = h_new                                  # single lane-dense store
        return carry

    lax.fori_loop(0, T, step, 0, unroll=True if T <= 16 else 4)


def _stack_core(x_ref, wp0, wq0, whh0, b0, wp1, wq1, whh1, b1,
                xw_scr, hf_scr, h_scr, c_scr):
    """2-layer bidirectional LSTM; layer-1 input stays in VMEM (hf_scr)."""
    T, N, D0 = x_ref.shape
    SB = h_scr.shape[-1]

    _project_bidir(x_ref[...].reshape(T * N, D0), wp0, wq0, b0, xw_scr, T=T, N=N)
    _run_bidir_layer(xw_scr, whh0, hf_scr, h_scr, c_scr)

    # TODO(synk): inter-layer dropout (train mode only) omitted; eval-mode semantics.
    _project_bidir(hf_scr[...].reshape(T * N, SB), wp1, wq1, b1, xw_scr, T=T, N=N)
    _run_bidir_layer(xw_scr, whh1, hf_scr, h_scr, c_scr)


# ------------------------------------------------------------------
# Pallas kernels: one per 2-layer bidirectional stack (epilogue fused)
# ------------------------------------------------------------------
def _bilstm_stack_meanpool_kernel(x_ref, wp0, wq0, whh0, b0, wp1, wq1, whh1, b1,
                                  out_ref, xw_scr, hf_scr, h_scr, c_scr):
    T = x_ref.shape[0]
    _stack_core(x_ref, wp0, wq0, whh0, b0, wp1, wq1, whh1, b1,
                xw_scr, hf_scr, h_scr, c_scr)
    # Summing the per-step states equals summing over original time indices for
    # both directions (same set, permuted); pad/junk lanes are sliced off outside.
    out_ref[...] = jnp.sum(hf_scr[...], axis=0) * (1.0 / T)


def _bilstm_stack_fc_kernel(x_ref, wp0, wq0, whh0, b0, wp1, wq1, whh1, b1,
                            fcp_ref, fcq_ref, fcb_ref,
                            out_ref, xw_scr, hf_scr, h_scr, c_scr):
    T, N, _ = x_ref.shape
    SB = h_scr.shape[-1]
    OP = out_ref.shape[-1]
    _stack_core(x_ref, wp0, wq0, whh0, b0, wp1, wq1, whh1, b1,
                xw_scr, hf_scr, h_scr, c_scr)
    # Fused output Linear; fc_P / fc_Q split mirrors the W_P/W_Q trick so no
    # in-kernel lane selection / sequence flip is needed.
    seq = hf_scr[...].reshape(T * N, SB).astype(jnp.bfloat16)
    op = jnp.dot(seq, fcp_ref[...], preferred_element_type=jnp.float32).reshape(T, N, OP)
    oq = jnp.dot(seq, fcq_ref[...], preferred_element_type=jnp.float32).reshape(T, N, OP)
    b = fcb_ref[...]
    for s in range(T):
        out_ref[s] = op[s] + oq[T - 1 - s] + b


# ------------------------------------------------------------------
# pallas_call wrappers (batch-tiled parallel grid; weights stay resident)
# ------------------------------------------------------------------
def _const_spec(w):
    return pl.BlockSpec(w.shape, lambda i: (0, 0))


def _tile_for(n):
    nt = min(128, n)
    while n % nt:
        nt -= 8
    return max(nt, 8)


def _stack_scratch(T, Nt, SB, G4):
    return [
        pltpu.VMEM((T, Nt, G4), jnp.float32),   # gate pre-activations (all steps)
        pltpu.VMEM((T, Nt, SB), jnp.float32),   # per-step hidden sequence
        pltpu.VMEM((Nt, SB), jnp.float32),      # h
        pltpu.VMEM((Nt, SB), jnp.float32),      # c
    ]


def _vmem_limit(T, Nt, D0, SB, G4, out_elems, weights):
    scratch = 4 * (T * Nt * (G4 + SB) + 2 * Nt * SB)
    blocks = 2 * 4 * T * Nt * D0 + 2 * 4 * out_elems
    w_bytes = sum(int(w.size) * w.dtype.itemsize for w in weights)
    est = scratch + blocks + w_bytes + (8 << 20)
    return int(min(max(2 * est, 32 << 20), 100 << 20))


def bilstm_stack_meanpool(x_tnd, stack_w, *, H):
    T, N, D0 = x_tnd.shape
    SB = _round_up(2 * H, 128)
    G4 = stack_w[0].shape[1]
    Nt = _tile_for(N)
    return pl.pallas_call(
        _bilstm_stack_meanpool_kernel,
        out_shape=jax.ShapeDtypeStruct((N, SB), jnp.float32),
        grid_spec=pltpu.PrefetchScalarGridSpec(
            num_scalar_prefetch=0,
            grid=(N // Nt,),
            in_specs=[pl.BlockSpec((T, Nt, D0), lambda i: (0, i, 0))]
                     + [_const_spec(w) for w in stack_w],
            out_specs=pl.BlockSpec((Nt, SB), lambda i: (i, 0)),
            scratch_shapes=_stack_scratch(T, Nt, SB, G4)),
        compiler_params=pltpu.CompilerParams(
            dimension_semantics=("parallel",),
            vmem_limit_bytes=_vmem_limit(T, Nt, D0, SB, G4, Nt * SB, stack_w)),
    )(x_tnd, *stack_w)


def bilstm_stack_fc(x_tnd, stack_w, fc_p, fc_q, fc_b, *, H):
    T, N, D0 = x_tnd.shape
    SB = _round_up(2 * H, 128)
    G4 = stack_w[0].shape[1]
    OP = fc_p.shape[1]
    Nt = _tile_for(N)
    weights = tuple(stack_w) + (fc_p, fc_q, fc_b)
    return pl.pallas_call(
        _bilstm_stack_fc_kernel,
        out_shape=jax.ShapeDtypeStruct((T, N, OP), jnp.float32),
        grid_spec=pltpu.PrefetchScalarGridSpec(
            num_scalar_prefetch=0,
            grid=(N // Nt,),
            in_specs=[pl.BlockSpec((T, Nt, D0), lambda i: (0, i, 0))]
                     + [_const_spec(w) for w in weights],
            out_specs=pl.BlockSpec((T, Nt, OP), lambda i: (0, i, 0)),
            scratch_shapes=_stack_scratch(T, Nt, SB, G4)),
        compiler_params=pltpu.CompilerParams(
            dimension_semantics=("parallel",),
            vmem_limit_bytes=_vmem_limit(T, Nt, D0, SB, G4, T * Nt * OP, weights)),
    )(x_tnd, *weights)


# ------------------------------------------------------------------
# Parameter initialization (PyTorch-style U(-1/sqrt(H), 1/sqrt(H))) and packing.
# ------------------------------------------------------------------
def _init_dir(key, in_sz, H, bound):
    key, k1, k2, k3, k4 = jax.random.split(key, 5)
    wih_t = jax.random.uniform(k1, (in_sz, 4 * H), jnp.float32, -bound, bound)
    whh_t = jax.random.uniform(k2, (H, 4 * H), jnp.float32, -bound, bound)
    b_ih = jax.random.uniform(k3, (4 * H,), jnp.float32, -bound, bound)
    b_hh = jax.random.uniform(k4, (4 * H,), jnp.float32, -bound, bound)
    return key, (wih_t, whh_t, b_ih + b_hh)


def _gate_col(g, d, H, SB, packed):
    # packed (4H==128): block A = [i_fwd|i_bwd|f_fwd|f_bwd], block B = [g|o] likewise.
    base = (0, 2 * H, SB, SB + 2 * H)[g] if packed else g * SB
    return base + d * H


def _pack_layer(fwd, bwd, H, d_in, d_in_pad, structured_input):
    """Pack fwd/bwd weights into combined, lane-aligned gate blocks.

    Returns (W_P, W_Q, W_hh_comb, bias) with:
      xw[t] = inp[t] @ W_P + inp[T-1-t] @ W_Q + bias
    For layer 0 the two directions share the raw input, so W_P holds the fwd-gate
    columns and W_Q the bwd-gate columns. For layer >= 1 the input is the previous
    layer's per-step state A[s] = [h_fwd(s) | h_bwd(T-1-s)], and W_P/W_Q also fold
    in the reassembly of (h_fwd(t), h_bwd(t)) from A[t] and A[T-1-t].
    """
    SB = _round_up(2 * H, 128)
    packed = (4 * H == 128)
    G4 = 2 * SB if packed else 4 * SB
    wp = jnp.zeros((d_in_pad, G4), jnp.float32)
    wq = jnp.zeros((d_in_pad, G4), jnp.float32)
    whh = jnp.zeros((SB, G4), jnp.float32)
    b = jnp.zeros((1, G4), jnp.float32)
    for d, (wih_t, whh_t, bias) in enumerate((fwd, bwd)):
        for g in range(4):                     # PyTorch gate order: i, f, g, o
            col = _gate_col(g, d, H, SB, packed)
            whh = whh.at[d * H:(d + 1) * H, col:col + H].set(whh_t[:, g * H:(g + 1) * H])
            b = b.at[0, col:col + H].set(bias[g * H:(g + 1) * H])
            w_g = wih_t[:, g * H:(g + 1) * H]
            if not structured_input:
                if d == 0:
                    wp = wp.at[:d_in, col:col + H].set(w_g)
                else:
                    wq = wq.at[:d_in, col:col + H].set(w_g)
            else:
                if d == 0:   # forward direction's gate columns
                    wp = wp.at[0:H, col:col + H].set(w_g[0:H, :])
                    wq = wq.at[H:2 * H, col:col + H].set(w_g[H:2 * H, :])
                else:        # backward direction's gate columns
                    wp = wp.at[H:2 * H, col:col + H].set(w_g[H:2 * H, :])
                    wq = wq.at[0:H, col:col + H].set(w_g[0:H, :])
    return (wp.astype(jnp.bfloat16), wq.astype(jnp.bfloat16),
            whh.astype(jnp.bfloat16), b)


def init_lstm_stack(key, input_size, H, num_layers):
    assert num_layers == 2, "kernel is specialized for num_layers=2 (matches config)"
    bound = 1.0 / float(H) ** 0.5
    weights = []
    for li in range(num_layers):
        in_sz = input_size if li == 0 else 2 * H
        in_pad = _round_up(in_sz, 128)
        key, fwd = _init_dir(key, in_sz, H, bound)
        key, bwd = _init_dir(key, in_sz, H, bound)
        weights.extend(_pack_layer(fwd, bwd, H, in_sz, in_pad,
                                   structured_input=(li > 0)))
    return key, tuple(weights)


def init_params(key, vocab, embed_size, H, num_layers, out_dim):
    SB = _round_up(2 * H, 128)
    OP = _round_up(out_dim, 128)

    key, k_emb = jax.random.split(key)
    emb = jax.random.normal(k_emb, (vocab, embed_size), jnp.float32)
    emb = emb.at[0].set(0.0)                              # padding_idx=0

    key, stack1 = init_lstm_stack(key, embed_size, H, num_layers)
    key, stack2 = init_lstm_stack(key, 2 * H, H, num_layers)

    bound = 1.0 / float(2 * H) ** 0.5
    key, k_w, k_b = jax.random.split(key, 3)
    fc_w = jax.random.uniform(k_w, (2 * H, out_dim), jnp.float32, -bound, bound)
    fc_b = jax.random.uniform(k_b, (out_dim,), jnp.float32, -bound, bound)
    fc_p = jnp.zeros((SB, OP), jnp.float32).at[:H, :out_dim].set(fc_w[:H])
    fc_q = jnp.zeros((SB, OP), jnp.float32).at[H:2 * H, :out_dim].set(fc_w[H:2 * H])
    fc_b_pad = jnp.zeros((1, OP), jnp.float32).at[0, :out_dim].set(fc_b)

    return {
        "embedding": emb,
        "stack1": stack1,
        "stack2": stack2,
        "fc_p": fc_p.astype(jnp.bfloat16),
        "fc_q": fc_q.astype(jnp.bfloat16),
        "fc_b": fc_b_pad,
    }


# ------------------------------------------------------------------
# Full forward pass (mirrors BiLSTM.forward, eval mode)
# ------------------------------------------------------------------
def _pad_batch(n):
    n8 = _round_up(max(n, 1), 8)
    nt = min(128, n8)
    return _round_up(n8, nt)


def bilstm_forward(params, batch_ids, *, embed_size, hidden_size, out_dim):
    B, V, S = batch_ids.shape
    H = hidden_size
    SB = _round_up(2 * H, 128)
    E_pad = _round_up(embed_size, 128)

    # Embedding lookup (gather) kept in plain JAX glue.
    embedded = jnp.take(params["embedding"], batch_ids, axis=0)        # (B, V, S, E)
    x1 = jnp.transpose(embedded.reshape(B * V, S, embed_size), (1, 0, 2))
    N1 = _pad_batch(B * V)
    x1 = jnp.pad(x1, ((0, 0), (0, N1 - B * V), (0, E_pad - embed_size)))

    # Stack 1: 2-layer BiLSTM over each visit sequence + fused mean-pool.
    visit = bilstm_stack_meanpool(x1, params["stack1"], H=H)           # (N1, SB)
    visit = visit[:B * V, :2 * H].reshape(B, V, 2 * H)

    # Stack 2: 2-layer BiLSTM over visit representations + fused output Linear.
    N2 = _pad_batch(B)
    x2 = jnp.transpose(visit, (1, 0, 2))                               # (V, B, 2H)
    x2 = jnp.pad(x2, ((0, 0), (0, N2 - B), (0, SB - 2 * H)))

    out = bilstm_stack_fc(x2, params["stack2"], params["fc_p"], params["fc_q"],
                          params["fc_b"], H=H)                          # (V, N2, OP)
    out = out[:, :B, :out_dim]
    return jnp.transpose(out, (1, 0, 2))                               # (B, V, out_dim)


# ------------------------------------------------------------------
# Main
# ------------------------------------------------------------------
if __name__ == "__main__":
    # Small config consistent with the module's forward.
    VOCAB = 64
    EMBED = 32
    HIDDEN = 32
    NUM_LAYERS = 2
    OUT_DIM = 16
    BATCH, NUM_VISIT, SEQ_LEN = 2, 3, 8

    key = jax.random.PRNGKey(0)
    key, k_ids = jax.random.split(key)
    params = init_params(key, VOCAB, EMBED, HIDDEN, NUM_LAYERS, OUT_DIM)

    batch_ids = jax.random.randint(
        k_ids, (BATCH, NUM_VISIT, SEQ_LEN), minval=0, maxval=VOCAB, dtype=jnp.int32)

    fwd = jax.jit(functools.partial(
        bilstm_forward, embed_size=EMBED, hidden_size=HIDDEN, out_dim=OUT_DIM))
    out = jax.block_until_ready(fwd(params, batch_ids))

    assert out.shape == (BATCH, NUM_VISIT, OUT_DIM), out.shape
    assert bool(jnp.all(jnp.isfinite(out)))
    print("KERNEL_OK")
</pallas_src>

<mosaic_0001>
module attributes {stable_mosaic.version = 11 : i64} {
  func.func @_bilstm_stack_fc_kernel(%arg0: i32, %arg1: memref<3x8x128xf32, #tpu.memory_space<vmem>>, %arg2: memref<128x256xbf16, #tpu.memory_space<vmem>>, %arg3: memref<128x256xbf16, #tpu.memory_space<vmem>>, %arg4: memref<128x256xbf16, #tpu.memory_space<vmem>>, %arg5: memref<1x256xf32, #tpu.memory_space<vmem>>, %arg6: memref<128x256xbf16, #tpu.memory_space<vmem>>, %arg7: memref<128x256xbf16, #tpu.memory_space<vmem>>, %arg8: memref<128x256xbf16, #tpu.memory_space<vmem>>, %arg9: memref<1x256xf32, #tpu.memory_space<vmem>>, %arg10: memref<128x128xbf16, #tpu.memory_space<vmem>>, %arg11: memref<128x128xbf16, #tpu.memory_space<vmem>>, %arg12: memref<1x128xf32, #tpu.memory_space<vmem>>, %arg13: memref<3x8x128xf32, #tpu.memory_space<vmem>>, %arg14: memref<3x8x256xf32, #tpu.memory_space<vmem>>, %arg15: memref<3x8x128xf32, #tpu.memory_space<vmem>>, %arg16: memref<8x128xf32, #tpu.memory_space<vmem>>, %arg17: memref<8x128xf32, #tpu.memory_space<vmem>>) attributes {dimension_semantics = [#tpu.dimension_semantics<parallel>], iteration_bounds = array<i64: 1>, scalar_prefetch = 0 : i64, scratch_operands = 4 : i64, tpu.core_type = #tpu.core_type<tc>, window_params = [{transform_indices = @transform_0, window_bounds = array<i64: 3, 8, 128>}, {pipeline_mode = #tpu.pipeline_mode<synchronous>, transform_indices = @transform_1, window_bounds = array<i64: 128, 256>}, {pipeline_mode = #tpu.pipeline_mode<synchronous>, transform_indices = @transform_2, window_bounds = array<i64: 128, 256>}, {pipeline_mode = #tpu.pipeline_mode<synchronous>, transform_indices = @transform_3, window_bounds = array<i64: 128, 256>}, {pipeline_mode = #tpu.pipeline_mode<synchronous>, transform_indices = @transform_4, window_bounds = array<i64: 1, 256>}, {pipeline_mode = #tpu.pipeline_mode<synchronous>, transform_indices = @transform_5, window_bounds = array<i64: 128, 256>}, {pipeline_mode = #tpu.pipeline_mode<synchronous>, transform_indices = @transform_6, window_bounds = array<i64: 128, 256>}, {pipeline_mode = #tpu.pipeline_mode<synchronous>, transform_indices = @transform_7, window_bounds = array<i64: 128, 256>}, {pipeline_mode = #tpu.pipeline_mode<synchronous>, transform_indices = @transform_8, window_bounds = array<i64: 1, 256>}, {pipeline_mode = #tpu.pipeline_mode<synchronous>, transform_indices = @transform_9, window_bounds = array<i64: 128, 128>}, {pipeline_mode = #tpu.pipeline_mode<synchronous>, transform_indices = @transform_10, window_bounds = array<i64: 128, 128>}, {pipeline_mode = #tpu.pipeline_mode<synchronous>, transform_indices = @transform_11, window_bounds = array<i64: 1, 128>}, {transform_indices = @transform_12, window_bounds = array<i64: 3, 8, 128>}]} {
    %c0 = arith.constant 0 : index
    %c0_0 = arith.constant 0 : index
    %c0_1 = arith.constant 0 : index
    %0 = vector.load %arg1[%c0, %c0_0, %c0_1] : memref<3x8x128xf32, #tpu.memory_space<vmem>>, vector<3x8x128xf32>
    %1 = vector.shape_cast %0 : vector<3x8x128xf32> to vector<24x128xf32>
    %2 = arith.truncf %1 : vector<24x128xf32> to vector<24x128xbf16>
    %c0_2 = arith.constant 0 : index
    %c0_3 = arith.constant 0 : index
    %3 = vector.load %arg2[%c0_2, %c0_3] : memref<128x256xbf16, #tpu.memory_space<vmem>>, vector<128x256xbf16>
    %cst = arith.constant dense<0.000000e+00> : vector<24x256xf32>
    %4 = tpu.matmul %2, %3, %cst {dimension_numbers = #tpu.dot_dimension_numbers<[1], [0], [0], [1], [0, 0, 1, 1], [], []>} : vector<24x128xbf16>, vector<128x256xbf16>, vector<24x256xf32> -> vector<24x256xf32>
    %c0_4 = arith.constant 0 : index
    %c0_5 = arith.constant 0 : index
    %5 = vector.load %arg3[%c0_4, %c0_5] : memref<128x256xbf16, #tpu.memory_space<vmem>>, vector<128x256xbf16>
    %cst_6 = arith.constant dense<0.000000e+00> : vector<24x256xf32>
    %6 = tpu.matmul %2, %5, %cst_6 {dimension_numbers = #tpu.dot_dimension_numbers<[1], [0], [0], [1], [0, 0, 1, 1], [], []>} : vector<24x128xbf16>, vector<128x256xbf16>, vector<24x256xf32> -> vector<24x256xf32>
    %c0_7 = arith.constant 0 : index
    %c0_8 = arith.constant 0 : index
    %7 = vector.load %arg5[%c0_7, %c0_8] : memref<1x256xf32, #tpu.memory_space<vmem>>, vector<1x256xf32>
    %8 = vector.broadcast %7 : vector<1x256xf32> to vector<24x256xf32>
    %9 = arith.addf %4, %8 : vector<24x256xf32>
    %10 = vector.shape_cast %9 : vector<24x256xf32> to vector<3x8x256xf32>
    %11 = vector.shape_cast %6 : vector<24x256xf32> to vector<3x8x256xf32>
    %12 = vector.extract_strided_slice %10 {offsets = [0, 0, 0], sizes = [1, 8, 256], strides = [1, 1, 1]} : vector<3x8x256xf32> to vector<1x8x256xf32>
    %13 = vector.shape_cast %12 : vector<1x8x256xf32> to vector<8x256xf32>
    %14 = vector.extract_strided_slice %11 {offsets = [2, 0, 0], sizes = [1, 8, 256], strides = [1, 1, 1]} : vector<3x8x256xf32> to vector<1x8x256xf32>
    %15 = vector.shape_cast %14 : vector<1x8x256xf32> to vector<8x256xf32>
    %16 = arith.addf %13, %15 : vector<8x256xf32>
    %c0_9 = arith.constant 0 : index
    %c0_10 = arith.constant 0 : index
    %c0_11 = arith.constant 0 : index
    %17 = vector.load %arg14[%c0_9, %c0_10, %c0_11] : memref<3x8x256xf32, #tpu.memory_space<vmem>>, vector<1x8x256xf32>
    %18 = vector.shape_cast %17 : vector<1x8x256xf32> to vector<8x256xf32>
    %19 = vector.shape_cast %16 : vector<8x256xf32> to vector<1x8x256xf32>
    tpu.vector_store %arg14[%c0_9, %c0_10, %c0_11], %19 {strides = array<i32>} : memref<3x8x256xf32, #tpu.memory_space<vmem>>, vector<1x8x256xf32>,
    %20 = vector.extract_strided_slice %10 {offsets = [1, 0, 0], sizes = [1, 8, 256], strides = [1, 1, 1]} : vector<3x8x256xf32> to vector<1x8x256xf32>
    %21 = vector.shape_cast %20 : vector<1x8x256xf32> to vector<8x256xf32>
    %22 = vector.extract_strided_slice %11 {offsets = [1, 0, 0], sizes = [1, 8, 256], strides = [1, 1, 1]} : vector<3x8x256xf32> to vector<1x8x256xf32>
    %23 = vector.shape_cast %22 : vector<1x8x256xf32> to vector<8x256xf32>
    %24 = arith.addf %21, %23 : vector<8x256xf32>
    %c1 = arith.constant 1 : index
    %c0_12 = arith.constant 0 : index
    %c0_13 = arith.constant 0 : index
    %25 = vector.load %arg14[%c1, %c0_12, %c0_13] : memref<3x8x256xf32, #tpu.memory_space<vmem>>, vector<1x8x256xf32>
    %26 = vector.shape_cast %25 : vector<1x8x256xf32> to vector<8x256xf32>
    %27 = vector.shape_cast %24 : vector<8x256xf32> to vector<1x8x256xf32>
    tpu.vector_store %arg14[%c1, %c0_12, %c0_13], %27 {strides = array<i32>} : memref<3x8x256xf32, #tpu.memory_space<vmem>>, vector<1x8x256xf32>,
    %28 = vector.extract_strided_slice %10 {offsets = [2, 0, 0], sizes = [1, 8, 256], strides = [1, 1, 1]} : vector<3x8x256xf32> to vector<1x8x256xf32>
    %29 = vector.shape_cast %28 : vector<1x8x256xf32> to vector<8x256xf32>
    %30 = vector.extract_strided_slice %11 {offsets = [0, 0, 0], sizes = [1, 8, 256], strides = [1, 1, 1]} : vector<3x8x256xf32> to vector<1x8x256xf32>
    %31 = vector.shape_cast %30 : vector<1x8x256xf32> to vector<8x256xf32>
    %32 = arith.addf %29, %31 : vector<8x256xf32>
    %c2 = arith.constant 2 : index
    %c0_14 = arith.constant 0 : index
    %c0_15 = arith.constant 0 : index
    %33 = vector.load %arg14[%c2, %c0_14, %c0_15] : memref<3x8x256xf32, #tpu.memory_space<vmem>>, vector<1x8x256xf32>
    %34 = vector.shape_cast %33 : vector<1x8x256xf32> to vector<8x256xf32>
    %35 = vector.shape_cast %32 : vector<8x256xf32> to vector<1x8x256xf32>
    tpu.vector_store %arg14[%c2, %c0_14, %c0_15], %35 {strides = array<i32>} : memref<3x8x256xf32, #tpu.memory_space<vmem>>, vector<1x8x256xf32>,
    %c0_16 = arith.constant 0 : index
    %c0_17 = arith.constant 0 : index
    %36 = vector.load %arg4[%c0_16, %c0_17] : memref<128x256xbf16, #tpu.memory_space<vmem>>, vector<128x256xbf16>
    %cst_18 = arith.constant 0.000000e+00 : f32
    %37 = vector.broadcast %cst_18 : f32 to vector<8x128xf32>
    %c0_19 = arith.constant 0 : index
    %c0_20 = arith.constant 0 : index
    %38 = vector.load %arg16[%c0_19, %c0_20] : memref<8x128xf32, #tpu.memory_space<vmem>>, vector<8x128xf32>
    tpu.vector_store %arg16[%c0_19, %c0_20], %37 {strides = array<i32>} : memref<8x128xf32, #tpu.memory_space<vmem>>, vector<8x128xf32>,
    %cst_21 = arith.constant 0.000000e+00 : f32
    %39 = vector.broadcast %cst_21 : f32 to vector<8x128xf32>
    %c0_22 = arith.constant 0 : index
    %c0_23 = arith.constant 0 : index
    %40 = vector.load %arg17[%c0_22, %c0_23] : memref<8x128xf32, #tpu.memory_space<vmem>>, vector<8x128xf32>
    tpu.vector_store %arg17[%c0_22, %c0_23], %39 {strides = array<i32>} : memref<8x128xf32, #tpu.memory_space<vmem>>, vector<8x128xf32>,
    %c0_i32 = arith.constant 0 : i32
    %41 = arith.index_cast %c0_i32 : i32 to index
    %c0_24 = arith.constant 0 : index
    %c0_25 = arith.constant 0 : index
    %42 = vector.load %arg14[%41, %c0_24, %c0_25] : memref<3x8x256xf32, #tpu.memory_space<vmem>>, vector<1x8x256xf32>
    %43 = vector.shape_cast %42 : vector<1x8x256xf32> to vector<8x256xf32>
    %c0_26 = arith.constant 0 : index
    %c0_27 = arith.constant 0 : index
    %44 = vector.load %arg16[%c0_26, %c0_27] : memref<8x128xf32, #tpu.memory_space<vmem>>, vector<8x128xf32>
    %45 = arith.truncf %44 : vector<8x128xf32> to vector<8x128xbf16>
    %cst_28 = arith.constant dense<0.000000e+00> : vector<8x256xf32>
    %46 = tpu.matmul %45, %36, %cst_28 {dimension_numbers = #tpu.dot_dimension_numbers<[1], [0], [0], [1], [0, 0, 1, 1], [], []>} : vector<8x128xbf16>, vector<128x256xbf16>, vector<8x256xf32> -> vector<8x256xf32>
    %47 = arith.addf %43, %46 : vector<8x256xf32>
    %48 = vector.extract_strided_slice %47 {offsets = [0, 0], sizes = [8, 128], strides = [1, 1]} : vector<8x256xf32> to vector<8x128xf32>
    %49 = vector.extract_strided_slice %47 {offsets = [0, 128], sizes = [8, 128], strides = [1, 1]} : vector<8x256xf32> to vector<8x128xf32>
    %50 = arith.negf %48 : vector<8x128xf32>
    %51 = math.exp %50 : vector<8x128xf32>
    %cst_29 = arith.constant 1.000000e+00 : f32
    %52 = vector.broadcast %cst_29 : f32 to vector<8x128xf32>
    %53 = arith.addf %52, %51 : vector<8x128xf32>
    %54 = arith.divf %52, %53 : vector<8x128xf32>
    %55 = math.tanh %49 : vector<8x128xf32>
    %56 = arith.negf %49 : vector<8x128xf32>
    %57 = math.exp %56 : vector<8x128xf32>
    %cst_30 = arith.constant 1.000000e+00 : f32
    %58 = vector.broadcast %cst_30 : f32 to vector<8x128xf32>
    %59 = arith.addf %58, %57 : vector<8x128xf32>
    %60 = arith.divf %58, %59 : vector<8x128xf32>
    %c64_i32 = arith.constant 64 : i32
    %61 = tpu.dynamic_rotate %54 by %c64_i32 dim 1 : vector<8x128xf32>, i32 -> vector<8x128xf32>
    %c64_i32_31 = arith.constant 64 : i32
    %62 = tpu.dynamic_rotate %60 by %c64_i32_31 dim 1 : vector<8x128xf32>, i32 -> vector<8x128xf32>
    %c0_32 = arith.constant 0 : index
    %c0_33 = arith.constant 0 : index
    %63 = vector.load %arg17[%c0_32, %c0_33] : memref<8x128xf32, #tpu.memory_space<vmem>>, vector<8x128xf32>
    %64 = arith.mulf %61, %63 : vector<8x128xf32>
    %65 = arith.mulf %54, %55 : vector<8x128xf32>
    %66 = arith.addf %64, %65 : vector<8x128xf32>
    %67 = math.tanh %66 : vector<8x128xf32>
    %68 = arith.mulf %62, %67 : vector<8x128xf32>
    %c0_34 = arith.constant 0 : index
    %c0_35 = arith.constant 0 : index
    %69 = vector.load %arg16[%c0_34, %c0_35] : memref<8x128xf32, #tpu.memory_space<vmem>>, vector<8x128xf32>
    tpu.vector_store %arg16[%c0_34, %c0_35], %68 {strides = array<i32>} : memref<8x128xf32, #tpu.memory_space<vmem>>, vector<8x128xf32>,
    %c0_36 = arith.constant 0 : index
    %c0_37 = arith.constant 0 : index
    %70 = vector.load %arg17[%c0_36, %c0_37] : memref<8x128xf32, #tpu.memory_space<vmem>>, vector<8x128xf32>
    tpu.vector_store %arg17[%c0_36, %c0_37], %66 {strides = array<i32>} : memref<8x128xf32, #tpu.memory_space<vmem>>, vector<8x128xf32>,
    %71 = arith.index_cast %c0_i32 : i32 to index
    %c0_38 = arith.constant 0 : index
    %c0_39 = arith.constant 0 : index
    %72 = vector.load %arg15[%71, %c0_38, %c0_39] : memref<3x8x128xf32, #tpu.memory_space<vmem>>, vector<1x8x128xf32>
    %73 = vector.shape_cast %72 : vector<1x8x128xf32> to vector<8x128xf32>
    %74 = vector.shape_cast %68 : vector<8x128xf32> to vector<1x8x128xf32>
    tpu.vector_store %arg15[%71, %c0_38, %c0_39], %74 {strides = array<i32>} : memref<3x8x128xf32, #tpu.memory_space<vmem>>, vector<1x8x128xf32>,
    %c1_i32 = arith.constant 1 : i32
    %75 = arith.index_cast %c1_i32 : i32 to index
    %c0_40 = arith.constant 0 : index
    %c0_41 = arith.constant 0 : index
    %76 = vector.load %arg14[%75, %c0_40, %c0_41] : memref<3x8x256xf32, #tpu.memory_space<vmem>>, vector<1x8x256xf32>
    %77 = vector.shape_cast %76 : vector<1x8x256xf32> to vector<8x256xf32>
    %c0_42 = arith.constant 0 : index
    %c0_43 = arith.constant 0 : index
    %78 = vector.load %arg16[%c0_42, %c0_43] : memref<8x128xf32, #tpu.memory_space<vmem>>, vector<8x128xf32>
    %79 = arith.truncf %78 : vector<8x128xf32> to vector<8x128xbf16>
    %cst_44 = arith.constant dense<0.000000e+00> : vector<8x256xf32>
    %80 = tpu.matmul %79, %36, %cst_44 {dimension_numbers = #tpu.dot_dimension_numbers<[1], [0], [0], [1], [0, 0, 1, 1], [], []>} : vector<8x128xbf16>, vector<128x256xbf16>, vector<8x256xf32> -> vector<8x256xf32>
    %81 = arith.addf %77, %80 : vector<8x256xf32>
    %82 = vector.extract_strided_slice %81 {offsets = [0, 0], sizes = [8, 128], strides = [1, 1]} : vector<8x256xf32> to vector<8x128xf32>
    %83 = vector.extract_strided_slice %81 {offsets = [0, 128], sizes = [8, 128], strides = [1, 1]} : vector<8x256xf32> to vector<8x128xf32>
    %84 = arith.negf %82 : vector<8x128xf32>
    %85 = math.exp %84 : vector<8x128xf32>
    %cst_45 = arith.constant 1.000000e+00 : f32
    %86 = vector.broadcast %cst_45 : f32 to vector<8x128xf32>
    %87 = arith.addf %86, %85 : vector<8x128xf32>
    %88 = arith.divf %86, %87 : vector<8x128xf32>
    %89 = math.tanh %83 : vector<8x128xf32>
    %90 = arith.negf %83 : vector<8x128xf32>
    %91 = math.exp %90 : vector<8x128xf32>
    %cst_46 = arith.constant 1.000000e+00 : f32
    %92 = vector.broadcast %cst_46 : f32 to vector<8x128xf32>
    %93 = arith.addf %92, %91 : vector<8x128xf32>
    %94 = arith.divf %92, %93 : vector<8x128xf32>
    %c64_i32_47 = arith.constant 64 : i32
    %95 = tpu.dynamic_rotate %88 by %c64_i32_47 dim 1 : vector<8x128xf32>, i32 -> vector<8x128xf32>
    %c64_i32_48 = arith.constant 64 : i32
    %96 = tpu.dynamic_rotate %94 by %c64_i32_48 dim 1 : vector<8x128xf32>, i32 -> vector<8x128xf32>
    %c0_49 = arith.constant 0 : index
    %c0_50 = arith.constant 0 : index
    %97 = vector.load %arg17[%c0_49, %c0_50] : memref<8x128xf32, #tpu.memory_space<vmem>>, vector<8x128xf32>
    %98 = arith.mulf %95, %97 : vector<8x128xf32>
    %99 = arith.mulf %88, %89 : vector<8x128xf32>
    %100 = arith.addf %98, %99 : vector<8x128xf32>
    %101 = math.tanh %100 : vector<8x128xf32>
    %102 = arith.mulf %96, %101 : vector<8x128xf32>
    %c0_51 = arith.constant 0 : index
    %c0_52 = arith.constant 0 : index
    %103 = vector.load %arg16[%c0_51, %c0_52] : memref<8x128xf32, #tpu.memory_space<vmem>>, vector<8x128xf32>
    tpu.vector_store %arg16[%c0_51, %c0_52], %102 {strides = array<i32>} : memref<8x128xf32, #tpu.memory_space<vmem>>, vector<8x128xf32>,
    %c0_53 = arith.constant 0 : index
    %c0_54 = arith.constant 0 : index
    %104 = vector.load %arg17[%c0_53, %c0_54] : memref<8x128xf32, #tpu.memory_space<vmem>>, vector<8x128xf32>
    tpu.vector_store %arg17[%c0_53, %c0_54], %100 {strides = array<i32>} : memref<8x128xf32, #tpu.memory_space<vmem>>, vector<8x128xf32>,
    %105 = arith.index_cast %c1_i32 : i32 to index
    %c0_55 = arith.constant 0 : index
    %c0_56 = arith.constant 0 : index
    %106 = vector.load %arg15[%105, %c0_55, %c0_56] : memref<3x8x128xf32, #tpu.memory_space<vmem>>, vector<1x8x128xf32>
    %107 = vector.shape_cast %106 : vector<1x8x128xf32> to vector<8x128xf32>
    %108 = vector.shape_cast %102 : vector<8x128xf32> to vector<1x8x128xf32>
    tpu.vector_store %arg15[%105, %c0_55, %c0_56], %108 {strides = array<i32>} : memref<3x8x128xf32, #tpu.memory_space<vmem>>, vector<1x8x128xf32>,
    %c2_i32 = arith.constant 2 : i32
    %109 = arith.index_cast %c2_i32 : i32 to index
    %c0_57 = arith.constant 0 : index
    %c0_58 = arith.constant 0 : index
    %110 = vector.load %arg14[%109, %c0_57, %c0_58] : memref<3x8x256xf32, #tpu.memory_space<vmem>>, vector<1x8x256xf32>
    %111 = vector.shape_cast %110 : vector<1x8x256xf32> to vector<8x256xf32>
    %c0_59 = arith.constant 0 : index
    %c0_60 = arith.constant 0 : index
    %112 = vector.load %arg16[%c0_59, %c0_60] : memref<8x128xf32, #tpu.memory_space<vmem>>, vector<8x128xf32>
    %113 = arith.truncf %112 : vector<8x128xf32> to vector<8x128xbf16>
    %cst_61 = arith.constant dense<0.000000e+00> : vector<8x256xf32>
    %114 = tpu.matmul %113, %36, %cst_61 {dimension_numbers = #tpu.dot_dimension_numbers<[1], [0], [0], [1], [0, 0, 1, 1], [], []>} : vector<8x128xbf16>, vector<128x256xbf16>, vector<8x256xf32> -> vector<8x256xf32>
    %115 = arith.addf %111, %114 : vector<8x256xf32>
    %116 = vector.extract_strided_slice %115 {offsets = [0, 0], sizes = [8, 128], strides = [1, 1]} : vector<8x256xf32> to vector<8x128xf32>
    %117 = vector.extract_strided_slice %115 {offsets = [0, 128], sizes = [8, 128], strides = [1, 1]} : vector<8x256xf32> to vector<8x128xf32>
    %118 = arith.negf %116 : vector<8x128xf32>
    %119 = math.exp %118 : vector<8x128xf32>
    %cst_62 = arith.constant 1.000000e+00 : f32
    %120 = vector.broadcast %cst_62 : f32 to vector<8x128xf32>
    %121 = arith.addf %120, %119 : vector<8x128xf32>
    %122 = arith.divf %120, %121 : vector<8x128xf32>
    %123 = math.tanh %117 : vector<8x128xf32>
    %124 = arith.negf %117 : vector<8x128xf32>
    %125 = math.exp %124 : vector<8x128xf32>
    %cst_63 = arith.constant 1.000000e+00 : f32
    %126 = vector.broadcast %cst_63 : f32 to vector<8x128xf32>
    %127 = arith.addf %126, %125 : vector<8x128xf32>
    %128 = arith.divf %126, %127 : vector<8x128xf32>
    %c64_i32_64 = arith.constant 64 : i32
    %129 = tpu.dynamic_rotate %122 by %c64_i32_64 dim 1 : vector<8x128xf32>, i32 -> vector<8x128xf32>
    %c64_i32_65 = arith.constant 64 : i32
    %130 = tpu.dynamic_rotate %128 by %c64_i32_65 dim 1 : vector<8x128xf32>, i32 -> vector<8x128xf32>
    %c0_66 = arith.constant 0 : index
    %c0_67 = arith.constant 0 : index
    %131 = vector.load %arg17[%c0_66, %c0_67] : memref<8x128xf32, #tpu.memory_space<vmem>>, vector<8x128xf32>
    %132 = arith.mulf %129, %131 : vector<8x128xf32>
    %133 = arith.mulf %122, %123 : vector<8x128xf32>
    %134 = arith.addf %132, %133 : vector<8x128xf32>
    %135 = math.tanh %134 : vector<8x128xf32>
    %136 = arith.mulf %130, %135 : vector<8x128xf32>
    %c0_68 = arith.constant 0 : index
    %c0_69 = arith.constant 0 : index
    %137 = vector.load %arg16[%c0_68, %c0_69] : memref<8x128xf32, #tpu.memory_space<vmem>>, vector<8x128xf32>
    tpu.vector_store %arg16[%c0_68, %c0_69], %136 {strides = array<i32>} : memref<8x128xf32, #tpu.memory_space<vmem>>, vector<8x128xf32>,
    %c0_70 = arith.constant 0 : index
    %c0_71 = arith.constant 0 : index
    %138 = vector.load %arg17[%c0_70, %c0_71] : memref<8x128xf32, #tpu.memory_space<vmem>>, vector<8x128xf32>
    tpu.vector_store %arg17[%c0_70, %c0_71], %134 {strides = array<i32>} : memref<8x128xf32, #tpu.memory_space<vmem>>, vector<8x128xf32>,
    %139 = arith.index_cast %c2_i32 : i32 to index
    %c0_72 = arith.constant 0 : index
    %c0_73 = arith.constant 0 : index
    %140 = vector.load %arg15[%139, %c0_72, %c0_73] : memref<3x8x128xf32, #tpu.memory_space<vmem>>, vector<1x8x128xf32>
    %141 = vector.shape_cast %140 : vector<1x8x128xf32> to vector<8x128xf32>
    %142 = vector.shape_cast %136 : vector<8x128xf32> to vector<1x8x128xf32>
    tpu.vector_store %arg15[%139, %c0_72, %c0_73], %142 {strides = array<i32>} : memref<3x8x128xf32, #tpu.memory_space<vmem>>, vector<1x8x128xf32>,
    %c3_i32 = arith.constant 3 : i32
    %c0_74 = arith.constant 0 : index
    %c0_75 = arith.constant 0 : index
    %c0_76 = arith.constant 0 : index
    %143 = vector.load %arg15[%c0_74, %c0_75, %c0_76] : memref<3x8x128xf32, #tpu.memory_space<vmem>>, vector<3x8x128xf32>
    %144 = vector.shape_cast %143 : vector<3x8x128xf32> to vector<24x128xf32>
    %145 = arith.truncf %144 : vector<24x128xf32> to vector<24x128xbf16>
    %c0_77 = arith.constant 0 : index
    %c0_78 = arith.constant 0 : index
    %146 = vector.load %arg6[%c0_77, %c0_78] : memref<128x256xbf16, #tpu.memory_space<vmem>>, vector<128x256xbf16>
    %cst_79 = arith.constant dense<0.000000e+00> : vector<24x256xf32>
    %147 = tpu.matmul %145, %146, %cst_79 {dimension_numbers = #tpu.dot_dimension_numbers<[1], [0], [0], [1], [0, 0, 1, 1], [], []>} : vector<24x128xbf16>, vector<128x256xbf16>, vector<24x256xf32> -> vector<24x256xf32>
    %c0_80 = arith.constant 0 : index
    %c0_81 = arith.constant 0 : index
    %148 = vector.load %arg7[%c0_80, %c0_81] : memref<128x256xbf16, #tpu.memory_space<vmem>>, vector<128x256xbf16>
    %cst_82 = arith.constant dense<0.000000e+00> : vector<24x256xf32>
    %149 = tpu.matmul %145, %148, %cst_82 {dimension_numbers = #tpu.dot_dimension_numbers<[1], [0], [0], [1], [0, 0, 1, 1], [], []>} : vector<24x128xbf16>, vector<128x256xbf16>, vector<24x256xf32> -> vector<24x256xf32>
    %c0_83 = arith.constant 0 : index
    %c0_84 = arith.constant 0 : index
    %150 = vector.load %arg9[%c0_83, %c0_84] : memref<1x256xf32, #tpu.memory_space<vmem>>, vector<1x256xf32>
    %151 = vector.broadcast %150 : vector<1x256xf32> to vector<24x256xf32>
    %152 = arith.addf %147, %151 : vector<24x256xf32>
    %153 = vector.shape_cast %152 : vector<24x256xf32> to vector<3x8x256xf32>
    %154 = vector.shape_cast %149 : vector<24x256xf32> to vector<3x8x256xf32>
    %155 = vector.extract_strided_slice %153 {offsets = [0, 0, 0], sizes = [1, 8, 256], strides = [1, 1, 1]} : vector<3x8x256xf32> to vector<1x8x256xf32>
    %156 = vector.shape_cast %155 : vector<1x8x256xf32> to vector<8x256xf32>
    %157 = vector.extract_strided_slice %154 {offsets = [2, 0, 0], sizes = [1, 8, 256], strides = [1, 1, 1]} : vector<3x8x256xf32> to vector<1x8x256xf32>
    %158 = vector.shape_cast %157 : vector<1x8x256xf32> to vector<8x256xf32>
    %159 = arith.addf %156, %158 : vector<8x256xf32>
    %c0_85 = arith.constant 0 : index
    %c0_86 = arith.constant 0 : index
    %c0_87 = arith.constant 0 : index
    %160 = vector.load %arg14[%c0_85, %c0_86, %c0_87] : memref<3x8x256xf32, #tpu.memory_space<vmem>>, vector<1x8x256xf32>
    %161 = vector.shape_cast %160 : vector<1x8x256xf32> to vector<8x256xf32>
    %162 = vector.shape_cast %159 : vector<8x256xf32> to vector<1x8x256xf32>
    tpu.vector_store %arg14[%c0_85, %c0_86, %c0_87], %162 {strides = array<i32>} : memref<3x8x256xf32, #tpu.memory_space<vmem>>, vector<1x8x256xf32>,
    %163 = vector.extract_strided_slice %153 {offsets = [1, 0, 0], sizes = [1, 8, 256], strides = [1, 1, 1]} : vector<3x8x256xf32> to vector<1x8x256xf32>
    %164 = vector.shape_cast %163 : vector<1x8x256xf32> to vector<8x256xf32>
    %165 = vector.extract_strided_slice %154 {offsets = [1, 0, 0], sizes = [1, 8, 256], strides = [1, 1, 1]} : vector<3x8x256xf32> to vector<1x8x256xf32>
    %166 = vector.shape_cast %165 : vector<1x8x256xf32> to vector<8x256xf32>
    %167 = arith.addf %164, %166 : vector<8x256xf32>
    %c1_88 = arith.constant 1 : index
    %c0_89 = arith.constant 0 : index
    %c0_90 = arith.constant 0 : index
    %168 = vector.load %arg14[%c1_88, %c0_89, %c0_90] : memref<3x8x256xf32, #tpu.memory_space<vmem>>, vector<1x8x256xf32>
    %169 = vector.shape_cast %168 : vector<1x8x256xf32> to vector<8x256xf32>
    %170 = vector.shape_cast %167 : vector<8x256xf32> to vector<1x8x256xf32>
    tpu.vector_store %arg14[%c1_88, %c0_89, %c0_90], %170 {strides = array<i32>} : memref<3x8x256xf32, #tpu.memory_space<vmem>>, vector<1x8x256xf32>,
    %171 = vector.extract_strided_slice %153 {offsets = [2, 0, 0], sizes = [1, 8, 256], strides = [1, 1, 1]} : vector<3x8x256xf32> to vector<1x8x256xf32>
    %172 = vector.shape_cast %171 : vector<1x8x256xf32> to vector<8x256xf32>
    %173 = vector.extract_strided_slice %154 {offsets = [0, 0, 0], sizes = [1, 8, 256], strides = [1, 1, 1]} : vector<3x8x256xf32> to vector<1x8x256xf32>
    %174 = vector.shape_cast %173 : vector<1x8x256xf32> to vector<8x256xf32>
    %175 = arith.addf %172, %174 : vector<8x256xf32>
    %c2_91 = arith.constant 2 : index
    %c0_92 = arith.constant 0 : index
    %c0_93 = arith.constant 0 : index
    %176 = vector.load %arg14[%c2_91, %c0_92, %c0_93] : memref<3x8x256xf32, #tpu.memory_space<vmem>>, vector<1x8x256xf32>
    %177 = vector.shape_cast %176 : vector<1x8x256xf32> to vector<8x256xf32>
    %178 = vector.shape_cast %175 : vector<8x256xf32> to vector<1x8x256xf32>
    tpu.vector_store %arg14[%c2_91, %c0_92, %c0_93], %178 {strides = array<i32>} : memref<3x8x256xf32, #tpu.memory_space<vmem>>, vector<1x8x256xf32>,
    %c0_94 = arith.constant 0 : index
    %c0_95 = arith.constant 0 : index
    %179 = vector.load %arg8[%c0_94, %c0_95] : memref<128x256xbf16, #tpu.memory_space<vmem>>, vector<128x256xbf16>
    %cst_96 = arith.constant 0.000000e+00 : f32
    %180 = vector.broadcast %cst_96 : f32 to vector<8x128xf32>
    %c0_97 = arith.constant 0 : index
    %c0_98 = arith.constant 0 : index
    %181 = vector.load %arg16[%c0_97, %c0_98] : memref<8x128xf32, #tpu.memory_space<vmem>>, vector<8x128xf32>
    tpu.vector_store %arg16[%c0_97, %c0_98], %180 {strides = array<i32>} : memref<8x128xf32, #tpu.memory_space<vmem>>, vector<8x128xf32>,
    %cst_99 = arith.constant 0.000000e+00 : f32
    %182 = vector.broadcast %cst_99 : f32 to vector<8x128xf32>
    %c0_100 = arith.constant 0 : index
    %c0_101 = arith.constant 0 : index
    %183 = vector.load %arg17[%c0_100, %c0_101] : memref<8x128xf32, #tpu.memory_space<vmem>>, vector<8x128xf32>
    tpu.vector_store %arg17[%c0_100, %c0_101], %182 {strides = array<i32>} : memref<8x128xf32, #tpu.memory_space<vmem>>, vector<8x128xf32>,
    %c0_i32_102 = arith.constant 0 : i32
    %184 = arith.index_cast %c0_i32_102 : i32 to index
    %c0_103 = arith.constant 0 : index
    %c0_104 = arith.constant 0 : index
    %185 = vector.load %arg14[%184, %c0_103, %c0_104] : memref<3x8x256xf32, #tpu.memory_space<vmem>>, vector<1x8x256xf32>
    %186 = vector.shape_cast %185 : vector<1x8x256xf32> to vector<8x256xf32>
    %c0_105 = arith.constant 0 : index
    %c0_106 = arith.constant 0 : index
    %187 = vector.load %arg16[%c0_105, %c0_106] : memref<8x128xf32, #tpu.memory_space<vmem>>, vector<8x128xf32>
    %188 = arith.truncf %187 : vector<8x128xf32> to vector<8x128xbf16>
    %cst_107 = arith.constant dense<0.000000e+00> : vector<8x256xf32>
    %189 = tpu.matmul %188, %179, %cst_107 {dimension_numbers = #tpu.dot_dimension_numbers<[1], [0], [0], [1], [0, 0, 1, 1], [], []>} : vector<8x128xbf16>, vector<128x256xbf16>, vector<8x256xf32> -> vector<8x256xf32>
    %190 = arith.addf %186, %189 : vector<8x256xf32>
    %191 = vector.extract_strided_slice %190 {offsets = [0, 0], sizes = [8, 128], strides = [1, 1]} : vector<8x256xf32> to vector<8x128xf32>
    %192 = vector.extract_strided_slice %190 {offsets = [0, 128], sizes = [8, 128], strides = [1, 1]} : vector<8x256xf32> to vector<8x128xf32>
    %193 = arith.negf %191 : vector<8x128xf32>
    %194 = math.exp %193 : vector<8x128xf32>
    %cst_108 = arith.constant 1.000000e+00 : f32
    %195 = vector.broadcast %cst_108 : f32 to vector<8x128xf32>
    %196 = arith.addf %195, %194 : vector<8x128xf32>
    %197 = arith.divf %195, %196 : vector<8x128xf32>
    %198 = math.tanh %192 : vector<8x128xf32>
    %199 = arith.negf %192 : vector<8x128xf32>
    %200 = math.exp %199 : vector<8x128xf32>
    %cst_109 = arith.constant 1.000000e+00 : f32
    %201 = vector.broadcast %cst_109 : f32 to vector<8x128xf32>
    %202 = arith.addf %201, %200 : vector<8x128xf32>
    %203 = arith.divf %201, %202 : vector<8x128xf32>
    %c64_i32_110 = arith.constant 64 : i32
    %204 = tpu.dynamic_rotate %197 by %c64_i32_110 dim 1 : vector<8x128xf32>, i32 -> vector<8x128xf32>
    %c64_i32_111 = arith.constant 64 : i32
    %205 = tpu.dynamic_rotate %203 by %c64_i32_111 dim 1 : vector<8x128xf32>, i32 -> vector<8x128xf32>
    %c0_112 = arith.constant 0 : index
    %c0_113 = arith.constant 0 : index
    %206 = vector.load %arg17[%c0_112, %c0_113] : memref<8x128xf32, #tpu.memory_space<vmem>>, vector<8x128xf32>
    %207 = arith.mulf %204, %206 : vector<8x128xf32>
    %208 = arith.mulf %197, %198 : vector<8x128xf32>
    %209 = arith.addf %207, %208 : vector<8x128xf32>
    %210 = math.tanh %209 : vector<8x128xf32>
    %211 = arith.mulf %205, %210 : vector<8x128xf32>
    %c0_114 = arith.constant 0 : index
    %c0_115 = arith.constant 0 : index
    %212 = vector.load %arg16[%c0_114, %c0_115] : memref<8x128xf32, #tpu.memory_space<vmem>>, vector<8x128xf32>
    tpu.vector_store %arg16[%c0_114, %c0_115], %211 {strides = array<i32>} : memref<8x128xf32, #tpu.memory_space<vmem>>, vector<8x128xf32>,
    %c0_116 = arith.constant 0 : index
    %c0_117 = arith.constant 0 : index
    %213 = vector.load %arg17[%c0_116, %c0_117] : memref<8x128xf32, #tpu.memory_space<vmem>>, vector<8x128xf32>
    tpu.vector_store %arg17[%c0_116, %c0_117], %209 {strides = array<i32>} : memref<8x128xf32, #tpu.memory_space<vmem>>, vector<8x128xf32>,
    %214 = arith.index_cast %c0_i32_102 : i32 to index
    %c0_118 = arith.constant 0 : index
    %c0_119 = arith.constant 0 : index
    %215 = vector.load %arg15[%214, %c0_118, %c0_119] : memref<3x8x128xf32, #tpu.memory_space<vmem>>, vector<1x8x128xf32>
    %216 = vector.shape_cast %215 : vector<1x8x128xf32> to vector<8x128xf32>
    %217 = vector.shape_cast %211 : vector<8x128xf32> to vector<1x8x128xf32>
    tpu.vector_store %arg15[%214, %c0_118, %c0_119], %217 {strides = array<i32>} : memref<3x8x128xf32, #tpu.memory_space<vmem>>, vector<1x8x128xf32>,
    %c1_i32_120 = arith.constant 1 : i32
    %218 = arith.index_cast %c1_i32_120 : i32 to index
    %c0_121 = arith.constant 0 : index
    %c0_122 = arith.constant 0 : index
    %219 = vector.load %arg14[%218, %c0_121, %c0_122] : memref<3x8x256xf32, #tpu.memory_space<vmem>>, vector<1x8x256xf32>
    %220 = vector.shape_cast %219 : vector<1x8x256xf32> to vector<8x256xf32>
    %c0_123 = arith.constant 0 : index
    %c0_124 = arith.constant 0 : index
    %221 = vector.load %arg16[%c0_123, %c0_124] : memref<8x128xf32, #tpu.memory_space<vmem>>, vector<8x128xf32>
    %222 = arith.truncf %221 : vector<8x128xf32> to vector<8x128xbf16>
    %cst_125 = arith.constant dense<0.000000e+00> : vector<8x256xf32>
    %223 = tpu.matmul %222, %179, %cst_125 {dimension_numbers = #tpu.dot_dimension_numbers<[1], [0], [0], [1], [0, 0, 1, 1], [], []>} : vector<8x128xbf16>, vector<128x256xbf16>, vector<8x256xf32> -> vector<8x256xf32>
    %224 = arith.addf %220, %223 : vector<8x256xf32>
    %225 = vector.extract_strided_slice %224 {offsets = [0, 0], sizes = [8, 128], strides = [1, 1]} : vector<8x256xf32> to vector<8x128xf32>
    %226 = vector.extract_strided_slice %224 {offsets = [0, 128], sizes = [8, 128], strides = [1, 1]} : vector<8x256xf32> to vector<8x128xf32>
    %227 = arith.negf %225 : vector<8x128xf32>
    %228 = math.exp %227 : vector<8x128xf32>
    %cst_126 = arith.constant 1.000000e+00 : f32
    %229 = vector.broadcast %cst_126 : f32 to vector<8x128xf32>
    %230 = arith.addf %229, %228 : vector<8x128xf32>
    %231 = arith.divf %229, %230 : vector<8x128xf32>
    %232 = math.tanh %226 : vector<8x128xf32>
    %233 = arith.negf %226 : vector<8x128xf32>
    %234 = math.exp %233 : vector<8x128xf32>
    %cst_127 = arith.constant 1.000000e+00 : f32
    %235 = vector.broadcast %cst_127 : f32 to vector<8x128xf32>
    %236 = arith.addf %235, %234 : vector<8x128xf32>
    %237 = arith.divf %235, %236 : vector<8x128xf32>
    %c64_i32_128 = arith.constant 64 : i32
    %238 = tpu.dynamic_rotate %231 by %c64_i32_128 dim 1 : vector<8x128xf32>, i32 -> vector<8x128xf32>
    %c64_i32_129 = arith.constant 64 : i32
    %239 = tpu.dynamic_rotate %237 by %c64_i32_129 dim 1 : vector<8x128xf32>, i32 -> vector<8x128xf32>
    %c0_130 = arith.constant 0 : index
    %c0_131 = arith.constant 0 : index
    %240 = vector.load %arg17[%c0_130, %c0_131] : memref<8x128xf32, #tpu.memory_space<vmem>>, vector<8x128xf32>
    %241 = arith.mulf %238, %240 : vector<8x128xf32>
    %242 = arith.mulf %231, %232 : vector<8x128xf32>
    %243 = arith.addf %241, %242 : vector<8x128xf32>
    %244 = math.tanh %243 : vector<8x128xf32>
    %245 = arith.mulf %239, %244 : vector<8x128xf32>
    %c0_132 = arith.constant 0 : index
    %c0_133 = arith.constant 0 : index
    %246 = vector.load %arg16[%c0_132, %c0_133] : memref<8x128xf32, #tpu.memory_space<vmem>>, vector<8x128xf32>
    tpu.vector_store %arg16[%c0_132, %c0_133], %245 {strides = array<i32>} : memref<8x128xf32, #tpu.memory_space<vmem>>, vector<8x128xf32>,
    %c0_134 = arith.constant 0 : index
    %c0_135 = arith.constant 0 : index
    %247 = vector.load %arg17[%c0_134, %c0_135] : memref<8x128xf32, #tpu.memory_space<vmem>>, vector<8x128xf32>
    tpu.vector_store %arg17[%c0_134, %c0_135], %243 {strides = array<i32>} : memref<8x128xf32, #tpu.memory_space<vmem>>, vector<8x128xf32>,
    %248 = arith.index_cast %c1_i32_120 : i32 to index
    %c0_136 = arith.constant 0 : index
    %c0_137 = arith.constant 0 : index
    %249 = vector.load %arg15[%248, %c0_136, %c0_137] : memref<3x8x128xf32, #tpu.memory_space<vmem>>, vector<1x8x128xf32>
    %250 = vector.shape_cast %249 : vector<1x8x128xf32> to vector<8x128xf32>
    %251 = vector.shape_cast %245 : vector<8x128xf32> to vector<1x8x128xf32>
    tpu.vector_store %arg15[%248, %c0_136, %c0_137], %251 {strides = array<i32>} : memref<3x8x128xf32, #tpu.memory_space<vmem>>, vector<1x8x128xf32>,
    %c2_i32_138 = arith.constant 2 : i32
    %252 = arith.index_cast %c2_i32_138 : i32 to index
    %c0_139 = arith.constant 0 : index
    %c0_140 = arith.constant 0 : index
    %253 = vector.load %arg14[%252, %c0_139, %c0_140] : memref<3x8x256xf32, #tpu.memory_space<vmem>>, vector<1x8x256xf32>
    %254 = vector.shape_cast %253 : vector<1x8x256xf32> to vector<8x256xf32>
    %c0_141 = arith.constant 0 : index
    %c0_142 = arith.constant 0 : index
    %255 = vector.load %arg16[%c0_141, %c0_142] : memref<8x128xf32, #tpu.memory_space<vmem>>, vector<8x128xf32>
    %256 = arith.truncf %255 : vector<8x128xf32> to vector<8x128xbf16>
    %cst_143 = arith.constant dense<0.000000e+00> : vector<8x256xf32>
    %257 = tpu.matmul %256, %179, %cst_143 {dimension_numbers = #tpu.dot_dimension_numbers<[1], [0], [0], [1], [0, 0, 1, 1], [], []>} : vector<8x128xbf16>, vector<128x256xbf16>, vector<8x256xf32> -> vector<8x256xf32>
    %258 = arith.addf %254, %257 : vector<8x256xf32>
    %259 = vector.extract_strided_slice %258 {offsets = [0, 0], sizes = [8, 128], strides = [1, 1]} : vector<8x256xf32> to vector<8x128xf32>
    %260 = vector.extract_strided_slice %258 {offsets = [0, 128], sizes = [8, 128], strides = [1, 1]} : vector<8x256xf32> to vector<8x128xf32>
    %261 = arith.negf %259 : vector<8x128xf32>
    %262 = math.exp %261 : vector<8x128xf32>
    %cst_144 = arith.constant 1.000000e+00 : f32
    %263 = vector.broadcast %cst_144 : f32 to vector<8x128xf32>
    %264 = arith.addf %263, %262 : vector<8x128xf32>
    %265 = arith.divf %263, %264 : vector<8x128xf32>
    %266 = math.tanh %260 : vector<8x128xf32>
    %267 = arith.negf %260 : vector<8x128xf32>
    %268 = math.exp %267 : vector<8x128xf32>
    %cst_145 = arith.constant 1.000000e+00 : f32
    %269 = vector.broadcast %cst_145 : f32 to vector<8x128xf32>
    %270 = arith.addf %269, %268 : vector<8x128xf32>
    %271 = arith.divf %269, %270 : vector<8x128xf32>
    %c64_i32_146 = arith.constant 64 : i32
    %272 = tpu.dynamic_rotate %265 by %c64_i32_146 dim 1 : vector<8x128xf32>, i32 -> vector<8x128xf32>
    %c64_i32_147 = arith.constant 64 : i32
    %273 = tpu.dynamic_rotate %271 by %c64_i32_147 dim 1 : vector<8x128xf32>, i32 -> vector<8x128xf32>
    %c0_148 = arith.constant 0 : index
    %c0_149 = arith.constant 0 : index
    %274 = vector.load %arg17[%c0_148, %c0_149] : memref<8x128xf32, #tpu.memory_space<vmem>>, vector<8x128xf32>
    %275 = arith.mulf %272, %274 : vector<8x128xf32>
    %276 = arith.mulf %265, %266 : vector<8x128xf32>
    %277 = arith.addf %275, %276 : vector<8x128xf32>
    %278 = math.tanh %277 : vector<8x128xf32>
    %279 = arith.mulf %273, %278 : vector<8x128xf32>
    %c0_150 = arith.constant 0 : index
    %c0_151 = arith.constant 0 : index
    %280 = vector.load %arg16[%c0_150, %c0_151] : memref<8x128xf32, #tpu.memory_space<vmem>>, vector<8x128xf32>
    tpu.vector_store %arg16[%c0_150, %c0_151], %279 {strides = array<i32>} : memref<8x128xf32, #tpu.memory_space<vmem>>, vector<8x128xf32>,
    %c0_152 = arith.constant 0 : index
    %c0_153 = arith.constant 0 : index
    %281 = vector.load %arg17[%c0_152, %c0_153] : memref<8x128xf32, #tpu.memory_space<vmem>>, vector<8x128xf32>
    tpu.vector_store %arg17[%c0_152, %c0_153], %277 {strides = array<i32>} : memref<8x128xf32, #tpu.memory_space<vmem>>, vector<8x128xf32>,
    %282 = arith.index_cast %c2_i32_138 : i32 to index
    %c0_154 = arith.constant 0 : index
    %c0_155 = arith.constant 0 : index
    %283 = vector.load %arg15[%282, %c0_154, %c0_155] : memref<3x8x128xf32, #tpu.memory_space<vmem>>, vector<1x8x128xf32>
    %284 = vector.shape_cast %283 : vector<1x8x128xf32> to vector<8x128xf32>
    %285 = vector.shape_cast %279 : vector<8x128xf32> to vector<1x8x128xf32>
    tpu.vector_store %arg15[%282, %c0_154, %c0_155], %285 {strides = array<i32>} : memref<3x8x128xf32, #tpu.memory_space<vmem>>, vector<1x8x128xf32>,
    %c3_i32_156 = arith.constant 3 : i32
    %c0_157 = arith.constant 0 : index
    %c0_158 = arith.constant 0 : index
    %c0_159 = arith.constant 0 : index
    %286 = vector.load %arg15[%c0_157, %c0_158, %c0_159] : memref<3x8x128xf32, #tpu.memory_space<vmem>>, vector<3x8x128xf32>
    %287 = vector.shape_cast %286 : vector<3x8x128xf32> to vector<24x128xf32>
    %288 = arith.truncf %287 : vector<24x128xf32> to vector<24x128xbf16>
    %c0_160 = arith.constant 0 : index
    %c0_161 = arith.constant 0 : index
    %289 = vector.load %arg10[%c0_160, %c0_161] : memref<128x128xbf16, #tpu.memory_space<vmem>>, vector<128x128xbf16>
    %cst_162 = arith.constant dense<0.000000e+00> : vector<24x128xf32>
    %290 = tpu.matmul %288, %289, %cst_162 {dimension_numbers = #tpu.dot_dimension_numbers<[1], [0], [0], [1], [0, 0, 1, 1], [], []>} : vector<24x128xbf16>, vector<128x128xbf16>, vector<24x128xf32> -> vector<24x128xf32>
    %291 = vector.shape_cast %290 : vector<24x128xf32> to vector<3x8x128xf32>
    %c0_163 = arith.constant 0 : index
    %c0_164 = arith.constant 0 : index
    %292 = vector.load %arg11[%c0_163, %c0_164] : memref<128x128xbf16, #tpu.memory_space<vmem>>, vector<128x128xbf16>
    %cst_165 = arith.constant dense<0.000000e+00> : vector<24x128xf32>
    %293 = tpu.matmul %288, %292, %cst_165 {dimension_numbers = #tpu.dot_dimension_numbers<[1], [0], [0], [1], [0, 0, 1, 1], [], []>} : vector<24x128xbf16>, vector<128x128xbf16>, vector<24x128xf32> -> vector<24x128xf32>
    %294 = vector.shape_cast %293 : vector<24x128xf32> to vector<3x8x128xf32>
    %c0_166 = arith.constant 0 : index
    %c0_167 = arith.constant 0 : index
    %295 = vector.load %arg12[%c0_166, %c0_167] : memref<1x128xf32, #tpu.memory_space<vmem>>, vector<1x128xf32>
    %296 = vector.extract_strided_slice %291 {offsets = [0, 0, 0], sizes = [1, 8, 128], strides = [1, 1, 1]} : vector<3x8x128xf32> to vector<1x8x128xf32>
    %297 = vector.shape_cast %296 : vector<1x8x128xf32> to vector<8x128xf32>
    %298 = vector.extract_strided_slice %294 {offsets = [2, 0, 0], sizes = [1, 8, 128], strides = [1, 1, 1]} : vector<3x8x128xf32> to vector<1x8x128xf32>
    %299 = vector.shape_cast %298 : vector<1x8x128xf32> to vector<8x128xf32>
    %300 = arith.addf %297, %299 : vector<8x128xf32>
    %301 = vector.broadcast %295 : vector<1x128xf32> to vector<8x128xf32>
    %302 = arith.addf %300, %301 : vector<8x128xf32>
    %c0_168 = arith.constant 0 : index
    %c0_169 = arith.constant 0 : index
    %c0_170 = arith.constant 0 : index
    %303 = vector.load %arg13[%c0_168, %c0_169, %c0_170] : memref<3x8x128xf32, #tpu.memory_space<vmem>>, vector<1x8x128xf32>
    %304 = vector.shape_cast %303 : vector<1x8x128xf32> to vector<8x128xf32>
    %305 = vector.shape_cast %302 : vector<8x128xf32> to vector<1x8x128xf32>
    tpu.vector_store %arg13[%c0_168, %c0_169, %c0_170], %305 {strides = array<i32>} : memref<3x8x128xf32, #tpu.memory_space<vmem>>, vector<1x8x128xf32>,
    %306 = vector.extract_strided_slice %291 {offsets = [1, 0, 0], sizes = [1, 8, 128], strides = [1, 1, 1]} : vector<3x8x128xf32> to vector<1x8x128xf32>
    %307 = vector.shape_cast %306 : vector<1x8x128xf32> to vector<8x128xf32>
    %308 = vector.extract_strided_slice %294 {offsets = [1, 0, 0], sizes = [1, 8, 128], strides = [1, 1, 1]} : vector<3x8x128xf32> to vector<1x8x128xf32>
    %309 = vector.shape_cast %308 : vector<1x8x128xf32> to vector<8x128xf32>
    %310 = arith.addf %307, %309 : vector<8x128xf32>
    %311 = vector.broadcast %295 : vector<1x128xf32> to vector<8x128xf32>
    %312 = arith.addf %310, %311 : vector<8x128xf32>
    %c1_171 = arith.constant 1 : index
    %c0_172 = arith.constant 0 : index
    %c0_173 = arith.constant 0 : index
    %313 = vector.load %arg13[%c1_171, %c0_172, %c0_173] : memref<3x8x128xf32, #tpu.memory_space<vmem>>, vector<1x8x128xf32>
    %314 = vector.shape_cast %313 : vector<1x8x128xf32> to vector<8x128xf32>
    %315 = vector.shape_cast %312 : vector<8x128xf32> to vector<1x8x128xf32>
    tpu.vector_store %arg13[%c1_171, %c0_172, %c0_173], %315 {strides = array<i32>} : memref<3x8x128xf32, #tpu.memory_space<vmem>>, vector<1x8x128xf32>,
    %316 = vector.extract_strided_slice %291 {offsets = [2, 0, 0], sizes = [1, 8, 128], strides = [1, 1, 1]} : vector<3x8x128xf32> to vector<1x8x128xf32>
    %317 = vector.shape_cast %316 : vector<1x8x128xf32> to vector<8x128xf32>
    %318 = vector.extract_strided_slice %294 {offsets = [0, 0, 0], sizes = [1, 8, 128], strides = [1, 1, 1]} : vector<3x8x128xf32> to vector<1x8x128xf32>
    %319 = vector.shape_cast %318 : vector<1x8x128xf32> to vector<8x128xf32>
    %320 = arith.addf %317, %319 : vector<8x128xf32>
    %321 = vector.broadcast %295 : vector<1x128xf32> to vector<8x128xf32>
    %322 = arith.addf %320, %321 : vector<8x128xf32>
    %c2_174 = arith.constant 2 : index
    %c0_175 = arith.constant 0 : index
    %c0_176 = arith.constant 0 : index
    %323 = vector.load %arg13[%c2_174, %c0_175, %c0_176] : memref<3x8x128xf32, #tpu.memory_space<vmem>>, vector<1x8x128xf32>
    %324 = vector.shape_cast %323 : vector<1x8x128xf32> to vector<8x128xf32>
    %325 = vector.shape_cast %322 : vector<8x128xf32> to vector<1x8x128xf32>
    tpu.vector_store %arg13[%c2_174, %c0_175, %c0_176], %325 {strides = array<i32>} : memref<3x8x128xf32, #tpu.memory_space<vmem>>, vector<1x8x128xf32>,
    return
  }
  func.func @transform_0(%arg0: i32) -> (i32, i32, i32) {
    %c0_i32 = arith.constant 0 : i32
    %c0_i32_0 = arith.constant 0 : i32
    %c0_i32_1 = arith.constant 0 : i32
    return %c0_i32, %arg0, %c0_i32_0 : i32, i32, i32
  }
  func.func @transform_1(%arg0: i32) -> (i32, i32) {
    %c0_i32 = arith.constant 0 : i32
    %c0_i32_0 = arith.constant 0 : i32
    %c0_i32_1 = arith.constant 0 : i32
    return %c0_i32, %c0_i32_0 : i32, i32
  }
  func.func @transform_2(%arg0: i32) -> (i32, i32) {
    %c0_i32 = arith.constant 0 : i32
    %c0_i32_0 = arith.constant 0 : i32
    %c0_i32_1 = arith.constant 0 : i32
    return %c0_i32, %c0_i32_0 : i32, i32
  }
  func.func @transform_3(%arg0: i32) -> (i32, i32) {
    %c0_i32 = arith.constant 0 : i32
    %c0_i32_0 = arith.constant 0 : i32
    %c0_i32_1 = arith.constant 0 : i32
    return %c0_i32, %c0_i32_0 : i32, i32
  }
  func.func @transform_4(%arg0: i32) -> (i32, i32) {
    %c0_i32 = arith.constant 0 : i32
    %c0_i32_0 = arith.constant 0 : i32
    %c0_i32_1 = arith.constant 0 : i32
    return %c0_i32, %c0_i32_0 : i32, i32
  }
  func.func @transform_5(%arg0: i32) -> (i32, i32) {
    %c0_i32 = arith.constant 0 : i32
    %c0_i32_0 = arith.constant 0 : i32
    %c0_i32_1 = arith.constant 0 : i32
    return %c0_i32, %c0_i32_0 : i32, i32
  }
  func.func @transform_6(%arg0: i32) -> (i32, i32) {
    %c0_i32 = arith.constant 0 : i32
    %c0_i32_0 = arith.constant 0 : i32
    %c0_i32_1 = arith.constant 0 : i32
    return %c0_i32, %c0_i32_0 : i32, i32
  }
  func.func @transform_7(%arg0: i32) -> (i32, i32) {
    %c0_i32 = arith.constant 0 : i32
    %c0_i32_0 = arith.constant 0 : i32
    %c0_i32_1 = arith.constant 0 : i32
    return %c0_i32, %c0_i32_0 : i32, i32
  }
  func.func @transform_8(%arg0: i32) -> (i32, i32) {
    %c0_i32 = arith.constant 0 : i32
    %c0_i32_0 = arith.constant 0 : i32
    %c0_i32_1 = arith.constant 0 : i32
    return %c0_i32, %c0_i32_0 : i32, i32
  }
  func.func @transform_9(%arg0: i32) -> (i32, i32) {
    %c0_i32 = arith.constant 0 : i32
    %c0_i32_0 = arith.constant 0 : i32
    %c0_i32_1 = arith.constant 0 : i32
    return %c0_i32, %c0_i32_0 : i32, i32
  }
  func.func @transform_10(%arg0: i32) -> (i32, i32) {
    %c0_i32 = arith.constant 0 : i32
    %c0_i32_0 = arith.constant 0 : i32
    %c0_i32_1 = arith.constant 0 : i32
    return %c0_i32, %c0_i32_0 : i32, i32
  }
  func.func @transform_11(%arg0: i32) -> (i32, i32) {
    %c0_i32 = arith.constant 0 : i32
    %c0_i32_0 = arith.constant 0 : i32
    %c0_i32_1 = arith.constant 0 : i32
    return %c0_i32, %c0_i32_0 : i32, i32
  }
  func.func @transform_12(%arg0: i32) -> (i32, i32, i32) {
    %c0_i32 = arith.constant 0 : i32
    %c0_i32_0 = arith.constant 0 : i32
    %c0_i32_1 = arith.constant 0 : i32
    return %c0_i32, %arg0, %c0_i32_0 : i32, i32, i32
  }
}

module attributes {stable_mosaic.version = 11 : i64} {
  func.func @_bilstm_stack_meanpool_kernel(%arg0: i32, %arg1: memref<8x8x128xf32, #tpu.memory_space<vmem>>, %arg2: memref<128x256xbf16, #tpu.memory_space<vmem>>, %arg3: memref<128x256xbf16, #tpu.memory_space<vmem>>, %arg4: memref<128x256xbf16, #tpu.memory_space<vmem>>, %arg5: memref<1x256xf32, #tpu.memory_space<vmem>>, %arg6: memref<128x256xbf16, #tpu.memory_space<vmem>>, %arg7: memref<128x256xbf16, #tpu.memory_space<vmem>>, %arg8: memref<128x256xbf16, #tpu.memory_space<vmem>>, %arg9: memref<1x256xf32, #tpu.memory_space<vmem>>, %arg10: memref<8x128xf32, #tpu.memory_space<vmem>>, %arg11: memref<8x8x256xf32, #tpu.memory_space<vmem>>, %arg12: memref<8x8x128xf32, #tpu.memory_space<vmem>>, %arg13: memref<8x128xf32, #tpu.memory_space<vmem>>, %arg14: memref<8x128xf32, #tpu.memory_space<vmem>>) attributes {dimension_semantics = [#tpu.dimension_semantics<parallel>], iteration_bounds = array<i64: 1>, scalar_prefetch = 0 : i64, scratch_operands = 4 : i64, tpu.core_type = #tpu.core_type<tc>, window_params = [{transform_indices = @transform_0, window_bounds = array<i64: 8, 8, 128>}, {pipeline_mode = #tpu.pipeline_mode<synchronous>, transform_indices = @transform_1, window_bounds = array<i64: 128, 256>}, {pipeline_mode = #tpu.pipeline_mode<synchronous>, transform_indices = @transform_2, window_bounds = array<i64: 128, 256>}, {pipeline_mode = #tpu.pipeline_mode<synchronous>, transform_indices = @transform_3, window_bounds = array<i64: 128, 256>}, {pipeline_mode = #tpu.pipeline_mode<synchronous>, transform_indices = @transform_4, window_bounds = array<i64: 1, 256>}, {pipeline_mode = #tpu.pipeline_mode<synchronous>, transform_indices = @transform_5, window_bounds = array<i64: 128, 256>}, {pipeline_mode = #tpu.pipeline_mode<synchronous>, transform_indices = @transform_6, window_bounds = array<i64: 128, 256>}, {pipeline_mode = #tpu.pipeline_mode<synchronous>, transform_indices = @transform_7, window_bounds = array<i64: 128, 256>}, {pipeline_mode = #tpu.pipeline_mode<synchronous>, transform_indices = @transform_8, window_bounds = array<i64: 1, 256>}, {transform_indices = @transform_9, window_bounds = array<i64: 8, 128>}]} {
    %c0 = arith.constant 0 : index
    %c0_0 = arith.constant 0 : index
    %c0_1 = arith.constant 0 : index
    %0 = vector.load %arg1[%c0, %c0_0, %c0_1] : memref<8x8x128xf32, #tpu.memory_space<vmem>>, vector<8x8x128xf32>
    %1 = vector.shape_cast %0 : vector<8x8x128xf32> to vector<64x128xf32>
    %2 = arith.truncf %1 : vector<64x128xf32> to vector<64x128xbf16>
    %c0_2 = arith.constant 0 : index
    %c0_3 = arith.constant 0 : index
    %3 = vector.load %arg2[%c0_2, %c0_3] : memref<128x256xbf16, #tpu.memory_space<vmem>>, vector<128x256xbf16>
    %cst = arith.constant dense<0.000000e+00> : vector<64x256xf32>
    %4 = tpu.matmul %2, %3, %cst {dimension_numbers = #tpu.dot_dimension_numbers<[1], [0], [0], [1], [0, 0, 1, 1], [], []>} : vector<64x128xbf16>, vector<128x256xbf16>, vector<64x256xf32> -> vector<64x256xf32>
    %c0_4 = arith.constant 0 : index
    %c0_5 = arith.constant 0 : index
    %5 = vector.load %arg3[%c0_4, %c0_5] : memref<128x256xbf16, #tpu.memory_space<vmem>>, vector<128x256xbf16>
    %cst_6 = arith.constant dense<0.000000e+00> : vector<64x256xf32>
    %6 = tpu.matmul %2, %5, %cst_6 {dimension_numbers = #tpu.dot_dimension_numbers<[1], [0], [0], [1], [0, 0, 1, 1], [], []>} : vector<64x128xbf16>, vector<128x256xbf16>, vector<64x256xf32> -> vector<64x256xf32>
    %c0_7 = arith.constant 0 : index
    %c0_8 = arith.constant 0 : index
    %7 = vector.load %arg5[%c0_7, %c0_8] : memref<1x256xf32, #tpu.memory_space<vmem>>, vector<1x256xf32>
    %8 = vector.broadcast %7 : vector<1x256xf32> to vector<64x256xf32>
    %9 = arith.addf %4, %8 : vector<64x256xf32>
    %10 = vector.shape_cast %9 : vector<64x256xf32> to vector<8x8x256xf32>
    %11 = vector.shape_cast %6 : vector<64x256xf32> to vector<8x8x256xf32>
    %12 = vector.extract_strided_slice %10 {offsets = [0, 0, 0], sizes = [1, 8, 256], strides = [1, 1, 1]} : vector<8x8x256xf32> to vector<1x8x256xf32>
    %13 = vector.shape_cast %12 : vector<1x8x256xf32> to vector<8x256xf32>
    %14 = vector.extract_strided_slice %11 {offsets = [7, 0, 0], sizes = [1, 8, 256], strides = [1, 1, 1]} : vector<8x8x256xf32> to vector<1x8x256xf32>
    %15 = vector.shape_cast %14 : vector<1x8x256xf32> to vector<8x256xf32>
    %16 = arith.addf %13, %15 : vector<8x256xf32>
    %c0_9 = arith.constant 0 : index
    %c0_10 = arith.constant 0 : index
    %c0_11 = arith.constant 0 : index
    %17 = vector.load %arg11[%c0_9, %c0_10, %c0_11] : memref<8x8x256xf32, #tpu.memory_space<vmem>>, vector<1x8x256xf32>
    %18 = vector.shape_cast %17 : vector<1x8x256xf32> to vector<8x256xf32>
    %19 = vector.shape_cast %16 : vector<8x256xf32> to vector<1x8x256xf32>
    tpu.vector_store %arg11[%c0_9, %c0_10, %c0_11], %19 {strides = array<i32>} : memref<8x8x256xf32, #tpu.memory_space<vmem>>, vector<1x8x256xf32>,
    %20 = vector.extract_strided_slice %10 {offsets = [1, 0, 0], sizes = [1, 8, 256], strides = [1, 1, 1]} : vector<8x8x256xf32> to vector<1x8x256xf32>
    %21 = vector.shape_cast %20 : vector<1x8x256xf32> to vector<8x256xf32>
    %22 = vector.extract_strided_slice %11 {offsets = [6, 0, 0], sizes = [1, 8, 256], strides = [1, 1, 1]} : vector<8x8x256xf32> to vector<1x8x256xf32>
    %23 = vector.shape_cast %22 : vector<1x8x256xf32> to vector<8x256xf32>
    %24 = arith.addf %21, %23 : vector<8x256xf32>
    %c1 = arith.constant 1 : index
    %c0_12 = arith.constant 0 : index
    %c0_13 = arith.constant 0 : index
    %25 = vector.load %arg11[%c1, %c0_12, %c0_13] : memref<8x8x256xf32, #tpu.memory_space<vmem>>, vector<1x8x256xf32>
    %26 = vector.shape_cast %25 : vector<1x8x256xf32> to vector<8x256xf32>
    %27 = vector.shape_cast %24 : vector<8x256xf32> to vector<1x8x256xf32>
    tpu.vector_store %arg11[%c1, %c0_12, %c0_13], %27 {strides = array<i32>} : memref<8x8x256xf32, #tpu.memory_space<vmem>>, vector<1x8x256xf32>,
    %28 = vector.extract_strided_slice %10 {offsets = [2, 0, 0], sizes = [1, 8, 256], strides = [1, 1, 1]} : vector<8x8x256xf32> to vector<1x8x256xf32>
    %29 = vector.shape_cast %28 : vector<1x8x256xf32> to vector<8x256xf32>
    %30 = vector.extract_strided_slice %11 {offsets = [5, 0, 0], sizes = [1, 8, 256], strides = [1, 1, 1]} : vector<8x8x256xf32> to vector<1x8x256xf32>
    %31 = vector.shape_cast %30 : vector<1x8x256xf32> to vector<8x256xf32>
    %32 = arith.addf %29, %31 : vector<8x256xf32>
    %c2 = arith.constant 2 : index
    %c0_14 = arith.constant 0 : index
    %c0_15 = arith.constant 0 : index
    %33 = vector.load %arg11[%c2, %c0_14, %c0_15] : memref<8x8x256xf32, #tpu.memory_space<vmem>>, vector<1x8x256xf32>
    %34 = vector.shape_cast %33 : vector<1x8x256xf32> to vector<8x256xf32>
    %35 = vector.shape_cast %32 : vector<8x256xf32> to vector<1x8x256xf32>
    tpu.vector_store %arg11[%c2, %c0_14, %c0_15], %35 {strides = array<i32>} : memref<8x8x256xf32, #tpu.memory_space<vmem>>, vector<1x8x256xf32>,
    %36 = vector.extract_strided_slice %10 {offsets = [3, 0, 0], sizes = [1, 8, 256], strides = [1, 1, 1]} : vector<8x8x256xf32> to vector<1x8x256xf32>
    %37 = vector.shape_cast %36 : vector<1x8x256xf32> to vector<8x256xf32>
    %38 = vector.extract_strided_slice %11 {offsets = [4, 0, 0], sizes = [1, 8, 256], strides = [1, 1, 1]} : vector<8x8x256xf32> to vector<1x8x256xf32>
    %39 = vector.shape_cast %38 : vector<1x8x256xf32> to vector<8x256xf32>
    %40 = arith.addf %37, %39 : vector<8x256xf32>
    %c3 = arith.constant 3 : index
    %c0_16 = arith.constant 0 : index
    %c0_17 = arith.constant 0 : index
    %41 = vector.load %arg11[%c3, %c0_16, %c0_17] : memref<8x8x256xf32, #tpu.memory_space<vmem>>, vector<1x8x256xf32>
    %42 = vector.shape_cast %41 : vector<1x8x256xf32> to vector<8x256xf32>
    %43 = vector.shape_cast %40 : vector<8x256xf32> to vector<1x8x256xf32>
    tpu.vector_store %arg11[%c3, %c0_16, %c0_17], %43 {strides = array<i32>} : memref<8x8x256xf32, #tpu.memory_space<vmem>>, vector<1x8x256xf32>,
    %44 = vector.extract_strided_slice %10 {offsets = [4, 0, 0], sizes = [1, 8, 256], strides = [1, 1, 1]} : vector<8x8x256xf32> to vector<1x8x256xf32>
    %45 = vector.shape_cast %44 : vector<1x8x256xf32> to vector<8x256xf32>
    %46 = vector.extract_strided_slice %11 {offsets = [3, 0, 0], sizes = [1, 8, 256], strides = [1, 1, 1]} : vector<8x8x256xf32> to vector<1x8x256xf32>
    %47 = vector.shape_cast %46 : vector<1x8x256xf32> to vector<8x256xf32>
    %48 = arith.addf %45, %47 : vector<8x256xf32>
    %c4 = arith.constant 4 : index
    %c0_18 = arith.constant 0 : index
    %c0_19 = arith.constant 0 : index
    %49 = vector.load %arg11[%c4, %c0_18, %c0_19] : memref<8x8x256xf32, #tpu.memory_space<vmem>>, vector<1x8x256xf32>
    %50 = vector.shape_cast %49 : vector<1x8x256xf32> to vector<8x256xf32>
    %51 = vector.shape_cast %48 : vector<8x256xf32> to vector<1x8x256xf32>
    tpu.vector_store %arg11[%c4, %c0_18, %c0_19], %51 {strides = array<i32>} : memref<8x8x256xf32, #tpu.memory_space<vmem>>, vector<1x8x256xf32>,
    %52 = vector.extract_strided_slice %10 {offsets = [5, 0, 0], sizes = [1, 8, 256], strides = [1, 1, 1]} : vector<8x8x256xf32> to vector<1x8x256xf32>
    %53 = vector.shape_cast %52 : vector<1x8x256xf32> to vector<8x256xf32>
    %54 = vector.extract_strided_slice %11 {offsets = [2, 0, 0], sizes = [1, 8, 256], strides = [1, 1, 1]} : vector<8x8x256xf32> to vector<1x8x256xf32>
    %55 = vector.shape_cast %54 : vector<1x8x256xf32> to vector<8x256xf32>
    %56 = arith.addf %53, %55 : vector<8x256xf32>
    %c5 = arith.constant 5 : index
    %c0_20 = arith.constant 0 : index
    %c0_21 = arith.constant 0 : index
    %57 = vector.load %arg11[%c5, %c0_20, %c0_21] : memref<8x8x256xf32, #tpu.memory_space<vmem>>, vector<1x8x256xf32>
    %58 = vector.shape_cast %57 : vector<1x8x256xf32> to vector<8x256xf32>
    %59 = vector.shape_cast %56 : vector<8x256xf32> to vector<1x8x256xf32>
    tpu.vector_store %arg11[%c5, %c0_20, %c0_21], %59 {strides = array<i32>} : memref<8x8x256xf32, #tpu.memory_space<vmem>>, vector<1x8x256xf32>,
    %60 = vector.extract_strided_slice %10 {offsets = [6, 0, 0], sizes = [1, 8, 256], strides = [1, 1, 1]} : vector<8x8x256xf32> to vector<1x8x256xf32>
    %61 = vector.shape_cast %60 : vector<1x8x256xf32> to vector<8x256xf32>
    %62 = vector.extract_strided_slice %11 {offsets = [1, 0, 0], sizes = [1, 8, 256], strides = [1, 1, 1]} : vector<8x8x256xf32> to vector<1x8x256xf32>
    %63 = vector.shape_cast %62 : vector<1x8x256xf32> to vector<8x256xf32>
    %64 = arith.addf %61, %63 : vector<8x256xf32>
    %c6 = arith.constant 6 : index
    %c0_22 = arith.constant 0 : index
    %c0_23 = arith.constant 0 : index
    %65 = vector.load %arg11[%c6, %c0_22, %c0_23] : memref<8x8x256xf32, #tpu.memory_space<vmem>>, vector<1x8x256xf32>
    %66 = vector.shape_cast %65 : vector<1x8x256xf32> to vector<8x256xf32>
    %67 = vector.shape_cast %64 : vector<8x256xf32> to vector<1x8x256xf32>
    tpu.vector_store %arg11[%c6, %c0_22, %c0_23], %67 {strides = array<i32>} : memref<8x8x256xf32, #tpu.memory_space<vmem>>, vector<1x8x256xf32>,
    %68 = vector.extract_strided_slice %10 {offsets = [7, 0, 0], sizes = [1, 8, 256], strides = [1, 1, 1]} : vector<8x8x256xf32> to vector<1x8x256xf32>
    %69 = vector.shape_cast %68 : vector<1x8x256xf32> to vector<8x256xf32>
    %70 = vector.extract_strided_slice %11 {offsets = [0, 0, 0], sizes = [1, 8, 256], strides = [1, 1, 1]} : vector<8x8x256xf32> to vector<1x8x256xf32>
    %71 = vector.shape_cast %70 : vector<1x8x256xf32> to vector<8x256xf32>
    %72 = arith.addf %69, %71 : vector<8x256xf32>
    %c7 = arith.constant 7 : index
    %c0_24 = arith.constant 0 : index
    %c0_25 = arith.constant 0 : index
    %73 = vector.load %arg11[%c7, %c0_24, %c0_25] : memref<8x8x256xf32, #tpu.memory_space<vmem>>, vector<1x8x256xf32>
    %74 = vector.shape_cast %73 : vector<1x8x256xf32> to vector<8x256xf32>
    %75 = vector.shape_cast %72 : vector<8x256xf32> to vector<1x8x256xf32>
    tpu.vector_store %arg11[%c7, %c0_24, %c0_25], %75 {strides = array<i32>} : memref<8x8x256xf32, #tpu.memory_space<vmem>>, vector<1x8x256xf32>,
    %c0_26 = arith.constant 0 : index
    %c0_27 = arith.constant 0 : index
    %76 = vector.load %arg4[%c0_26, %c0_27] : memref<128x256xbf16, #tpu.memory_space<vmem>>, vector<128x256xbf16>
    %cst_28 = arith.constant 0.000000e+00 : f32
    %77 = vector.broadcast %cst_28 : f32 to vector<8x128xf32>
    %c0_29 = arith.constant 0 : index
    %c0_30 = arith.constant 0 : index
    %78 = vector.load %arg13[%c0_29, %c0_30] : memref<8x128xf32, #tpu.memory_space<vmem>>, vector<8x128xf32>
    tpu.vector_store %arg13[%c0_29, %c0_30], %77 {strides = array<i32>} : memref<8x128xf32, #tpu.memory_space<vmem>>, vector<8x128xf32>,
    %cst_31 = arith.constant 0.000000e+00 : f32
    %79 = vector.broadcast %cst_31 : f32 to vector<8x128xf32>
    %c0_32 = arith.constant 0 : index
    %c0_33 = arith.constant 0 : index
    %80 = vector.load %arg14[%c0_32, %c0_33] : memref<8x128xf32, #tpu.memory_space<vmem>>, vector<8x128xf32>
    tpu.vector_store %arg14[%c0_32, %c0_33], %79 {strides = array<i32>} : memref<8x128xf32, #tpu.memory_space<vmem>>, vector<8x128xf32>,
    %c0_i32 = arith.constant 0 : i32
    %81 = arith.index_cast %c0_i32 : i32 to index
    %c0_34 = arith.constant 0 : index
    %c0_35 = arith.constant 0 : index
    %82 = vector.load %arg11[%81, %c0_34, %c0_35] : memref<8x8x256xf32, #tpu.memory_space<vmem>>, vector<1x8x256xf32>
    %83 = vector.shape_cast %82 : vector<1x8x256xf32> to vector<8x256xf32>
    %c0_36 = arith.constant 0 : index
    %c0_37 = arith.constant 0 : index
    %84 = vector.load %arg13[%c0_36, %c0_37] : memref<8x128xf32, #tpu.memory_space<vmem>>, vector<8x128xf32>
    %85 = arith.truncf %84 : vector<8x128xf32> to vector<8x128xbf16>
    %cst_38 = arith.constant dense<0.000000e+00> : vector<8x256xf32>
    %86 = tpu.matmul %85, %76, %cst_38 {dimension_numbers = #tpu.dot_dimension_numbers<[1], [0], [0], [1], [0, 0, 1, 1], [], []>} : vector<8x128xbf16>, vector<128x256xbf16>, vector<8x256xf32> -> vector<8x256xf32>
    %87 = arith.addf %83, %86 : vector<8x256xf32>
    %88 = vector.extract_strided_slice %87 {offsets = [0, 0], sizes = [8, 128], strides = [1, 1]} : vector<8x256xf32> to vector<8x128xf32>
    %89 = vector.extract_strided_slice %87 {offsets = [0, 128], sizes = [8, 128], strides = [1, 1]} : vector<8x256xf32> to vector<8x128xf32>
    %90 = arith.negf %88 : vector<8x128xf32>
    %91 = math.exp %90 : vector<8x128xf32>
    %cst_39 = arith.constant 1.000000e+00 : f32
    %92 = vector.broadcast %cst_39 : f32 to vector<8x128xf32>
    %93 = arith.addf %92, %91 : vector<8x128xf32>
    %94 = arith.divf %92, %93 : vector<8x128xf32>
    %95 = math.tanh %89 : vector<8x128xf32>
    %96 = arith.negf %89 : vector<8x128xf32>
    %97 = math.exp %96 : vector<8x128xf32>
    %cst_40 = arith.constant 1.000000e+00 : f32
    %98 = vector.broadcast %cst_40 : f32 to vector<8x128xf32>
    %99 = arith.addf %98, %97 : vector<8x128xf32>
    %100 = arith.divf %98, %99 : vector<8x128xf32>
    %c64_i32 = arith.constant 64 : i32
    %101 = tpu.dynamic_rotate %94 by %c64_i32 dim 1 : vector<8x128xf32>, i32 -> vector<8x128xf32>
    %c64_i32_41 = arith.constant 64 : i32
    %102 = tpu.dynamic_rotate %100 by %c64_i32_41 dim 1 : vector<8x128xf32>, i32 -> vector<8x128xf32>
    %c0_42 = arith.constant 0 : index
    %c0_43 = arith.constant 0 : index
    %103 = vector.load %arg14[%c0_42, %c0_43] : memref<8x128xf32, #tpu.memory_space<vmem>>, vector<8x128xf32>
    %104 = arith.mulf %101, %103 : vector<8x128xf32>
    %105 = arith.mulf %94, %95 : vector<8x128xf32>
    %106 = arith.addf %104, %105 : vector<8x128xf32>
    %107 = math.tanh %106 : vector<8x128xf32>
    %108 = arith.mulf %102, %107 : vector<8x128xf32>
    %c0_44 = arith.constant 0 : index
    %c0_45 = arith.constant 0 : index
    %109 = vector.load %arg13[%c0_44, %c0_45] : memref<8x128xf32, #tpu.memory_space<vmem>>, vector<8x128xf32>
    tpu.vector_store %arg13[%c0_44, %c0_45], %108 {strides = array<i32>} : memref<8x128xf32, #tpu.memory_space<vmem>>, vector<8x128xf32>,
    %c0_46 = arith.constant 0 : index
    %c0_47 = arith.constant 0 : index
    %110 = vector.load %arg14[%c0_46, %c0_47] : memref<8x128xf32, #tpu.memory_space<vmem>>, vector<8x128xf32>
    tpu.vector_store %arg14[%c0_46, %c0_47], %106 {strides = array<i32>} : memref<8x128xf32, #tpu.memory_space<vmem>>, vector<8x128xf32>,
    %111 = arith.index_cast %c0_i32 : i32 to index
    %c0_48 = arith.constant 0 : index
    %c0_49 = arith.constant 0 : index
    %112 = vector.load %arg12[%111, %c0_48, %c0_49] : memref<8x8x128xf32, #tpu.memory_space<vmem>>, vector<1x8x128xf32>
    %113 = vector.shape_cast %112 : vector<1x8x128xf32> to vector<8x128xf32>
    %114 = vector.shape_cast %108 : vector<8x128xf32> to vector<1x8x128xf32>
    tpu.vector_store %arg12[%111, %c0_48, %c0_49], %114 {strides = array<i32>} : memref<8x8x128xf32, #tpu.memory_space<vmem>>, vector<1x8x128xf32>,
    %c1_i32 = arith.constant 1 : i32
    %115 = arith.index_cast %c1_i32 : i32 to index
    %c0_50 = arith.constant 0 : index
    %c0_51 = arith.constant 0 : index
    %116 = vector.load %arg11[%115, %c0_50, %c0_51] : memref<8x8x256xf32, #tpu.memory_space<vmem>>, vector<1x8x256xf32>
    %117 = vector.shape_cast %116 : vector<1x8x256xf32> to vector<8x256xf32>
    %c0_52 = arith.constant 0 : index
    %c0_53 = arith.constant 0 : index
    %118 = vector.load %arg13[%c0_52, %c0_53] : memref<8x128xf32, #tpu.memory_space<vmem>>, vector<8x128xf32>
    %119 = arith.truncf %118 : vector<8x128xf32> to vector<8x128xbf16>
    %cst_54 = arith.constant dense<0.000000e+00> : vector<8x256xf32>
    %120 = tpu.matmul %119, %76, %cst_54 {dimension_numbers = #tpu.dot_dimension_numbers<[1], [0], [0], [1], [0, 0, 1, 1], [], []>} : vector<8x128xbf16>, vector<128x256xbf16>, vector<8x256xf32> -> vector<8x256xf32>
    %121 = arith.addf %117, %120 : vector<8x256xf32>
    %122 = vector.extract_strided_slice %121 {offsets = [0, 0], sizes = [8, 128], strides = [1, 1]} : vector<8x256xf32> to vector<8x128xf32>
    %123 = vector.extract_strided_slice %121 {offsets = [0, 128], sizes = [8, 128], strides = [1, 1]} : vector<8x256xf32> to vector<8x128xf32>
    %124 = arith.negf %122 : vector<8x128xf32>
    %125 = math.exp %124 : vector<8x128xf32>
    %cst_55 = arith.constant 1.000000e+00 : f32
    %126 = vector.broadcast %cst_55 : f32 to vector<8x128xf32>
    %127 = arith.addf %126, %125 : vector<8x128xf32>
    %128 = arith.divf %126, %127 : vector<8x128xf32>
    %129 = math.tanh %123 : vector<8x128xf32>
    %130 = arith.negf %123 : vector<8x128xf32>
    %131 = math.exp %130 : vector<8x128xf32>
    %cst_56 = arith.constant 1.000000e+00 : f32
    %132 = vector.broadcast %cst_56 : f32 to vector<8x128xf32>
    %133 = arith.addf %132, %131 : vector<8x128xf32>
    %134 = arith.divf %132, %133 : vector<8x128xf32>
    %c64_i32_57 = arith.constant 64 : i32
    %135 = tpu.dynamic_rotate %128 by %c64_i32_57 dim 1 : vector<8x128xf32>, i32 -> vector<8x128xf32>
    %c64_i32_58 = arith.constant 64 : i32
    %136 = tpu.dynamic_rotate %134 by %c64_i32_58 dim 1 : vector<8x128xf32>, i32 -> vector<8x128xf32>
    %c0_59 = arith.constant 0 : index
    %c0_60 = arith.constant 0 : index
    %137 = vector.load %arg14[%c0_59, %c0_60] : memref<8x128xf32, #tpu.memory_space<vmem>>, vector<8x128xf32>
    %138 = arith.mulf %135, %137 : vector<8x128xf32>
    %139 = arith.mulf %128, %129 : vector<8x128xf32>
    %140 = arith.addf %138, %139 : vector<8x128xf32>
    %141 = math.tanh %140 : vector<8x128xf32>
    %142 = arith.mulf %136, %141 : vector<8x128xf32>
    %c0_61 = arith.constant 0 : index
    %c0_62 = arith.constant 0 : index
    %143 = vector.load %arg13[%c0_61, %c0_62] : memref<8x128xf32, #tpu.memory_space<vmem>>, vector<8x128xf32>
    tpu.vector_store %arg13[%c0_61, %c0_62], %142 {strides = array<i32>} : memref<8x128xf32, #tpu.memory_space<vmem>>, vector<8x128xf32>,
    %c0_63 = arith.constant 0 : index
    %c0_64 = arith.constant 0 : index
    %144 = vector.load %arg14[%c0_63, %c0_64] : memref<8x128xf32, #tpu.memory_space<vmem>>, vector<8x128xf32>
    tpu.vector_store %arg14[%c0_63, %c0_64], %140 {strides = array<i32>} : memref<8x128xf32, #tpu.memory_space<vmem>>, vector<8x128xf32>,
    %145 = arith.index_cast %c1_i32 : i32 to index
    %c0_65 = arith.constant 0 : index
    %c0_66 = arith.constant 0 : index
    %146 = vector.load %arg12[%145, %c0_65, %c0_66] : memref<8x8x128xf32, #tpu.memory_space<vmem>>, vector<1x8x128xf32>
    %147 = vector.shape_cast %146 : vector<1x8x128xf32> to vector<8x128xf32>
    %148 = vector.shape_cast %142 : vector<8x128xf32> to vector<1x8x128xf32>
    tpu.vector_store %arg12[%145, %c0_65, %c0_66], %148 {strides = array<i32>} : memref<8x8x128xf32, #tpu.memory_space<vmem>>, vector<1x8x128xf32>,
    %c2_i32 = arith.constant 2 : i32
    %149 = arith.index_cast %c2_i32 : i32 to index
    %c0_67 = arith.constant 0 : index
    %c0_68 = arith.constant 0 : index
    %150 = vector.load %arg11[%149, %c0_67, %c0_68] : memref<8x8x256xf32, #tpu.memory_space<vmem>>, vector<1x8x256xf32>
    %151 = vector.shape_cast %150 : vector<1x8x256xf32> to vector<8x256xf32>
    %c0_69 = arith.constant 0 : index
    %c0_70 = arith.constant 0 : index
    %152 = vector.load %arg13[%c0_69, %c0_70] : memref<8x128xf32, #tpu.memory_space<vmem>>, vector<8x128xf32>
    %153 = arith.truncf %152 : vector<8x128xf32> to vector<8x128xbf16>
    %cst_71 = arith.constant dense<0.000000e+00> : vector<8x256xf32>
    %154 = tpu.matmul %153, %76, %cst_71 {dimension_numbers = #tpu.dot_dimension_numbers<[1], [0], [0], [1], [0, 0, 1, 1], [], []>} : vector<8x128xbf16>, vector<128x256xbf16>, vector<8x256xf32> -> vector<8x256xf32>
    %155 = arith.addf %151, %154 : vector<8x256xf32>
    %156 = vector.extract_strided_slice %155 {offsets = [0, 0], sizes = [8, 128], strides = [1, 1]} : vector<8x256xf32> to vector<8x128xf32>
    %157 = vector.extract_strided_slice %155 {offsets = [0, 128], sizes = [8, 128], strides = [1, 1]} : vector<8x256xf32> to vector<8x128xf32>
    %158 = arith.negf %156 : vector<8x128xf32>
    %159 = math.exp %158 : vector<8x128xf32>
    %cst_72 = arith.constant 1.000000e+00 : f32
    %160 = vector.broadcast %cst_72 : f32 to vector<8x128xf32>
    %161 = arith.addf %160, %159 : vector<8x128xf32>
    %162 = arith.divf %160, %161 : vector<8x128xf32>
    %163 = math.tanh %157 : vector<8x128xf32>
    %164 = arith.negf %157 : vector<8x128xf32>
    %165 = math.exp %164 : vector<8x128xf32>
    %cst_73 = arith.constant 1.000000e+00 : f32
    %166 = vector.broadcast %cst_73 : f32 to vector<8x128xf32>
    %167 = arith.addf %166, %165 : vector<8x128xf32>
    %168 = arith.divf %166, %167 : vector<8x128xf32>
    %c64_i32_74 = arith.constant 64 : i32
    %169 = tpu.dynamic_rotate %162 by %c64_i32_74 dim 1 : vector<8x128xf32>, i32 -> vector<8x128xf32>
    %c64_i32_75 = arith.constant 64 : i32
    %170 = tpu.dynamic_rotate %168 by %c64_i32_75 dim 1 : vector<8x128xf32>, i32 -> vector<8x128xf32>
    %c0_76 = arith.constant 0 : index
    %c0_77 = arith.constant 0 : index
    %171 = vector.load %arg14[%c0_76, %c0_77] : memref<8x128xf32, #tpu.memory_space<vmem>>, vector<8x128xf32>
    %172 = arith.mulf %169, %171 : vector<8x128xf32>
    %173 = arith.mulf %162, %163 : vector<8x128xf32>
    %174 = arith.addf %172, %173 : vector<8x128xf32>
    %175 = math.tanh %174 : vector<8x128xf32>
    %176 = arith.mulf %170, %175 : vector<8x128xf32>
    %c0_78 = arith.constant 0 : index
    %c0_79 = arith.constant 0 : index
    %177 = vector.load %arg13[%c0_78, %c0_79] : memref<8x128xf32, #tpu.memory_space<vmem>>, vector<8x128xf32>
    tpu.vector_store %arg13[%c0_78, %c0_79], %176 {strides = array<i32>} : memref<8x128xf32, #tpu.memory_space<vmem>>, vector<8x128xf32>,
    %c0_80 = arith.constant 0 : index
    %c0_81 = arith.constant 0 : index
    %178 = vector.load %arg14[%c0_80, %c0_81] : memref<8x128xf32, #tpu.memory_space<vmem>>, vector<8x128xf32>
    tpu.vector_store %arg14[%c0_80, %c0_81], %174 {strides = array<i32>} : memref<8x128xf32, #tpu.memory_space<vmem>>, vector<8x128xf32>,
    %179 = arith.index_cast %c2_i32 : i32 to index
    %c0_82 = arith.constant 0 : index
    %c0_83 = arith.constant 0 : index
    %180 = vector.load %arg12[%179, %c0_82, %c0_83] : memref<8x8x128xf32, #tpu.memory_space<vmem>>, vector<1x8x128xf32>
    %181 = vector.shape_cast %180 : vector<1x8x128xf32> to vector<8x128xf32>
    %182 = vector.shape_cast %176 : vector<8x128xf32> to vector<1x8x128xf32>
    tpu.vector_store %arg12[%179, %c0_82, %c0_83], %182 {strides = array<i32>} : memref<8x8x128xf32, #tpu.memory_space<vmem>>, vector<1x8x128xf32>,
    %c3_i32 = arith.constant 3 : i32
    %183 = arith.index_cast %c3_i32 : i32 to index
    %c0_84 = arith.constant 0 : index
    %c0_85 = arith.constant 0 : index
    %184 = vector.load %arg11[%183, %c0_84, %c0_85] : memref<8x8x256xf32, #tpu.memory_space<vmem>>, vector<1x8x256xf32>
    %185 = vector.shape_cast %184 : vector<1x8x256xf32> to vector<8x256xf32>
    %c0_86 = arith.constant 0 : index
    %c0_87 = arith.constant 0 : index
    %186 = vector.load %arg13[%c0_86, %c0_87] : memref<8x128xf32, #tpu.memory_space<vmem>>, vector<8x128xf32>
    %187 = arith.truncf %186 : vector<8x128xf32> to vector<8x128xbf16>
    %cst_88 = arith.constant dense<0.000000e+00> : vector<8x256xf32>
    %188 = tpu.matmul %187, %76, %cst_88 {dimension_numbers = #tpu.dot_dimension_numbers<[1], [0], [0], [1], [0, 0, 1, 1], [], []>} : vector<8x128xbf16>, vector<128x256xbf16>, vector<8x256xf32> -> vector<8x256xf32>
    %189 = arith.addf %185, %188 : vector<8x256xf32>
    %190 = vector.extract_strided_slice %189 {offsets = [0, 0], sizes = [8, 128], strides = [1, 1]} : vector<8x256xf32> to vector<8x128xf32>
    %191 = vector.extract_strided_slice %189 {offsets = [0, 128], sizes = [8, 128], strides = [1, 1]} : vector<8x256xf32> to vector<8x128xf32>
    %192 = arith.negf %190 : vector<8x128xf32>
    %193 = math.exp %192 : vector<8x128xf32>
    %cst_89 = arith.constant 1.000000e+00 : f32
    %194 = vector.broadcast %cst_89 : f32 to vector<8x128xf32>
    %195 = arith.addf %194, %193 : vector<8x128xf32>
    %196 = arith.divf %194, %195 : vector<8x128xf32>
    %197 = math.tanh %191 : vector<8x128xf32>
    %198 = arith.negf %191 : vector<8x128xf32>
    %199 = math.exp %198 : vector<8x128xf32>
    %cst_90 = arith.constant 1.000000e+00 : f32
    %200 = vector.broadcast %cst_90 : f32 to vector<8x128xf32>
    %201 = arith.addf %200, %199 : vector<8x128xf32>
    %202 = arith.divf %200, %201 : vector<8x128xf32>
    %c64_i32_91 = arith.constant 64 : i32
    %203 = tpu.dynamic_rotate %196 by %c64_i32_91 dim 1 : vector<8x128xf32>, i32 -> vector<8x128xf32>
    %c64_i32_92 = arith.constant 64 : i32
    %204 = tpu.dynamic_rotate %202 by %c64_i32_92 dim 1 : vector<8x128xf32>, i32 -> vector<8x128xf32>
    %c0_93 = arith.constant 0 : index
    %c0_94 = arith.constant 0 : index
    %205 = vector.load %arg14[%c0_93, %c0_94] : memref<8x128xf32, #tpu.memory_space<vmem>>, vector<8x128xf32>
    %206 = arith.mulf %203, %205 : vector<8x128xf32>
    %207 = arith.mulf %196, %197 : vector<8x128xf32>
    %208 = arith.addf %206, %207 : vector<8x128xf32>
    %209 = math.tanh %208 : vector<8x128xf32>
    %210 = arith.mulf %204, %209 : vector<8x128xf32>
    %c0_95 = arith.constant 0 : index
    %c0_96 = arith.constant 0 : index
    %211 = vector.load %arg13[%c0_95, %c0_96] : memref<8x128xf32, #tpu.memory_space<vmem>>, vector<8x128xf32>
    tpu.vector_store %arg13[%c0_95, %c0_96], %210 {strides = array<i32>} : memref<8x128xf32, #tpu.memory_space<vmem>>, vector<8x128xf32>,
    %c0_97 = arith.constant 0 : index
    %c0_98 = arith.constant 0 : index
    %212 = vector.load %arg14[%c0_97, %c0_98] : memref<8x128xf32, #tpu.memory_space<vmem>>, vector<8x128xf32>
    tpu.vector_store %arg14[%c0_97, %c0_98], %208 {strides = array<i32>} : memref<8x128xf32, #tpu.memory_space<vmem>>, vector<8x128xf32>,
    %213 = arith.index_cast %c3_i32 : i32 to index
    %c0_99 = arith.constant 0 : index
    %c0_100 = arith.constant 0 : index
    %214 = vector.load %arg12[%213, %c0_99, %c0_100] : memref<8x8x128xf32, #tpu.memory_space<vmem>>, vector<1x8x128xf32>
    %215 = vector.shape_cast %214 : vector<1x8x128xf32> to vector<8x128xf32>
    %216 = vector.shape_cast %210 : vector<8x128xf32> to vector<1x8x128xf32>
    tpu.vector_store %arg12[%213, %c0_99, %c0_100], %216 {strides = array<i32>} : memref<8x8x128xf32, #tpu.memory_space<vmem>>, vector<1x8x128xf32>,
    %c4_i32 = arith.constant 4 : i32
    %217 = arith.index_cast %c4_i32 : i32 to index
    %c0_101 = arith.constant 0 : index
    %c0_102 = arith.constant 0 : index
    %218 = vector.load %arg11[%217, %c0_101, %c0_102] : memref<8x8x256xf32, #tpu.memory_space<vmem>>, vector<1x8x256xf32>
    %219 = vector.shape_cast %218 : vector<1x8x256xf32> to vector<8x256xf32>
    %c0_103 = arith.constant 0 : index
    %c0_104 = arith.constant 0 : index
    %220 = vector.load %arg13[%c0_103, %c0_104] : memref<8x128xf32, #tpu.memory_space<vmem>>, vector<8x128xf32>
    %221 = arith.truncf %220 : vector<8x128xf32> to vector<8x128xbf16>
    %cst_105 = arith.constant dense<0.000000e+00> : vector<8x256xf32>
    %222 = tpu.matmul %221, %76, %cst_105 {dimension_numbers = #tpu.dot_dimension_numbers<[1], [0], [0], [1], [0, 0, 1, 1], [], []>} : vector<8x128xbf16>, vector<128x256xbf16>, vector<8x256xf32> -> vector<8x256xf32>
    %223 = arith.addf %219, %222 : vector<8x256xf32>
    %224 = vector.extract_strided_slice %223 {offsets = [0, 0], sizes = [8, 128], strides = [1, 1]} : vector<8x256xf32> to vector<8x128xf32>
    %225 = vector.extract_strided_slice %223 {offsets = [0, 128], sizes = [8, 128], strides = [1, 1]} : vector<8x256xf32> to vector<8x128xf32>
    %226 = arith.negf %224 : vector<8x128xf32>
    %227 = math.exp %226 : vector<8x128xf32>
    %cst_106 = arith.constant 1.000000e+00 : f32
    %228 = vector.broadcast %cst_106 : f32 to vector<8x128xf32>
    %229 = arith.addf %228, %227 : vector<8x128xf32>
    %230 = arith.divf %228, %229 : vector<8x128xf32>
    %231 = math.tanh %225 : vector<8x128xf32>
    %232 = arith.negf %225 : vector<8x128xf32>
    %233 = math.exp %232 : vector<8x128xf32>
    %cst_107 = arith.constant 1.000000e+00 : f32
    %234 = vector.broadcast %cst_107 : f32 to vector<8x128xf32>
    %235 = arith.addf %234, %233 : vector<8x128xf32>
    %236 = arith.divf %234, %235 : vector<8x128xf32>
    %c64_i32_108 = arith.constant 64 : i32
    %237 = tpu.dynamic_rotate %230 by %c64_i32_108 dim 1 : vector<8x128xf32>, i32 -> vector<8x128xf32>
    %c64_i32_109 = arith.constant 64 : i32
    %238 = tpu.dynamic_rotate %236 by %c64_i32_109 dim 1 : vector<8x128xf32>, i32 -> vector<8x128xf32>
    %c0_110 = arith.constant 0 : index
    %c0_111 = arith.constant 0 : index
    %239 = vector.load %arg14[%c0_110, %c0_111] : memref<8x128xf32, #tpu.memory_space<vmem>>, vector<8x128xf32>
    %240 = arith.mulf %237, %239 : vector<8x128xf32>
    %241 = arith.mulf %230, %231 : vector<8x128xf32>
    %242 = arith.addf %240, %241 : vector<8x128xf32>
    %243 = math.tanh %242 : vector<8x128xf32>
    %244 = arith.mulf %238, %243 : vector<8x128xf32>
    %c0_112 = arith.constant 0 : index
    %c0_113 = arith.constant 0 : index
    %245 = vector.load %arg13[%c0_112, %c0_113] : memref<8x128xf32, #tpu.memory_space<vmem>>, vector<8x128xf32>
    tpu.vector_store %arg13[%c0_112, %c0_113], %244 {strides = array<i32>} : memref<8x128xf32, #tpu.memory_space<vmem>>, vector<8x128xf32>,
    %c0_114 = arith.constant 0 : index
    %c0_115 = arith.constant 0 : index
    %246 = vector.load %arg14[%c0_114, %c0_115] : memref<8x128xf32, #tpu.memory_space<vmem>>, vector<8x128xf32>
    tpu.vector_store %arg14[%c0_114, %c0_115], %242 {strides = array<i32>} : memref<8x128xf32, #tpu.memory_space<vmem>>, vector<8x128xf32>,
    %247 = arith.index_cast %c4_i32 : i32 to index
    %c0_116 = arith.constant 0 : index
    %c0_117 = arith.constant 0 : index
    %248 = vector.load %arg12[%247, %c0_116, %c0_117] : memref<8x8x128xf32, #tpu.memory_space<vmem>>, vector<1x8x128xf32>
    %249 = vector.shape_cast %248 : vector<1x8x128xf32> to vector<8x128xf32>
    %250 = vector.shape_cast %244 : vector<8x128xf32> to vector<1x8x128xf32>
    tpu.vector_store %arg12[%247, %c0_116, %c0_117], %250 {strides = array<i32>} : memref<8x8x128xf32, #tpu.memory_space<vmem>>, vector<1x8x128xf32>,
    %c5_i32 = arith.constant 5 : i32
    %251 = arith.index_cast %c5_i32 : i32 to index
    %c0_118 = arith.constant 0 : index
    %c0_119 = arith.constant 0 : index
    %252 = vector.load %arg11[%251, %c0_118, %c0_119] : memref<8x8x256xf32, #tpu.memory_space<vmem>>, vector<1x8x256xf32>
    %253 = vector.shape_cast %252 : vector<1x8x256xf32> to vector<8x256xf32>
    %c0_120 = arith.constant 0 : index
    %c0_121 = arith.constant 0 : index
    %254 = vector.load %arg13[%c0_120, %c0_121] : memref<8x128xf32, #tpu.memory_space<vmem>>, vector<8x128xf32>
    %255 = arith.truncf %254 : vector<8x128xf32> to vector<8x128xbf16>
    %cst_122 = arith.constant dense<0.000000e+00> : vector<8x256xf32>
    %256 = tpu.matmul %255, %76, %cst_122 {dimension_numbers = #tpu.dot_dimension_numbers<[1], [0], [0], [1], [0, 0, 1, 1], [], []>} : vector<8x128xbf16>, vector<128x256xbf16>, vector<8x256xf32> -> vector<8x256xf32>
    %257 = arith.addf %253, %256 : vector<8x256xf32>
    %258 = vector.extract_strided_slice %257 {offsets = [0, 0], sizes = [8, 128], strides = [1, 1]} : vector<8x256xf32> to vector<8x128xf32>
    %259 = vector.extract_strided_slice %257 {offsets = [0, 128], sizes = [8, 128], strides = [1, 1]} : vector<8x256xf32> to vector<8x128xf32>
    %260 = arith.negf %258 : vector<8x128xf32>
    %261 = math.exp %260 : vector<8x128xf32>
    %cst_123 = arith.constant 1.000000e+00 : f32
    %262 = vector.broadcast %cst_123 : f32 to vector<8x128xf32>
    %263 = arith.addf %262, %261 : vector<8x128xf32>
    %264 = arith.divf %262, %263 : vector<8x128xf32>
    %265 = math.tanh %259 : vector<8x128xf32>
    %266 = arith.negf %259 : vector<8x128xf32>
    %267 = math.exp %266 : vector<8x128xf32>
    %cst_124 = arith.constant 1.000000e+00 : f32
    %268 = vector.broadcast %cst_124 : f32 to vector<8x128xf32>
    %269 = arith.addf %268, %267 : vector<8x128xf32>
    %270 = arith.divf %268, %269 : vector<8x128xf32>
    %c64_i32_125 = arith.constant 64 : i32
    %271 = tpu.dynamic_rotate %264 by %c64_i32_125 dim 1 : vector<8x128xf32>, i32 -> vector<8x128xf32>
    %c64_i32_126 = arith.constant 64 : i32
    %272 = tpu.dynamic_rotate %270 by %c64_i32_126 dim 1 : vector<8x128xf32>, i32 -> vector<8x128xf32>
    %c0_127 = arith.constant 0 : index
    %c0_128 = arith.constant 0 : index
    %273 = vector.load %arg14[%c0_127, %c0_128] : memref<8x128xf32, #tpu.memory_space<vmem>>, vector<8x128xf32>
    %274 = arith.mulf %271, %273 : vector<8x128xf32>
    %275 = arith.mulf %264, %265 : vector<8x128xf32>
    %276 = arith.addf %274, %275 : vector<8x128xf32>
    %277 = math.tanh %276 : vector<8x128xf32>
    %278 = arith.mulf %272, %277 : vector<8x128xf32>
    %c0_129 = arith.constant 0 : index
    %c0_130 = arith.constant 0 : index
    %279 = vector.load %arg13[%c0_129, %c0_130] : memref<8x128xf32, #tpu.memory_space<vmem>>, vector<8x128xf32>
    tpu.vector_store %arg13[%c0_129, %c0_130], %278 {strides = array<i32>} : memref<8x128xf32, #tpu.memory_space<vmem>>, vector<8x128xf32>,
    %c0_131 = arith.constant 0 : index
    %c0_132 = arith.constant 0 : index
    %280 = vector.load %arg14[%c0_131, %c0_132] : memref<8x128xf32, #tpu.memory_space<vmem>>, vector<8x128xf32>
    tpu.vector_store %arg14[%c0_131, %c0_132], %276 {strides = array<i32>} : memref<8x128xf32, #tpu.memory_space<vmem>>, vector<8x128xf32>,
    %281 = arith.index_cast %c5_i32 : i32 to index
    %c0_133 = arith.constant 0 : index
    %c0_134 = arith.constant 0 : index
    %282 = vector.load %arg12[%281, %c0_133, %c0_134] : memref<8x8x128xf32, #tpu.memory_space<vmem>>, vector<1x8x128xf32>
    %283 = vector.shape_cast %282 : vector<1x8x128xf32> to vector<8x128xf32>
    %284 = vector.shape_cast %278 : vector<8x128xf32> to vector<1x8x128xf32>
    tpu.vector_store %arg12[%281, %c0_133, %c0_134], %284 {strides = array<i32>} : memref<8x8x128xf32, #tpu.memory_space<vmem>>, vector<1x8x128xf32>,
    %c6_i32 = arith.constant 6 : i32
    %285 = arith.index_cast %c6_i32 : i32 to index
    %c0_135 = arith.constant 0 : index
    %c0_136 = arith.constant 0 : index
    %286 = vector.load %arg11[%285, %c0_135, %c0_136] : memref<8x8x256xf32, #tpu.memory_space<vmem>>, vector<1x8x256xf32>
    %287 = vector.shape_cast %286 : vector<1x8x256xf32> to vector<8x256xf32>
    %c0_137 = arith.constant 0 : index
    %c0_138 = arith.constant 0 : index
    %288 = vector.load %arg13[%c0_137, %c0_138] : memref<8x128xf32, #tpu.memory_space<vmem>>, vector<8x128xf32>
    %289 = arith.truncf %288 : vector<8x128xf32> to vector<8x128xbf16>
    %cst_139 = arith.constant dense<0.000000e+00> : vector<8x256xf32>
    %290 = tpu.matmul %289, %76, %cst_139 {dimension_numbers = #tpu.dot_dimension_numbers<[1], [0], [0], [1], [0, 0, 1, 1], [], []>} : vector<8x128xbf16>, vector<128x256xbf16>, vector<8x256xf32> -> vector<8x256xf32>
    %291 = arith.addf %287, %290 : vector<8x256xf32>
    %292 = vector.extract_strided_slice %291 {offsets = [0, 0], sizes = [8, 128], strides = [1, 1]} : vector<8x256xf32> to vector<8x128xf32>
    %293 = vector.extract_strided_slice %291 {offsets = [0, 128], sizes = [8, 128], strides = [1, 1]} : vector<8x256xf32> to vector<8x128xf32>
    %294 = arith.negf %292 : vector<8x128xf32>
    %295 = math.exp %294 : vector<8x128xf32>
    %cst_140 = arith.constant 1.000000e+00 : f32
    %296 = vector.broadcast %cst_140 : f32 to vector<8x128xf32>
    %297 = arith.addf %296, %295 : vector<8x128xf32>
    %298 = arith.divf %296, %297 : vector<8x128xf32>
    %299 = math.tanh %293 : vector<8x128xf32>
    %300 = arith.negf %293 : vector<8x128xf32>
    %301 = math.exp %300 : vector<8x128xf32>
    %cst_141 = arith.constant 1.000000e+00 : f32
    %302 = vector.broadcast %cst_141 : f32 to vector<8x128xf32>
    %303 = arith.addf %302, %301 : vector<8x128xf32>
    %304 = arith.divf %302, %303 : vector<8x128xf32>
    %c64_i32_142 = arith.constant 64 : i32
    %305 = tpu.dynamic_rotate %298 by %c64_i32_142 dim 1 : vector<8x128xf32>, i32 -> vector<8x128xf32>
    %c64_i32_143 = arith.constant 64 : i32
    %306 = tpu.dynamic_rotate %304 by %c64_i32_143 dim 1 : vector<8x128xf32>, i32 -> vector<8x128xf32>
    %c0_144 = arith.constant 0 : index
    %c0_145 = arith.constant 0 : index
    %307 = vector.load %arg14[%c0_144, %c0_145] : memref<8x128xf32, #tpu.memory_space<vmem>>, vector<8x128xf32>
    %308 = arith.mulf %305, %307 : vector<8x128xf32>
    %309 = arith.mulf %298, %299 : vector<8x128xf32>
    %310 = arith.addf %308, %309 : vector<8x128xf32>
    %311 = math.tanh %310 : vector<8x128xf32>
    %312 = arith.mulf %306, %311 : vector<8x128xf32>
    %c0_146 = arith.constant 0 : index
    %c0_147 = arith.constant 0 : index
    %313 = vector.load %arg13[%c0_146, %c0_147] : memref<8x128xf32, #tpu.memory_space<vmem>>, vector<8x128xf32>
    tpu.vector_store %arg13[%c0_146, %c0_147], %312 {strides = array<i32>} : memref<8x128xf32, #tpu.memory_space<vmem>>, vector<8x128xf32>,
    %c0_148 = arith.constant 0 : index
    %c0_149 = arith.constant 0 : index
    %314 = vector.load %arg14[%c0_148, %c0_149] : memref<8x128xf32, #tpu.memory_space<vmem>>, vector<8x128xf32>
    tpu.vector_store %arg14[%c0_148, %c0_149], %310 {strides = array<i32>} : memref<8x128xf32, #tpu.memory_space<vmem>>, vector<8x128xf32>,
    %315 = arith.index_cast %c6_i32 : i32 to index
    %c0_150 = arith.constant 0 : index
    %c0_151 = arith.constant 0 : index
    %316 = vector.load %arg12[%315, %c0_150, %c0_151] : memref<8x8x128xf32, #tpu.memory_space<vmem>>, vector<1x8x128xf32>
    %317 = vector.shape_cast %316 : vector<1x8x128xf32> to vector<8x128xf32>
    %318 = vector.shape_cast %312 : vector<8x128xf32> to vector<1x8x128xf32>
    tpu.vector_store %arg12[%315, %c0_150, %c0_151], %318 {strides = array<i32>} : memref<8x8x128xf32, #tpu.memory_space<vmem>>, vector<1x8x128xf32>,
    %c7_i32 = arith.constant 7 : i32
    %319 = arith.index_cast %c7_i32 : i32 to index
    %c0_152 = arith.constant 0 : index
    %c0_153 = arith.constant 0 : index
    %320 = vector.load %arg11[%319, %c0_152, %c0_153] : memref<8x8x256xf32, #tpu.memory_space<vmem>>, vector<1x8x256xf32>
    %321 = vector.shape_cast %320 : vector<1x8x256xf32> to vector<8x256xf32>
    %c0_154 = arith.constant 0 : index
    %c0_155 = arith.constant 0 : index
    %322 = vector.load %arg13[%c0_154, %c0_155] : memref<8x128xf32, #tpu.memory_space<vmem>>, vector<8x128xf32>
    %323 = arith.truncf %322 : vector<8x128xf32> to vector<8x128xbf16>
    %cst_156 = arith.constant dense<0.000000e+00> : vector<8x256xf32>
    %324 = tpu.matmul %323, %76, %cst_156 {dimension_numbers = #tpu.dot_dimension_numbers<[1], [0], [0], [1], [0, 0, 1, 1], [], []>} : vector<8x128xbf16>, vector<128x256xbf16>, vector<8x256xf32> -> vector<8x256xf32>
    %325 = arith.addf %321, %324 : vector<8x256xf32>
    %326 = vector.extract_strided_slice %325 {offsets = [0, 0], sizes = [8, 128], strides = [1, 1]} : vector<8x256xf32> to vector<8x128xf32>
    %327 = vector.extract_strided_slice %325 {offsets = [0, 128], sizes = [8, 128], strides = [1, 1]} : vector<8x256xf32> to vector<8x128xf32>
    %328 = arith.negf %326 : vector<8x128xf32>
    %329 = math.exp %328 : vector<8x128xf32>
    %cst_157 = arith.constant 1.000000e+00 : f32
    %330 = vector.broadcast %cst_157 : f32 to vector<8x128xf32>
    %331 = arith.addf %330, %329 : vector<8x128xf32>
    %332 = arith.divf %330, %331 : vector<8x128xf32>
    %333 = math.tanh %327 : vector<8x128xf32>
    %334 = arith.negf %327 : vector<8x128xf32>
    %335 = math.exp %334 : vector<8x128xf32>
    %cst_158 = arith.constant 1.000000e+00 : f32
    %336 = vector.broadcast %cst_158 : f32 to vector<8x128xf32>
    %337 = arith.addf %336, %335 : vector<8x128xf32>
    %338 = arith.divf %336, %337 : vector<8x128xf32>
    %c64_i32_159 = arith.constant 64 : i32
    %339 = tpu.dynamic_rotate %332 by %c64_i32_159 dim 1 : vector<8x128xf32>, i32 -> vector<8x128xf32>
    %c64_i32_160 = arith.constant 64 : i32
    %340 = tpu.dynamic_rotate %338 by %c64_i32_160 dim 1 : vector<8x128xf32>, i32 -> vector<8x128xf32>
    %c0_161 = arith.constant 0 : index
    %c0_162 = arith.constant 0 : index
    %341 = vector.load %arg14[%c0_161, %c0_162] : memref<8x128xf32, #tpu.memory_space<vmem>>, vector<8x128xf32>
    %342 = arith.mulf %339, %341 : vector<8x128xf32>
    %343 = arith.mulf %332, %333 : vector<8x128xf32>
    %344 = arith.addf %342, %343 : vector<8x128xf32>
    %345 = math.tanh %344 : vector<8x128xf32>
    %346 = arith.mulf %340, %345 : vector<8x128xf32>
    %c0_163 = arith.constant 0 : index
    %c0_164 = arith.constant 0 : index
    %347 = vector.load %arg13[%c0_163, %c0_164] : memref<8x128xf32, #tpu.memory_space<vmem>>, vector<8x128xf32>
    tpu.vector_store %arg13[%c0_163, %c0_164], %346 {strides = array<i32>} : memref<8x128xf32, #tpu.memory_space<vmem>>, vector<8x128xf32>,
    %c0_165 = arith.constant 0 : index
    %c0_166 = arith.constant 0 : index
    %348 = vector.load %arg14[%c0_165, %c0_166] : memref<8x128xf32, #tpu.memory_space<vmem>>, vector<8x128xf32>
    tpu.vector_store %arg14[%c0_165, %c0_166], %344 {strides = array<i32>} : memref<8x128xf32, #tpu.memory_space<vmem>>, vector<8x128xf32>,
    %349 = arith.index_cast %c7_i32 : i32 to index
    %c0_167 = arith.constant 0 : index
    %c0_168 = arith.constant 0 : index
    %350 = vector.load %arg12[%349, %c0_167, %c0_168] : memref<8x8x128xf32, #tpu.memory_space<vmem>>, vector<1x8x128xf32>
    %351 = vector.shape_cast %350 : vector<1x8x128xf32> to vector<8x128xf32>
    %352 = vector.shape_cast %346 : vector<8x128xf32> to vector<1x8x128xf32>
    tpu.vector_store %arg12[%349, %c0_167, %c0_168], %352 {strides = array<i32>} : memref<8x8x128xf32, #tpu.memory_space<vmem>>, vector<1x8x128xf32>,
    %c8_i32 = arith.constant 8 : i32
    %c0_169 = arith.constant 0 : index
    %c0_170 = arith.constant 0 : index
    %c0_171 = arith.constant 0 : index
    %353 = vector.load %arg12[%c0_169, %c0_170, %c0_171] : memref<8x8x128xf32, #tpu.memory_space<vmem>>, vector<8x8x128xf32>
    %354 = vector.shape_cast %353 : vector<8x8x128xf32> to vector<64x128xf32>
    %355 = arith.truncf %354 : vector<64x128xf32> to vector<64x128xbf16>
    %c0_172 = arith.constant 0 : index
    %c0_173 = arith.constant 0 : index
    %356 = vector.load %arg6[%c0_172, %c0_173] : memref<128x256xbf16, #tpu.memory_space<vmem>>, vector<128x256xbf16>
    %cst_174 = arith.constant dense<0.000000e+00> : vector<64x256xf32>
    %357 = tpu.matmul %355, %356, %cst_174 {dimension_numbers = #tpu.dot_dimension_numbers<[1], [0], [0], [1], [0, 0, 1, 1], [], []>} : vector<64x128xbf16>, vector<128x256xbf16>, vector<64x256xf32> -> vector<64x256xf32>
    %c0_175 = arith.constant 0 : index
    %c0_176 = arith.constant 0 : index
    %358 = vector.load %arg7[%c0_175, %c0_176] : memref<128x256xbf16, #tpu.memory_space<vmem>>, vector<128x256xbf16>
    %cst_177 = arith.constant dense<0.000000e+00> : vector<64x256xf32>
    %359 = tpu.matmul %355, %358, %cst_177 {dimension_numbers = #tpu.dot_dimension_numbers<[1], [0], [0], [1], [0, 0, 1, 1], [], []>} : vector<64x128xbf16>, vector<128x256xbf16>, vector<64x256xf32> -> vector<64x256xf32>
    %c0_178 = arith.constant 0 : index
    %c0_179 = arith.constant 0 : index
    %360 = vector.load %arg9[%c0_178, %c0_179] : memref<1x256xf32, #tpu.memory_space<vmem>>, vector<1x256xf32>
    %361 = vector.broadcast %360 : vector<1x256xf32> to vector<64x256xf32>
    %362 = arith.addf %357, %361 : vector<64x256xf32>
    %363 = vector.shape_cast %362 : vector<64x256xf32> to vector<8x8x256xf32>
    %364 = vector.shape_cast %359 : vector<64x256xf32> to vector<8x8x256xf32>
    %365 = vector.extract_strided_slice %363 {offsets = [0, 0, 0], sizes = [1, 8, 256], strides = [1, 1, 1]} : vector<8x8x256xf32> to vector<1x8x256xf32>
    %366 = vector.shape_cast %365 : vector<1x8x256xf32> to vector<8x256xf32>
    %367 = vector.extract_strided_slice %364 {offsets = [7, 0, 0], sizes = [1, 8, 256], strides = [1, 1, 1]} : vector<8x8x256xf32> to vector<1x8x256xf32>
    %368 = vector.shape_cast %367 : vector<1x8x256xf32> to vector<8x256xf32>
    %369 = arith.addf %366, %368 : vector<8x256xf32>
    %c0_180 = arith.constant 0 : index
    %c0_181 = arith.constant 0 : index
    %c0_182 = arith.constant 0 : index
    %370 = vector.load %arg11[%c0_180, %c0_181, %c0_182] : memref<8x8x256xf32, #tpu.memory_space<vmem>>, vector<1x8x256xf32>
    %371 = vector.shape_cast %370 : vector<1x8x256xf32> to vector<8x256xf32>
    %372 = vector.shape_cast %369 : vector<8x256xf32> to vector<1x8x256xf32>
    tpu.vector_store %arg11[%c0_180, %c0_181, %c0_182], %372 {strides = array<i32>} : memref<8x8x256xf32, #tpu.memory_space<vmem>>, vector<1x8x256xf32>,
    %373 = vector.extract_strided_slice %363 {offsets = [1, 0, 0], sizes = [1, 8, 256], strides = [1, 1, 1]} : vector<8x8x256xf32> to vector<1x8x256xf32>
    %374 = vector.shape_cast %373 : vector<1x8x256xf32> to vector<8x256xf32>
    %375 = vector.extract_strided_slice %364 {offsets = [6, 0, 0], sizes = [1, 8, 256], strides = [1, 1, 1]} : vector<8x8x256xf32> to vector<1x8x256xf32>
    %376 = vector.shape_cast %375 : vector<1x8x256xf32> to vector<8x256xf32>
    %377 = arith.addf %374, %376 : vector<8x256xf32>
    %c1_183 = arith.constant 1 : index
    %c0_184 = arith.constant 0 : index
    %c0_185 = arith.constant 0 : index
    %378 = vector.load %arg11[%c1_183, %c0_184, %c0_185] : memref<8x8x256xf32, #tpu.memory_space<vmem>>, vector<1x8x256xf32>
    %379 = vector.shape_cast %378 : vector<1x8x256xf32> to vector<8x256xf32>
    %380 = vector.shape_cast %377 : vector<8x256xf32> to vector<1x8x256xf32>
    tpu.vector_store %arg11[%c1_183, %c0_184, %c0_185], %380 {strides = array<i32>} : memref<8x8x256xf32, #tpu.memory_space<vmem>>, vector<1x8x256xf32>,
    %381 = vector.extract_strided_slice %363 {offsets = [2, 0, 0], sizes = [1, 8, 256], strides = [1, 1, 1]} : vector<8x8x256xf32> to vector<1x8x256xf32>
    %382 = vector.shape_cast %381 : vector<1x8x256xf32> to vector<8x256xf32>
    %383 = vector.extract_strided_slice %364 {offsets = [5, 0, 0], sizes = [1, 8, 256], strides = [1, 1, 1]} : vector<8x8x256xf32> to vector<1x8x256xf32>
    %384 = vector.shape_cast %383 : vector<1x8x256xf32> to vector<8x256xf32>
    %385 = arith.addf %382, %384 : vector<8x256xf32>
    %c2_186 = arith.constant 2 : index
    %c0_187 = arith.constant 0 : index
    %c0_188 = arith.constant 0 : index
    %386 = vector.load %arg11[%c2_186, %c0_187, %c0_188] : memref<8x8x256xf32, #tpu.memory_space<vmem>>, vector<1x8x256xf32>
    %387 = vector.shape_cast %386 : vector<1x8x256xf32> to vector<8x256xf32>
    %388 = vector.shape_cast %385 : vector<8x256xf32> to vector<1x8x256xf32>
    tpu.vector_store %arg11[%c2_186, %c0_187, %c0_188], %388 {strides = array<i32>} : memref<8x8x256xf32, #tpu.memory_space<vmem>>, vector<1x8x256xf32>,
    %389 = vector.extract_strided_slice %363 {offsets = [3, 0, 0], sizes = [1, 8, 256], strides = [1, 1, 1]} : vector<8x8x256xf32> to vector<1x8x256xf32>
    %390 = vector.shape_cast %389 : vector<1x8x256xf32> to vector<8x256xf32>
    %391 = vector.extract_strided_slice %364 {offsets = [4, 0, 0], sizes = [1, 8, 256], strides = [1, 1, 1]} : vector<8x8x256xf32> to vector<1x8x256xf32>
    %392 = vector.shape_cast %391 : vector<1x8x256xf32> to vector<8x256xf32>
    %393 = arith.addf %390, %392 : vector<8x256xf32>
    %c3_189 = arith.constant 3 : index
    %c0_190 = arith.constant 0 : index
    %c0_191 = arith.constant 0 : index
    %394 = vector.load %arg11[%c3_189, %c0_190, %c0_191] : memref<8x8x256xf32, #tpu.memory_space<vmem>>, vector<1x8x256xf32>
    %395 = vector.shape_cast %394 : vector<1x8x256xf32> to vector<8x256xf32>
    %396 = vector.shape_cast %393 : vector<8x256xf32> to vector<1x8x256xf32>
    tpu.vector_store %arg11[%c3_189, %c0_190, %c0_191], %396 {strides = array<i32>} : memref<8x8x256xf32, #tpu.memory_space<vmem>>, vector<1x8x256xf32>,
    %397 = vector.extract_strided_slice %363 {offsets = [4, 0, 0], sizes = [1, 8, 256], strides = [1, 1, 1]} : vector<8x8x256xf32> to vector<1x8x256xf32>
    %398 = vector.shape_cast %397 : vector<1x8x256xf32> to vector<8x256xf32>
    %399 = vector.extract_strided_slice %364 {offsets = [3, 0, 0], sizes = [1, 8, 256], strides = [1, 1, 1]} : vector<8x8x256xf32> to vector<1x8x256xf32>
    %400 = vector.shape_cast %399 : vector<1x8x256xf32> to vector<8x256xf32>
    %401 = arith.addf %398, %400 : vector<8x256xf32>
    %c4_192 = arith.constant 4 : index
    %c0_193 = arith.constant 0 : index
    %c0_194 = arith.constant 0 : index
    %402 = vector.load %arg11[%c4_192, %c0_193, %c0_194] : memref<8x8x256xf32, #tpu.memory_space<vmem>>, vector<1x8x256xf32>
    %403 = vector.shape_cast %402 : vector<1x8x256xf32> to vector<8x256xf32>
    %404 = vector.shape_cast %401 : vector<8x256xf32> to vector<1x8x256xf32>
    tpu.vector_store %arg11[%c4_192, %c0_193, %c0_194], %404 {strides = array<i32>} : memref<8x8x256xf32, #tpu.memory_space<vmem>>, vector<1x8x256xf32>,
    %405 = vector.extract_strided_slice %363 {offsets = [5, 0, 0], sizes = [1, 8, 256], strides = [1, 1, 1]} : vector<8x8x256xf32> to vector<1x8x256xf32>
    %406 = vector.shape_cast %405 : vector<1x8x256xf32> to vector<8x256xf32>
    %407 = vector.extract_strided_slice %364 {offsets = [2, 0, 0], sizes = [1, 8, 256], strides = [1, 1, 1]} : vector<8x8x256xf32> to vector<1x8x256xf32>
    %408 = vector.shape_cast %407 : vector<1x8x256xf32> to vector<8x256xf32>
    %409 = arith.addf %406, %408 : vector<8x256xf32>
    %c5_195 = arith.constant 5 : index
    %c0_196 = arith.constant 0 : index
    %c0_197 = arith.constant 0 : index
    %410 = vector.load %arg11[%c5_195, %c0_196, %c0_197] : memref<8x8x256xf32, #tpu.memory_space<vmem>>, vector<1x8x256xf32>
    %411 = vector.shape_cast %410 : vector<1x8x256xf32> to vector<8x256xf32>
    %412 = vector.shape_cast %409 : vector<8x256xf32> to vector<1x8x256xf32>
    tpu.vector_store %arg11[%c5_195, %c0_196, %c0_197], %412 {strides = array<i32>} : memref<8x8x256xf32, #tpu.memory_space<vmem>>, vector<1x8x256xf32>,
    %413 = vector.extract_strided_slice %363 {offsets = [6, 0, 0], sizes = [1, 8, 256], strides = [1, 1, 1]} : vector<8x8x256xf32> to vector<1x8x256xf32>
    %414 = vector.shape_cast %413 : vector<1x8x256xf32> to vector<8x256xf32>
    %415 = vector.extract_strided_slice %364 {offsets = [1, 0, 0], sizes = [1, 8, 256], strides = [1, 1, 1]} : vector<8x8x256xf32> to vector<1x8x256xf32>
    %416 = vector.shape_cast %415 : vector<1x8x256xf32> to vector<8x256xf32>
    %417 = arith.addf %414, %416 : vector<8x256xf32>
    %c6_198 = arith.constant 6 : index
    %c0_199 = arith.constant 0 : index
    %c0_200 = arith.constant 0 : index
    %418 = vector.load %arg11[%c6_198, %c0_199, %c0_200] : memref<8x8x256xf32, #tpu.memory_space<vmem>>, vector<1x8x256xf32>
    %419 = vector.shape_cast %418 : vector<1x8x256xf32> to vector<8x256xf32>
    %420 = vector.shape_cast %417 : vector<8x256xf32> to vector<1x8x256xf32>
    tpu.vector_store %arg11[%c6_198, %c0_199, %c0_200], %420 {strides = array<i32>} : memref<8x8x256xf32, #tpu.memory_space<vmem>>, vector<1x8x256xf32>,
    %421 = vector.extract_strided_slice %363 {offsets = [7, 0, 0], sizes = [1, 8, 256], strides = [1, 1, 1]} : vector<8x8x256xf32> to vector<1x8x256xf32>
    %422 = vector.shape_cast %421 : vector<1x8x256xf32> to vector<8x256xf32>
    %423 = vector.extract_strided_slice %364 {offsets = [0, 0, 0], sizes = [1, 8, 256], strides = [1, 1, 1]} : vector<8x8x256xf32> to vector<1x8x256xf32>
    %424 = vector.shape_cast %423 : vector<1x8x256xf32> to vector<8x256xf32>
    %425 = arith.addf %422, %424 : vector<8x256xf32>
    %c7_201 = arith.constant 7 : index
    %c0_202 = arith.constant 0 : index
    %c0_203 = arith.constant 0 : index
    %426 = vector.load %arg11[%c7_201, %c0_202, %c0_203] : memref<8x8x256xf32, #tpu.memory_space<vmem>>, vector<1x8x256xf32>
    %427 = vector.shape_cast %426 : vector<1x8x256xf32> to vector<8x256xf32>
    %428 = vector.shape_cast %425 : vector<8x256xf32> to vector<1x8x256xf32>
    tpu.vector_store %arg11[%c7_201, %c0_202, %c0_203], %428 {strides = array<i32>} : memref<8x8x256xf32, #tpu.memory_space<vmem>>, vector<1x8x256xf32>,
    %c0_204 = arith.constant 0 : index
    %c0_205 = arith.constant 0 : index
    %429 = vector.load %arg8[%c0_204, %c0_205] : memref<128x256xbf16, #tpu.memory_space<vmem>>, vector<128x256xbf16>
    %cst_206 = arith.constant 0.000000e+00 : f32
    %430 = vector.broadcast %cst_206 : f32 to vector<8x128xf32>
    %c0_207 = arith.constant 0 : index
    %c0_208 = arith.constant 0 : index
    %431 = vector.load %arg13[%c0_207, %c0_208] : memref<8x128xf32, #tpu.memory_space<vmem>>, vector<8x128xf32>
    tpu.vector_store %arg13[%c0_207, %c0_208], %430 {strides = array<i32>} : memref<8x128xf32, #tpu.memory_space<vmem>>, vector<8x128xf32>,
    %cst_209 = arith.constant 0.000000e+00 : f32
    %432 = vector.broadcast %cst_209 : f32 to vector<8x128xf32>
    %c0_210 = arith.constant 0 : index
    %c0_211 = arith.constant 0 : index
    %433 = vector.load %arg14[%c0_210, %c0_211] : memref<8x128xf32, #tpu.memory_space<vmem>>, vector<8x128xf32>
    tpu.vector_store %arg14[%c0_210, %c0_211], %432 {strides = array<i32>} : memref<8x128xf32, #tpu.memory_space<vmem>>, vector<8x128xf32>,
    %c0_i32_212 = arith.constant 0 : i32
    %434 = arith.index_cast %c0_i32_212 : i32 to index
    %c0_213 = arith.constant 0 : index
    %c0_214 = arith.constant 0 : index
    %435 = vector.load %arg11[%434, %c0_213, %c0_214] : memref<8x8x256xf32, #tpu.memory_space<vmem>>, vector<1x8x256xf32>
    %436 = vector.shape_cast %435 : vector<1x8x256xf32> to vector<8x256xf32>
    %c0_215 = arith.constant 0 : index
    %c0_216 = arith.constant 0 : index
    %437 = vector.load %arg13[%c0_215, %c0_216] : memref<8x128xf32, #tpu.memory_space<vmem>>, vector<8x128xf32>
    %438 = arith.truncf %437 : vector<8x128xf32> to vector<8x128xbf16>
    %cst_217 = arith.constant dense<0.000000e+00> : vector<8x256xf32>
    %439 = tpu.matmul %438, %429, %cst_217 {dimension_numbers = #tpu.dot_dimension_numbers<[1], [0], [0], [1], [0, 0, 1, 1], [], []>} : vector<8x128xbf16>, vector<128x256xbf16>, vector<8x256xf32> -> vector<8x256xf32>
    %440 = arith.addf %436, %439 : vector<8x256xf32>
    %441 = vector.extract_strided_slice %440 {offsets = [0, 0], sizes = [8, 128], strides = [1, 1]} : vector<8x256xf32> to vector<8x128xf32>
    %442 = vector.extract_strided_slice %440 {offsets = [0, 128], sizes = [8, 128], strides = [1, 1]} : vector<8x256xf32> to vector<8x128xf32>
    %443 = arith.negf %441 : vector<8x128xf32>
    %444 = math.exp %443 : vector<8x128xf32>
    %cst_218 = arith.constant 1.000000e+00 : f32
    %445 = vector.broadcast %cst_218 : f32 to vector<8x128xf32>
    %446 = arith.addf %445, %444 : vector<8x128xf32>
    %447 = arith.divf %445, %446 : vector<8x128xf32>
    %448 = math.tanh %442 : vector<8x128xf32>
    %449 = arith.negf %442 : vector<8x128xf32>
    %450 = math.exp %449 : vector<8x128xf32>
    %cst_219 = arith.constant 1.000000e+00 : f32
    %451 = vector.broadcast %cst_219 : f32 to vector<8x128xf32>
    %452 = arith.addf %451, %450 : vector<8x128xf32>
    %453 = arith.divf %451, %452 : vector<8x128xf32>
    %c64_i32_220 = arith.constant 64 : i32
    %454 = tpu.dynamic_rotate %447 by %c64_i32_220 dim 1 : vector<8x128xf32>, i32 -> vector<8x128xf32>
    %c64_i32_221 = arith.constant 64 : i32
    %455 = tpu.dynamic_rotate %453 by %c64_i32_221 dim 1 : vector<8x128xf32>, i32 -> vector<8x128xf32>
    %c0_222 = arith.constant 0 : index
    %c0_223 = arith.constant 0 : index
    %456 = vector.load %arg14[%c0_222, %c0_223] : memref<8x128xf32, #tpu.memory_space<vmem>>, vector<8x128xf32>
    %457 = arith.mulf %454, %456 : vector<8x128xf32>
    %458 = arith.mulf %447, %448 : vector<8x128xf32>
    %459 = arith.addf %457, %458 : vector<8x128xf32>
    %460 = math.tanh %459 : vector<8x128xf32>
    %461 = arith.mulf %455, %460 : vector<8x128xf32>
    %c0_224 = arith.constant 0 : index
    %c0_225 = arith.constant 0 : index
    %462 = vector.load %arg13[%c0_224, %c0_225] : memref<8x128xf32, #tpu.memory_space<vmem>>, vector<8x128xf32>
    tpu.vector_store %arg13[%c0_224, %c0_225], %461 {strides = array<i32>} : memref<8x128xf32, #tpu.memory_space<vmem>>, vector<8x128xf32>,
    %c0_226 = arith.constant 0 : index
    %c0_227 = arith.constant 0 : index
    %463 = vector.load %arg14[%c0_226, %c0_227] : memref<8x128xf32, #tpu.memory_space<vmem>>, vector<8x128xf32>
    tpu.vector_store %arg14[%c0_226, %c0_227], %459 {strides = array<i32>} : memref<8x128xf32, #tpu.memory_space<vmem>>, vector<8x128xf32>,
    %464 = arith.index_cast %c0_i32_212 : i32 to index
    %c0_228 = arith.constant 0 : index
    %c0_229 = arith.constant 0 : index
    %465 = vector.load %arg12[%464, %c0_228, %c0_229] : memref<8x8x128xf32, #tpu.memory_space<vmem>>, vector<1x8x128xf32>
    %466 = vector.shape_cast %465 : vector<1x8x128xf32> to vector<8x128xf32>
    %467 = vector.shape_cast %461 : vector<8x128xf32> to vector<1x8x128xf32>
    tpu.vector_store %arg12[%464, %c0_228, %c0_229], %467 {strides = array<i32>} : memref<8x8x128xf32, #tpu.memory_space<vmem>>, vector<1x8x128xf32>,
    %c1_i32_230 = arith.constant 1 : i32
    %468 = arith.index_cast %c1_i32_230 : i32 to index
    %c0_231 = arith.constant 0 : index
    %c0_232 = arith.constant 0 : index
    %469 = vector.load %arg11[%468, %c0_231, %c0_232] : memref<8x8x256xf32, #tpu.memory_space<vmem>>, vector<1x8x256xf32>
    %470 = vector.shape_cast %469 : vector<1x8x256xf32> to vector<8x256xf32>
    %c0_233 = arith.constant 0 : index
    %c0_234 = arith.constant 0 : index
    %471 = vector.load %arg13[%c0_233, %c0_234] : memref<8x128xf32, #tpu.memory_space<vmem>>, vector<8x128xf32>
    %472 = arith.truncf %471 : vector<8x128xf32> to vector<8x128xbf16>
    %cst_235 = arith.constant dense<0.000000e+00> : vector<8x256xf32>
    %473 = tpu.matmul %472, %429, %cst_235 {dimension_numbers = #tpu.dot_dimension_numbers<[1], [0], [0], [1], [0, 0, 1, 1], [], []>} : vector<8x128xbf16>, vector<128x256xbf16>, vector<8x256xf32> -> vector<8x256xf32>
    %474 = arith.addf %470, %473 : vector<8x256xf32>
    %475 = vector.extract_strided_slice %474 {offsets = [0, 0], sizes = [8, 128], strides = [1, 1]} : vector<8x256xf32> to vector<8x128xf32>
    %476 = vector.extract_strided_slice %474 {offsets = [0, 128], sizes = [8, 128], strides = [1, 1]} : vector<8x256xf32> to vector<8x128xf32>
    %477 = arith.negf %475 : vector<8x128xf32>
    %478 = math.exp %477 : vector<8x128xf32>
    %cst_236 = arith.constant 1.000000e+00 : f32
    %479 = vector.broadcast %cst_236 : f32 to vector<8x128xf32>
    %480 = arith.addf %479, %478 : vector<8x128xf32>
    %481 = arith.divf %479, %480 : vector<8x128xf32>
    %482 = math.tanh %476 : vector<8x128xf32>
    %483 = arith.negf %476 : vector<8x128xf32>
    %484 = math.exp %483 : vector<8x128xf32>
    %cst_237 = arith.constant 1.000000e+00 : f32
    %485 = vector.broadcast %cst_237 : f32 to vector<8x128xf32>
    %486 = arith.addf %485, %484 : vector<8x128xf32>
    %487 = arith.divf %485, %486 : vector<8x128xf32>
    %c64_i32_238 = arith.constant 64 : i32
    %488 = tpu.dynamic_rotate %481 by %c64_i32_238 dim 1 : vector<8x128xf32>, i32 -> vector<8x128xf32>
    %c64_i32_239 = arith.constant 64 : i32
    %489 = tpu.dynamic_rotate %487 by %c64_i32_239 dim 1 : vector<8x128xf32>, i32 -> vector<8x128xf32>
    %c0_240 = arith.constant 0 : index
    %c0_241 = arith.constant 0 : index
    %490 = vector.load %arg14[%c0_240, %c0_241] : memref<8x128xf32, #tpu.memory_space<vmem>>, vector<8x128xf32>
    %491 = arith.mulf %488, %490 : vector<8x128xf32>
    %492 = arith.mulf %481, %482 : vector<8x128xf32>
    %493 = arith.addf %491, %492 : vector<8x128xf32>
    %494 = math.tanh %493 : vector<8x128xf32>
    %495 = arith.mulf %489, %494 : vector<8x128xf32>
    %c0_242 = arith.constant 0 : index
    %c0_243 = arith.constant 0 : index
    %496 = vector.load %arg13[%c0_242, %c0_243] : memref<8x128xf32, #tpu.memory_space<vmem>>, vector<8x128xf32>
    tpu.vector_store %arg13[%c0_242, %c0_243], %495 {strides = array<i32>} : memref<8x128xf32, #tpu.memory_space<vmem>>, vector<8x128xf32>,
    %c0_244 = arith.constant 0 : index
    %c0_245 = arith.constant 0 : index
    %497 = vector.load %arg14[%c0_244, %c0_245] : memref<8x128xf32, #tpu.memory_space<vmem>>, vector<8x128xf32>
    tpu.vector_store %arg14[%c0_244, %c0_245], %493 {strides = array<i32>} : memref<8x128xf32, #tpu.memory_space<vmem>>, vector<8x128xf32>,
    %498 = arith.index_cast %c1_i32_230 : i32 to index
    %c0_246 = arith.constant 0 : index
    %c0_247 = arith.constant 0 : index
    %499 = vector.load %arg12[%498, %c0_246, %c0_247] : memref<8x8x128xf32, #tpu.memory_space<vmem>>, vector<1x8x128xf32>
    %500 = vector.shape_cast %499 : vector<1x8x128xf32> to vector<8x128xf32>
    %501 = vector.shape_cast %495 : vector<8x128xf32> to vector<1x8x128xf32>
    tpu.vector_store %arg12[%498, %c0_246, %c0_247], %501 {strides = array<i32>} : memref<8x8x128xf32, #tpu.memory_space<vmem>>, vector<1x8x128xf32>,
    %c2_i32_248 = arith.constant 2 : i32
    %502 = arith.index_cast %c2_i32_248 : i32 to index
    %c0_249 = arith.constant 0 : index
    %c0_250 = arith.constant 0 : index
    %503 = vector.load %arg11[%502, %c0_249, %c0_250] : memref<8x8x256xf32, #tpu.memory_space<vmem>>, vector<1x8x256xf32>
    %504 = vector.shape_cast %503 : vector<1x8x256xf32> to vector<8x256xf32>
    %c0_251 = arith.constant 0 : index
    %c0_252 = arith.constant 0 : index
    %505 = vector.load %arg13[%c0_251, %c0_252] : memref<8x128xf32, #tpu.memory_space<vmem>>, vector<8x128xf32>
    %506 = arith.truncf %505 : vector<8x128xf32> to vector<8x128xbf16>
    %cst_253 = arith.constant dense<0.000000e+00> : vector<8x256xf32>
    %507 = tpu.matmul %506, %429, %cst_253 {dimension_numbers = #tpu.dot_dimension_numbers<[1], [0], [0], [1], [0, 0, 1, 1], [], []>} : vector<8x128xbf16>, vector<128x256xbf16>, vector<8x256xf32> -> vector<8x256xf32>
    %508 = arith.addf %504, %507 : vector<8x256xf32>
    %509 = vector.extract_strided_slice %508 {offsets = [0, 0], sizes = [8, 128], strides = [1, 1]} : vector<8x256xf32> to vector<8x128xf32>
    %510 = vector.extract_strided_slice %508 {offsets = [0, 128], sizes = [8, 128], strides = [1, 1]} : vector<8x256xf32> to vector<8x128xf32>
    %511 = arith.negf %509 : vector<8x128xf32>
    %512 = math.exp %511 : vector<8x128xf32>
    %cst_254 = arith.constant 1.000000e+00 : f32
    %513 = vector.broadcast %cst_254 : f32 to vector<8x128xf32>
    %514 = arith.addf %513, %512 : vector<8x128xf32>
    %515 = arith.divf %513, %514 : vector<8x128xf32>
    %516 = math.tanh %510 : vector<8x128xf32>
    %517 = arith.negf %510 : vector<8x128xf32>
    %518 = math.exp %517 : vector<8x128xf32>
    %cst_255 = arith.constant 1.000000e+00 : f32
    %519 = vector.broadcast %cst_255 : f32 to vector<8x128xf32>
    %520 = arith.addf %519, %518 : vector<8x128xf32>
    %521 = arith.divf %519, %520 : vector<8x128xf32>
    %c64_i32_256 = arith.constant 64 : i32
    %522 = tpu.dynamic_rotate %515 by %c64_i32_256 dim 1 : vector<8x128xf32>, i32 -> vector<8x128xf32>
    %c64_i32_257 = arith.constant 64 : i32
    %523 = tpu.dynamic_rotate %521 by %c64_i32_257 dim 1 : vector<8x128xf32>, i32 -> vector<8x128xf32>
    %c0_258 = arith.constant 0 : index
    %c0_259 = arith.constant 0 : index
    %524 = vector.load %arg14[%c0_258, %c0_259] : memref<8x128xf32, #tpu.memory_space<vmem>>, vector<8x128xf32>
    %525 = arith.mulf %522, %524 : vector<8x128xf32>
    %526 = arith.mulf %515, %516 : vector<8x128xf32>
    %527 = arith.addf %525, %526 : vector<8x128xf32>
    %528 = math.tanh %527 : vector<8x128xf32>
    %529 = arith.mulf %523, %528 : vector<8x128xf32>
    %c0_260 = arith.constant 0 : index
    %c0_261 = arith.constant 0 : index
    %530 = vector.load %arg13[%c0_260, %c0_261] : memref<8x128xf32, #tpu.memory_space<vmem>>, vector<8x128xf32>
    tpu.vector_store %arg13[%c0_260, %c0_261], %529 {strides = array<i32>} : memref<8x128xf32, #tpu.memory_space<vmem>>, vector<8x128xf32>,
    %c0_262 = arith.constant 0 : index
    %c0_263 = arith.constant 0 : index
    %531 = vector.load %arg14[%c0_262, %c0_263] : memref<8x128xf32, #tpu.memory_space<vmem>>, vector<8x128xf32>
    tpu.vector_store %arg14[%c0_262, %c0_263], %527 {strides = array<i32>} : memref<8x128xf32, #tpu.memory_space<vmem>>, vector<8x128xf32>,
    %532 = arith.index_cast %c2_i32_248 : i32 to index
    %c0_264 = arith.constant 0 : index
    %c0_265 = arith.constant 0 : index
    %533 = vector.load %arg12[%532, %c0_264, %c0_265] : memref<8x8x128xf32, #tpu.memory_space<vmem>>, vector<1x8x128xf32>
    %534 = vector.shape_cast %533 : vector<1x8x128xf32> to vector<8x128xf32>
    %535 = vector.shape_cast %529 : vector<8x128xf32> to vector<1x8x128xf32>
    tpu.vector_store %arg12[%532, %c0_264, %c0_265], %535 {strides = array<i32>} : memref<8x8x128xf32, #tpu.memory_space<vmem>>, vector<1x8x128xf32>,
    %c3_i32_266 = arith.constant 3 : i32
    %536 = arith.index_cast %c3_i32_266 : i32 to index
    %c0_267 = arith.constant 0 : index
    %c0_268 = arith.constant 0 : index
    %537 = vector.load %arg11[%536, %c0_267, %c0_268] : memref<8x8x256xf32, #tpu.memory_space<vmem>>, vector<1x8x256xf32>
    %538 = vector.shape_cast %537 : vector<1x8x256xf32> to vector<8x256xf32>
    %c0_269 = arith.constant 0 : index
    %c0_270 = arith.constant 0 : index
    %539 = vector.load %arg13[%c0_269, %c0_270] : memref<8x128xf32, #tpu.memory_space<vmem>>, vector<8x128xf32>
    %540 = arith.truncf %539 : vector<8x128xf32> to vector<8x128xbf16>
    %cst_271 = arith.constant dense<0.000000e+00> : vector<8x256xf32>
    %541 = tpu.matmul %540, %429, %cst_271 {dimension_numbers = #tpu.dot_dimension_numbers<[1], [0], [0], [1], [0, 0, 1, 1], [], []>} : vector<8x128xbf16>, vector<128x256xbf16>, vector<8x256xf32> -> vector<8x256xf32>
    %542 = arith.addf %538, %541 : vector<8x256xf32>
    %543 = vector.extract_strided_slice %542 {offsets = [0, 0], sizes = [8, 128], strides = [1, 1]} : vector<8x256xf32> to vector<8x128xf32>
    %544 = vector.extract_strided_slice %542 {offsets = [0, 128], sizes = [8, 128], strides = [1, 1]} : vector<8x256xf32> to vector<8x128xf32>
    %545 = arith.negf %543 : vector<8x128xf32>
    %546 = math.exp %545 : vector<8x128xf32>
    %cst_272 = arith.constant 1.000000e+00 : f32
    %547 = vector.broadcast %cst_272 : f32 to vector<8x128xf32>
    %548 = arith.addf %547, %546 : vector<8x128xf32>
    %549 = arith.divf %547, %548 : vector<8x128xf32>
    %550 = math.tanh %544 : vector<8x128xf32>
    %551 = arith.negf %544 : vector<8x128xf32>
    %552 = math.exp %551 : vector<8x128xf32>
    %cst_273 = arith.constant 1.000000e+00 : f32
    %553 = vector.broadcast %cst_273 : f32 to vector<8x128xf32>
    %554 = arith.addf %553, %552 : vector<8x128xf32>
    %555 = arith.divf %553, %554 : vector<8x128xf32>
    %c64_i32_274 = arith.constant 64 : i32
    %556 = tpu.dynamic_rotate %549 by %c64_i32_274 dim 1 : vector<8x128xf32>, i32 -> vector<8x128xf32>
    %c64_i32_275 = arith.constant 64 : i32
    %557 = tpu.dynamic_rotate %555 by %c64_i32_275 dim 1 : vector<8x128xf32>, i32 -> vector<8x128xf32>
    %c0_276 = arith.constant 0 : index
    %c0_277 = arith.constant 0 : index
    %558 = vector.load %arg14[%c0_276, %c0_277] : memref<8x128xf32, #tpu.memory_space<vmem>>, vector<8x128xf32>
    %559 = arith.mulf %556, %558 : vector<8x128xf32>
    %560 = arith.mulf %549, %550 : vector<8x128xf32>
    %561 = arith.addf %559, %560 : vector<8x128xf32>
    %562 = math.tanh %561 : vector<8x128xf32>
    %563 = arith.mulf %557, %562 : vector<8x128xf32>
    %c0_278 = arith.constant 0 : index
    %c0_279 = arith.constant 0 : index
    %564 = vector.load %arg13[%c0_278, %c0_279] : memref<8x128xf32, #tpu.memory_space<vmem>>, vector<8x128xf32>
    tpu.vector_store %arg13[%c0_278, %c0_279], %563 {strides = array<i32>} : memref<8x128xf32, #tpu.memory_space<vmem>>, vector<8x128xf32>,
    %c0_280 = arith.constant 0 : index
    %c0_281 = arith.constant 0 : index
    %565 = vector.load %arg14[%c0_280, %c0_281] : memref<8x128xf32, #tpu.memory_space<vmem>>, vector<8x128xf32>
    tpu.vector_store %arg14[%c0_280, %c0_281], %561 {strides = array<i32>} : memref<8x128xf32, #tpu.memory_space<vmem>>, vector<8x128xf32>,
    %566 = arith.index_cast %c3_i32_266 : i32 to index
    %c0_282 = arith.constant 0 : index
    %c0_283 = arith.constant 0 : index
    %567 = vector.load %arg12[%566, %c0_282, %c0_283] : memref<8x8x128xf32, #tpu.memory_space<vmem>>, vector<1x8x128xf32>
    %568 = vector.shape_cast %567 : vector<1x8x128xf32> to vector<8x128xf32>
    %569 = vector.shape_cast %563 : vector<8x128xf32> to vector<1x8x128xf32>
    tpu.vector_store %arg12[%566, %c0_282, %c0_283], %569 {strides = array<i32>} : memref<8x8x128xf32, #tpu.memory_space<vmem>>, vector<1x8x128xf32>,
    %c4_i32_284 = arith.constant 4 : i32
    %570 = arith.index_cast %c4_i32_284 : i32 to index
    %c0_285 = arith.constant 0 : index
    %c0_286 = arith.constant 0 : index
    %571 = vector.load %arg11[%570, %c0_285, %c0_286] : memref<8x8x256xf32, #tpu.memory_space<vmem>>, vector<1x8x256xf32>
    %572 = vector.shape_cast %571 : vector<1x8x256xf32> to vector<8x256xf32>
    %c0_287 = arith.constant 0 : index
    %c0_288 = arith.constant 0 : index
    %573 = vector.load %arg13[%c0_287, %c0_288] : memref<8x128xf32, #tpu.memory_space<vmem>>, vector<8x128xf32>
    %574 = arith.truncf %573 : vector<8x128xf32> to vector<8x128xbf16>
    %cst_289 = arith.constant dense<0.000000e+00> : vector<8x256xf32>
    %575 = tpu.matmul %574, %429, %cst_289 {dimension_numbers = #tpu.dot_dimension_numbers<[1], [0], [0], [1], [0, 0, 1, 1], [], []>} : vector<8x128xbf16>, vector<128x256xbf16>, vector<8x256xf32> -> vector<8x256xf32>
    %576 = arith.addf %572, %575 : vector<8x256xf32>
    %577 = vector.extract_strided_slice %576 {offsets = [0, 0], sizes = [8, 128], strides = [1, 1]} : vector<8x256xf32> to vector<8x128xf32>
    %578 = vector.extract_strided_slice %576 {offsets = [0, 128], sizes = [8, 128], strides = [1, 1]} : vector<8x256xf32> to vector<8x128xf32>
    %579 = arith.negf %577 : vector<8x128xf32>
    %580 = math.exp %579 : vector<8x128xf32>
    %cst_290 = arith.constant 1.000000e+00 : f32
    %581 = vector.broadcast %cst_290 : f32 to vector<8x128xf32>
    %582 = arith.addf %581, %580 : vector<8x128xf32>
    %583 = arith.divf %581, %582 : vector<8x128xf32>
    %584 = math.tanh %578 : vector<8x128xf32>
    %585 = arith.negf %578 : vector<8x128xf32>
    %586 = math.exp %585 : vector<8x128xf32>
    %cst_291 = arith.constant 1.000000e+00 : f32
    %587 = vector.broadcast %cst_291 : f32 to vector<8x128xf32>
    %588 = arith.addf %587, %586 : vector<8x128xf32>
    %589 = arith.divf %587, %588 : vector<8x128xf32>
    %c64_i32_292 = arith.constant 64 : i32
    %590 = tpu.dynamic_rotate %583 by %c64_i32_292 dim 1 : vector<8x128xf32>, i32 -> vector<8x128xf32>
    %c64_i32_293 = arith.constant 64 : i32
    %591 = tpu.dynamic_rotate %589 by %c64_i32_293 dim 1 : vector<8x128xf32>, i32 -> vector<8x128xf32>
    %c0_294 = arith.constant 0 : index
    %c0_295 = arith.constant 0 : index
    %592 = vector.load %arg14[%c0_294, %c0_295] : memref<8x128xf32, #tpu.memory_space<vmem>>, vector<8x128xf32>
    %593 = arith.mulf %590, %592 : vector<8x128xf32>
    %594 = arith.mulf %583, %584 : vector<8x128xf32>
    %595 = arith.addf %593, %594 : vector<8x128xf32>
    %596 = math.tanh %595 : vector<8x128xf32>
    %597 = arith.mulf %591, %596 : vector<8x128xf32>
    %c0_296 = arith.constant 0 : index
    %c0_297 = arith.constant 0 : index
    %598 = vector.load %arg13[%c0_296, %c0_297] : memref<8x128xf32, #tpu.memory_space<vmem>>, vector<8x128xf32>
    tpu.vector_store %arg13[%c0_296, %c0_297], %597 {strides = array<i32>} : memref<8x128xf32, #tpu.memory_space<vmem>>, vector<8x128xf32>,
    %c0_298 = arith.constant 0 : index
    %c0_299 = arith.constant 0 : index
    %599 = vector.load %arg14[%c0_298, %c0_299] : memref<8x128xf32, #tpu.memory_space<vmem>>, vector<8x128xf32>
    tpu.vector_store %arg14[%c0_298, %c0_299], %595 {strides = array<i32>} : memref<8x128xf32, #tpu.memory_space<vmem>>, vector<8x128xf32>,
    %600 = arith.index_cast %c4_i32_284 : i32 to index
    %c0_300 = arith.constant 0 : index
    %c0_301 = arith.constant 0 : index
    %601 = vector.load %arg12[%600, %c0_300, %c0_301] : memref<8x8x128xf32, #tpu.memory_space<vmem>>, vector<1x8x128xf32>
    %602 = vector.shape_cast %601 : vector<1x8x128xf32> to vector<8x128xf32>
    %603 = vector.shape_cast %597 : vector<8x128xf32> to vector<1x8x128xf32>
    tpu.vector_store %arg12[%600, %c0_300, %c0_301], %603 {strides = array<i32>} : memref<8x8x128xf32, #tpu.memory_space<vmem>>, vector<1x8x128xf32>,
    %c5_i32_302 = arith.constant 5 : i32
    %604 = arith.index_cast %c5_i32_302 : i32 to index
    %c0_303 = arith.constant 0 : index
    %c0_304 = arith.constant 0 : index
    %605 = vector.load %arg11[%604, %c0_303, %c0_304] : memref<8x8x256xf32, #tpu.memory_space<vmem>>, vector<1x8x256xf32>
    %606 = vector.shape_cast %605 : vector<1x8x256xf32> to vector<8x256xf32>
    %c0_305 = arith.constant 0 : index
    %c0_306 = arith.constant 0 : index
    %607 = vector.load %arg13[%c0_305, %c0_306] : memref<8x128xf32, #tpu.memory_space<vmem>>, vector<8x128xf32>
    %608 = arith.truncf %607 : vector<8x128xf32> to vector<8x128xbf16>
    %cst_307 = arith.constant dense<0.000000e+00> : vector<8x256xf32>
    %609 = tpu.matmul %608, %429, %cst_307 {dimension_numbers = #tpu.dot_dimension_numbers<[1], [0], [0], [1], [0, 0, 1, 1], [], []>} : vector<8x128xbf16>, vector<128x256xbf16>, vector<8x256xf32> -> vector<8x256xf32>
    %610 = arith.addf %606, %609 : vector<8x256xf32>
    %611 = vector.extract_strided_slice %610 {offsets = [0, 0], sizes = [8, 128], strides = [1, 1]} : vector<8x256xf32> to vector<8x128xf32>
    %612 = vector.extract_strided_slice %610 {offsets = [0, 128], sizes = [8, 128], strides = [1, 1]} : vector<8x256xf32> to vector<8x128xf32>
    %613 = arith.negf %611 : vector<8x128xf32>
    %614 = math.exp %613 : vector<8x128xf32>
    %cst_308 = arith.constant 1.000000e+00 : f32
    %615 = vector.broadcast %cst_308 : f32 to vector<8x128xf32>
    %616 = arith.addf %615, %614 : vector<8x128xf32>
    %617 = arith.divf %615, %616 : vector<8x128xf32>
    %618 = math.tanh %612 : vector<8x128xf32>
    %619 = arith.negf %612 : vector<8x128xf32>
    %620 = math.exp %619 : vector<8x128xf32>
    %cst_309 = arith.constant 1.000000e+00 : f32
    %621 = vector.broadcast %cst_309 : f32 to vector<8x128xf32>
    %622 = arith.addf %621, %620 : vector<8x128xf32>
    %623 = arith.divf %621, %622 : vector<8x128xf32>
    %c64_i32_310 = arith.constant 64 : i32
    %624 = tpu.dynamic_rotate %617 by %c64_i32_310 dim 1 : vector<8x128xf32>, i32 -> vector<8x128xf32>
    %c64_i32_311 = arith.constant 64 : i32
    %625 = tpu.dynamic_rotate %623 by %c64_i32_311 dim 1 : vector<8x128xf32>, i32 -> vector<8x128xf32>
    %c0_312 = arith.constant 0 : index
    %c0_313 = arith.constant 0 : index
    %626 = vector.load %arg14[%c0_312, %c0_313] : memref<8x128xf32, #tpu.memory_space<vmem>>, vector<8x128xf32>
    %627 = arith.mulf %624, %626 : vector<8x128xf32>
    %628 = arith.mulf %617, %618 : vector<8x128xf32>
    %629 = arith.addf %627, %628 : vector<8x128xf32>
    %630 = math.tanh %629 : vector<8x128xf32>
    %631 = arith.mulf %625, %630 : vector<8x128xf32>
    %c0_314 = arith.constant 0 : index
    %c0_315 = arith.constant 0 : index
    %632 = vector.load %arg13[%c0_314, %c0_315] : memref<8x128xf32, #tpu.memory_space<vmem>>, vector<8x128xf32>
    tpu.vector_store %arg13[%c0_314, %c0_315], %631 {strides = array<i32>} : memref<8x128xf32, #tpu.memory_space<vmem>>, vector<8x128xf32>,
    %c0_316 = arith.constant 0 : index
    %c0_317 = arith.constant 0 : index
    %633 = vector.load %arg14[%c0_316, %c0_317] : memref<8x128xf32, #tpu.memory_space<vmem>>, vector<8x128xf32>
    tpu.vector_store %arg14[%c0_316, %c0_317], %629 {strides = array<i32>} : memref<8x128xf32, #tpu.memory_space<vmem>>, vector<8x128xf32>,
    %634 = arith.index_cast %c5_i32_302 : i32 to index
    %c0_318 = arith.constant 0 : index
    %c0_319 = arith.constant 0 : index
    %635 = vector.load %arg12[%634, %c0_318, %c0_319] : memref<8x8x128xf32, #tpu.memory_space<vmem>>, vector<1x8x128xf32>
    %636 = vector.shape_cast %635 : vector<1x8x128xf32> to vector<8x128xf32>
    %637 = vector.shape_cast %631 : vector<8x128xf32> to vector<1x8x128xf32>
    tpu.vector_store %arg12[%634, %c0_318, %c0_319], %637 {strides = array<i32>} : memref<8x8x128xf32, #tpu.memory_space<vmem>>, vector<1x8x128xf32>,
    %c6_i32_320 = arith.constant 6 : i32
    %638 = arith.index_cast %c6_i32_320 : i32 to index
    %c0_321 = arith.constant 0 : index
    %c0_322 = arith.constant 0 : index
    %639 = vector.load %arg11[%638, %c0_321, %c0_322] : memref<8x8x256xf32, #tpu.memory_space<vmem>>, vector<1x8x256xf32>
    %640 = vector.shape_cast %639 : vector<1x8x256xf32> to vector<8x256xf32>
    %c0_323 = arith.constant 0 : index
    %c0_324 = arith.constant 0 : index
    %641 = vector.load %arg13[%c0_323, %c0_324] : memref<8x128xf32, #tpu.memory_space<vmem>>, vector<8x128xf32>
    %642 = arith.truncf %641 : vector<8x128xf32> to vector<8x128xbf16>
    %cst_325 = arith.constant dense<0.000000e+00> : vector<8x256xf32>
    %643 = tpu.matmul %642, %429, %cst_325 {dimension_numbers = #tpu.dot_dimension_numbers<[1], [0], [0], [1], [0, 0, 1, 1], [], []>} : vector<8x128xbf16>, vector<128x256xbf16>, vector<8x256xf32> -> vector<8x256xf32>
    %644 = arith.addf %640, %643 : vector<8x256xf32>
    %645 = vector.extract_strided_slice %644 {offsets = [0, 0], sizes = [8, 128], strides = [1, 1]} : vector<8x256xf32> to vector<8x128xf32>
    %646 = vector.extract_strided_slice %644 {offsets = [0, 128], sizes = [8, 128], strides = [1, 1]} : vector<8x256xf32> to vector<8x128xf32>
    %647 = arith.negf %645 : vector<8x128xf32>
    %648 = math.exp %647 : vector<8x128xf32>
    %cst_326 = arith.constant 1.000000e+00 : f32
    %649 = vector.broadcast %cst_326 : f32 to vector<8x128xf32>
    %650 = arith.addf %649, %648 : vector<8x128xf32>
    %651 = arith.divf %649, %650 : vector<8x128xf32>
    %652 = math.tanh %646 : vector<8x128xf32>
    %653 = arith.negf %646 : vector<8x128xf32>
    %654 = math.exp %653 : vector<8x128xf32>
    %cst_327 = arith.constant 1.000000e+00 : f32
    %655 = vector.broadcast %cst_327 : f32 to vector<8x128xf32>
    %656 = arith.addf %655, %654 : vector<8x128xf32>
    %657 = arith.divf %655, %656 : vector<8x128xf32>
    %c64_i32_328 = arith.constant 64 : i32
    %658 = tpu.dynamic_rotate %651 by %c64_i32_328 dim 1 : vector<8x128xf32>, i32 -> vector<8x128xf32>
    %c64_i32_329 = arith.constant 64 : i32
    %659 = tpu.dynamic_rotate %657 by %c64_i32_329 dim 1 : vector<8x128xf32>, i32 -> vector<8x128xf32>
    %c0_330 = arith.constant 0 : index
    %c0_331 = arith.constant 0 : index
    %660 = vector.load %arg14[%c0_330, %c0_331] : memref<8x128xf32, #tpu.memory_space<vmem>>, vector<8x128xf32>
    %661 = arith.mulf %658, %660 : vector<8x128xf32>
    %662 = arith.mulf %651, %652 : vector<8x128xf32>
    %663 = arith.addf %661, %662 : vector<8x128xf32>
    %664 = math.tanh %663 : vector<8x128xf32>
    %665 = arith.mulf %659, %664 : vector<8x128xf32>
    %c0_332 = arith.constant 0 : index
    %c0_333 = arith.constant 0 : index
    %666 = vector.load %arg13[%c0_332, %c0_333] : memref<8x128xf32, #tpu.memory_space<vmem>>, vector<8x128xf32>
    tpu.vector_store %arg13[%c0_332, %c0_333], %665 {strides = array<i32>} : memref<8x128xf32, #tpu.memory_space<vmem>>, vector<8x128xf32>,
    %c0_334 = arith.constant 0 : index
    %c0_335 = arith.constant 0 : index
    %667 = vector.load %arg14[%c0_334, %c0_335] : memref<8x128xf32, #tpu.memory_space<vmem>>, vector<8x128xf32>
    tpu.vector_store %arg14[%c0_334, %c0_335], %663 {strides = array<i32>} : memref<8x128xf32, #tpu.memory_space<vmem>>, vector<8x128xf32>,
    %668 = arith.index_cast %c6_i32_320 : i32 to index
    %c0_336 = arith.constant 0 : index
    %c0_337 = arith.constant 0 : index
    %669 = vector.load %arg12[%668, %c0_336, %c0_337] : memref<8x8x128xf32, #tpu.memory_space<vmem>>, vector<1x8x128xf32>
    %670 = vector.shape_cast %669 : vector<1x8x128xf32> to vector<8x128xf32>
    %671 = vector.shape_cast %665 : vector<8x128xf32> to vector<1x8x128xf32>
    tpu.vector_store %arg12[%668, %c0_336, %c0_337], %671 {strides = array<i32>} : memref<8x8x128xf32, #tpu.memory_space<vmem>>, vector<1x8x128xf32>,
    %c7_i32_338 = arith.constant 7 : i32
    %672 = arith.index_cast %c7_i32_338 : i32 to index
    %c0_339 = arith.constant 0 : index
    %c0_340 = arith.constant 0 : index
    %673 = vector.load %arg11[%672, %c0_339, %c0_340] : memref<8x8x256xf32, #tpu.memory_space<vmem>>, vector<1x8x256xf32>
    %674 = vector.shape_cast %673 : vector<1x8x256xf32> to vector<8x256xf32>
    %c0_341 = arith.constant 0 : index
    %c0_342 = arith.constant 0 : index
    %675 = vector.load %arg13[%c0_341, %c0_342] : memref<8x128xf32, #tpu.memory_space<vmem>>, vector<8x128xf32>
    %676 = arith.truncf %675 : vector<8x128xf32> to vector<8x128xbf16>
    %cst_343 = arith.constant dense<0.000000e+00> : vector<8x256xf32>
    %677 = tpu.matmul %676, %429, %cst_343 {dimension_numbers = #tpu.dot_dimension_numbers<[1], [0], [0], [1], [0, 0, 1, 1], [], []>} : vector<8x128xbf16>, vector<128x256xbf16>, vector<8x256xf32> -> vector<8x256xf32>
    %678 = arith.addf %674, %677 : vector<8x256xf32>
    %679 = vector.extract_strided_slice %678 {offsets = [0, 0], sizes = [8, 128], strides = [1, 1]} : vector<8x256xf32> to vector<8x128xf32>
    %680 = vector.extract_strided_slice %678 {offsets = [0, 128], sizes = [8, 128], strides = [1, 1]} : vector<8x256xf32> to vector<8x128xf32>
    %681 = arith.negf %679 : vector<8x128xf32>
    %682 = math.exp %681 : vector<8x128xf32>
    %cst_344 = arith.constant 1.000000e+00 : f32
    %683 = vector.broadcast %cst_344 : f32 to vector<8x128xf32>
    %684 = arith.addf %683, %682 : vector<8x128xf32>
    %685 = arith.divf %683, %684 : vector<8x128xf32>
    %686 = math.tanh %680 : vector<8x128xf32>
    %687 = arith.negf %680 : vector<8x128xf32>
    %688 = math.exp %687 : vector<8x128xf32>
    %cst_345 = arith.constant 1.000000e+00 : f32
    %689 = vector.broadcast %cst_345 : f32 to vector<8x128xf32>
    %690 = arith.addf %689, %688 : vector<8x128xf32>
    %691 = arith.divf %689, %690 : vector<8x128xf32>
    %c64_i32_346 = arith.constant 64 : i32
    %692 = tpu.dynamic_rotate %685 by %c64_i32_346 dim 1 : vector<8x128xf32>, i32 -> vector<8x128xf32>
    %c64_i32_347 = arith.constant 64 : i32
    %693 = tpu.dynamic_rotate %691 by %c64_i32_347 dim 1 : vector<8x128xf32>, i32 -> vector<8x128xf32>
    %c0_348 = arith.constant 0 : index
    %c0_349 = arith.constant 0 : index
    %694 = vector.load %arg14[%c0_348, %c0_349] : memref<8x128xf32, #tpu.memory_space<vmem>>, vector<8x128xf32>
    %695 = arith.mulf %692, %694 : vector<8x128xf32>
    %696 = arith.mulf %685, %686 : vector<8x128xf32>
    %697 = arith.addf %695, %696 : vector<8x128xf32>
    %698 = math.tanh %697 : vector<8x128xf32>
    %699 = arith.mulf %693, %698 : vector<8x128xf32>
    %c0_350 = arith.constant 0 : index
    %c0_351 = arith.constant 0 : index
    %700 = vector.load %arg13[%c0_350, %c0_351] : memref<8x128xf32, #tpu.memory_space<vmem>>, vector<8x128xf32>
    tpu.vector_store %arg13[%c0_350, %c0_351], %699 {strides = array<i32>} : memref<8x128xf32, #tpu.memory_space<vmem>>, vector<8x128xf32>,
    %c0_352 = arith.constant 0 : index
    %c0_353 = arith.constant 0 : index
    %701 = vector.load %arg14[%c0_352, %c0_353] : memref<8x128xf32, #tpu.memory_space<vmem>>, vector<8x128xf32>
    tpu.vector_store %arg14[%c0_352, %c0_353], %697 {strides = array<i32>} : memref<8x128xf32, #tpu.memory_space<vmem>>, vector<8x128xf32>,
    %702 = arith.index_cast %c7_i32_338 : i32 to index
    %c0_354 = arith.constant 0 : index
    %c0_355 = arith.constant 0 : index
    %703 = vector.load %arg12[%702, %c0_354, %c0_355] : memref<8x8x128xf32, #tpu.memory_space<vmem>>, vector<1x8x128xf32>
    %704 = vector.shape_cast %703 : vector<1x8x128xf32> to vector<8x128xf32>
    %705 = vector.shape_cast %699 : vector<8x128xf32> to vector<1x8x128xf32>
    tpu.vector_store %arg12[%702, %c0_354, %c0_355], %705 {strides = array<i32>} : memref<8x8x128xf32, #tpu.memory_space<vmem>>, vector<1x8x128xf32>,
    %c8_i32_356 = arith.constant 8 : i32
    %c0_357 = arith.constant 0 : index
    %c0_358 = arith.constant 0 : index
    %c0_359 = arith.constant 0 : index
    %706 = vector.load %arg12[%c0_357, %c0_358, %c0_359] : memref<8x8x128xf32, #tpu.memory_space<vmem>>, vector<8x8x128xf32>
    %cst_360 = arith.constant dense<0.000000e+00> : vector<8x128xf32>
    %707 = vector.multi_reduction <add>, %706, %cst_360 [0] : vector<8x8x128xf32> to vector<8x128xf32>
    %cst_361 = arith.constant 1.250000e-01 : f32
    %708 = vector.broadcast %cst_361 : f32 to vector<8x128xf32>
    %709 = arith.mulf %707, %708 : vector<8x128xf32>
    %c0_362 = arith.constant 0 : index
    %c0_363 = arith.constant 0 : index
    %710 = vector.load %arg10[%c0_362, %c0_363] : memref<8x128xf32, #tpu.memory_space<vmem>>, vector<8x128xf32>
    tpu.vector_store %arg10[%c0_362, %c0_363], %709 {strides = array<i32>} : memref<8x128xf32, #tpu.memory_space<vmem>>, vector<8x128xf32>,
    return
  }
  func.func @transform_0(%arg0: i32) -> (i32, i32, i32) {
    %c0_i32 = arith.constant 0 : i32
    %c0_i32_0 = arith.constant 0 : i32
    %c0_i32_1 = arith.constant 0 : i32
    return %c0_i32, %arg0, %c0_i32_0 : i32, i32, i32
  }
  func.func @transform_1(%arg0: i32) -> (i32, i32) {
    %c0_i32 = arith.constant 0 : i32
    %c0_i32_0 = arith.constant 0 : i32
    %c0_i32_1 = arith.constant 0 : i32
    return %c0_i32, %c0_i32_0 : i32, i32
  }
  func.func @transform_2(%arg0: i32) -> (i32, i32) {
    %c0_i32 = arith.constant 0 : i32
    %c0_i32_0 = arith.constant 0 : i32
    %c0_i32_1 = arith.constant 0 : i32
    return %c0_i32, %c0_i32_0 : i32, i32
  }
  func.func @transform_3(%arg0: i32) -> (i32, i32) {
    %c0_i32 = arith.constant 0 : i32
    %c0_i32_0 = arith.constant 0 : i32
    %c0_i32_1 = arith.constant 0 : i32
    return %c0_i32, %c0_i32_0 : i32, i32
  }
  func.func @transform_4(%arg0: i32) -> (i32, i32) {
    %c0_i32 = arith.constant 0 : i32
    %c0_i32_0 = arith.constant 0 : i32
    %c0_i32_1 = arith.constant 0 : i32
    return %c0_i32, %c0_i32_0 : i32, i32
  }
  func.func @transform_5(%arg0: i32) -> (i32, i32) {
    %c0_i32 = arith.constant 0 : i32
    %c0_i32_0 = arith.constant 0 : i32
    %c0_i32_1 = arith.constant 0 : i32
    return %c0_i32, %c0_i32_0 : i32, i32
  }
  func.func @transform_6(%arg0: i32) -> (i32, i32) {
    %c0_i32 = arith.constant 0 : i32
    %c0_i32_0 = arith.constant 0 : i32
    %c0_i32_1 = arith.constant 0 : i32
    return %c0_i32, %c0_i32_0 : i32, i32
  }
  func.func @transform_7(%arg0: i32) -> (i32, i32) {
    %c0_i32 = arith.constant 0 : i32
    %c0_i32_0 = arith.constant 0 : i32
    %c0_i32_1 = arith.constant 0 : i32
    return %c0_i32, %c0_i32_0 : i32, i32
  }
  func.func @transform_8(%arg0: i32) -> (i32, i32) {
    %c0_i32 = arith.constant 0 : i32
    %c0_i32_0 = arith.constant 0 : i32
    %c0_i32_1 = arith.constant 0 : i32
    return %c0_i32, %c0_i32_0 : i32, i32
  }
  func.func @transform_9(%arg0: i32) -> (i32, i32) {
    %c0_i32 = arith.constant 0 : i32
    %c0_i32_0 = arith.constant 0 : i32
    return %arg0, %c0_i32 : i32, i32
  }
}

</mosaic_0001>

<llo_original>
// kernel: bilstm_forward.3
$region0: #{bilstm_forward.3}
  #allocation0 [shape = 'u32[]', space=smem, size = 0x4, offset = 0x4, fixed_abs, tag = 'smem constant byte address 0x4 - core index']
  #allocation1 [shape = 'u32[144,128]{1,0:T(1,128)}', space=vmem, size = 0x12000, scoped, tag = 'internal scratch']
  #allocation2 [shape = 'f32[3,8,256]{2,1,0:T(8,128)}', space=vmem, size = 0x6000, scoped, tag = 'scratch operand']
  #allocation3 [shape = 'f32[3,8,128]{2,1,0:T(8,128)}', space=vmem, size = 0x3000, scoped, tag = 'scratch operand']
  #allocation4 [shape = 'f32[8,128]{1,0:T(8,128)}', space=vmem, size = 0x1000, scoped, tag = 'scratch operand']
  #allocation5 [shape = 'f32[8,128]{1,0:T(8,128)}', space=vmem, size = 0x1000, scoped, tag = 'scratch operand']
  %s0 = inlined_call_operand.vmem [shape: f32[3,8,128], index: 0, kind: input, shape index: {}]
  %s1 = inlined_call_operand.vmem [shape: bf16[128,256], index: 1, kind: input, shape index: {}]
  %s2 = inlined_call_operand.vmem [shape: bf16[128,256], index: 2, kind: input, shape index: {}]
  %s3 = inlined_call_operand.vmem [shape: bf16[128,256], index: 3, kind: input, shape index: {}]
  %s4 = inlined_call_operand.vmem [shape: f32[1,256], index: 4, kind: input, shape index: {}]
  %s5 = inlined_call_operand.vmem [shape: bf16[128,256], index: 5, kind: input, shape index: {}]
  %s6 = inlined_call_operand.vmem [shape: bf16[128,256], index: 6, kind: input, shape index: {}]
  %s7 = inlined_call_operand.vmem [shape: bf16[128,256], index: 7, kind: input, shape index: {}]
  %s8 = inlined_call_operand.vmem [shape: f32[1,256], index: 8, kind: input, shape index: {}]
  %s9 = inlined_call_operand.vmem [shape: bf16[128,128], index: 9, kind: input, shape index: {}]
  %s10 = inlined_call_operand.vmem [shape: bf16[128,128], index: 10, kind: input, shape index: {}]
  %s11 = inlined_call_operand.vmem [shape: f32[1,128], index: 11, kind: input, shape index: {}]
  %s12 = inlined_call_operand.vmem [shape: f32[3,8,128], index: 12, kind: output, shape index: {}]
  %s13 = sld [smem:[#allocation0]]
  $region58: #{bilstm_forward.3} parent=0
    _
  %s15 = ssub.s32 1, %s13
  %s16 = scalar_select 0, %s15, %s13
  // Predicated region
  $region2: #{bilstm_forward.3} parent=0 // pred_check
    _
  $region3: #{bilstm_forward.3} parent=0 // pred_check_branch
    %18 = sbr.rel (0) target = $region5
  $region4: #{bilstm_forward.3} parent=0 // pred_region
    _
  $region5: #{bilstm_forward.3} parent=0 // pred_fallthru
    _
  // Predicated region
  $region6: #{bilstm_forward.3} parent=0 // pred_check
    _
  $region7: #{bilstm_forward.3} parent=0 // pred_check_branch
    %20 = sbr.rel (0) target = $region9
  $region8: #{bilstm_forward.3} parent=0 // pred_region
    _
  $region9: #{bilstm_forward.3} parent=0 // pred_fallthru
    _
  // Predicated region
  $region10: #{bilstm_forward.3} parent=0 // pred_check
    _
  $region11: #{bilstm_forward.3} parent=0 // pred_check_branch
    %22 = sbr.rel (0) target = $region13
  $region12: #{bilstm_forward.3} parent=0 // pred_region
    _
  $region13: #{bilstm_forward.3} parent=0 // pred_fallthru
    _
  // Predicated region
  $region14: #{bilstm_forward.3} parent=0 // pred_check
    _
  $region15: #{bilstm_forward.3} parent=0 // pred_check_branch
    %24 = sbr.rel (0) target = $region17
  $region16: #{bilstm_forward.3} parent=0 // pred_region
    _
  $region17: #{bilstm_forward.3} parent=0 // pred_fallthru
    _
  // Predicated region
  $region18: #{bilstm_forward.3} parent=0 // pred_check
    _
  $region19: #{bilstm_forward.3} parent=0 // pred_check_branch
    %26 = sbr.rel (0) target = $region21
  $region20: #{bilstm_forward.3} parent=0 // pred_region
    _
  $region21: #{bilstm_forward.3} parent=0 // pred_fallthru
    _
  // Predicated region
  $region22: #{bilstm_forward.3} parent=0 // pred_check
    _
  $region23: #{bilstm_forward.3} parent=0 // pred_check_branch
    %28 = sbr.rel (0) target = $region25
  $region24: #{bilstm_forward.3} parent=0 // pred_region
    _
  $region25: #{bilstm_forward.3} parent=0 // pred_fallthru
    _
  // Predicated region
  $region26: #{bilstm_forward.3} parent=0 // pred_check
    _
  $region27: #{bilstm_forward.3} parent=0 // pred_check_branch
    %30 = sbr.rel (0) target = $region29
  $region28: #{bilstm_forward.3} parent=0 // pred_region
    _
  $region29: #{bilstm_forward.3} parent=0 // pred_fallthru
    _
  // Predicated region
  $region30: #{bilstm_forward.3} parent=0 // pred_check
    _
  $region31: #{bilstm_forward.3} parent=0 // pred_check_branch
    %32 = sbr.rel (0) target = $region33
  $region32: #{bilstm_forward.3} parent=0 // pred_region
    _
  $region33: #{bilstm_forward.3} parent=0 // pred_fallthru
    _
  // Predicated region
  $region34: #{bilstm_forward.3} parent=0 // pred_check
    _
  $region35: #{bilstm_forward.3} parent=0 // pred_check_branch
    %34 = sbr.rel (0) target = $region37
  $region36: #{bilstm_forward.3} parent=0 // pred_region
    _
  $region37: #{bilstm_forward.3} parent=0 // pred_fallthru
    _
  // Predicated region
  $region38: #{bilstm_forward.3} parent=0 // pred_check
    _
  $region39: #{bilstm_forward.3} parent=0 // pred_check_branch
    %36 = sbr.rel (0) target = $region41
  $region40: #{bilstm_forward.3} parent=0 // pred_region
    _
  $region41: #{bilstm_forward.3} parent=0 // pred_fallthru
    _
  // Predicated region
  $region42: #{bilstm_forward.3} parent=0 // pred_check
    _
  $region43: #{bilstm_forward.3} parent=0 // pred_check_branch
    %38 = sbr.rel (0) target = $region45
  $region44: #{bilstm_forward.3} parent=0 // pred_region
    _
  $region45: #{bilstm_forward.3} parent=0 // pred_fallthru
    _
  // Predicated region
  $region46: #{bilstm_forward.3} parent=0 // pred_check
    _
  $region47: #{bilstm_forward.3} parent=0 // pred_check_branch
    %40 = sbr.rel (0) target = $region49
  $region48: #{bilstm_forward.3} parent=0 // pred_region
    _
  $region49: #{bilstm_forward.3} parent=0 // pred_fallthru
    _
  %v42 = vld [vmem:[%s0] sm:$0xff]
  %v43 = vld [vmem:[%s0 + $0x8] sm:$0xff]
  %v44 = vld [vmem:[%s0 + $0x10] sm:$0xff]
  %v45 = vpack.c.bf16 %v43, %v42
  %v46 = vpack.c.bf16 %v44, %v44
  %v47 = vld [vmem:[%s1] sm:$0xff]
  %v48 = vld [vmem:[%s1 + $0x8] sm:$0xff]
  %v49 = vld [vmem:[%s1 + $0x10] sm:$0xff]
  %v50 = vld [vmem:[%s1 + $0x18] sm:$0xff]
  %v51 = vld [vmem:[%s1 + $0x20] sm:$0xff]
  %v52 = vld [vmem:[%s1 + $0x28] sm:$0xff]
  %v53 = vld [vmem:[%s1 + $0x30] sm:$0xff]
  %v54 = vld [vmem:[%s1 + $0x38] sm:$0xff]
  %v55 = vld [vmem:[%s1 + $0x40] sm:$0xff]
  %v56 = vld [vmem:[%s1 + $0x48] sm:$0xff]
  %v57 = vld [vmem:[%s1 + $0x50] sm:$0xff]
  %v58 = vld [vmem:[%s1 + $0x58] sm:$0xff]
  %v59 = vld [vmem:[%s1 + $0x60] sm:$0xff]
  %v60 = vld [vmem:[%s1 + $0x68] sm:$0xff]
  %v61 = vld [vmem:[%s1 + $0x70] sm:$0xff]
  %v62 = vld [vmem:[%s1 + $0x78] sm:$0xff]
  %v63 = vld [vmem:[%s2] sm:$0xff]
  %v64 = vld [vmem:[%s2 + $0x8] sm:$0xff]
  %v65 = vld [vmem:[%s2 + $0x10] sm:$0xff]
  %v66 = vld [vmem:[%s2 + $0x18] sm:$0xff]
  %v67 = vld [vmem:[%s2 + $0x20] sm:$0xff]
  %v68 = vld [vmem:[%s2 + $0x28] sm:$0xff]
  %v69 = vld [vmem:[%s2 + $0x30] sm:$0xff]
  %v70 = vld [vmem:[%s2 + $0x38] sm:$0xff]
  %v71 = vld [vmem:[%s2 + $0x40] sm:$0xff]
  %v72 = vld [vmem:[%s2 + $0x48] sm:$0xff]
  %v73 = vld [vmem:[%s2 + $0x50] sm:$0xff]
  %v74 = vld [vmem:[%s2 + $0x58] sm:$0xff]
  %v75 = vld [vmem:[%s2 + $0x60] sm:$0xff]
  %v76 = vld [vmem:[%s2 + $0x68] sm:$0xff]
  %v77 = vld [vmem:[%s2 + $0x70] sm:$0xff]
  %v78 = vld [vmem:[%s2 + $0x78] sm:$0xff]
  %v95 = vunpack.c.l.b16 %v63
  %v96 = vunpack.c.h.b16 %v63
  %v97 = vunpack.c.l.b16 %v64
  %v98 = vunpack.c.h.b16 %v64
  %v99 = vunpack.c.l.b16 %v65
  %v100 = vunpack.c.h.b16 %v65
  %v101 = vunpack.c.l.b16 %v66
  %v102 = vunpack.c.h.b16 %v66
  %v103 = vunpack.c.l.b16 %v67
  %v104 = vunpack.c.h.b16 %v67
  %v105 = vunpack.c.l.b16 %v68
  %v106 = vunpack.c.h.b16 %v68
  %v107 = vunpack.c.l.b16 %v69
  %v108 = vunpack.c.h.b16 %v69
  %v109 = vunpack.c.l.b16 %v70
  %v110 = vunpack.c.h.b16 %v70
  %v111 = vunpack.c.l.b16 %v71
  %v112 = vunpack.c.h.b16 %v71
  %v113 = vunpack.c.l.b16 %v72
  %v114 = vunpack.c.h.b16 %v72
  %v115 = vunpack.c.l.b16 %v73
  %v116 = vunpack.c.h.b16 %v73
  %v117 = vunpack.c.l.b16 %v74
  %v118 = vunpack.c.h.b16 %v74
  %v119 = vunpack.c.l.b16 %v75
  %v120 = vunpack.c.h.b16 %v75
  %v121 = vunpack.c.l.b16 %v76
  %v122 = vunpack.c.h.b16 %v76
  %v123 = vunpack.c.l.b16 %v77
  %v124 = vunpack.c.h.b16 %v77
  %v125 = vunpack.c.l.b16 %v78
  %v126 = vunpack.c.h.b16 %v78
  %v127 = vpack.c.b16 %v97, %v95
  %v128 = vpack.c.b16 %v98, %v96
  %v129 = vpack.c.b16 %v101, %v99
  %v130 = vpack.c.b16 %v102, %v100
  %v131 = vpack.c.b16 %v105, %v103
  %v132 = vpack.c.b16 %v106, %v104
  %v133 = vpack.c.b16 %v109, %v107
  %v134 = vpack.c.b16 %v110, %v108
  %v135 = vpack.c.b16 %v113, %v111
  %v136 = vpack.c.b16 %v114, %v112
  %v137 = vpack.c.b16 %v117, %v115
  %v138 = vpack.c.b16 %v118, %v116
  %v139 = vpack.c.b16 %v121, %v119
  %v140 = vpack.c.b16 %v122, %v120
  %v141 = vpack.c.b16 %v125, %v123
  %v142 = vpack.c.b16 %v126, %v124
  %159 = vmatprep.subr.bf16.mxu0 %v128
  %160 = vmatpush1.bf16.msra.mxu0 %v127
  %161 = vmatprep.subr.bf16.mxu0 %v130
  %162 = vmatpush1.bf16.msra.mxu0 %v129
  %163 = vmatprep.subr.bf16.mxu0 %v132
  %164 = vmatpush1.bf16.msra.mxu0 %v131
  %165 = vmatprep.subr.bf16.mxu0 %v134
  %166 = vmatpush1.bf16.msra.mxu0 %v133
  %167 = vmatprep.subr.bf16.mxu0 %v136
  %168 = vmatpush1.bf16.msra.mxu0 %v135
  %169 = vmatprep.subr.bf16.mxu0 %v138
  %170 = vmatpush1.bf16.msra.mxu0 %v137
  %171 = vmatprep.subr.bf16.mxu0 %v140
  %172 = vmatpush1.bf16.msra.mxu0 %v139
  %173 = vmatprep.subr.bf16.mxu0 %v142
  %174 = vmatpush1.bf16.msra.mxu0 %v141
  %175 = vmatprep.subr.bf16.mxu0 0
  %176 = vmatpush1.bf16.msra.mxu0 0
  %177 = vmatprep.subr.bf16.mxu0 0
  %178 = vmatpush1.bf16.msra.mxu0 0
  %179 = vmatprep.subr.bf16.mxu0 0
  %180 = vmatpush1.bf16.msra.mxu0 0
  %181 = vmatprep.subr.bf16.mxu0 0
  %182 = vmatpush1.bf16.msra.mxu0 0
  %183 = vmatprep.subr.bf16.mxu0 0
  %184 = vmatpush1.bf16.msra.mxu0 0
  %185 = vmatprep.subr.bf16.mxu0 0
  %186 = vmatpush1.bf16.msra.mxu0 0
  %187 = vmatprep.subr.bf16.mxu0 0
  %188 = vmatpush1.bf16.msra.mxu0 0
  %189 = vmatprep.subr.bf16.mxu0 0
  %190 = vmatpush1.bf16.msra.mxu0 0
  %191 = vmatprep.mubr.bf16.mxu0 0
  %192 = vmatmul.mubr.bf16.gmra.mrb[0].mxu0 %v45
  %v193 = vpop.f32.mrb[0].mxu0
  %v194 = vadd.f32 0.0, %v193
  %v195 = vpop.f32.mrb[0].mxu0
  %v196 = vadd.f32 0.0, %v195
  %v197 = vpop.f32.mrb[0].mxu0
  %v198 = vadd.f32 0.0, %v197
  %v199 = vpop.f32.mrb[0].mxu0
  %v200 = vadd.f32 0.0, %v199
  %201 = vmatprep.mubr.bf16.mxu0 0
  %202 = vmatmul.mubr.bf16.gmra.mrb[0].mxu0 %v46
  %v203 = vpop.f32.mrb[0].mxu0
  %v204 = vadd.f32 0.0, %v203
  %v205 = vpop.f32.mrb[0].mxu0
  %v206 = vadd.f32 0.0, %v205
  %v207 = vpop.f32.mrb[0].mxu0
  %v208 = vpop.f32.mrb[0].mxu0
  %209 = vdwg.mxu0
  %v210 = vld [vmem:[%s4] sm:$0x3]
  %v212 = vlaneseq
  %v213 = vshrl.u32 %v212, 7
  %v214 = vsub.s32 0, %v213
  %v215 = vrot.slane %v210, %v214
  %v216 = vlaneseq
  %v217 = vshrl.u32 %v216, 7
  %v218 = vsub.s32 1, %v217
  %v219 = vrot.slane %v210, %v218
  %v238 = vunpack.c.l.b16 %v47
  %v239 = vunpack.c.h.b16 %v47
  %v240 = vunpack.c.l.b16 %v48
  %v241 = vunpack.c.h.b16 %v48
  %v242 = vunpack.c.l.b16 %v49
  %v243 = vunpack.c.h.b16 %v49
  %v244 = vunpack.c.l.b16 %v50
  %v245 = vunpack.c.h.b16 %v50
  %v246 = vunpack.c.l.b16 %v51
  %v247 = vunpack.c.h.b16 %v51
  %v248 = vunpack.c.l.b16 %v52
  %v249 = vunpack.c.h.b16 %v52
  %v250 = vunpack.c.l.b16 %v53
  %v251 = vunpack.c.h.b16 %v53
  %v252 = vunpack.c.l.b16 %v54
  %v253 = vunpack.c.h.b16 %v54
  %v254 = vunpack.c.l.b16 %v55
  %v255 = vunpack.c.h.b16 %v55
  %v256 = vunpack.c.l.b16 %v56
  %v257 = vunpack.c.h.b16 %v56
  %v258 = vunpack.c.l.b16 %v57
  %v259 = vunpack.c.h.b16 %v57
  %v260 = vunpack.c.l.b16 %v58
  %v261 = vunpack.c.h.b16 %v58
  %v262 = vunpack.c.l.b16 %v59
  %v263 = vunpack.c.h.b16 %v59
  %v264 = vunpack.c.l.b16 %v60
  %v265 = vunpack.c.h.b16 %v60
  %v266 = vunpack.c.l.b16 %v61
  %v267 = vunpack.c.h.b16 %v61
  %v268 = vunpack.c.l.b16 %v62
  %v269 = vunpack.c.h.b16 %v62
  %v270 = vpack.c.b16 %v240, %v238
  %v271 = vpack.c.b16 %v241, %v239
  %v272 = vpack.c.b16 %v244, %v242
  %v273 = vpack.c.b16 %v245, %v243
  %v274 = vpack.c.b16 %v248, %v246
  %v275 = vpack.c.b16 %v249, %v247
  %v276 = vpack.c.b16 %v252, %v250
  %v277 = vpack.c.b16 %v253, %v251
  %v278 = vpack.c.b16 %v256, %v254
  %v279 = vpack.c.b16 %v257, %v255
  %v280 = vpack.c.b16 %v260, %v258
  %v281 = vpack.c.b16 %v261, %v259
  %v282 = vpack.c.b16 %v264, %v262
  %v283 = vpack.c.b16 %v265, %v263
  %v284 = vpack.c.b16 %v268, %v266
  %v285 = vpack.c.b16 %v269, %v267
  %302 = vmatprep.subr.bf16.mxu0 %v271
  %303 = vmatpush1.bf16.msra.mxu0 %v270
  %304 = vmatprep.subr.bf16.mxu0 %v273
  %305 = vmatpush1.bf16.msra.mxu0 %v272
  %306 = vmatprep.subr.bf16.mxu0 %v275
  %307 = vmatpush1.bf16.msra.mxu0 %v274
  %308 = vmatprep.subr.bf16.mxu0 %v277
  %309 = vmatpush1.bf16.msra.mxu0 %v276
  %310 = vmatprep.subr.bf16.mxu0 %v279
  %311 = vmatpush1.bf16.msra.mxu0 %v278
  %312 = vmatprep.subr.bf16.mxu0 %v281
  %313 = vmatpush1.bf16.msra.mxu0 %v280
  %314 = vmatprep.subr.bf16.mxu0 %v283
  %315 = vmatpush1.bf16.msra.mxu0 %v282
  %316 = vmatprep.subr.bf16.mxu0 %v285
  %317 = vmatpush1.bf16.msra.mxu0 %v284
  %318 = vmatprep.subr.bf16.mxu0 0
  %319 = vmatpush1.bf16.msra.mxu0 0
  %320 = vmatprep.subr.bf16.mxu0 0
  %321 = vmatpush1.bf16.msra.mxu0 0
  %322 = vmatprep.subr.bf16.mxu0 0
  %323 = vmatpush1.bf16.msra.mxu0 0
  %324 = vmatprep.subr.bf16.mxu0 0
  %325 = vmatpush1.bf16.msra.mxu0 0
  %326 = vmatprep.subr.bf16.mxu0 0
  %327 = vmatpush1.bf16.msra.mxu0 0
  %328 = vmatprep.subr.bf16.mxu0 0
  %329 = vmatpush1.bf16.msra.mxu0 0
  %330 = vmatprep.subr.bf16.mxu0 0
  %331 = vmatpush1.bf16.msra.mxu0 0
  %332 = vmatprep.subr.bf16.mxu0 0
  %333 = vmatpush1.bf16.msra.mxu0 0
  %334 = vmatprep.mubr.bf16.mxu0 0
  %335 = vmatmul.mubr.bf16.gmra.mrb[0].mxu0 %v45
  %v336 = vpop.f32.mrb[0].mxu0
  %v337 = vadd.f32 %v215, %v336
  %v338 = vpop.f32.mrb[0].mxu0
  %v339 = vadd.f32 %v219, %v338
  %v340 = vpop.f32.mrb[0].mxu0
  %v341 = vadd.f32 %v215, %v340
  %v342 = vpop.f32.mrb[0].mxu0
  %v343 = vadd.f32 %v219, %v342
  %344 = vmatprep.mubr.bf16.mxu0 0
  %345 = vmatmul.mubr.bf16.gmra.mrb[0].mxu0 %v46
  %v346 = vpop.f32.mrb[0].mxu0
  %v347 = vadd.f32 %v215, %v346
  %v348 = vpop.f32.mrb[0].mxu0
  %v349 = vadd.f32 %v219, %v348
  %v350 = vpop.f32.mrb[0].mxu0
  %v351 = vpop.f32.mrb[0].mxu0
  %352 = vdwg.mxu0
  %v353 = vadd.f32 %v337, %v204
  %v354 = vadd.f32 %v339, %v206
  %355 = vst [vmem:[#allocation2] sm:$0xff] %v353
  %356 = vst [vmem:[#allocation2 + $0x8] sm:$0xff] %v354
  %v357 = vadd.f32 %v341, %v198
  %v358 = vadd.f32 %v343, %v200
  %s359 = scalar_lea.vmem [#allocation2], 16
  %360 = vst [vmem:[%s359] sm:$0xff] %v357
  %361 = vst [vmem:[%s359 + $0x8] sm:$0xff] %v358
  %v362 = vadd.f32 %v347, %v194
  %v363 = vadd.f32 %v349, %v196
  %s364 = scalar_lea.vmem [#allocation2], 32
  %365 = vst [vmem:[%s364] sm:$0xff] %v362
  %366 = vst [vmem:[%s364 + $0x8] sm:$0xff] %v363
  %v367 = vld [vmem:[%s3] sm:$0xff]
  %v368 = vld [vmem:[%s3 + $0x8] sm:$0xff]
  %v369 = vld [vmem:[%s3 + $0x10] sm:$0xff]
  %v370 = vld [vmem:[%s3 + $0x18] sm:$0xff]
  %v371 = vld [vmem:[%s3 + $0x20] sm:$0xff]
  %v372 = vld [vmem:[%s3 + $0x28] sm:$0xff]
  %v373 = vld [vmem:[%s3 + $0x30] sm:$0xff]
  %v374 = vld [vmem:[%s3 + $0x38] sm:$0xff]
  %v375 = vld [vmem:[%s3 + $0x40] sm:$0xff]
  %v376 = vld [vmem:[%s3 + $0x48] sm:$0xff]
  %v377 = vld [vmem:[%s3 + $0x50] sm:$0xff]
  %v378 = vld [vmem:[%s3 + $0x58] sm:$0xff]
  %v379 = vld [vmem:[%s3 + $0x60] sm:$0xff]
  %v380 = vld [vmem:[%s3 + $0x68] sm:$0xff]
  %v381 = vld [vmem:[%s3 + $0x70] sm:$0xff]
  %v382 = vld [vmem:[%s3 + $0x78] sm:$0xff]
  %383 = vst [vmem:[#allocation4] sm:$0xff] 0.0
  %384 = vst [vmem:[#allocation5] sm:$0xff] 0.0
  %v385 = vld [vmem:[#allocation2] sm:$0xff]
  %v386 = vld [vmem:[#allocation2 + $0x8] sm:$0xff]
  %v387 = vld [vmem:[#allocation4] sm:$0xff]
  %v388 = vpack.c.bf16 %v387, %v387
  %v405 = vunpack.c.l.b16 %v367
  %v406 = vunpack.c.h.b16 %v367
  %v407 = vunpack.c.l.b16 %v368
  %v408 = vunpack.c.h.b16 %v368
  %v409 = vunpack.c.l.b16 %v369
  %v410 = vunpack.c.h.b16 %v369
  %v411 = vunpack.c.l.b16 %v370
  %v412 = vunpack.c.h.b16 %v370
  %v413 = vunpack.c.l.b16 %v371
  %v414 = vunpack.c.h.b16 %v371
  %v415 = vunpack.c.l.b16 %v372
  %v416 = vunpack.c.h.b16 %v372
  %v417 = vunpack.c.l.b16 %v373
  %v418 = vunpack.c.h.b16 %v373
  %v419 = vunpack.c.l.b16 %v374
  %v420 = vunpack.c.h.b16 %v374
  %v421 = vunpack.c.l.b16 %v375
  %v422 = vunpack.c.h.b16 %v375
  %v423 = vunpack.c.l.b16 %v376
  %v424 = vunpack.c.h.b16 %v376
  %v425 = vunpack.c.l.b16 %v377
  %v426 = vunpack.c.h.b16 %v377
  %v427 = vunpack.c.l.b16 %v378
  %v428 = vunpack.c.h.b16 %v378
  %v429 = vunpack.c.l.b16 %v379
  %v430 = vunpack.c.h.b16 %v379
  %v431 = vunpack.c.l.b16 %v380
  %v432 = vunpack.c.h.b16 %v380
  %v433 = vunpack.c.l.b16 %v381
  %v434 = vunpack.c.h.b16 %v381
  %v435 = vunpack.c.l.b16 %v382
  %v436 = vunpack.c.h.b16 %v382
  %v437 = vpack.c.b16 %v407, %v405
  %v438 = vpack.c.b16 %v408, %v406
  %v439 = vpack.c.b16 %v411, %v409
  %v440 = vpack.c.b16 %v412, %v410
  %v441 = vpack.c.b16 %v415, %v413
  %v442 = vpack.c.b16 %v416, %v414
  %v443 = vpack.c.b16 %v419, %v417
  %v444 = vpack.c.b16 %v420, %v418
  %v445 = vpack.c.b16 %v423, %v421
  %v446 = vpack.c.b16 %v424, %v422
  %v447 = vpack.c.b16 %v427, %v425
  %v448 = vpack.c.b16 %v428, %v426
  %v449 = vpack.c.b16 %v431, %v429
  %v450 = vpack.c.b16 %v432, %v430
  %v451 = vpack.c.b16 %v435, %v433
  %v452 = vpack.c.b16 %v436, %v434
  %469 = vmatprep.subr.bf16.mxu0 %v438
  %470 = vmatpush1.bf16.msra.mxu0 %v437
  %471 = vmatprep.subr.bf16.mxu0 %v440
  %472 = vmatpush1.bf16.msra.mxu0 %v439
  %473 = vmatprep.subr.bf16.mxu0 %v442
  %474 = vmatpush1.bf16.msra.mxu0 %v441
  %475 = vmatprep.subr.bf16.mxu0 %v444
  %476 = vmatpush1.bf16.msra.mxu0 %v443
  %477 = vmatprep.subr.bf16.mxu0 %v446
  %478 = vmatpush1.bf16.msra.mxu0 %v445
  %479 = vmatprep.subr.bf16.mxu0 %v448
  %480 = vmatpush1.bf16.msra.mxu0 %v447
  %481 = vmatprep.subr.bf16.mxu0 %v450
  %482 = vmatpush1.bf16.msra.mxu0 %v449
  %483 = vmatprep.subr.bf16.mxu0 %v452
  %484 = vmatpush1.bf16.msra.mxu0 %v451
  %485 = vmatprep.subr.bf16.mxu0 0
  %486 = vmatpush1.bf16.msra.mxu0 0
  %487 = vmatprep.subr.bf16.mxu0 0
  %488 = vmatpush1.bf16.msra.mxu0 0
  %489 = vmatprep.subr.bf16.mxu0 0
  %490 = vmatpush1.bf16.msra.mxu0 0
  %491 = vmatprep.subr.bf16.mxu0 0
  %492 = vmatpush1.bf16.msra.mxu0 0
  %493 = vmatprep.subr.bf16.mxu0 0
  %494 = vmatpush1.bf16.msra.mxu0 0
  %495 = vmatprep.subr.bf16.mxu0 0
  %496 = vmatpush1.bf16.msra.mxu0 0
  %497 = vmatprep.subr.bf16.mxu0 0
  %498 = vmatpush1.bf16.msra.mxu0 0
  %499 = vmatprep.subr.bf16.mxu0 0
  %500 = vmatpush1.bf16.msra.mxu0 0
  %501 = vmatprep.mubr.bf16.mxu0 0
  %502 = vmatmul.mubr.bf16.gmra.mrb[0].mxu0 %v388
  %v503 = vpop.f32.mrb[0].mxu0
  %v504 = vadd.f32 0.0, %v503
  %v505 = vpop.f32.mrb[0].mxu0
  %v506 = vadd.f32 0.0, %v505
  %v507 = vpop.f32.mrb[0].mxu0
  %v508 = vpop.f32.mrb[0].mxu0
  %509 = vdwg.mxu0
  %v510 = vadd.f32 %v385, %v504
  %v511 = vadd.f32 %v386, %v506
  %v512 = vxor.u32 %v510, 2147483648
  %v513 = vmul.f32 %v512, 1.442695
  %v514 = vpow.pop %v513
  %v515 = vadd.f32 %v514, 1.0
  %v516 = vrcp.pop %v515
  %v517 = vmul.f32 1.0, %v516
  %v518 = vtanh.pop %v511
  %v519 = vxor.u32 %v511, 2147483648
  %v520 = vmul.f32 %v519, 1.442695
  %v521 = vpow.pop %v520
  %v522 = vadd.f32 %v521, 1.0
  %v523 = vrcp.pop %v522
  %v524 = vmul.f32 1.0, %v523
  %525 = vrot.lane.b32.xlu0 %v517, 64
  %v526 = vpop.permute.xlu0 %525
  %527 = vrot.lane.b32.xlu0 %v524, 64
  %v528 = vpop.permute.xlu0 %527
  %v529 = vld [vmem:[#allocation5] sm:$0xff]
  %v530 = vmul.f32 %v526, %v529
  %v531 = vmul.f32 %v517, %v518
  %v532 = vadd.f32 %v530, %v531
  %v533 = vtanh.pop %v532
  %v534 = vmul.f32 %v528, %v533
  %535 = vst [vmem:[#allocation4] sm:$0xff] %v534
  %536 = vst [vmem:[#allocation5] sm:$0xff] %v532
  %537 = vst [vmem:[#allocation3] sm:$0xff] %v534
  %v538 = vld [vmem:[%s359] sm:$0xff]
  %v539 = vld [vmem:[%s359 + $0x8] sm:$0xff]
  %v540 = vld [vmem:[#allocation4] sm:$0xff]
  %v541 = vpack.c.bf16 %v540, %v540
  %542 = vmatprep.subr.bf16.mxu0 %v438
  %543 = vmatpush1.bf16.msra.mxu0 %v437
  %544 = vmatprep.subr.bf16.mxu0 %v440
  %545 = vmatpush1.bf16.msra.mxu0 %v439
  %546 = vmatprep.subr.bf16.mxu0 %v442
  %547 = vmatpush1.bf16.msra.mxu0 %v441
  %548 = vmatprep.subr.bf16.mxu0 %v444
  %549 = vmatpush1.bf16.msra.mxu0 %v443
  %550 = vmatprep.subr.bf16.mxu0 %v446
  %551 = vmatpush1.bf16.msra.mxu0 %v445
  %552 = vmatprep.subr.bf16.mxu0 %v448
  %553 = vmatpush1.bf16.msra.mxu0 %v447
  %554 = vmatprep.subr.bf16.mxu0 %v450
  %555 = vmatpush1.bf16.msra.mxu0 %v449
  %556 = vmatprep.subr.bf16.mxu0 %v452
  %557 = vmatpush1.bf16.msra.mxu0 %v451
  %558 = vmatprep.subr.bf16.mxu0 0
  %559 = vmatpush1.bf16.msra.mxu0 0
  %560 = vmatprep.subr.bf16.mxu0 0
  %561 = vmatpush1.bf16.msra.mxu0 0
  %562 = vmatprep.subr.bf16.mxu0 0
  %563 = vmatpush1.bf16.msra.mxu0 0
  %564 = vmatprep.subr.bf16.mxu0 0
  %565 = vmatpush1.bf16.msra.mxu0 0
  %566 = vmatprep.subr.bf16.mxu0 0
  %567 = vmatpush1.bf16.msra.mxu0 0
  %568 = vmatprep.subr.bf16.mxu0 0
  %569 = vmatpush1.bf16.msra.mxu0 0
  %570 = vmatprep.subr.bf16.mxu0 0
  %571 = vmatpush1.bf16.msra.mxu0 0
  %572 = vmatprep.subr.bf16.mxu0 0
  %573 = vmatpush1.bf16.msra.mxu0 0
  %574 = vmatprep.mubr.bf16.mxu0 0
  %575 = vmatmul.mubr.bf16.gmra.mrb[0].mxu0 %v541
  %v576 = vpop.f32.mrb[0].mxu0
  %v577 = vadd.f32 0.0, %v576
  %v578 = vpop.f32.mrb[0].mxu0
  %v579 = vadd.f32 0.0, %v578
  %v580 = vpop.f32.mrb[0].mxu0
  %v581 = vpop.f32.mrb[0].mxu0
  %582 = vdwg.mxu0
  %v583 = vadd.f32 %v538, %v577
  %v584 = vadd.f32 %v539, %v579
  %v585 = vxor.u32 %v583, 2147483648
  %v586 = vmul.f32 %v585, 1.442695
  %v587 = vpow.pop %v586
  %v588 = vadd.f32 %v587, 1.0
  %v589 = vrcp.pop %v588
  %v590 = vmul.f32 1.0, %v589
  %v591 = vtanh.pop %v584
  %v592 = vxor.u32 %v584, 2147483648
  %v593 = vmul.f32 %v592, 1.442695
  %v594 = vpow.pop %v593
  %v595 = vadd.f32 %v594, 1.0
  %v596 = vrcp.pop %v595
  %v597 = vmul.f32 1.0, %v596
  %598 = vrot.lane.b32.xlu0 %v590, 64
  %v599 = vpop.permute.xlu0 %598
  %600 = vrot.lane.b32.xlu0 %v597, 64
  %v601 = vpop.permute.xlu0 %600
  %v602 = vld [vmem:[#allocation5] sm:$0xff]
  %v603 = vmul.f32 %v599, %v602
  %v604 = vmul.f32 %v590, %v591
  %v605 = vadd.f32 %v603, %v604
  %v606 = vtanh.pop %v605
  %v607 = vmul.f32 %v601, %v606
  %608 = vst [vmem:[#allocation4] sm:$0xff] %v607
  %609 = vst [vmem:[#allocation5] sm:$0xff] %v605
  %s610 = scalar_lea.vmem [#allocation3], 8
  %611 = vst [vmem:[%s610] sm:$0xff] %v607
  %v612 = vld [vmem:[%s364] sm:$0xff]
  %v613 = vld [vmem:[%s364 + $0x8] sm:$0xff]
  %v614 = vld [vmem:[#allocation4] sm:$0xff]
  %v615 = vpack.c.bf16 %v614, %v614
  %616 = vmatprep.subr.bf16.mxu0 %v438
  %617 = vmatpush1.bf16.msra.mxu0 %v437
  %618 = vmatprep.subr.bf16.mxu0 %v440
  %619 = vmatpush1.bf16.msra.mxu0 %v439
  %620 = vmatprep.subr.bf16.mxu0 %v442
  %621 = vmatpush1.bf16.msra.mxu0 %v441
  %622 = vmatprep.subr.bf16.mxu0 %v444
  %623 = vmatpush1.bf16.msra.mxu0 %v443
  %624 = vmatprep.subr.bf16.mxu0 %v446
  %625 = vmatpush1.bf16.msra.mxu0 %v445
  %626 = vmatprep.subr.bf16.mxu0 %v448
  %627 = vmatpush1.bf16.msra.mxu0 %v447
  %628 = vmatprep.subr.bf16.mxu0 %v450
  %629 = vmatpush1.bf16.msra.mxu0 %v449
  %630 = vmatprep.subr.bf16.mxu0 %v452
  %631 = vmatpush1.bf16.msra.mxu0 %v451
  %632 = vmatprep.subr.bf16.mxu0 0
  %633 = vmatpush1.bf16.msra.mxu0 0
  %634 = vmatprep.subr.bf16.mxu0 0
  %635 = vmatpush1.bf16.msra.mxu0 0
  %636 = vmatprep.subr.bf16.mxu0 0
  %637 = vmatpush1.bf16.msra.mxu0 0
  %638 = vmatprep.subr.bf16.mxu0 0
  %639 = vmatpush1.bf16.msra.mxu0 0
  %640 = vmatprep.subr.bf16.mxu0 0
  %641 = vmatpush1.bf16.msra.mxu0 0
  %642 = vmatprep.subr.bf16.mxu0 0
  %643 = vmatpush1.bf16.msra.mxu0 0
  %644 = vmatprep.subr.bf16.mxu0 0
  %645 = vmatpush1.bf16.msra.mxu0 0
  %646 = vmatprep.subr.bf16.mxu0 0
  %647 = vmatpush1.bf16.msra.mxu0 0
  %648 = vmatprep.mubr.bf16.mxu0 0
  %649 = vmatmul.mubr.bf16.gmra.mrb[0].mxu0 %v615
  %v650 = vpop.f32.mrb[0].mxu0
  %v651 = vadd.f32 0.0, %v650
  %v652 = vpop.f32.mrb[0].mxu0
  %v653 = vadd.f32 0.0, %v652
  %v654 = vpop.f32.mrb[0].mxu0
  %v655 = vpop.f32.mrb[0].mxu0
  %656 = vdwg.mxu0
  %v657 = vadd.f32 %v612, %v651
  %v658 = vadd.f32 %v613, %v653
  %v659 = vxor.u32 %v657, 2147483648
  %v660 = vmul.f32 %v659, 1.442695
  %v661 = vpow.pop %v660
  %v662 = vadd.f32 %v661, 1.0
  %v663 = vrcp.pop %v662
  %v664 = vmul.f32 1.0, %v663
  %v665 = vtanh.pop %v658
  %v666 = vxor.u32 %v658, 2147483648
  %v667 = vmul.f32 %v666, 1.442695
  %v668 = vpow.pop %v667
  %v669 = vadd.f32 %v668, 1.0
  %v670 = vrcp.pop %v669
  %v671 = vmul.f32 1.0, %v670
  %672 = vrot.lane.b32.xlu0 %v664, 64
  %v673 = vpop.permute.xlu0 %672
  %674 = vrot.lane.b32.xlu0 %v671, 64
  %v675 = vpop.permute.xlu0 %674
  %v676 = vld [vmem:[#allocation5] sm:$0xff]
  %v677 = vmul.f32 %v673, %v676
  %v678 = vmul.f32 %v664, %v665
  %v679 = vadd.f32 %v677, %v678
  %v680 = vtanh.pop %v679
  %v681 = vmul.f32 %v675, %v680
  %682 = vst [vmem:[#allocation4] sm:$0xff] %v681
  %683 = vst [vmem:[#allocation5] sm:$0xff] %v679
  %s684 = scalar_lea.vmem [#allocation3], 16
  %685 = vst [vmem:[%s684] sm:$0xff] %v681
  %v686 = vld [vmem:[#allocation3] sm:$0xff]
  %v687 = vld [vmem:[#allocation3 + $0x8] sm:$0xff]
  %v688 = vld [vmem:[#allocation3 + $0x10] sm:$0xff]
  %v689 = vpack.c.bf16 %v687, %v686
  %v690 = vpack.c.bf16 %v688, %v688
  %v691 = vld [vmem:[%s5] sm:$0xff]
  %v692 = vld [vmem:[%s5 + $0x8] sm:$0xff]
  %v693 = vld [vmem:[%s5 + $0x10] sm:$0xff]
  %v694 = vld [vmem:[%s5 + $0x18] sm:$0xff]
  %v695 = vld [vmem:[%s5 + $0x20] sm:$0xff]
  %v696 = vld [vmem:[%s5 + $0x28] sm:$0xff]
  %v697 = vld [vmem:[%s5 + $0x30] sm:$0xff]
  %v698 = vld [vmem:[%s5 + $0x38] sm:$0xff]
  %v699 = vld [vmem:[%s5 + $0x40] sm:$0xff]
  %v700 = vld [vmem:[%s5 + $0x48] sm:$0xff]
  %v701 = vld [vmem:[%s5 + $0x50] sm:$0xff]
  %v702 = vld [vmem:[%s5 + $0x58] sm:$0xff]
  %v703 = vld [vmem:[%s5 + $0x60] sm:$0xff]
  %v704 = vld [vmem:[%s5 + $0x68] sm:$0xff]
  %v705 = vld [vmem:[%s5 + $0x70] sm:$0xff]
  %v706 = vld [vmem:[%s5 + $0x78] sm:$0xff]
  %v707 = vld [vmem:[%s6] sm:$0xff]
  %v708 = vld [vmem:[%s6 + $0x8] sm:$0xff]
  %v709 = vld [vmem:[%s6 + $0x10] sm:$0xff]
  %v710 = vld [vmem:[%s6 + $0x18] sm:$0xff]
  %v711 = vld [vmem:[%s6 + $0x20] sm:$0xff]
  %v712 = vld [vmem:[%s6 + $0x28] sm:$0xff]
  %v713 = vld [vmem:[%s6 + $0x30] sm:$0xff]
  %v714 = vld [vmem:[%s6 + $0x38] sm:$0xff]
  %v715 = vld [vmem:[%s6 + $0x40] sm:$0xff]
  %v716 = vld [vmem:[%s6 + $0x48] sm:$0xff]
  %v717 = vld [vmem:[%s6 + $0x50] sm:$0xff]
  %v718 = vld [vmem:[%s6 + $0x58] sm:$0xff]
  %v719 = vld [vmem:[%s6 + $0x60] sm:$0xff]
  %v720 = vld [vmem:[%s6 + $0x68] sm:$0xff]
  %v721 = vld [vmem:[%s6 + $0x70] sm:$0xff]
  %v722 = vld [vmem:[%s6 + $0x78] sm:$0xff]
  %v739 = vunpack.c.l.b16 %v707
  %v740 = vunpack.c.h.b16 %v707
  %v741 = vunpack.c.l.b16 %v708
  %v742 = vunpack.c.h.b16 %v708
  %v743 = vunpack.c.l.b16 %v709
  %v744 = vunpack.c.h.b16 %v709
  %v745 = vunpack.c.l.b16 %v710
  %v746 = vunpack.c.h.b16 %v710
  %v747 = vunpack.c.l.b16 %v711
  %v748 = vunpack.c.h.b16 %v711
  %v749 = vunpack.c.l.b16 %v712
  %v750 = vunpack.c.h.b16 %v712
  %v751 = vunpack.c.l.b16 %v713
  %v752 = vunpack.c.h.b16 %v713
  %v753 = vunpack.c.l.b16 %v714
  %v754 = vunpack.c.h.b16 %v714
  %v755 = vunpack.c.l.b16 %v715
  %v756 = vunpack.c.h.b16 %v715
  %v757 = vunpack.c.l.b16 %v716
  %v758 = vunpack.c.h.b16 %v716
  %v759 = vunpack.c.l.b16 %v717
  %v760 = vunpack.c.h.b16 %v717
  %v761 = vunpack.c.l.b16 %v718
  %v762 = vunpack.c.h.b16 %v718
  %v763 = vunpack.c.l.b16 %v719
  %v764 = vunpack.c.h.b16 %v719
  %v765 = vunpack.c.l.b16 %v720
  %v766 = vunpack.c.h.b16 %v720
  %v767 = vunpack.c.l.b16 %v721
  %v768 = vunpack.c.h.b16 %v721
  %v769 = vunpack.c.l.b16 %v722
  %v770 = vunpack.c.h.b16 %v722
  %v771 = vpack.c.b16 %v741, %v739
  %v772 = vpack.c.b16 %v742, %v740
  %v773 = vpack.c.b16 %v745, %v743
  %v774 = vpack.c.b16 %v746, %v744
  %v775 = vpack.c.b16 %v749, %v747
  %v776 = vpack.c.b16 %v750, %v748
  %v777 = vpack.c.b16 %v753, %v751
  %v778 = vpack.c.b16 %v754, %v752
  %v779 = vpack.c.b16 %v757, %v755
  %v780 = vpack.c.b16 %v758, %v756
  %v781 = vpack.c.b16 %v761, %v759
  %v782 = vpack.c.b16 %v762, %v760
  %v783 = vpack.c.b16 %v765, %v763
  %v784 = vpack.c.b16 %v766, %v764
  %v785 = vpack.c.b16 %v769, %v767
  %v786 = vpack.c.b16 %v770, %v768
  %803 = vmatprep.subr.bf16.mxu0 %v772
  %804 = vmatpush1.bf16.msra.mxu0 %v771
  %805 = vmatprep.subr.bf16.mxu0 %v774
  %806 = vmatpush1.bf16.msra.mxu0 %v773
  %807 = vmatprep.subr.bf16.mxu0 %v776
  %808 = vmatpush1.bf16.msra.mxu0 %v775
  %809 = vmatprep.subr.bf16.mxu0 %v778
  %810 = vmatpush1.bf16.msra.mxu0 %v777
  %811 = vmatprep.subr.bf16.mxu0 %v780
  %812 = vmatpush1.bf16.msra.mxu0 %v779
  %813 = vmatprep.subr.bf16.mxu0 %v782
  %814 = vmatpush1.bf16.msra.mxu0 %v781
  %815 = vmatprep.subr.bf16.mxu0 %v784
  %816 = vmatpush1.bf16.msra.mxu0 %v783
  %817 = vmatprep.subr.bf16.mxu0 %v786
  %818 = vmatpush1.bf16.msra.mxu0 %v785
  %819 = vmatprep.subr.bf16.mxu0 0
  %820 = vmatpush1.bf16.msra.mxu0 0
  %821 = vmatprep.subr.bf16.mxu0 0
  %822 = vmatpush1.bf16.msra.mxu0 0
  %823 = vmatprep.subr.bf16.mxu0 0
  %824 = vmatpush1.bf16.msra.mxu0 0
  %825 = vmatprep.subr.bf16.mxu0 0
  %826 = vmatpush1.bf16.msra.mxu0 0
  %827 = vmatprep.subr.bf16.mxu0 0
  %828 = vmatpush1.bf16.msra.mxu0 0
  %829 = vmatprep.subr.bf16.mxu0 0
  %830 = vmatpush1.bf16.msra.mxu0 0
  %831 = vmatprep.subr.bf16.mxu0 0
  %832 = vmatpush1.bf16.msra.mxu0 0
  %833 = vmatprep.subr.bf16.mxu0 0
  %834 = vmatpush1.bf16.msra.mxu0 0
  %835 = vmatprep.mubr.bf16.mxu0 0
  %836 = vmatmul.mubr.bf16.gmra.mrb[0].mxu0 %v689
  %v837 = vpop.f32.mrb[0].mxu0
  %v838 = vadd.f32 0.0, %v837
  %v839 = vpop.f32.mrb[0].mxu0
  %v840 = vadd.f32 0.0, %v839
  %v841 = vpop.f32.mrb[0].mxu0
  %v842 = vadd.f32 0.0, %v841
  %v843 = vpop.f32.mrb[0].mxu0
  %v844 = vadd.f32 0.0, %v843
  %845 = vmatprep.mubr.bf16.mxu0 0
  %846 = vmatmul.mubr.bf16.gmra.mrb[0].mxu0 %v690
  %v847 = vpop.f32.mrb[0].mxu0
  %v848 = vadd.f32 0.0, %v847
  %v849 = vpop.f32.mrb[0].mxu0
  %v850 = vadd.f32 0.0, %v849
  %v851 = vpop.f32.mrb[0].mxu0
  %v852 = vpop.f32.mrb[0].mxu0
  %853 = vdwg.mxu0
  %v854 = vld [vmem:[%s8] sm:$0x3]
  %v856 = vlaneseq
  %v857 = vshrl.u32 %v856, 7
  %v858 = vsub.s32 0, %v857
  %v859 = vrot.slane %v854, %v858
  %v860 = vlaneseq
  %v861 = vshrl.u32 %v860, 7
  %v862 = vsub.s32 1, %v861
  %v863 = vrot.slane %v854, %v862
  %v882 = vunpack.c.l.b16 %v691
  %v883 = vunpack.c.h.b16 %v691
  %v884 = vunpack.c.l.b16 %v692
  %v885 = vunpack.c.h.b16 %v692
  %v886 = vunpack.c.l.b16 %v693
  %v887 = vunpack.c.h.b16 %v693
  %v888 = vunpack.c.l.b16 %v694
  %v889 = vunpack.c.h.b16 %v694
  %v890 = vunpack.c.l.b16 %v695
  %v891 = vunpack.c.h.b16 %v695
  %v892 = vunpack.c.l.b16 %v696
  %v893 = vunpack.c.h.b16 %v696
  %v894 = vunpack.c.l.b16 %v697
  %v895 = vunpack.c.h.b16 %v697
  %v896 = vunpack.c.l.b16 %v698
  %v897 = vunpack.c.h.b16 %v698
  %v898 = vunpack.c.l.b16 %v699
  %v899 = vunpack.c.h.b16 %v699
  %v900 = vunpack.c.l.b16 %v700
  %v901 = vunpack.c.h.b16 %v700
  %v902 = vunpack.c.l.b16 %v701
  %v903 = vunpack.c.h.b16 %v701
  %v904 = vunpack.c.l.b16 %v702
  %v905 = vunpack.c.h.b16 %v702
  %v906 = vunpack.c.l.b16 %v703
  %v907 = vunpack.c.h.b16 %v703
  %v908 = vunpack.c.l.b16 %v704
  %v909 = vunpack.c.h.b16 %v704
  %v910 = vunpack.c.l.b16 %v705
  %v911 = vunpack.c.h.b16 %v705
  %v912 = vunpack.c.l.b16 %v706
  %v913 = vunpack.c.h.b16 %v706
  %v914 = vpack.c.b16 %v884, %v882
  %v915 = vpack.c.b16 %v885, %v883
  %v916 = vpack.c.b16 %v888, %v886
  %v917 = vpack.c.b16 %v889, %v887
  %v918 = vpack.c.b16 %v892, %v890
  %v919 = vpack.c.b16 %v893, %v891
  %v920 = vpack.c.b16 %v896, %v894
  %v921 = vpack.c.b16 %v897, %v895
  %v922 = vpack.c.b16 %v900, %v898
  %v923 = vpack.c.b16 %v901, %v899
  %v924 = vpack.c.b16 %v904, %v902
  %v925 = vpack.c.b16 %v905, %v903
  %v926 = vpack.c.b16 %v908, %v906
  %v927 = vpack.c.b16 %v909, %v907
  %v928 = vpack.c.b16 %v912, %v910
  %v929 = vpack.c.b16 %v913, %v911
  %946 = vmatprep.subr.bf16.mxu0 %v915
  %947 = vmatpush1.bf16.msra.mxu0 %v914
  %948 = vmatprep.subr.bf16.mxu0 %v917
  %949 = vmatpush1.bf16.msra.mxu0 %v916
  %950 = vmatprep.subr.bf16.mxu0 %v919
  %951 = vmatpush1.bf16.msra.mxu0 %v918
  %952 = vmatprep.subr.bf16.mxu0 %v921
  %953 = vmatpush1.bf16.msra.mxu0 %v920
  %954 = vmatprep.subr.bf16.mxu0 %v923
  %955 = vmatpush1.bf16.msra.mxu0 %v922
  %956 = vmatprep.subr.bf16.mxu0 %v925
  %957 = vmatpush1.bf16.msra.mxu0 %v924
  %958 = vmatprep.subr.bf16.mxu0 %v927
  %959 = vmatpush1.bf16.msra.mxu0 %v926
  %960 = vmatprep.subr.bf16.mxu0 %v929
  %961 = vmatpush1.bf16.msra.mxu0 %v928
  %962 = vmatprep.subr.bf16.mxu0 0
  %963 = vmatpush1.bf16.msra.mxu0 0
  %964 = vmatprep.subr.bf16.mxu0 0
  %965 = vmatpush1.bf16.msra.mxu0 0
  %966 = vmatprep.subr.bf16.mxu0 0
  %967 = vmatpush1.bf16.msra.mxu0 0
  %968 = vmatprep.subr.bf16.mxu0 0
  %969 = vmatpush1.bf16.msra.mxu0 0
  %970 = vmatprep.subr.bf16.mxu0 0
  %971 = vmatpush1.bf16.msra.mxu0 0
  %972 = vmatprep.subr.bf16.mxu0 0
  %973 = vmatpush1.bf16.msra.mxu0 0
  %974 = vmatprep.subr.bf16.mxu0 0
  %975 = vmatpush1.bf16.msra.mxu0 0
  %976 = vmatprep.subr.bf16.mxu0 0
  %977 = vmatpush1.bf16.msra.mxu0 0
  %978 = vmatprep.mubr.bf16.mxu0 0
  %979 = vmatmul.mubr.bf16.gmra.mrb[0].mxu0 %v689
  %v980 = vpop.f32.mrb[0].mxu0
  %v981 = vadd.f32 %v859, %v980
  %v982 = vpop.f32.mrb[0].mxu0
  %v983 = vadd.f32 %v863, %v982
  %v984 = vpop.f32.mrb[0].mxu0
  %v985 = vadd.f32 %v859, %v984
  %v986 = vpop.f32.mrb[0].mxu0
  %v987 = vadd.f32 %v863, %v986
  %988 = vmatprep.mubr.bf16.mxu0 0
  %989 = vmatmul.mubr.bf16.gmra.mrb[0].mxu0 %v690
  %v990 = vpop.f32.mrb[0].mxu0
  %v991 = vadd.f32 %v859, %v990
  %v992 = vpop.f32.mrb[0].mxu0
  %v993 = vadd.f32 %v863, %v992
  %v994 = vpop.f32.mrb[0].mxu0
  %v995 = vpop.f32.mrb[0].mxu0
  %996 = vdwg.mxu0
  %v997 = vadd.f32 %v981, %v848
  %v998 = vadd.f32 %v983, %v850
  %999 = vst [vmem:[#allocation2] sm:$0xff] %v997
  %1000 = vst [vmem:[#allocation2 + $0x8] sm:$0xff] %v998
  %v1001 = vadd.f32 %v985, %v842
  %v1002 = vadd.f32 %v987, %v844
  %1003 = vst [vmem:[%s359] sm:$0xff] %v1001
  %1004 = vst [vmem:[%s359 + $0x8] sm:$0xff] %v1002
  %v1005 = vadd.f32 %v991, %v838
  %v1006 = vadd.f32 %v993, %v840
  %1007 = vst [vmem:[%s364] sm:$0xff] %v1005
  %1008 = vst [vmem:[%s364 + $0x8] sm:$0xff] %v1006
  %v1009 = vld [vmem:[%s7] sm:$0xff]
  %v1010 = vld [vmem:[%s7 + $0x8] sm:$0xff]
  %v1011 = vld [vmem:[%s7 + $0x10] sm:$0xff]
  %v1012 = vld [vmem:[%s7 + $0x18] sm:$0xff]
  %v1013 = vld [vmem:[%s7 + $0x20] sm:$0xff]
  %v1014 = vld [vmem:[%s7 + $0x28] sm:$0xff]
  %v1015 = vld [vmem:[%s7 + $0x30] sm:$0xff]
  %v1016 = vld [vmem:[%s7 + $0x38] sm:$0xff]
  %v1017 = vld [vmem:[%s7 + $0x40] sm:$0xff]
  %v1018 = vld [vmem:[%s7 + $0x48] sm:$0xff]
  %v1019 = vld [vmem:[%s7 + $0x50] sm:$0xff]
  %v1020 = vld [vmem:[%s7 + $0x58] sm:$0xff]
  %v1021 = vld [vmem:[%s7 + $0x60] sm:$0xff]
  %v1022 = vld [vmem:[%s7 + $0x68] sm:$0xff]
  %v1023 = vld [vmem:[%s7 + $0x70] sm:$0xff]
  %v1024 = vld [vmem:[%s7 + $0x78] sm:$0xff]
  %1025 = vst [vmem:[#allocation4] sm:$0xff] 0.0
  %1026 = vst [vmem:[#allocation5] sm:$0xff] 0.0
  %v1027 = vld [vmem:[#allocation2] sm:$0xff]
  %v1028 = vld [vmem:[#allocation2 + $0x8] sm:$0xff]
  %v1029 = vld [vmem:[#allocation4] sm:$0xff]
  %v1030 = vpack.c.bf16 %v1029, %v1029
  %v1047 = vunpack.c.l.b16 %v1009
  %v1048 = vunpack.c.h.b16 %v1009
  %v1049 = vunpack.c.l.b16 %v1010
  %v1050 = vunpack.c.h.b16 %v1010
  %v1051 = vunpack.c.l.b16 %v1011
  %v1052 = vunpack.c.h.b16 %v1011
  %v1053 = vunpack.c.l.b16 %v1012
  %v1054 = vunpack.c.h.b16 %v1012
  %v1055 = vunpack.c.l.b16 %v1013
  %v1056 = vunpack.c.h.b16 %v1013
  %v1057 = vunpack.c.l.b16 %v1014
  %v1058 = vunpack.c.h.b16 %v1014
  %v1059 = vunpack.c.l.b16 %v1015
  %v1060 = vunpack.c.h.b16 %v1015
  %v1061 = vunpack.c.l.b16 %v1016
  %v1062 = vunpack.c.h.b16 %v1016
  %v1063 = vunpack.c.l.b16 %v1017
  %v1064 = vunpack.c.h.b16 %v1017
  %v1065 = vunpack.c.l.b16 %v1018
  %v1066 = vunpack.c.h.b16 %v1018
  %v1067 = vunpack.c.l.b16 %v1019
  %v1068 = vunpack.c.h.b16 %v1019
  %v1069 = vunpack.c.l.b16 %v1020
  %v1070 = vunpack.c.h.b16 %v1020
  %v1071 = vunpack.c.l.b16 %v1021
  %v1072 = vunpack.c.h.b16 %v1021
  %v1073 = vunpack.c.l.b16 %v1022
  %v1074 = vunpack.c.h.b16 %v1022
  %v1075 = vunpack.c.l.b16 %v1023
  %v1076 = vunpack.c.h.b16 %v1023
  %v1077 = vunpack.c.l.b16 %v1024
  %v1078 = vunpack.c.h.b16 %v1024
  %v1079 = vpack.c.b16 %v1049, %v1047
  %v1080 = vpack.c.b16 %v1050, %v1048
  %v1081 = vpack.c.b16 %v1053, %v1051
  %v1082 = vpack.c.b16 %v1054, %v1052
  %v1083 = vpack.c.b16 %v1057, %v1055
  %v1084 = vpack.c.b16 %v1058, %v1056
  %v1085 = vpack.c.b16 %v1061, %v1059
  %v1086 = vpack.c.b16 %v1062, %v1060
  %v1087 = vpack.c.b16 %v1065, %v1063
  %v1088 = vpack.c.b16 %v1066, %v1064
  %v1089 = vpack.c.b16 %v1069, %v1067
  %v1090 = vpack.c.b16 %v1070, %v1068
  %v1091 = vpack.c.b16 %v1073, %v1071
  %v1092 = vpack.c.b16 %v1074, %v1072
  %v1093 = vpack.c.b16 %v1077, %v1075
  %v1094 = vpack.c.b16 %v1078, %v1076
  %1111 = vmatprep.subr.bf16.mxu0 %v1080
  %1112 = vmatpush1.bf16.msra.mxu0 %v1079
  %1113 = vmatprep.subr.bf16.mxu0 %v1082
  %1114 = vmatpush1.bf16.msra.mxu0 %v1081
  %1115 = vmatprep.subr.bf16.mxu0 %v1084
  %1116 = vmatpush1.bf16.msra.mxu0 %v1083
  %1117 = vmatprep.subr.bf16.mxu0 %v1086
  %1118 = vmatpush1.bf16.msra.mxu0 %v1085
  %1119 = vmatprep.subr.bf16.mxu0 %v1088
  %1120 = vmatpush1.bf16.msra.mxu0 %v1087
  %1121 = vmatprep.subr.bf16.mxu0 %v1090
  %1122 = vmatpush1.bf16.msra.mxu0 %v1089
  %1123 = vmatprep.subr.bf16.mxu0 %v1092
  %1124 = vmatpush1.bf16.msra.mxu0 %v1091
  %1125 = vmatprep.subr.bf16.mxu0 %v1094
  %1126 = vmatpush1.bf16.msra.mxu0 %v1093
  %1127 = vmatprep.subr.bf16.mxu0 0
  %1128 = vmatpush1.bf16.msra.mxu0 0
  %1129 = vmatprep.subr.bf16.mxu0 0
  %1130 = vmatpush1.bf16.msra.mxu0 0
  %1131 = vmatprep.subr.bf16.mxu0 0
  %1132 = vmatpush1.bf16.msra.mxu0 0
  %1133 = vmatprep.subr.bf16.mxu0 0
  %1134 = vmatpush1.bf16.msra.mxu0 0
  %1135 = vmatprep.subr.bf16.mxu0 0
  %1136 = vmatpush1.bf16.msra.mxu0 0
  %1137 = vmatprep.subr.bf16.mxu0 0
  %1138 = vmatpush1.bf16.msra.mxu0 0
  %1139 = vmatprep.subr.bf16.mxu0 0
  %1140 = vmatpush1.bf16.msra.mxu0 0
  %1141 = vmatprep.subr.bf16.mxu0 0
  %1142 = vmatpush1.bf16.msra.mxu0 0
  %1143 = vmatprep.mubr.bf16.mxu0 0
  %1144 = vmatmul.mubr.bf16.gmra.mrb[0].mxu0 %v1030
  %v1145 = vpop.f32.mrb[0].mxu0
  %v1146 = vadd.f32 0.0, %v1145
  %v1147 = vpop.f32.mrb[0].mxu0
  %v1148 = vadd.f32 0.0, %v1147
  %v1149 = vpop.f32.mrb[0].mxu0
  %v1150 = vpop.f32.mrb[0].mxu0
  %1151 = vdwg.mxu0
  %v1152 = vadd.f32 %v1027, %v1146
  %v1153 = vadd.f32 %v1028, %v1148
  %v1154 = vxor.u32 %v1152, 2147483648
  %v1155 = vmul.f32 %v1154, 1.442695
  %v1156 = vpow.pop %v1155
  %v1157 = vadd.f32 %v1156, 1.0
  %v1158 = vrcp.pop %v1157
  %v1159 = vmul.f32 1.0, %v1158
  %v1160 = vtanh.pop %v1153
  %v1161 = vxor.u32 %v1153, 2147483648
  %v1162 = vmul.f32 %v1161, 1.442695
  %v1163 = vpow.pop %v1162
  %v1164 = vadd.f32 %v1163, 1.0
  %v1165 = vrcp.pop %v1164
  %v1166 = vmul.f32 1.0, %v1165
  %1167 = vrot.lane.b32.xlu0 %v1159, 64
  %v1168 = vpop.permute.xlu0 %1167
  %1169 = vrot.lane.b32.xlu0 %v1166, 64
  %v1170 = vpop.permute.xlu0 %1169
  %v1171 = vld [vmem:[#allocation5] sm:$0xff]
  %v1172 = vmul.f32 %v1168, %v1171
  %v1173 = vmul.f32 %v1159, %v1160
  %v1174 = vadd.f32 %v1172, %v1173
  %v1175 = vtanh.pop %v1174
  %v1176 = vmul.f32 %v1170, %v1175
  %1177 = vst [vmem:[#allocation4] sm:$0xff] %v1176
  %1178 = vst [vmem:[#allocation5] sm:$0xff] %v1174
  %1179 = vst [vmem:[#allocation3] sm:$0xff] %v1176
  %v1180 = vld [vmem:[%s359] sm:$0xff]
  %v1181 = vld [vmem:[%s359 + $0x8] sm:$0xff]
  %v1182 = vld [vmem:[#allocation4] sm:$0xff]
  %v1183 = vpack.c.bf16 %v1182, %v1182
  %1184 = vmatprep.subr.bf16.mxu0 %v1080
  %1185 = vmatpush1.bf16.msra.mxu0 %v1079
  %1186 = vmatprep.subr.bf16.mxu0 %v1082
  %1187 = vmatpush1.bf16.msra.mxu0 %v1081
  %1188 = vmatprep.subr.bf16.mxu0 %v1084
  %1189 = vmatpush1.bf16.msra.mxu0 %v1083
  %1190 = vmatprep.subr.bf16.mxu0 %v1086
  %1191 = vmatpush1.bf16.msra.mxu0 %v1085
  %1192 = vmatprep.subr.bf16.mxu0 %v1088
  %1193 = vmatpush1.bf16.msra.mxu0 %v1087
  %1194 = vmatprep.subr.bf16.mxu0 %v1090
  %1195 = vmatpush1.bf16.msra.mxu0 %v1089
  %1196 = vmatprep.subr.bf16.mxu0 %v1092
  %1197 = vmatpush1.bf16.msra.mxu0 %v1091
  %1198 = vmatprep.subr.bf16.mxu0 %v1094
  %1199 = vmatpush1.bf16.msra.mxu0 %v1093
  %1200 = vmatprep.subr.bf16.mxu0 0
  %1201 = vmatpush1.bf16.msra.mxu0 0
  %1202 = vmatprep.subr.bf16.mxu0 0
  %1203 = vmatpush1.bf16.msra.mxu0 0
  %1204 = vmatprep.subr.bf16.mxu0 0
  %1205 = vmatpush1.bf16.msra.mxu0 0
  %1206 = vmatprep.subr.bf16.mxu0 0
  %1207 = vmatpush1.bf16.msra.mxu0 0
  %1208 = vmatprep.subr.bf16.mxu0 0
  %1209 = vmatpush1.bf16.msra.mxu0 0
  %1210 = vmatprep.subr.bf16.mxu0 0
  %1211 = vmatpush1.bf16.msra.mxu0 0
  %1212 = vmatprep.subr.bf16.mxu0 0
  %1213 = vmatpush1.bf16.msra.mxu0 0
  %1214 = vmatprep.subr.bf16.mxu0 0
  %1215 = vmatpush1.bf16.msra.mxu0 0
  %1216 = vmatprep.mubr.bf16.mxu0 0
  %1217 = vmatmul.mubr.bf16.gmra.mrb[0].mxu0 %v1183
  %v1218 = vpop.f32.mrb[0].mxu0
  %v1219 = vadd.f32 0.0, %v1218
  %v1220 = vpop.f32.mrb[0].mxu0
  %v1221 = vadd.f32 0.0, %v1220
  %v1222 = vpop.f32.mrb[0].mxu0
  %v1223 = vpop.f32.mrb[0].mxu0
  %1224 = vdwg.mxu0
  %v1225 = vadd.f32 %v1180, %v1219
  %v1226 = vadd.f32 %v1181, %v1221
  %v1227 = vxor.u32 %v1225, 2147483648
  %v1228 = vmul.f32 %v1227, 1.442695
  %v1229 = vpow.pop %v1228
  %v1230 = vadd.f32 %v1229, 1.0
  %v1231 = vrcp.pop %v1230
  %v1232 = vmul.f32 1.0, %v1231
  %v1233 = vtanh.pop %v1226
  %v1234 = vxor.u32 %v1226, 2147483648
  %v1235 = vmul.f32 %v1234, 1.442695
  %v1236 = vpow.pop %v1235
  %v1237 = vadd.f32 %v1236, 1.0
  %v1238 = vrcp.pop %v1237
  %v1239 = vmul.f32 1.0, %v1238
  %1240 = vrot.lane.b32.xlu0 %v1232, 64
  %v1241 = vpop.permute.xlu0 %1240
  %1242 = vrot.lane.b32.xlu0 %v1239, 64
  %v1243 = vpop.permute.xlu0 %1242
  %v1244 = vld [vmem:[#allocation5] sm:$0xff]
  %v1245 = vmul.f32 %v1241, %v1244
  %v1246 = vmul.f32 %v1232, %v1233
  %v1247 = vadd.f32 %v1245, %v1246
  %v1248 = vtanh.pop %v1247
  %v1249 = vmul.f32 %v1243, %v1248
  %1250 = vst [vmem:[#allocation4] sm:$0xff] %v1249
  %1251 = vst [vmem:[#allocation5] sm:$0xff] %v1247
  %1252 = vst [vmem:[%s610] sm:$0xff] %v1249
  %v1253 = vld [vmem:[%s364] sm:$0xff]
  %v1254 = vld [vmem:[%s364 + $0x8] sm:$0xff]
  %v1255 = vld [vmem:[#allocation4] sm:$0xff]
  %v1256 = vpack.c.bf16 %v1255, %v1255
  %1257 = vmatprep.subr.bf16.mxu0 %v1080
  %1258 = vmatpush1.bf16.msra.mxu0 %v1079
  %1259 = vmatprep.subr.bf16.mxu0 %v1082
  %1260 = vmatpush1.bf16.msra.mxu0 %v1081
  %1261 = vmatprep.subr.bf16.mxu0 %v1084
  %1262 = vmatpush1.bf16.msra.mxu0 %v1083
  %1263 = vmatprep.subr.bf16.mxu0 %v1086
  %1264 = vmatpush1.bf16.msra.mxu0 %v1085
  %1265 = vmatprep.subr.bf16.mxu0 %v1088
  %1266 = vmatpush1.bf16.msra.mxu0 %v1087
  %1267 = vmatprep.subr.bf16.mxu0 %v1090
  %1268 = vmatpush1.bf16.msra.mxu0 %v1089
  %1269 = vmatprep.subr.bf16.mxu0 %v1092
  %1270 = vmatpush1.bf16.msra.mxu0 %v1091
  %1271 = vmatprep.subr.bf16.mxu0 %v1094
  %1272 = vmatpush1.bf16.msra.mxu0 %v1093
  %1273 = vmatprep.subr.bf16.mxu0 0
  %1274 = vmatpush1.bf16.msra.mxu0 0
  %1275 = vmatprep.subr.bf16.mxu0 0
  %1276 = vmatpush1.bf16.msra.mxu0 0
  %1277 = vmatprep.subr.bf16.mxu0 0
  %1278 = vmatpush1.bf16.msra.mxu0 0
  %1279 = vmatprep.subr.bf16.mxu0 0
  %1280 = vmatpush1.bf16.msra.mxu0 0
  %1281 = vmatprep.subr.bf16.mxu0 0
  %1282 = vmatpush1.bf16.msra.mxu0 0
  %1283 = vmatprep.subr.bf16.mxu0 0
  %1284 = vmatpush1.bf16.msra.mxu0 0
  %1285 = vmatprep.subr.bf16.mxu0 0
  %1286 = vmatpush1.bf16.msra.mxu0 0
  %1287 = vmatprep.subr.bf16.mxu0 0
  %1288 = vmatpush1.bf16.msra.mxu0 0
  %1289 = vmatprep.mubr.bf16.mxu0 0
  %1290 = vmatmul.mubr.bf16.gmra.mrb[0].mxu0 %v1256
  %v1291 = vpop.f32.mrb[0].mxu0
  %v1292 = vadd.f32 0.0, %v1291
  %v1293 = vpop.f32.mrb[0].mxu0
  %v1294 = vadd.f32 0.0, %v1293
  %v1295 = vpop.f32.mrb[0].mxu0
  %v1296 = vpop.f32.mrb[0].mxu0
  %1297 = vdwg.mxu0
  %v1298 = vadd.f32 %v1253, %v1292
  %v1299 = vadd.f32 %v1254, %v1294
  %v1300 = vxor.u32 %v1298, 2147483648
  %v1301 = vmul.f32 %v1300, 1.442695
  %v1302 = vpow.pop %v1301
  %v1303 = vadd.f32 %v1302, 1.0
  %v1304 = vrcp.pop %v1303
  %v1305 = vmul.f32 1.0, %v1304
  %v1306 = vtanh.pop %v1299
  %v1307 = vxor.u32 %v1299, 2147483648
  %v1308 = vmul.f32 %v1307, 1.442695
  %v1309 = vpow.pop %v1308
  %v1310 = vadd.f32 %v1309, 1.0
  %v1311 = vrcp.pop %v1310
  %v1312 = vmul.f32 1.0, %v1311
  %1313 = vrot.lane.b32.xlu0 %v1305, 64
  %v1314 = vpop.permute.xlu0 %1313
  %1315 = vrot.lane.b32.xlu0 %v1312, 64
  %v1316 = vpop.permute.xlu0 %1315
  %v1317 = vld [vmem:[#allocation5] sm:$0xff]
  %v1318 = vmul.f32 %v1314, %v1317
  %v1319 = vmul.f32 %v1305, %v1306
  %v1320 = vadd.f32 %v1318, %v1319
  %v1321 = vtanh.pop %v1320
  %v1322 = vmul.f32 %v1316, %v1321
  %1323 = vst [vmem:[#allocation4] sm:$0xff] %v1322
  %1324 = vst [vmem:[#allocation5] sm:$0xff] %v1320
  %1325 = vst [vmem:[%s684] sm:$0xff] %v1322
  %v1326 = vld [vmem:[#allocation3] sm:$0xff]
  %v1327 = vld [vmem:[#allocation3 + $0x8] sm:$0xff]
  %v1328 = vld [vmem:[#allocation3 + $0x10] sm:$0xff]
  %v1329 = vpack.c.bf16 %v1327, %v1326
  %v1330 = vpack.c.bf16 %v1328, %v1328
  %v1331 = vld [vmem:[%s9] sm:$0xf]
  %v1332 = vld [vmem:[%s9 + $0x4] sm:$0xf]
  %v1333 = vld [vmem:[%s9 + $0x8] sm:$0xf]
  %v1334 = vld [vmem:[%s9 + $0xc] sm:$0xf]
  %v1335 = vld [vmem:[%s9 + $0x10] sm:$0xf]
  %v1336 = vld [vmem:[%s9 + $0x14] sm:$0xf]
  %v1337 = vld [vmem:[%s9 + $0x18] sm:$0xf]
  %v1338 = vld [vmem:[%s9 + $0x1c] sm:$0xf]
  %v1339 = vld [vmem:[%s9 + $0x20] sm:$0xf]
  %v1340 = vld [vmem:[%s9 + $0x24] sm:$0xf]
  %v1341 = vld [vmem:[%s9 + $0x28] sm:$0xf]
  %v1342 = vld [vmem:[%s9 + $0x2c] sm:$0xf]
  %v1343 = vld [vmem:[%s9 + $0x30] sm:$0xf]
  %v1344 = vld [vmem:[%s9 + $0x34] sm:$0xf]
  %v1345 = vld [vmem:[%s9 + $0x38] sm:$0xf]
  %v1346 = vld [vmem:[%s9 + $0x3c] sm:$0xf]
  %v1363 = vunpack.c.l.b16 %v1331
  %v1364 = vunpack.c.l.b16 %v1332
  %v1365 = vunpack.c.l.b16 %v1333
  %v1366 = vunpack.c.l.b16 %v1334
  %v1367 = vunpack.c.l.b16 %v1335
  %v1368 = vunpack.c.l.b16 %v1336
  %v1369 = vunpack.c.l.b16 %v1337
  %v1370 = vunpack.c.l.b16 %v1338
  %v1371 = vunpack.c.l.b16 %v1339
  %v1372 = vunpack.c.l.b16 %v1340
  %v1373 = vunpack.c.l.b16 %v1341
  %v1374 = vunpack.c.l.b16 %v1342
  %v1375 = vunpack.c.l.b16 %v1343
  %v1376 = vunpack.c.l.b16 %v1344
  %v1377 = vunpack.c.l.b16 %v1345
  %v1378 = vunpack.c.l.b16 %v1346
  %v1379 = vpack.c.b16 %v1364, %v1363
  %v1380 = vpack.c.b16 %v1366, %v1365
  %v1381 = vpack.c.b16 %v1368, %v1367
  %v1382 = vpack.c.b16 %v1370, %v1369
  %v1383 = vpack.c.b16 %v1372, %v1371
  %v1384 = vpack.c.b16 %v1374, %v1373
  %v1385 = vpack.c.b16 %v1376, %v1375
  %v1386 = vpack.c.b16 %v1378, %v1377
  %1395 = vmatprep.subr.bf16.mxu0 0
  %1396 = vmatpush1.bf16.msra.mxu0 %v1379
  %1397 = vmatprep.subr.bf16.mxu0 0
  %1398 = vmatpush1.bf16.msra.mxu0 %v1380
  %1399 = vmatprep.subr.bf16.mxu0 0
  %1400 = vmatpush1.bf16.msra.mxu0 %v1381
  %1401 = vmatprep.subr.bf16.mxu0 0
  %1402 = vmatpush1.bf16.msra.mxu0 %v1382
  %1403 = vmatprep.subr.bf16.mxu0 0
  %1404 = vmatpush1.bf16.msra.mxu0 %v1383
  %1405 = vmatprep.subr.bf16.mxu0 0
  %1406 = vmatpush1.bf16.msra.mxu0 %v1384
  %1407 = vmatprep.subr.bf16.mxu0 0
  %1408 = vmatpush1.bf16.msra.mxu0 %v1385
  %1409 = vmatprep.subr.bf16.mxu0 0
  %1410 = vmatpush1.bf16.msra.mxu0 %v1386
  %1411 = vmatprep.subr.bf16.mxu0 0
  %1412 = vmatpush1.bf16.msra.mxu0 0
  %1413 = vmatprep.subr.bf16.mxu0 0
  %1414 = vmatpush1.bf16.msra.mxu0 0
  %1415 = vmatprep.subr.bf16.mxu0 0
  %1416 = vmatpush1.bf16.msra.mxu0 0
  %1417 = vmatprep.subr.bf16.mxu0 0
  %1418 = vmatpush1.bf16.msra.mxu0 0
  %1419 = vmatprep.subr.bf16.mxu0 0
  %1420 = vmatpush1.bf16.msra.mxu0 0
  %1421 = vmatprep.subr.bf16.mxu0 0
  %1422 = vmatpush1.bf16.msra.mxu0 0
  %1423 = vmatprep.subr.bf16.mxu0 0
  %1424 = vmatpush1.bf16.msra.mxu0 0
  %1425 = vmatprep.subr.bf16.mxu0 0
  %1426 = vmatpush1.bf16.msra.mxu0 0
  %1427 = vmatprep.mubr.bf16.mxu0 0
  %1428 = vmatmul.mubr.bf16.gmra.mrb[0].mxu0 %v1329
  %v1429 = vpop.f32.mrb[0].mxu0
  %v1430 = vadd.f32 0.0, %v1429
  %v1431 = vpop.f32.mrb[0].mxu0
  %v1432 = vpop.f32.mrb[0].mxu0
  %v1433 = vadd.f32 0.0, %v1432
  %v1434 = vpop.f32.mrb[0].mxu0
  %1435 = vmatprep.mubr.bf16.mxu0 0
  %1436 = vmatmul.mubr.bf16.gmra.mrb[0].mxu0 %v1330
  %v1437 = vpop.f32.mrb[0].mxu0
  %v1438 = vadd.f32 0.0, %v1437
  %v1439 = vpop.f32.mrb[0].mxu0
  %v1440 = vpop.f32.mrb[0].mxu0
  %v1441 = vpop.f32.mrb[0].mxu0
  %1442 = vdwg.mxu0
  %v1443 = vld [vmem:[%s10] sm:$0xf]
  %v1444 = vld [vmem:[%s10 + $0x4] sm:$0xf]
  %v1445 = vld [vmem:[%s10 + $0x8] sm:$0xf]
  %v1446 = vld [vmem:[%s10 + $0xc] sm:$0xf]
  %v1447 = vld [vmem:[%s10 + $0x10] sm:$0xf]
  %v1448 = vld [vmem:[%s10 + $0x14] sm:$0xf]
  %v1449 = vld [vmem:[%s10 + $0x18] sm:$0xf]
  %v1450 = vld [vmem:[%s10 + $0x1c] sm:$0xf]
  %v1451 = vld [vmem:[%s10 + $0x20] sm:$0xf]
  %v1452 = vld [vmem:[%s10 + $0x24] sm:$0xf]
  %v1453 = vld [vmem:[%s10 + $0x28] sm:$0xf]
  %v1454 = vld [vmem:[%s10 + $0x2c] sm:$0xf]
  %v1455 = vld [vmem:[%s10 + $0x30] sm:$0xf]
  %v1456 = vld [vmem:[%s10 + $0x34] sm:$0xf]
  %v1457 = vld [vmem:[%s10 + $0x38] sm:$0xf]
  %v1458 = vld [vmem:[%s10 + $0x3c] sm:$0xf]
  %v1475 = vunpack.c.l.b16 %v1443
  %v1476 = vunpack.c.l.b16 %v1444
  %v1477 = vunpack.c.l.b16 %v1445
  %v1478 = vunpack.c.l.b16 %v1446
  %v1479 = vunpack.c.l.b16 %v1447
  %v1480 = vunpack.c.l.b16 %v1448
  %v1481 = vunpack.c.l.b16 %v1449
  %v1482 = vunpack.c.l.b16 %v1450
  %v1483 = vunpack.c.l.b16 %v1451
  %v1484 = vunpack.c.l.b16 %v1452
  %v1485 = vunpack.c.l.b16 %v1453
  %v1486 = vunpack.c.l.b16 %v1454
  %v1487 = vunpack.c.l.b16 %v1455
  %v1488 = vunpack.c.l.b16 %v1456
  %v1489 = vunpack.c.l.b16 %v1457
  %v1490 = vunpack.c.l.b16 %v1458
  %v1491 = vpack.c.b16 %v1476, %v1475
  %v1492 = vpack.c.b16 %v1478, %v1477
  %v1493 = vpack.c.b16 %v1480, %v1479
  %v1494 = vpack.c.b16 %v1482, %v1481
  %v1495 = vpack.c.b16 %v1484, %v1483
  %v1496 = vpack.c.b16 %v1486, %v1485
  %v1497 = vpack.c.b16 %v1488, %v1487
  %v1498 = vpack.c.b16 %v1490, %v1489
  %1507 = vmatprep.subr.bf16.mxu0 0
  %1508 = vmatpush1.bf16.msra.mxu0 %v1491
  %1509 = vmatprep.subr.bf16.mxu0 0
  %1510 = vmatpush1.bf16.msra.mxu0 %v1492
  %1511 = vmatprep.subr.bf16.mxu0 0
  %1512 = vmatpush1.bf16.msra.mxu0 %v1493
  %1513 = vmatprep.subr.bf16.mxu0 0
  %1514 = vmatpush1.bf16.msra.mxu0 %v1494
  %1515 = vmatprep.subr.bf16.mxu0 0
  %1516 = vmatpush1.bf16.msra.mxu0 %v1495
  %1517 = vmatprep.subr.bf16.mxu0 0
  %1518 = vmatpush1.bf16.msra.mxu0 %v1496
  %1519 = vmatprep.subr.bf16.mxu0 0
  %1520 = vmatpush1.bf16.msra.mxu0 %v1497
  %1521 = vmatprep.subr.bf16.mxu0 0
  %1522 = vmatpush1.bf16.msra.mxu0 %v1498
  %1523 = vmatprep.subr.bf16.mxu0 0
  %1524 = vmatpush1.bf16.msra.mxu0 0
  %1525 = vmatprep.subr.bf16.mxu0 0
  %1526 = vmatpush1.bf16.msra.mxu0 0
  %1527 = vmatprep.subr.bf16.mxu0 0
  %1528 = vmatpush1.bf16.msra.mxu0 0
  %1529 = vmatprep.subr.bf16.mxu0 0
  %1530 = vmatpush1.bf16.msra.mxu0 0
  %1531 = vmatprep.subr.bf16.mxu0 0
  %1532 = vmatpush1.bf16.msra.mxu0 0
  %1533 = vmatprep.subr.bf16.mxu0 0
  %1534 = vmatpush1.bf16.msra.mxu0 0
  %1535 = vmatprep.subr.bf16.mxu0 0
  %1536 = vmatpush1.bf16.msra.mxu0 0
  %1537 = vmatprep.subr.bf16.mxu0 0
  %1538 = vmatpush1.bf16.msra.mxu0 0
  %1539 = vmatprep.mubr.bf16.mxu0 0
  %1540 = vmatmul.mubr.bf16.gmra.mrb[0].mxu0 %v1329
  %v1541 = vpop.f32.mrb[0].mxu0
  %v1542 = vadd.f32 0.0, %v1541
  %v1543 = vpop.f32.mrb[0].mxu0
  %v1544 = vpop.f32.mrb[0].mxu0
  %v1545 = vadd.f32 0.0, %v1544
  %v1546 = vpop.f32.mrb[0].mxu0
  %1547 = vmatprep.mubr.bf16.mxu0 0
  %1548 = vmatmul.mubr.bf16.gmra.mrb[0].mxu0 %v1330
  %v1549 = vpop.f32.mrb[0].mxu0
  %v1550 = vadd.f32 0.0, %v1549
  %v1551 = vpop.f32.mrb[0].mxu0
  %v1552 = vpop.f32.mrb[0].mxu0
  %v1553 = vpop.f32.mrb[0].mxu0
  %1554 = vdwg.mxu0
  %v1555 = vld [vmem:[%s11] sm:$0x1]
  %v1556 = vadd.f32 %v1430, %v1550
  %v1558 = vlaneseq
  %v1559 = vshrl.u32 %v1558, 7
  %v1560 = vsub.s32 0, %v1559
  %v1561 = vrot.slane %v1555, %v1560
  %v1563 = vadd.f32 %v1556, %v1561
  %1564 = vst [vmem:[%s12] sm:$0xff] %v1563
  %v1565 = vadd.f32 %v1433, %v1545
  %v1566 = vadd.f32 %v1565, %v1561
  %s1567 = scalar_lea.vmem %s12, 8
  %1568 = vst [vmem:[%s1567] sm:$0xff] %v1566
  %v1569 = vadd.f32 %v1438, %v1542
  %v1570 = vadd.f32 %v1569, %v1561
  %s1571 = scalar_lea.vmem %s12, 16
  %1572 = vst [vmem:[%s1571] sm:$0xff] %v1570
  // Predicated region
  $region50: #{bilstm_forward.3} parent=0 // pred_check
    _
  $region51: #{bilstm_forward.3} parent=0 // pred_check_branch
    %1574 = sbr.rel (0) target = $region53
  $region52: #{bilstm_forward.3} parent=0 // pred_region
    _
  $region53: #{bilstm_forward.3} parent=0 // pred_fallthru
    _
  // Predicated region
  $region54: #{bilstm_forward.3} parent=0 // pred_check
    _
  $region55: #{bilstm_forward.3} parent=0 // pred_check_branch
    %1576 = sbr.rel (0) target = $region57
  $region56: #{bilstm_forward.3} parent=0 // pred_region
    _
  $region57: #{bilstm_forward.3} parent=0 // pred_fallthru
    _

// kernel: bilstm_forward.2
$region0: #{bilstm_forward.2}
  #allocation0 [shape = 'u32[]', space=smem, size = 0x4, offset = 0x4, fixed_abs, tag = 'smem constant byte address 0x4 - core index']
  #allocation1 [shape = 'u32[144,128]{1,0:T(1,128)}', space=vmem, size = 0x12000, scoped, tag = 'internal scratch']
  #allocation2 [shape = 'f32[8,8,256]{2,1,0:T(8,128)}', space=vmem, size = 0x10000, scoped, tag = 'scratch operand']
  #allocation3 [shape = 'f32[8,8,128]{2,1,0:T(8,128)}', space=vmem, size = 0x8000, scoped, tag = 'scratch operand']
  #allocation4 [shape = 'f32[8,128]{1,0:T(8,128)}', space=vmem, size = 0x1000, scoped, tag = 'scratch operand']
  #allocation5 [shape = 'f32[8,128]{1,0:T(8,128)}', space=vmem, size = 0x1000, scoped, tag = 'scratch operand']
  %s0 = inlined_call_operand.vmem [shape: f32[8,8,128], index: 0, kind: input, shape index: {}]
  %s1 = inlined_call_operand.vmem [shape: bf16[128,256], index: 1, kind: input, shape index: {}]
  %s2 = inlined_call_operand.vmem [shape: bf16[128,256], index: 2, kind: input, shape index: {}]
  %s3 = inlined_call_operand.vmem [shape: bf16[128,256], index: 3, kind: input, shape index: {}]
  %s4 = inlined_call_operand.vmem [shape: f32[1,256], index: 4, kind: input, shape index: {}]
  %s5 = inlined_call_operand.vmem [shape: bf16[128,256], index: 5, kind: input, shape index: {}]
  %s6 = inlined_call_operand.vmem [shape: bf16[128,256], index: 6, kind: input, shape index: {}]
  %s7 = inlined_call_operand.vmem [shape: bf16[128,256], index: 7, kind: input, shape index: {}]
  %s8 = inlined_call_operand.vmem [shape: f32[1,256], index: 8, kind: input, shape index: {}]
  %s9 = inlined_call_operand.vmem [shape: f32[8,128], index: 9, kind: output, shape index: {}]
  %s10 = sld [smem:[#allocation0]]
  $region46: #{bilstm_forward.2} parent=0
    _
  %s12 = ssub.s32 1, %s10
  %s13 = scalar_select 0, %s12, %s10
  // Predicated region
  $region2: #{bilstm_forward.2} parent=0 // pred_check
    _
  $region3: #{bilstm_forward.2} parent=0 // pred_check_branch
    %15 = sbr.rel (0) target = $region5
  $region4: #{bilstm_forward.2} parent=0 // pred_region
    _
  $region5: #{bilstm_forward.2} parent=0 // pred_fallthru
    _
  // Predicated region
  $region6: #{bilstm_forward.2} parent=0 // pred_check
    _
  $region7: #{bilstm_forward.2} parent=0 // pred_check_branch
    %17 = sbr.rel (0) target = $region9
  $region8: #{bilstm_forward.2} parent=0 // pred_region
    _
  $region9: #{bilstm_forward.2} parent=0 // pred_fallthru
    _
  // Predicated region
  $region10: #{bilstm_forward.2} parent=0 // pred_check
    _
  $region11: #{bilstm_forward.2} parent=0 // pred_check_branch
    %19 = sbr.rel (0) target = $region13
  $region12: #{bilstm_forward.2} parent=0 // pred_region
    _
  $region13: #{bilstm_forward.2} parent=0 // pred_fallthru
    _
  // Predicated region
  $region14: #{bilstm_forward.2} parent=0 // pred_check
    _
  $region15: #{bilstm_forward.2} parent=0 // pred_check_branch
    %21 = sbr.rel (0) target = $region17
  $region16: #{bilstm_forward.2} parent=0 // pred_region
    _
  $region17: #{bilstm_forward.2} parent=0 // pred_fallthru
    _
  // Predicated region
  $region18: #{bilstm_forward.2} parent=0 // pred_check
    _
  $region19: #{bilstm_forward.2} parent=0 // pred_check_branch
    %23 = sbr.rel (0) target = $region21
  $region20: #{bilstm_forward.2} parent=0 // pred_region
    _
  $region21: #{bilstm_forward.2} parent=0 // pred_fallthru
    _
  // Predicated region
  $region22: #{bilstm_forward.2} parent=0 // pred_check
    _
  $region23: #{bilstm_forward.2} parent=0 // pred_check_branch
    %25 = sbr.rel (0) target = $region25
  $region24: #{bilstm_forward.2} parent=0 // pred_region
    _
  $region25: #{bilstm_forward.2} parent=0 // pred_fallthru
    _
  // Predicated region
  $region26: #{bilstm_forward.2} parent=0 // pred_check
    _
  $region27: #{bilstm_forward.2} parent=0 // pred_check_branch
    %27 = sbr.rel (0) target = $region29
  $region28: #{bilstm_forward.2} parent=0 // pred_region
    _
  $region29: #{bilstm_forward.2} parent=0 // pred_fallthru
    _
  // Predicated region
  $region30: #{bilstm_forward.2} parent=0 // pred_check
    _
  $region31: #{bilstm_forward.2} parent=0 // pred_check_branch
    %29 = sbr.rel (0) target = $region33
  $region32: #{bilstm_forward.2} parent=0 // pred_region
    _
  $region33: #{bilstm_forward.2} parent=0 // pred_fallthru
    _
  // Predicated region
  $region34: #{bilstm_forward.2} parent=0 // pred_check
    _
  $region35: #{bilstm_forward.2} parent=0 // pred_check_branch
    %31 = sbr.rel (0) target = $region37
  $region36: #{bilstm_forward.2} parent=0 // pred_region
    _
  $region37: #{bilstm_forward.2} parent=0 // pred_fallthru
    _
  %v33 = vld [vmem:[%s0] sm:$0xff]
  %v34 = vld [vmem:[%s0 + $0x8] sm:$0xff]
  %v35 = vld [vmem:[%s0 + $0x10] sm:$0xff]
  %v36 = vld [vmem:[%s0 + $0x18] sm:$0xff]
  %v37 = vld [vmem:[%s0 + $0x20] sm:$0xff]
  %v38 = vld [vmem:[%s0 + $0x28] sm:$0xff]
  %v39 = vld [vmem:[%s0 + $0x30] sm:$0xff]
  %v40 = vld [vmem:[%s0 + $0x38] sm:$0xff]
  %v41 = vpack.c.bf16 %v34, %v33
  %v42 = vpack.c.bf16 %v36, %v35
  %v43 = vpack.c.bf16 %v38, %v37
  %v44 = vpack.c.bf16 %v40, %v39
  %v45 = vld [vmem:[%s1] sm:$0xff]
  %v46 = vld [vmem:[%s1 + $0x8] sm:$0xff]
  %v47 = vld [vmem:[%s1 + $0x10] sm:$0xff]
  %v48 = vld [vmem:[%s1 + $0x18] sm:$0xff]
  %v49 = vld [vmem:[%s1 + $0x20] sm:$0xff]
  %v50 = vld [vmem:[%s1 + $0x28] sm:$0xff]
  %v51 = vld [vmem:[%s1 + $0x30] sm:$0xff]
  %v52 = vld [vmem:[%s1 + $0x38] sm:$0xff]
  %v53 = vld [vmem:[%s1 + $0x40] sm:$0xff]
  %v54 = vld [vmem:[%s1 + $0x48] sm:$0xff]
  %v55 = vld [vmem:[%s1 + $0x50] sm:$0xff]
  %v56 = vld [vmem:[%s1 + $0x58] sm:$0xff]
  %v57 = vld [vmem:[%s1 + $0x60] sm:$0xff]
  %v58 = vld [vmem:[%s1 + $0x68] sm:$0xff]
  %v59 = vld [vmem:[%s1 + $0x70] sm:$0xff]
  %v60 = vld [vmem:[%s1 + $0x78] sm:$0xff]
  %v61 = vld [vmem:[%s2] sm:$0xff]
  %v62 = vld [vmem:[%s2 + $0x8] sm:$0xff]
  %v63 = vld [vmem:[%s2 + $0x10] sm:$0xff]
  %v64 = vld [vmem:[%s2 + $0x18] sm:$0xff]
  %v65 = vld [vmem:[%s2 + $0x20] sm:$0xff]
  %v66 = vld [vmem:[%s2 + $0x28] sm:$0xff]
  %v67 = vld [vmem:[%s2 + $0x30] sm:$0xff]
  %v68 = vld [vmem:[%s2 + $0x38] sm:$0xff]
  %v69 = vld [vmem:[%s2 + $0x40] sm:$0xff]
  %v70 = vld [vmem:[%s2 + $0x48] sm:$0xff]
  %v71 = vld [vmem:[%s2 + $0x50] sm:$0xff]
  %v72 = vld [vmem:[%s2 + $0x58] sm:$0xff]
  %v73 = vld [vmem:[%s2 + $0x60] sm:$0xff]
  %v74 = vld [vmem:[%s2 + $0x68] sm:$0xff]
  %v75 = vld [vmem:[%s2 + $0x70] sm:$0xff]
  %v76 = vld [vmem:[%s2 + $0x78] sm:$0xff]
  %v93 = vunpack.c.l.b16 %v61
  %v94 = vunpack.c.h.b16 %v61
  %v95 = vunpack.c.l.b16 %v62
  %v96 = vunpack.c.h.b16 %v62
  %v97 = vunpack.c.l.b16 %v63
  %v98 = vunpack.c.h.b16 %v63
  %v99 = vunpack.c.l.b16 %v64
  %v100 = vunpack.c.h.b16 %v64
  %v101 = vunpack.c.l.b16 %v65
  %v102 = vunpack.c.h.b16 %v65
  %v103 = vunpack.c.l.b16 %v66
  %v104 = vunpack.c.h.b16 %v66
  %v105 = vunpack.c.l.b16 %v67
  %v106 = vunpack.c.h.b16 %v67
  %v107 = vunpack.c.l.b16 %v68
  %v108 = vunpack.c.h.b16 %v68
  %v109 = vunpack.c.l.b16 %v69
  %v110 = vunpack.c.h.b16 %v69
  %v111 = vunpack.c.l.b16 %v70
  %v112 = vunpack.c.h.b16 %v70
  %v113 = vunpack.c.l.b16 %v71
  %v114 = vunpack.c.h.b16 %v71
  %v115 = vunpack.c.l.b16 %v72
  %v116 = vunpack.c.h.b16 %v72
  %v117 = vunpack.c.l.b16 %v73
  %v118 = vunpack.c.h.b16 %v73
  %v119 = vunpack.c.l.b16 %v74
  %v120 = vunpack.c.h.b16 %v74
  %v121 = vunpack.c.l.b16 %v75
  %v122 = vunpack.c.h.b16 %v75
  %v123 = vunpack.c.l.b16 %v76
  %v124 = vunpack.c.h.b16 %v76
  %v125 = vpack.c.b16 %v95, %v93
  %v126 = vpack.c.b16 %v96, %v94
  %v127 = vpack.c.b16 %v99, %v97
  %v128 = vpack.c.b16 %v100, %v98
  %v129 = vpack.c.b16 %v103, %v101
  %v130 = vpack.c.b16 %v104, %v102
  %v131 = vpack.c.b16 %v107, %v105
  %v132 = vpack.c.b16 %v108, %v106
  %v133 = vpack.c.b16 %v111, %v109
  %v134 = vpack.c.b16 %v112, %v110
  %v135 = vpack.c.b16 %v115, %v113
  %v136 = vpack.c.b16 %v116, %v114
  %v137 = vpack.c.b16 %v119, %v117
  %v138 = vpack.c.b16 %v120, %v118
  %v139 = vpack.c.b16 %v123, %v121
  %v140 = vpack.c.b16 %v124, %v122
  %157 = vmatprep.subr.bf16.mxu0 %v126
  %158 = vmatpush1.bf16.msra.mxu0 %v125
  %159 = vmatprep.subr.bf16.mxu0 %v128
  %160 = vmatpush1.bf16.msra.mxu0 %v127
  %161 = vmatprep.subr.bf16.mxu0 %v130
  %162 = vmatpush1.bf16.msra.mxu0 %v129
  %163 = vmatprep.subr.bf16.mxu0 %v132
  %164 = vmatpush1.bf16.msra.mxu0 %v131
  %165 = vmatprep.subr.bf16.mxu0 %v134
  %166 = vmatpush1.bf16.msra.mxu0 %v133
  %167 = vmatprep.subr.bf16.mxu0 %v136
  %168 = vmatpush1.bf16.msra.mxu0 %v135
  %169 = vmatprep.subr.bf16.mxu0 %v138
  %170 = vmatpush1.bf16.msra.mxu0 %v137
  %171 = vmatprep.subr.bf16.mxu0 %v140
  %172 = vmatpush1.bf16.msra.mxu0 %v139
  %173 = vmatprep.subr.bf16.mxu0 0
  %174 = vmatpush1.bf16.msra.mxu0 0
  %175 = vmatprep.subr.bf16.mxu0 0
  %176 = vmatpush1.bf16.msra.mxu0 0
  %177 = vmatprep.subr.bf16.mxu0 0
  %178 = vmatpush1.bf16.msra.mxu0 0
  %179 = vmatprep.subr.bf16.mxu0 0
  %180 = vmatpush1.bf16.msra.mxu0 0
  %181 = vmatprep.subr.bf16.mxu0 0
  %182 = vmatpush1.bf16.msra.mxu0 0
  %183 = vmatprep.subr.bf16.mxu0 0
  %184 = vmatpush1.bf16.msra.mxu0 0
  %185 = vmatprep.subr.bf16.mxu0 0
  %186 = vmatpush1.bf16.msra.mxu0 0
  %187 = vmatprep.subr.bf16.mxu0 0
  %188 = vmatpush1.bf16.msra.mxu0 0
  %189 = vmatprep.mubr.bf16.mxu0 0
  %190 = vmatmul.mubr.bf16.gmra.mrb[0].mxu0 %v41
  %v191 = vpop.f32.mrb[0].mxu0
  %v192 = vadd.f32 0.0, %v191
  %v193 = vpop.f32.mrb[0].mxu0
  %v194 = vadd.f32 0.0, %v193
  %v195 = vpop.f32.mrb[0].mxu0
  %v196 = vadd.f32 0.0, %v195
  %v197 = vpop.f32.mrb[0].mxu0
  %v198 = vadd.f32 0.0, %v197
  %199 = vmatprep.mubr.bf16.mxu0 0
  %200 = vmatmul.mubr.bf16.gmra.mrb[0].mxu0 %v42
  %v201 = vpop.f32.mrb[0].mxu0
  %v202 = vadd.f32 0.0, %v201
  %v203 = vpop.f32.mrb[0].mxu0
  %v204 = vadd.f32 0.0, %v203
  %v205 = vpop.f32.mrb[0].mxu0
  %v206 = vadd.f32 0.0, %v205
  %v207 = vpop.f32.mrb[0].mxu0
  %v208 = vadd.f32 0.0, %v207
  %209 = vmatprep.mubr.bf16.mxu0 0
  %210 = vmatmul.mubr.bf16.gmra.mrb[0].mxu0 %v43
  %v211 = vpop.f32.mrb[0].mxu0
  %v212 = vadd.f32 0.0, %v211
  %v213 = vpop.f32.mrb[0].mxu0
  %v214 = vadd.f32 0.0, %v213
  %v215 = vpop.f32.mrb[0].mxu0
  %v216 = vadd.f32 0.0, %v215
  %v217 = vpop.f32.mrb[0].mxu0
  %v218 = vadd.f32 0.0, %v217
  %219 = vmatprep.mubr.bf16.mxu0 0
  %220 = vmatmul.mubr.bf16.gmra.mrb[0].mxu0 %v44
  %v221 = vpop.f32.mrb[0].mxu0
  %v222 = vadd.f32 0.0, %v221
  %v223 = vpop.f32.mrb[0].mxu0
  %v224 = vadd.f32 0.0, %v223
  %v225 = vpop.f32.mrb[0].mxu0
  %v226 = vadd.f32 0.0, %v225
  %v227 = vpop.f32.mrb[0].mxu0
  %v228 = vadd.f32 0.0, %v227
  %229 = vdwg.mxu0
  %v230 = vld [vmem:[%s4] sm:$0x3]
  %v232 = vlaneseq
  %v233 = vshrl.u32 %v232, 7
  %v234 = vsub.s32 0, %v233
  %v235 = vrot.slane %v230, %v234
  %v236 = vlaneseq
  %v237 = vshrl.u32 %v236, 7
  %v238 = vsub.s32 1, %v237
  %v239 = vrot.slane %v230, %v238
  %v258 = vunpack.c.l.b16 %v45
  %v259 = vunpack.c.h.b16 %v45
  %v260 = vunpack.c.l.b16 %v46
  %v261 = vunpack.c.h.b16 %v46
  %v262 = vunpack.c.l.b16 %v47
  %v263 = vunpack.c.h.b16 %v47
  %v264 = vunpack.c.l.b16 %v48
  %v265 = vunpack.c.h.b16 %v48
  %v266 = vunpack.c.l.b16 %v49
  %v267 = vunpack.c.h.b16 %v49
  %v268 = vunpack.c.l.b16 %v50
  %v269 = vunpack.c.h.b16 %v50
  %v270 = vunpack.c.l.b16 %v51
  %v271 = vunpack.c.h.b16 %v51
  %v272 = vunpack.c.l.b16 %v52
  %v273 = vunpack.c.h.b16 %v52
  %v274 = vunpack.c.l.b16 %v53
  %v275 = vunpack.c.h.b16 %v53
  %v276 = vunpack.c.l.b16 %v54
  %v277 = vunpack.c.h.b16 %v54
  %v278 = vunpack.c.l.b16 %v55
  %v279 = vunpack.c.h.b16 %v55
  %v280 = vunpack.c.l.b16 %v56
  %v281 = vunpack.c.h.b16 %v56
  %v282 = vunpack.c.l.b16 %v57
  %v283 = vunpack.c.h.b16 %v57
  %v284 = vunpack.c.l.b16 %v58
  %v285 = vunpack.c.h.b16 %v58
  %v286 = vunpack.c.l.b16 %v59
  %v287 = vunpack.c.h.b16 %v59
  %v288 = vunpack.c.l.b16 %v60
  %v289 = vunpack.c.h.b16 %v60
  %v290 = vpack.c.b16 %v260, %v258
  %v291 = vpack.c.b16 %v261, %v259
  %v292 = vpack.c.b16 %v264, %v262
  %v293 = vpack.c.b16 %v265, %v263
  %v294 = vpack.c.b16 %v268, %v266
  %v295 = vpack.c.b16 %v269, %v267
  %v296 = vpack.c.b16 %v272, %v270
  %v297 = vpack.c.b16 %v273, %v271
  %v298 = vpack.c.b16 %v276, %v274
  %v299 = vpack.c.b16 %v277, %v275
  %v300 = vpack.c.b16 %v280, %v278
  %v301 = vpack.c.b16 %v281, %v279
  %v302 = vpack.c.b16 %v284, %v282
  %v303 = vpack.c.b16 %v285, %v283
  %v304 = vpack.c.b16 %v288, %v286
  %v305 = vpack.c.b16 %v289, %v287
  %322 = vmatprep.subr.bf16.mxu0 %v291
  %323 = vmatpush1.bf16.msra.mxu0 %v290
  %324 = vmatprep.subr.bf16.mxu0 %v293
  %325 = vmatpush1.bf16.msra.mxu0 %v292
  %326 = vmatprep.subr.bf16.mxu0 %v295
  %327 = vmatpush1.bf16.msra.mxu0 %v294
  %328 = vmatprep.subr.bf16.mxu0 %v297
  %329 = vmatpush1.bf16.msra.mxu0 %v296
  %330 = vmatprep.subr.bf16.mxu0 %v299
  %331 = vmatpush1.bf16.msra.mxu0 %v298
  %332 = vmatprep.subr.bf16.mxu0 %v301
  %333 = vmatpush1.bf16.msra.mxu0 %v300
  %334 = vmatprep.subr.bf16.mxu0 %v303
  %335 = vmatpush1.bf16.msra.mxu0 %v302
  %336 = vmatprep.subr.bf16.mxu0 %v305
  %337 = vmatpush1.bf16.msra.mxu0 %v304
  %338 = vmatprep.subr.bf16.mxu0 0
  %339 = vmatpush1.bf16.msra.mxu0 0
  %340 = vmatprep.subr.bf16.mxu0 0
  %341 = vmatpush1.bf16.msra.mxu0 0
  %342 = vmatprep.subr.bf16.mxu0 0
  %343 = vmatpush1.bf16.msra.mxu0 0
  %344 = vmatprep.subr.bf16.mxu0 0
  %345 = vmatpush1.bf16.msra.mxu0 0
  %346 = vmatprep.subr.bf16.mxu0 0
  %347 = vmatpush1.bf16.msra.mxu0 0
  %348 = vmatprep.subr.bf16.mxu0 0
  %349 = vmatpush1.bf16.msra.mxu0 0
  %350 = vmatprep.subr.bf16.mxu0 0
  %351 = vmatpush1.bf16.msra.mxu0 0
  %352 = vmatprep.subr.bf16.mxu0 0
  %353 = vmatpush1.bf16.msra.mxu0 0
  %354 = vmatprep.mubr.bf16.mxu0 0
  %355 = vmatmul.mubr.bf16.gmra.mrb[0].mxu0 %v41
  %v356 = vpop.f32.mrb[0].mxu0
  %v357 = vadd.f32 %v235, %v356
  %v358 = vpop.f32.mrb[0].mxu0
  %v359 = vadd.f32 %v239, %v358
  %v360 = vpop.f32.mrb[0].mxu0
  %v361 = vadd.f32 %v235, %v360
  %v362 = vpop.f32.mrb[0].mxu0
  %v363 = vadd.f32 %v239, %v362
  %364 = vmatprep.mubr.bf16.mxu0 0
  %365 = vmatmul.mubr.bf16.gmra.mrb[0].mxu0 %v42
  %v366 = vpop.f32.mrb[0].mxu0
  %v367 = vadd.f32 %v235, %v366
  %v368 = vpop.f32.mrb[0].mxu0
  %v369 = vadd.f32 %v239, %v368
  %v370 = vpop.f32.mrb[0].mxu0
  %v371 = vadd.f32 %v235, %v370
  %v372 = vpop.f32.mrb[0].mxu0
  %v373 = vadd.f32 %v239, %v372
  %374 = vmatprep.mubr.bf16.mxu0 0
  %375 = vmatmul.mubr.bf16.gmra.mrb[0].mxu0 %v43
  %v376 = vpop.f32.mrb[0].mxu0
  %v377 = vadd.f32 %v235, %v376
  %v378 = vpop.f32.mrb[0].mxu0
  %v379 = vadd.f32 %v239, %v378
  %v380 = vpop.f32.mrb[0].mxu0
  %v381 = vadd.f32 %v235, %v380
  %v382 = vpop.f32.mrb[0].mxu0
  %v383 = vadd.f32 %v239, %v382
  %384 = vmatprep.mubr.bf16.mxu0 0
  %385 = vmatmul.mubr.bf16.gmra.mrb[0].mxu0 %v44
  %v386 = vpop.f32.mrb[0].mxu0
  %v387 = vadd.f32 %v235, %v386
  %v388 = vpop.f32.mrb[0].mxu0
  %v389 = vadd.f32 %v239, %v388
  %v390 = vpop.f32.mrb[0].mxu0
  %v391 = vadd.f32 %v235, %v390
  %v392 = vpop.f32.mrb[0].mxu0
  %v393 = vadd.f32 %v239, %v392
  %394 = vdwg.mxu0
  %v395 = vadd.f32 %v357, %v226
  %v396 = vadd.f32 %v359, %v228
  %397 = vst [vmem:[#allocation2] sm:$0xff] %v395
  %398 = vst [vmem:[#allocation2 + $0x8] sm:$0xff] %v396
  %v399 = vadd.f32 %v361, %v222
  %v400 = vadd.f32 %v363, %v224
  %s401 = scalar_lea.vmem [#allocation2], 16
  %402 = vst [vmem:[%s401] sm:$0xff] %v399
  %403 = vst [vmem:[%s401 + $0x8] sm:$0xff] %v400
  %v404 = vadd.f32 %v367, %v216
  %v405 = vadd.f32 %v369, %v218
  %s406 = scalar_lea.vmem [#allocation2], 32
  %407 = vst [vmem:[%s406] sm:$0xff] %v404
  %408 = vst [vmem:[%s406 + $0x8] sm:$0xff] %v405
  %v409 = vadd.f32 %v371, %v212
  %v410 = vadd.f32 %v373, %v214
  %s411 = scalar_lea.vmem [#allocation2], 48
  %412 = vst [vmem:[%s411] sm:$0xff] %v409
  %413 = vst [vmem:[%s411 + $0x8] sm:$0xff] %v410
  %v414 = vadd.f32 %v377, %v206
  %v415 = vadd.f32 %v379, %v208
  %s416 = scalar_lea.vmem [#allocation2], 64
  %417 = vst [vmem:[%s416] sm:$0xff] %v414
  %418 = vst [vmem:[%s416 + $0x8] sm:$0xff] %v415
  %v419 = vadd.f32 %v381, %v202
  %v420 = vadd.f32 %v383, %v204
  %s421 = scalar_lea.vmem [#allocation2], 80
  %422 = vst [vmem:[%s421] sm:$0xff] %v419
  %423 = vst [vmem:[%s421 + $0x8] sm:$0xff] %v420
  %v424 = vadd.f32 %v387, %v196
  %v425 = vadd.f32 %v389, %v198
  %s426 = scalar_lea.vmem [#allocation2], 96
  %427 = vst [vmem:[%s426] sm:$0xff] %v424
  %428 = vst [vmem:[%s426 + $0x8] sm:$0xff] %v425
  %v429 = vadd.f32 %v391, %v192
  %v430 = vadd.f32 %v393, %v194
  %s431 = scalar_lea.vmem [#allocation2], 112
  %432 = vst [vmem:[%s431] sm:$0xff] %v429
  %433 = vst [vmem:[%s431 + $0x8] sm:$0xff] %v430
  %v434 = vld [vmem:[%s3] sm:$0xff]
  %v435 = vld [vmem:[%s3 + $0x8] sm:$0xff]
  %v436 = vld [vmem:[%s3 + $0x10] sm:$0xff]
  %v437 = vld [vmem:[%s3 + $0x18] sm:$0xff]
  %v438 = vld [vmem:[%s3 + $0x20] sm:$0xff]
  %v439 = vld [vmem:[%s3 + $0x28] sm:$0xff]
  %v440 = vld [vmem:[%s3 + $0x30] sm:$0xff]
  %v441 = vld [vmem:[%s3 + $0x38] sm:$0xff]
  %v442 = vld [vmem:[%s3 + $0x40] sm:$0xff]
  %v443 = vld [vmem:[%s3 + $0x48] sm:$0xff]
  %v444 = vld [vmem:[%s3 + $0x50] sm:$0xff]
  %v445 = vld [vmem:[%s3 + $0x58] sm:$0xff]
  %v446 = vld [vmem:[%s3 + $0x60] sm:$0xff]
  %v447 = vld [vmem:[%s3 + $0x68] sm:$0xff]
  %v448 = vld [vmem:[%s3 + $0x70] sm:$0xff]
  %v449 = vld [vmem:[%s3 + $0x78] sm:$0xff]
  %450 = vst [vmem:[#allocation4] sm:$0xff] 0.0
  %451 = vst [vmem:[#allocation5] sm:$0xff] 0.0
  %v452 = vld [vmem:[#allocation2] sm:$0xff]
  %v453 = vld [vmem:[#allocation2 + $0x8] sm:$0xff]
  %v454 = vld [vmem:[#allocation4] sm:$0xff]
  %v455 = vpack.c.bf16 %v454, %v454
  %v472 = vunpack.c.l.b16 %v434
  %v473 = vunpack.c.h.b16 %v434
  %v474 = vunpack.c.l.b16 %v435
  %v475 = vunpack.c.h.b16 %v435
  %v476 = vunpack.c.l.b16 %v436
  %v477 = vunpack.c.h.b16 %v436
  %v478 = vunpack.c.l.b16 %v437
  %v479 = vunpack.c.h.b16 %v437
  %v480 = vunpack.c.l.b16 %v438
  %v481 = vunpack.c.h.b16 %v438
  %v482 = vunpack.c.l.b16 %v439
  %v483 = vunpack.c.h.b16 %v439
  %v484 = vunpack.c.l.b16 %v440
  %v485 = vunpack.c.h.b16 %v440
  %v486 = vunpack.c.l.b16 %v441
  %v487 = vunpack.c.h.b16 %v441
  %v488 = vunpack.c.l.b16 %v442
  %v489 = vunpack.c.h.b16 %v442
  %v490 = vunpack.c.l.b16 %v443
  %v491 = vunpack.c.h.b16 %v443
  %v492 = vunpack.c.l.b16 %v444
  %v493 = vunpack.c.h.b16 %v444
  %v494 = vunpack.c.l.b16 %v445
  %v495 = vunpack.c.h.b16 %v445
  %v496 = vunpack.c.l.b16 %v446
  %v497 = vunpack.c.h.b16 %v446
  %v498 = vunpack.c.l.b16 %v447
  %v499 = vunpack.c.h.b16 %v447
  %v500 = vunpack.c.l.b16 %v448
  %v501 = vunpack.c.h.b16 %v448
  %v502 = vunpack.c.l.b16 %v449
  %v503 = vunpack.c.h.b16 %v449
  %v504 = vpack.c.b16 %v474, %v472
  %v505 = vpack.c.b16 %v475, %v473
  %v506 = vpack.c.b16 %v478, %v476
  %v507 = vpack.c.b16 %v479, %v477
  %v508 = vpack.c.b16 %v482, %v480
  %v509 = vpack.c.b16 %v483, %v481
  %v510 = vpack.c.b16 %v486, %v484
  %v511 = vpack.c.b16 %v487, %v485
  %v512 = vpack.c.b16 %v490, %v488
  %v513 = vpack.c.b16 %v491, %v489
  %v514 = vpack.c.b16 %v494, %v492
  %v515 = vpack.c.b16 %v495, %v493
  %v516 = vpack.c.b16 %v498, %v496
  %v517 = vpack.c.b16 %v499, %v497
  %v518 = vpack.c.b16 %v502, %v500
  %v519 = vpack.c.b16 %v503, %v501
  %536 = vmatprep.subr.bf16.mxu0 %v505
  %537 = vmatpush1.bf16.msra.mxu0 %v504
  %538 = vmatprep.subr.bf16.mxu0 %v507
  %539 = vmatpush1.bf16.msra.mxu0 %v506
  %540 = vmatprep.subr.bf16.mxu0 %v509
  %541 = vmatpush1.bf16.msra.mxu0 %v508
  %542 = vmatprep.subr.bf16.mxu0 %v511
  %543 = vmatpush1.bf16.msra.mxu0 %v510
  %544 = vmatprep.subr.bf16.mxu0 %v513
  %545 = vmatpush1.bf16.msra.mxu0 %v512
  %546 = vmatprep.subr.bf16.mxu0 %v515
  %547 = vmatpush1.bf16.msra.mxu0 %v514
  %548 = vmatprep.subr.bf16.mxu0 %v517
  %549 = vmatpush1.bf16.msra.mxu0 %v516
  %550 = vmatprep.subr.bf16.mxu0 %v519
  %551 = vmatpush1.bf16.msra.mxu0 %v518
  %552 = vmatprep.subr.bf16.mxu0 0
  %553 = vmatpush1.bf16.msra.mxu0 0
  %554 = vmatprep.subr.bf16.mxu0 0
  %555 = vmatpush1.bf16.msra.mxu0 0
  %556 = vmatprep.subr.bf16.mxu0 0
  %557 = vmatpush1.bf16.msra.mxu0 0
  %558 = vmatprep.subr.bf16.mxu0 0
  %559 = vmatpush1.bf16.msra.mxu0 0
  %560 = vmatprep.subr.bf16.mxu0 0
  %561 = vmatpush1.bf16.msra.mxu0 0
  %562 = vmatprep.subr.bf16.mxu0 0
  %563 = vmatpush1.bf16.msra.mxu0 0
  %564 = vmatprep.subr.bf16.mxu0 0
  %565 = vmatpush1.bf16.msra.mxu0 0
  %566 = vmatprep.subr.bf16.mxu0 0
  %567 = vmatpush1.bf16.msra.mxu0 0
  %568 = vmatprep.mubr.bf16.mxu0 0
  %569 = vmatmul.mubr.bf16.gmra.mrb[0].mxu0 %v455
  %v570 = vpop.f32.mrb[0].mxu0
  %v571 = vadd.f32 0.0, %v570
  %v572 = vpop.f32.mrb[0].mxu0
  %v573 = vadd.f32 0.0, %v572
  %v574 = vpop.f32.mrb[0].mxu0
  %v575 = vpop.f32.mrb[0].mxu0
  %576 = vdwg.mxu0
  %v577 = vadd.f32 %v452, %v571
  %v578 = vadd.f32 %v453, %v573
  %v579 = vxor.u32 %v577, 2147483648
  %v580 = vmul.f32 %v579, 1.442695
  %v581 = vpow.pop %v580
  %v582 = vadd.f32 %v581, 1.0
  %v583 = vrcp.pop %v582
  %v584 = vmul.f32 1.0, %v583
  %v585 = vtanh.pop %v578
  %v586 = vxor.u32 %v578, 2147483648
  %v587 = vmul.f32 %v586, 1.442695
  %v588 = vpow.pop %v587
  %v589 = vadd.f32 %v588, 1.0
  %v590 = vrcp.pop %v589
  %v591 = vmul.f32 1.0, %v590
  %592 = vrot.lane.b32.xlu0 %v584, 64
  %v593 = vpop.permute.xlu0 %592
  %594 = vrot.lane.b32.xlu0 %v591, 64
  %v595 = vpop.permute.xlu0 %594
  %v596 = vld [vmem:[#allocation5] sm:$0xff]
  %v597 = vmul.f32 %v593, %v596
  %v598 = vmul.f32 %v584, %v585
  %v599 = vadd.f32 %v597, %v598
  %v600 = vtanh.pop %v599
  %v601 = vmul.f32 %v595, %v600
  %602 = vst [vmem:[#allocation4] sm:$0xff] %v601
  %603 = vst [vmem:[#allocation5] sm:$0xff] %v599
  %604 = vst [vmem:[#allocation3] sm:$0xff] %v601
  %v605 = vld [vmem:[%s401] sm:$0xff]
  %v606 = vld [vmem:[%s401 + $0x8] sm:$0xff]
  %v607 = vld [vmem:[#allocation4] sm:$0xff]
  %v608 = vpack.c.bf16 %v607, %v607
  %609 = vmatprep.subr.bf16.mxu0 %v505
  %610 = vmatpush1.bf16.msra.mxu0 %v504
  %611 = vmatprep.subr.bf16.mxu0 %v507
  %612 = vmatpush1.bf16.msra.mxu0 %v506
  %613 = vmatprep.subr.bf16.mxu0 %v509
  %614 = vmatpush1.bf16.msra.mxu0 %v508
  %615 = vmatprep.subr.bf16.mxu0 %v511
  %616 = vmatpush1.bf16.msra.mxu0 %v510
  %617 = vmatprep.subr.bf16.mxu0 %v513
  %618 = vmatpush1.bf16.msra.mxu0 %v512
  %619 = vmatprep.subr.bf16.mxu0 %v515
  %620 = vmatpush1.bf16.msra.mxu0 %v514
  %621 = vmatprep.subr.bf16.mxu0 %v517
  %622 = vmatpush1.bf16.msra.mxu0 %v516
  %623 = vmatprep.subr.bf16.mxu0 %v519
  %624 = vmatpush1.bf16.msra.mxu0 %v518
  %625 = vmatprep.subr.bf16.mxu0 0
  %626 = vmatpush1.bf16.msra.mxu0 0
  %627 = vmatprep.subr.bf16.mxu0 0
  %628 = vmatpush1.bf16.msra.mxu0 0
  %629 = vmatprep.subr.bf16.mxu0 0
  %630 = vmatpush1.bf16.msra.mxu0 0
  %631 = vmatprep.subr.bf16.mxu0 0
  %632 = vmatpush1.bf16.msra.mxu0 0
  %633 = vmatprep.subr.bf16.mxu0 0
  %634 = vmatpush1.bf16.msra.mxu0 0
  %635 = vmatprep.subr.bf16.mxu0 0
  %636 = vmatpush1.bf16.msra.mxu0 0
  %637 = vmatprep.subr.bf16.mxu0 0
  %638 = vmatpush1.bf16.msra.mxu0 0
  %639 = vmatprep.subr.bf16.mxu0 0
  %640 = vmatpush1.bf16.msra.mxu0 0
  %641 = vmatprep.mubr.bf16.mxu0 0
  %642 = vmatmul.mubr.bf16.gmra.mrb[0].mxu0 %v608
  %v643 = vpop.f32.mrb[0].mxu0
  %v644 = vadd.f32 0.0, %v643
  %v645 = vpop.f32.mrb[0].mxu0
  %v646 = vadd.f32 0.0, %v645
  %v647 = vpop.f32.mrb[0].mxu0
  %v648 = vpop.f32.mrb[0].mxu0
  %649 = vdwg.mxu0
  %v650 = vadd.f32 %v605, %v644
  %v651 = vadd.f32 %v606, %v646
  %v652 = vxor.u32 %v650, 2147483648
  %v653 = vmul.f32 %v652, 1.442695
  %v654 = vpow.pop %v653
  %v655 = vadd.f32 %v654, 1.0
  %v656 = vrcp.pop %v655
  %v657 = vmul.f32 1.0, %v656
  %v658 = vtanh.pop %v651
  %v659 = vxor.u32 %v651, 2147483648
  %v660 = vmul.f32 %v659, 1.442695
  %v661 = vpow.pop %v660
  %v662 = vadd.f32 %v661, 1.0
  %v663 = vrcp.pop %v662
  %v664 = vmul.f32 1.0, %v663
  %665 = vrot.lane.b32.xlu0 %v657, 64
  %v666 = vpop.permute.xlu0 %665
  %667 = vrot.lane.b32.xlu0 %v664, 64
  %v668 = vpop.permute.xlu0 %667
  %v669 = vld [vmem:[#allocation5] sm:$0xff]
  %v670 = vmul.f32 %v666, %v669
  %v671 = vmul.f32 %v657, %v658
  %v672 = vadd.f32 %v670, %v671
  %v673 = vtanh.pop %v672
  %v674 = vmul.f32 %v668, %v673
  %675 = vst [vmem:[#allocation4] sm:$0xff] %v674
  %676 = vst [vmem:[#allocation5] sm:$0xff] %v672
  %s677 = scalar_lea.vmem [#allocation3], 8
  %678 = vst [vmem:[%s677] sm:$0xff] %v674
  %v679 = vld [vmem:[%s406] sm:$0xff]
  %v680 = vld [vmem:[%s406 + $0x8] sm:$0xff]
  %v681 = vld [vmem:[#allocation4] sm:$0xff]
  %v682 = vpack.c.bf16 %v681, %v681
  %683 = vmatprep.subr.bf16.mxu0 %v505
  %684 = vmatpush1.bf16.msra.mxu0 %v504
  %685 = vmatprep.subr.bf16.mxu0 %v507
  %686 = vmatpush1.bf16.msra.mxu0 %v506
  %687 = vmatprep.subr.bf16.mxu0 %v509
  %688 = vmatpush1.bf16.msra.mxu0 %v508
  %689 = vmatprep.subr.bf16.mxu0 %v511
  %690 = vmatpush1.bf16.msra.mxu0 %v510
  %691 = vmatprep.subr.bf16.mxu0 %v513
  %692 = vmatpush1.bf16.msra.mxu0 %v512
  %693 = vmatprep.subr.bf16.mxu0 %v515
  %694 = vmatpush1.bf16.msra.mxu0 %v514
  %695 = vmatprep.subr.bf16.mxu0 %v517
  %696 = vmatpush1.bf16.msra.mxu0 %v516
  %697 = vmatprep.subr.bf16.mxu0 %v519
  %698 = vmatpush1.bf16.msra.mxu0 %v518
  %699 = vmatprep.subr.bf16.mxu0 0
  %700 = vmatpush1.bf16.msra.mxu0 0
  %701 = vmatprep.subr.bf16.mxu0 0
  %702 = vmatpush1.bf16.msra.mxu0 0
  %703 = vmatprep.subr.bf16.mxu0 0
  %704 = vmatpush1.bf16.msra.mxu0 0
  %705 = vmatprep.subr.bf16.mxu0 0
  %706 = vmatpush1.bf16.msra.mxu0 0
  %707 = vmatprep.subr.bf16.mxu0 0
  %708 = vmatpush1.bf16.msra.mxu0 0
  %709 = vmatprep.subr.bf16.mxu0 0
  %710 = vmatpush1.bf16.msra.mxu0 0
  %711 = vmatprep.subr.bf16.mxu0 0
  %712 = vmatpush1.bf16.msra.mxu0 0
  %713 = vmatprep.subr.bf16.mxu0 0
  %714 = vmatpush1.bf16.msra.mxu0 0
  %715 = vmatprep.mubr.bf16.mxu0 0
  %716 = vmatmul.mubr.bf16.gmra.mrb[0].mxu0 %v682
  %v717 = vpop.f32.mrb[0].mxu0
  %v718 = vadd.f32 0.0, %v717
  %v719 = vpop.f32.mrb[0].mxu0
  %v720 = vadd.f32 0.0, %v719
  %v721 = vpop.f32.mrb[0].mxu0
  %v722 = vpop.f32.mrb[0].mxu0
  %723 = vdwg.mxu0
  %v724 = vadd.f32 %v679, %v718
  %v725 = vadd.f32 %v680, %v720
  %v726 = vxor.u32 %v724, 2147483648
  %v727 = vmul.f32 %v726, 1.442695
  %v728 = vpow.pop %v727
  %v729 = vadd.f32 %v728, 1.0
  %v730 = vrcp.pop %v729
  %v731 = vmul.f32 1.0, %v730
  %v732 = vtanh.pop %v725
  %v733 = vxor.u32 %v725, 2147483648
  %v734 = vmul.f32 %v733, 1.442695
  %v735 = vpow.pop %v734
  %v736 = vadd.f32 %v735, 1.0
  %v737 = vrcp.pop %v736
  %v738 = vmul.f32 1.0, %v737
  %739 = vrot.lane.b32.xlu0 %v731, 64
  %v740 = vpop.permute.xlu0 %739
  %741 = vrot.lane.b32.xlu0 %v738, 64
  %v742 = vpop.permute.xlu0 %741
  %v743 = vld [vmem:[#allocation5] sm:$0xff]
  %v744 = vmul.f32 %v740, %v743
  %v745 = vmul.f32 %v731, %v732
  %v746 = vadd.f32 %v744, %v745
  %v747 = vtanh.pop %v746
  %v748 = vmul.f32 %v742, %v747
  %749 = vst [vmem:[#allocation4] sm:$0xff] %v748
  %750 = vst [vmem:[#allocation5] sm:$0xff] %v746
  %s751 = scalar_lea.vmem [#allocation3], 16
  %752 = vst [vmem:[%s751] sm:$0xff] %v748
  %v753 = vld [vmem:[%s411] sm:$0xff]
  %v754 = vld [vmem:[%s411 + $0x8] sm:$0xff]
  %v755 = vld [vmem:[#allocation4] sm:$0xff]
  %v756 = vpack.c.bf16 %v755, %v755
  %757 = vmatprep.subr.bf16.mxu0 %v505
  %758 = vmatpush1.bf16.msra.mxu0 %v504
  %759 = vmatprep.subr.bf16.mxu0 %v507
  %760 = vmatpush1.bf16.msra.mxu0 %v506
  %761 = vmatprep.subr.bf16.mxu0 %v509
  %762 = vmatpush1.bf16.msra.mxu0 %v508
  %763 = vmatprep.subr.bf16.mxu0 %v511
  %764 = vmatpush1.bf16.msra.mxu0 %v510
  %765 = vmatprep.subr.bf16.mxu0 %v513
  %766 = vmatpush1.bf16.msra.mxu0 %v512
  %767 = vmatprep.subr.bf16.mxu0 %v515
  %768 = vmatpush1.bf16.msra.mxu0 %v514
  %769 = vmatprep.subr.bf16.mxu0 %v517
  %770 = vmatpush1.bf16.msra.mxu0 %v516
  %771 = vmatprep.subr.bf16.mxu0 %v519
  %772 = vmatpush1.bf16.msra.mxu0 %v518
  %773 = vmatprep.subr.bf16.mxu0 0
  %774 = vmatpush1.bf16.msra.mxu0 0
  %775 = vmatprep.subr.bf16.mxu0 0
  %776 = vmatpush1.bf16.msra.mxu0 0
  %777 = vmatprep.subr.bf16.mxu0 0
  %778 = vmatpush1.bf16.msra.mxu0 0
  %779 = vmatprep.subr.bf16.mxu0 0
  %780 = vmatpush1.bf16.msra.mxu0 0
  %781 = vmatprep.subr.bf16.mxu0 0
  %782 = vmatpush1.bf16.msra.mxu0 0
  %783 = vmatprep.subr.bf16.mxu0 0
  %784 = vmatpush1.bf16.msra.mxu0 0
  %785 = vmatprep.subr.bf16.mxu0 0
  %786 = vmatpush1.bf16.msra.mxu0 0
  %787 = vmatprep.subr.bf16.mxu0 0
  %788 = vmatpush1.bf16.msra.mxu0 0
  %789 = vmatprep.mubr.bf16.mxu0 0
  %790 = vmatmul.mubr.bf16.gmra.mrb[0].mxu0 %v756
  %v791 = vpop.f32.mrb[0].mxu0
  %v792 = vadd.f32 0.0, %v791
  %v793 = vpop.f32.mrb[0].mxu0
  %v794 = vadd.f32 0.0, %v793
  %v795 = vpop.f32.mrb[0].mxu0
  %v796 = vpop.f32.mrb[0].mxu0
  %797 = vdwg.mxu0
  %v798 = vadd.f32 %v753, %v792
  %v799 = vadd.f32 %v754, %v794
  %v800 = vxor.u32 %v798, 2147483648
  %v801 = vmul.f32 %v800, 1.442695
  %v802 = vpow.pop %v801
  %v803 = vadd.f32 %v802, 1.0
  %v804 = vrcp.pop %v803
  %v805 = vmul.f32 1.0, %v804
  %v806 = vtanh.pop %v799
  %v807 = vxor.u32 %v799, 2147483648
  %v808 = vmul.f32 %v807, 1.442695
  %v809 = vpow.pop %v808
  %v810 = vadd.f32 %v809, 1.0
  %v811 = vrcp.pop %v810
  %v812 = vmul.f32 1.0, %v811
  %813 = vrot.lane.b32.xlu0 %v805, 64
  %v814 = vpop.permute.xlu0 %813
  %815 = vrot.lane.b32.xlu0 %v812, 64
  %v816 = vpop.permute.xlu0 %815
  %v817 = vld [vmem:[#allocation5] sm:$0xff]
  %v818 = vmul.f32 %v814, %v817
  %v819 = vmul.f32 %v805, %v806
  %v820 = vadd.f32 %v818, %v819
  %v821 = vtanh.pop %v820
  %v822 = vmul.f32 %v816, %v821
  %823 = vst [vmem:[#allocation4] sm:$0xff] %v822
  %824 = vst [vmem:[#allocation5] sm:$0xff] %v820
  %s825 = scalar_lea.vmem [#allocation3], 24
  %826 = vst [vmem:[%s825] sm:$0xff] %v822
  %v827 = vld [vmem:[%s416] sm:$0xff]
  %v828 = vld [vmem:[%s416 + $0x8] sm:$0xff]
  %v829 = vld [vmem:[#allocation4] sm:$0xff]
  %v830 = vpack.c.bf16 %v829, %v829
  %831 = vmatprep.subr.bf16.mxu0 %v505
  %832 = vmatpush1.bf16.msra.mxu0 %v504
  %833 = vmatprep.subr.bf16.mxu0 %v507
  %834 = vmatpush1.bf16.msra.mxu0 %v506
  %835 = vmatprep.subr.bf16.mxu0 %v509
  %836 = vmatpush1.bf16.msra.mxu0 %v508
  %837 = vmatprep.subr.bf16.mxu0 %v511
  %838 = vmatpush1.bf16.msra.mxu0 %v510
  %839 = vmatprep.subr.bf16.mxu0 %v513
  %840 = vmatpush1.bf16.msra.mxu0 %v512
  %841 = vmatprep.subr.bf16.mxu0 %v515
  %842 = vmatpush1.bf16.msra.mxu0 %v514
  %843 = vmatprep.subr.bf16.mxu0 %v517
  %844 = vmatpush1.bf16.msra.mxu0 %v516
  %845 = vmatprep.subr.bf16.mxu0 %v519
  %846 = vmatpush1.bf16.msra.mxu0 %v518
  %847 = vmatprep.subr.bf16.mxu0 0
  %848 = vmatpush1.bf16.msra.mxu0 0
  %849 = vmatprep.subr.bf16.mxu0 0
  %850 = vmatpush1.bf16.msra.mxu0 0
  %851 = vmatprep.subr.bf16.mxu0 0
  %852 = vmatpush1.bf16.msra.mxu0 0
  %853 = vmatprep.subr.bf16.mxu0 0
  %854 = vmatpush1.bf16.msra.mxu0 0
  %855 = vmatprep.subr.bf16.mxu0 0
  %856 = vmatpush1.bf16.msra.mxu0 0
  %857 = vmatprep.subr.bf16.mxu0 0
  %858 = vmatpush1.bf16.msra.mxu0 0
  %859 = vmatprep.subr.bf16.mxu0 0
  %860 = vmatpush1.bf16.msra.mxu0 0
  %861 = vmatprep.subr.bf16.mxu0 0
  %862 = vmatpush1.bf16.msra.mxu0 0
  %863 = vmatprep.mubr.bf16.mxu0 0
  %864 = vmatmul.mubr.bf16.gmra.mrb[0].mxu0 %v830
  %v865 = vpop.f32.mrb[0].mxu0
  %v866 = vadd.f32 0.0, %v865
  %v867 = vpop.f32.mrb[0].mxu0
  %v868 = vadd.f32 0.0, %v867
  %v869 = vpop.f32.mrb[0].mxu0
  %v870 = vpop.f32.mrb[0].mxu0
  %871 = vdwg.mxu0
  %v872 = vadd.f32 %v827, %v866
  %v873 = vadd.f32 %v828, %v868
  %v874 = vxor.u32 %v872, 2147483648
  %v875 = vmul.f32 %v874, 1.442695
  %v876 = vpow.pop %v875
  %v877 = vadd.f32 %v876, 1.0
  %v878 = vrcp.pop %v877
  %v879 = vmul.f32 1.0, %v878
  %v880 = vtanh.pop %v873
  %v881 = vxor.u32 %v873, 2147483648
  %v882 = vmul.f32 %v881, 1.442695
  %v883 = vpow.pop %v882
  %v884 = vadd.f32 %v883, 1.0
  %v885 = vrcp.pop %v884
  %v886 = vmul.f32 1.0, %v885
  %887 = vrot.lane.b32.xlu0 %v879, 64
  %v888 = vpop.permute.xlu0 %887
  %889 = vrot.lane.b32.xlu0 %v886, 64
  %v890 = vpop.permute.xlu0 %889
  %v891 = vld [vmem:[#allocation5] sm:$0xff]
  %v892 = vmul.f32 %v888, %v891
  %v893 = vmul.f32 %v879, %v880
  %v894 = vadd.f32 %v892, %v893
  %v895 = vtanh.pop %v894
  %v896 = vmul.f32 %v890, %v895
  %897 = vst [vmem:[#allocation4] sm:$0xff] %v896
  %898 = vst [vmem:[#allocation5] sm:$0xff] %v894
  %s899 = scalar_lea.vmem [#allocation3], 32
  %900 = vst [vmem:[%s899] sm:$0xff] %v896
  %v901 = vld [vmem:[%s421] sm:$0xff]
  %v902 = vld [vmem:[%s421 + $0x8] sm:$0xff]
  %v903 = vld [vmem:[#allocation4] sm:$0xff]
  %v904 = vpack.c.bf16 %v903, %v903
  %905 = vmatprep.subr.bf16.mxu0 %v505
  %906 = vmatpush1.bf16.msra.mxu0 %v504
  %907 = vmatprep.subr.bf16.mxu0 %v507
  %908 = vmatpush1.bf16.msra.mxu0 %v506
  %909 = vmatprep.subr.bf16.mxu0 %v509
  %910 = vmatpush1.bf16.msra.mxu0 %v508
  %911 = vmatprep.subr.bf16.mxu0 %v511
  %912 = vmatpush1.bf16.msra.mxu0 %v510
  %913 = vmatprep.subr.bf16.mxu0 %v513
  %914 = vmatpush1.bf16.msra.mxu0 %v512
  %915 = vmatprep.subr.bf16.mxu0 %v515
  %916 = vmatpush1.bf16.msra.mxu0 %v514
  %917 = vmatprep.subr.bf16.mxu0 %v517
  %918 = vmatpush1.bf16.msra.mxu0 %v516
  %919 = vmatprep.subr.bf16.mxu0 %v519
  %920 = vmatpush1.bf16.msra.mxu0 %v518
  %921 = vmatprep.subr.bf16.mxu0 0
  %922 = vmatpush1.bf16.msra.mxu0 0
  %923 = vmatprep.subr.bf16.mxu0 0
  %924 = vmatpush1.bf16.msra.mxu0 0
  %925 = vmatprep.subr.bf16.mxu0 0
  %926 = vmatpush1.bf16.msra.mxu0 0
  %927 = vmatprep.subr.bf16.mxu0 0
  %928 = vmatpush1.bf16.msra.mxu0 0
  %929 = vmatprep.subr.bf16.mxu0 0
  %930 = vmatpush1.bf16.msra.mxu0 0
  %931 = vmatprep.subr.bf16.mxu0 0
  %932 = vmatpush1.bf16.msra.mxu0 0
  %933 = vmatprep.subr.bf16.mxu0 0
  %934 = vmatpush1.bf16.msra.mxu0 0
  %935 = vmatprep.subr.bf16.mxu0 0
  %936 = vmatpush1.bf16.msra.mxu0 0
  %937 = vmatprep.mubr.bf16.mxu0 0
  %938 = vmatmul.mubr.bf16.gmra.mrb[0].mxu0 %v904
  %v939 = vpop.f32.mrb[0].mxu0
  %v940 = vadd.f32 0.0, %v939
  %v941 = vpop.f32.mrb[0].mxu0
  %v942 = vadd.f32 0.0, %v941
  %v943 = vpop.f32.mrb[0].mxu0
  %v944 = vpop.f32.mrb[0].mxu0
  %945 = vdwg.mxu0
  %v946 = vadd.f32 %v901, %v940
  %v947 = vadd.f32 %v902, %v942
  %v948 = vxor.u32 %v946, 2147483648
  %v949 = vmul.f32 %v948, 1.442695
  %v950 = vpow.pop %v949
  %v951 = vadd.f32 %v950, 1.0
  %v952 = vrcp.pop %v951
  %v953 = vmul.f32 1.0, %v952
  %v954 = vtanh.pop %v947
  %v955 = vxor.u32 %v947, 2147483648
  %v956 = vmul.f32 %v955, 1.442695
  %v957 = vpow.pop %v956
  %v958 = vadd.f32 %v957, 1.0
  %v959 = vrcp.pop %v958
  %v960 = vmul.f32 1.0, %v959
  %961 = vrot.lane.b32.xlu0 %v953, 64
  %v962 = vpop.permute.xlu0 %961
  %963 = vrot.lane.b32.xlu0 %v960, 64
  %v964 = vpop.permute.xlu0 %963
  %v965 = vld [vmem:[#allocation5] sm:$0xff]
  %v966 = vmul.f32 %v962, %v965
  %v967 = vmul.f32 %v953, %v954
  %v968 = vadd.f32 %v966, %v967
  %v969 = vtanh.pop %v968
  %v970 = vmul.f32 %v964, %v969
  %971 = vst [vmem:[#allocation4] sm:$0xff] %v970
  %972 = vst [vmem:[#allocation5] sm:$0xff] %v968
  %s973 = scalar_lea.vmem [#allocation3], 40
  %974 = vst [vmem:[%s973] sm:$0xff] %v970
  %v975 = vld [vmem:[%s426] sm:$0xff]
  %v976 = vld [vmem:[%s426 + $0x8] sm:$0xff]
  %v977 = vld [vmem:[#allocation4] sm:$0xff]
  %v978 = vpack.c.bf16 %v977, %v977
  %979 = vmatprep.subr.bf16.mxu0 %v505
  %980 = vmatpush1.bf16.msra.mxu0 %v504
  %981 = vmatprep.subr.bf16.mxu0 %v507
  %982 = vmatpush1.bf16.msra.mxu0 %v506
  %983 = vmatprep.subr.bf16.mxu0 %v509
  %984 = vmatpush1.bf16.msra.mxu0 %v508
  %985 = vmatprep.subr.bf16.mxu0 %v511
  %986 = vmatpush1.bf16.msra.mxu0 %v510
  %987 = vmatprep.subr.bf16.mxu0 %v513
  %988 = vmatpush1.bf16.msra.mxu0 %v512
  %989 = vmatprep.subr.bf16.mxu0 %v515
  %990 = vmatpush1.bf16.msra.mxu0 %v514
  %991 = vmatprep.subr.bf16.mxu0 %v517
  %992 = vmatpush1.bf16.msra.mxu0 %v516
  %993 = vmatprep.subr.bf16.mxu0 %v519
  %994 = vmatpush1.bf16.msra.mxu0 %v518
  %995 = vmatprep.subr.bf16.mxu0 0
  %996 = vmatpush1.bf16.msra.mxu0 0
  %997 = vmatprep.subr.bf16.mxu0 0
  %998 = vmatpush1.bf16.msra.mxu0 0
  %999 = vmatprep.subr.bf16.mxu0 0
  %1000 = vmatpush1.bf16.msra.mxu0 0
  %1001 = vmatprep.subr.bf16.mxu0 0
  %1002 = vmatpush1.bf16.msra.mxu0 0
  %1003 = vmatprep.subr.bf16.mxu0 0
  %1004 = vmatpush1.bf16.msra.mxu0 0
  %1005 = vmatprep.subr.bf16.mxu0 0
  %1006 = vmatpush1.bf16.msra.mxu0 0
  %1007 = vmatprep.subr.bf16.mxu0 0
  %1008 = vmatpush1.bf16.msra.mxu0 0
  %1009 = vmatprep.subr.bf16.mxu0 0
  %1010 = vmatpush1.bf16.msra.mxu0 0
  %1011 = vmatprep.mubr.bf16.mxu0 0
  %1012 = vmatmul.mubr.bf16.gmra.mrb[0].mxu0 %v978
  %v1013 = vpop.f32.mrb[0].mxu0
  %v1014 = vadd.f32 0.0, %v1013
  %v1015 = vpop.f32.mrb[0].mxu0
  %v1016 = vadd.f32 0.0, %v1015
  %v1017 = vpop.f32.mrb[0].mxu0
  %v1018 = vpop.f32.mrb[0].mxu0
  %1019 = vdwg.mxu0
  %v1020 = vadd.f32 %v975, %v1014
  %v1021 = vadd.f32 %v976, %v1016
  %v1022 = vxor.u32 %v1020, 2147483648
  %v1023 = vmul.f32 %v1022, 1.442695
  %v1024 = vpow.pop %v1023
  %v1025 = vadd.f32 %v1024, 1.0
  %v1026 = vrcp.pop %v1025
  %v1027 = vmul.f32 1.0, %v1026
  %v1028 = vtanh.pop %v1021
  %v1029 = vxor.u32 %v1021, 2147483648
  %v1030 = vmul.f32 %v1029, 1.442695
  %v1031 = vpow.pop %v1030
  %v1032 = vadd.f32 %v1031, 1.0
  %v1033 = vrcp.pop %v1032
  %v1034 = vmul.f32 1.0, %v1033
  %1035 = vrot.lane.b32.xlu0 %v1027, 64
  %v1036 = vpop.permute.xlu0 %1035
  %1037 = vrot.lane.b32.xlu0 %v1034, 64
  %v1038 = vpop.permute.xlu0 %1037
  %v1039 = vld [vmem:[#allocation5] sm:$0xff]
  %v1040 = vmul.f32 %v1036, %v1039
  %v1041 = vmul.f32 %v1027, %v1028
  %v1042 = vadd.f32 %v1040, %v1041
  %v1043 = vtanh.pop %v1042
  %v1044 = vmul.f32 %v1038, %v1043
  %1045 = vst [vmem:[#allocation4] sm:$0xff] %v1044
  %1046 = vst [vmem:[#allocation5] sm:$0xff] %v1042
  %s1047 = scalar_lea.vmem [#allocation3], 48
  %1048 = vst [vmem:[%s1047] sm:$0xff] %v1044
  %v1049 = vld [vmem:[%s431] sm:$0xff]
  %v1050 = vld [vmem:[%s431 + $0x8] sm:$0xff]
  %v1051 = vld [vmem:[#allocation4] sm:$0xff]
  %v1052 = vpack.c.bf16 %v1051, %v1051
  %1053 = vmatprep.subr.bf16.mxu0 %v505
  %1054 = vmatpush1.bf16.msra.mxu0 %v504
  %1055 = vmatprep.subr.bf16.mxu0 %v507
  %1056 = vmatpush1.bf16.msra.mxu0 %v506
  %1057 = vmatprep.subr.bf16.mxu0 %v509
  %1058 = vmatpush1.bf16.msra.mxu0 %v508
  %1059 = vmatprep.subr.bf16.mxu0 %v511
  %1060 = vmatpush1.bf16.msra.mxu0 %v510
  %1061 = vmatprep.subr.bf16.mxu0 %v513
  %1062 = vmatpush1.bf16.msra.mxu0 %v512
  %1063 = vmatprep.subr.bf16.mxu0 %v515
  %1064 = vmatpush1.bf16.msra.mxu0 %v514
  %1065 = vmatprep.subr.bf16.mxu0 %v517
  %1066 = vmatpush1.bf16.msra.mxu0 %v516
  %1067 = vmatprep.subr.bf16.mxu0 %v519
  %1068 = vmatpush1.bf16.msra.mxu0 %v518
  %1069 = vmatprep.subr.bf16.mxu0 0
  %1070 = vmatpush1.bf16.msra.mxu0 0
  %1071 = vmatprep.subr.bf16.mxu0 0
  %1072 = vmatpush1.bf16.msra.mxu0 0
  %1073 = vmatprep.subr.bf16.mxu0 0
  %1074 = vmatpush1.bf16.msra.mxu0 0
  %1075 = vmatprep.subr.bf16.mxu0 0
  %1076 = vmatpush1.bf16.msra.mxu0 0
  %1077 = vmatprep.subr.bf16.mxu0 0
  %1078 = vmatpush1.bf16.msra.mxu0 0
  %1079 = vmatprep.subr.bf16.mxu0 0
  %1080 = vmatpush1.bf16.msra.mxu0 0
  %1081 = vmatprep.subr.bf16.mxu0 0
  %1082 = vmatpush1.bf16.msra.mxu0 0
  %1083 = vmatprep.subr.bf16.mxu0 0
  %1084 = vmatpush1.bf16.msra.mxu0 0
  %1085 = vmatprep.mubr.bf16.mxu0 0
  %1086 = vmatmul.mubr.bf16.gmra.mrb[0].mxu0 %v1052
  %v1087 = vpop.f32.mrb[0].mxu0
  %v1088 = vadd.f32 0.0, %v1087
  %v1089 = vpop.f32.mrb[0].mxu0
  %v1090 = vadd.f32 0.0, %v1089
  %v1091 = vpop.f32.mrb[0].mxu0
  %v1092 = vpop.f32.mrb[0].mxu0
  %1093 = vdwg.mxu0
  %v1094 = vadd.f32 %v1049, %v1088
  %v1095 = vadd.f32 %v1050, %v1090
  %v1096 = vxor.u32 %v1094, 2147483648
  %v1097 = vmul.f32 %v1096, 1.442695
  %v1098 = vpow.pop %v1097
  %v1099 = vadd.f32 %v1098, 1.0
  %v1100 = vrcp.pop %v1099
  %v1101 = vmul.f32 1.0, %v1100
  %v1102 = vtanh.pop %v1095
  %v1103 = vxor.u32 %v1095, 2147483648
  %v1104 = vmul.f32 %v1103, 1.442695
  %v1105 = vpow.pop %v1104
  %v1106 = vadd.f32 %v1105, 1.0
  %v1107 = vrcp.pop %v1106
  %v1108 = vmul.f32 1.0, %v1107
  %1109 = vrot.lane.b32.xlu0 %v1101, 64
  %v1110 = vpop.permute.xlu0 %1109
  %1111 = vrot.lane.b32.xlu0 %v1108, 64
  %v1112 = vpop.permute.xlu0 %1111
  %v1113 = vld [vmem:[#allocation5] sm:$0xff]
  %v1114 = vmul.f32 %v1110, %v1113
  %v1115 = vmul.f32 %v1101, %v1102
  %v1116 = vadd.f32 %v1114, %v1115
  %v1117 = vtanh.pop %v1116
  %v1118 = vmul.f32 %v1112, %v1117
  %1119 = vst [vmem:[#allocation4] sm:$0xff] %v1118
  %1120 = vst [vmem:[#allocation5] sm:$0xff] %v1116
  %s1121 = scalar_lea.vmem [#allocation3], 56
  %1122 = vst [vmem:[%s1121] sm:$0xff] %v1118
  %v1123 = vld [vmem:[#allocation3] sm:$0xff]
  %v1124 = vld [vmem:[#allocation3 + $0x8] sm:$0xff]
  %v1125 = vld [vmem:[#allocation3 + $0x10] sm:$0xff]
  %v1126 = vld [vmem:[#allocation3 + $0x18] sm:$0xff]
  %v1127 = vld [vmem:[#allocation3 + $0x20] sm:$0xff]
  %v1128 = vld [vmem:[#allocation3 + $0x28] sm:$0xff]
  %v1129 = vld [vmem:[#allocation3 + $0x30] sm:$0xff]
  %v1130 = vld [vmem:[#allocation3 + $0x38] sm:$0xff]
  %v1131 = vpack.c.bf16 %v1124, %v1123
  %v1132 = vpack.c.bf16 %v1126, %v1125
  %v1133 = vpack.c.bf16 %v1128, %v1127
  %v1134 = vpack.c.bf16 %v1130, %v1129
  %v1135 = vld [vmem:[%s5] sm:$0xff]
  %v1136 = vld [vmem:[%s5 + $0x8] sm:$0xff]
  %v1137 = vld [vmem:[%s5 + $0x10] sm:$0xff]
  %v1138 = vld [vmem:[%s5 + $0x18] sm:$0xff]
  %v1139 = vld [vmem:[%s5 + $0x20] sm:$0xff]
  %v1140 = vld [vmem:[%s5 + $0x28] sm:$0xff]
  %v1141 = vld [vmem:[%s5 + $0x30] sm:$0xff]
  %v1142 = vld [vmem:[%s5 + $0x38] sm:$0xff]
  %v1143 = vld [vmem:[%s5 + $0x40] sm:$0xff]
  %v1144 = vld [vmem:[%s5 + $0x48] sm:$0xff]
  %v1145 = vld [vmem:[%s5 + $0x50] sm:$0xff]
  %v1146 = vld [vmem:[%s5 + $0x58] sm:$0xff]
  %v1147 = vld [vmem:[%s5 + $0x60] sm:$0xff]
  %v1148 = vld [vmem:[%s5 + $0x68] sm:$0xff]
  %v1149 = vld [vmem:[%s5 + $0x70] sm:$0xff]
  %v1150 = vld [vmem:[%s5 + $0x78] sm:$0xff]
  %v1151 = vld [vmem:[%s6] sm:$0xff]
  %v1152 = vld [vmem:[%s6 + $0x8] sm:$0xff]
  %v1153 = vld [vmem:[%s6 + $0x10] sm:$0xff]
  %v1154 = vld [vmem:[%s6 + $0x18] sm:$0xff]
  %v1155 = vld [vmem:[%s6 + $0x20] sm:$0xff]
  %v1156 = vld [vmem:[%s6 + $0x28] sm:$0xff]
  %v1157 = vld [vmem:[%s6 + $0x30] sm:$0xff]
  %v1158 = vld [vmem:[%s6 + $0x38] sm:$0xff]
  %v1159 = vld [vmem:[%s6 + $0x40] sm:$0xff]
  %v1160 = vld [vmem:[%s6 + $0x48] sm:$0xff]
  %v1161 = vld [vmem:[%s6 + $0x50] sm:$0xff]
  %v1162 = vld [vmem:[%s6 + $0x58] sm:$0xff]
  %v1163 = vld [vmem:[%s6 + $0x60] sm:$0xff]
  %v1164 = vld [vmem:[%s6 + $0x68] sm:$0xff]
  %v1165 = vld [vmem:[%s6 + $0x70] sm:$0xff]
  %v1166 = vld [vmem:[%s6 + $0x78] sm:$0xff]
  %v1183 = vunpack.c.l.b16 %v1151
  %v1184 = vunpack.c.h.b16 %v1151
  %v1185 = vunpack.c.l.b16 %v1152
  %v1186 = vunpack.c.h.b16 %v1152
  %v1187 = vunpack.c.l.b16 %v1153
  %v1188 = vunpack.c.h.b16 %v1153
  %v1189 = vunpack.c.l.b16 %v1154
  %v1190 = vunpack.c.h.b16 %v1154
  %v1191 = vunpack.c.l.b16 %v1155
  %v1192 = vunpack.c.h.b16 %v1155
  %v1193 = vunpack.c.l.b16 %v1156
  %v1194 = vunpack.c.h.b16 %v1156
  %v1195 = vunpack.c.l.b16 %v1157
  %v1196 = vunpack.c.h.b16 %v1157
  %v1197 = vunpack.c.l.b16 %v1158
  %v1198 = vunpack.c.h.b16 %v1158
  %v1199 = vunpack.c.l.b16 %v1159
  %v1200 = vunpack.c.h.b16 %v1159
  %v1201 = vunpack.c.l.b16 %v1160
  %v1202 = vunpack.c.h.b16 %v1160
  %v1203 = vunpack.c.l.b16 %v1161
  %v1204 = vunpack.c.h.b16 %v1161
  %v1205 = vunpack.c.l.b16 %v1162
  %v1206 = vunpack.c.h.b16 %v1162
  %v1207 = vunpack.c.l.b16 %v1163
  %v1208 = vunpack.c.h.b16 %v1163
  %v1209 = vunpack.c.l.b16 %v1164
  %v1210 = vunpack.c.h.b16 %v1164
  %v1211 = vunpack.c.l.b16 %v1165
  %v1212 = vunpack.c.h.b16 %v1165
  %v1213 = vunpack.c.l.b16 %v1166
  %v1214 = vunpack.c.h.b16 %v1166
  %v1215 = vpack.c.b16 %v1185, %v1183
  %v1216 = vpack.c.b16 %v1186, %v1184
  %v1217 = vpack.c.b16 %v1189, %v1187
  %v1218 = vpack.c.b16 %v1190, %v1188
  %v1219 = vpack.c.b16 %v1193, %v1191
  %v1220 = vpack.c.b16 %v1194, %v1192
  %v1221 = vpack.c.b16 %v1197, %v1195
  %v1222 = vpack.c.b16 %v1198, %v1196
  %v1223 = vpack.c.b16 %v1201, %v1199
  %v1224 = vpack.c.b16 %v1202, %v1200
  %v1225 = vpack.c.b16 %v1205, %v1203
  %v1226 = vpack.c.b16 %v1206, %v1204
  %v1227 = vpack.c.b16 %v1209, %v1207
  %v1228 = vpack.c.b16 %v1210, %v1208
  %v1229 = vpack.c.b16 %v1213, %v1211
  %v1230 = vpack.c.b16 %v1214, %v1212
  %1247 = vmatprep.subr.bf16.mxu0 %v1216
  %1248 = vmatpush1.bf16.msra.mxu0 %v1215
  %1249 = vmatprep.subr.bf16.mxu0 %v1218
  %1250 = vmatpush1.bf16.msra.mxu0 %v1217
  %1251 = vmatprep.subr.bf16.mxu0 %v1220
  %1252 = vmatpush1.bf16.msra.mxu0 %v1219
  %1253 = vmatprep.subr.bf16.mxu0 %v1222
  %1254 = vmatpush1.bf16.msra.mxu0 %v1221
  %1255 = vmatprep.subr.bf16.mxu0 %v1224
  %1256 = vmatpush1.bf16.msra.mxu0 %v1223
  %1257 = vmatprep.subr.bf16.mxu0 %v1226
  %1258 = vmatpush1.bf16.msra.mxu0 %v1225
  %1259 = vmatprep.subr.bf16.mxu0 %v1228
  %1260 = vmatpush1.bf16.msra.mxu0 %v1227
  %1261 = vmatprep.subr.bf16.mxu0 %v1230
  %1262 = vmatpush1.bf16.msra.mxu0 %v1229
  %1263 = vmatprep.subr.bf16.mxu0 0
  %1264 = vmatpush1.bf16.msra.mxu0 0
  %1265 = vmatprep.subr.bf16.mxu0 0
  %1266 = vmatpush1.bf16.msra.mxu0 0
  %1267 = vmatprep.subr.bf16.mxu0 0
  %1268 = vmatpush1.bf16.msra.mxu0 0
  %1269 = vmatprep.subr.bf16.mxu0 0
  %1270 = vmatpush1.bf16.msra.mxu0 0
  %1271 = vmatprep.subr.bf16.mxu0 0
  %1272 = vmatpush1.bf16.msra.mxu0 0
  %1273 = vmatprep.subr.bf16.mxu0 0
  %1274 = vmatpush1.bf16.msra.mxu0 0
  %1275 = vmatprep.subr.bf16.mxu0 0
  %1276 = vmatpush1.bf16.msra.mxu0 0
  %1277 = vmatprep.subr.bf16.mxu0 0
  %1278 = vmatpush1.bf16.msra.mxu0 0
  %1279 = vmatprep.mubr.bf16.mxu0 0
  %1280 = vmatmul.mubr.bf16.gmra.mrb[0].mxu0 %v1131
  %v1281 = vpop.f32.mrb[0].mxu0
  %v1282 = vadd.f32 0.0, %v1281
  %v1283 = vpop.f32.mrb[0].mxu0
  %v1284 = vadd.f32 0.0, %v1283
  %v1285 = vpop.f32.mrb[0].mxu0
  %v1286 = vadd.f32 0.0, %v1285
  %v1287 = vpop.f32.mrb[0].mxu0
  %v1288 = vadd.f32 0.0, %v1287
  %1289 = vmatprep.mubr.bf16.mxu0 0
  %1290 = vmatmul.mubr.bf16.gmra.mrb[0].mxu0 %v1132
  %v1291 = vpop.f32.mrb[0].mxu0
  %v1292 = vadd.f32 0.0, %v1291
  %v1293 = vpop.f32.mrb[0].mxu0
  %v1294 = vadd.f32 0.0, %v1293
  %v1295 = vpop.f32.mrb[0].mxu0
  %v1296 = vadd.f32 0.0, %v1295
  %v1297 = vpop.f32.mrb[0].mxu0
  %v1298 = vadd.f32 0.0, %v1297
  %1299 = vmatprep.mubr.bf16.mxu0 0
  %1300 = vmatmul.mubr.bf16.gmra.mrb[0].mxu0 %v1133
  %v1301 = vpop.f32.mrb[0].mxu0
  %v1302 = vadd.f32 0.0, %v1301
  %v1303 = vpop.f32.mrb[0].mxu0
  %v1304 = vadd.f32 0.0, %v1303
  %v1305 = vpop.f32.mrb[0].mxu0
  %v1306 = vadd.f32 0.0, %v1305
  %v1307 = vpop.f32.mrb[0].mxu0
  %v1308 = vadd.f32 0.0, %v1307
  %1309 = vmatprep.mubr.bf16.mxu0 0
  %1310 = vmatmul.mubr.bf16.gmra.mrb[0].mxu0 %v1134
  %v1311 = vpop.f32.mrb[0].mxu0
  %v1312 = vadd.f32 0.0, %v1311
  %v1313 = vpop.f32.mrb[0].mxu0
  %v1314 = vadd.f32 0.0, %v1313
  %v1315 = vpop.f32.mrb[0].mxu0
  %v1316 = vadd.f32 0.0, %v1315
  %v1317 = vpop.f32.mrb[0].mxu0
  %v1318 = vadd.f32 0.0, %v1317
  %1319 = vdwg.mxu0
  %v1320 = vld [vmem:[%s8] sm:$0x3]
  %v1322 = vlaneseq
  %v1323 = vshrl.u32 %v1322, 7
  %v1324 = vsub.s32 0, %v1323
  %v1325 = vrot.slane %v1320, %v1324
  %v1326 = vlaneseq
  %v1327 = vshrl.u32 %v1326, 7
  %v1328 = vsub.s32 1, %v1327
  %v1329 = vrot.slane %v1320, %v1328
  %v1348 = vunpack.c.l.b16 %v1135
  %v1349 = vunpack.c.h.b16 %v1135
  %v1350 = vunpack.c.l.b16 %v1136
  %v1351 = vunpack.c.h.b16 %v1136
  %v1352 = vunpack.c.l.b16 %v1137
  %v1353 = vunpack.c.h.b16 %v1137
  %v1354 = vunpack.c.l.b16 %v1138
  %v1355 = vunpack.c.h.b16 %v1138
  %v1356 = vunpack.c.l.b16 %v1139
  %v1357 = vunpack.c.h.b16 %v1139
  %v1358 = vunpack.c.l.b16 %v1140
  %v1359 = vunpack.c.h.b16 %v1140
  %v1360 = vunpack.c.l.b16 %v1141
  %v1361 = vunpack.c.h.b16 %v1141
  %v1362 = vunpack.c.l.b16 %v1142
  %v1363 = vunpack.c.h.b16 %v1142
  %v1364 = vunpack.c.l.b16 %v1143
  %v1365 = vunpack.c.h.b16 %v1143
  %v1366 = vunpack.c.l.b16 %v1144
  %v1367 = vunpack.c.h.b16 %v1144
  %v1368 = vunpack.c.l.b16 %v1145
  %v1369 = vunpack.c.h.b16 %v1145
  %v1370 = vunpack.c.l.b16 %v1146
  %v1371 = vunpack.c.h.b16 %v1146
  %v1372 = vunpack.c.l.b16 %v1147
  %v1373 = vunpack.c.h.b16 %v1147
  %v1374 = vunpack.c.l.b16 %v1148
  %v1375 = vunpack.c.h.b16 %v1148
  %v1376 = vunpack.c.l.b16 %v1149
  %v1377 = vunpack.c.h.b16 %v1149
  %v1378 = vunpack.c.l.b16 %v1150
  %v1379 = vunpack.c.h.b16 %v1150
  %v1380 = vpack.c.b16 %v1350, %v1348
  %v1381 = vpack.c.b16 %v1351, %v1349
  %v1382 = vpack.c.b16 %v1354, %v1352
  %v1383 = vpack.c.b16 %v1355, %v1353
  %v1384 = vpack.c.b16 %v1358, %v1356
  %v1385 = vpack.c.b16 %v1359, %v1357
  %v1386 = vpack.c.b16 %v1362, %v1360
  %v1387 = vpack.c.b16 %v1363, %v1361
  %v1388 = vpack.c.b16 %v1366, %v1364
  %v1389 = vpack.c.b16 %v1367, %v1365
  %v1390 = vpack.c.b16 %v1370, %v1368
  %v1391 = vpack.c.b16 %v1371, %v1369
  %v1392 = vpack.c.b16 %v1374, %v1372
  %v1393 = vpack.c.b16 %v1375, %v1373
  %v1394 = vpack.c.b16 %v1378, %v1376
  %v1395 = vpack.c.b16 %v1379, %v1377
  %1412 = vmatprep.subr.bf16.mxu0 %v1381
  %1413 = vmatpush1.bf16.msra.mxu0 %v1380
  %1414 = vmatprep.subr.bf16.mxu0 %v1383
  %1415 = vmatpush1.bf16.msra.mxu0 %v1382
  %1416 = vmatprep.subr.bf16.mxu0 %v1385
  %1417 = vmatpush1.bf16.msra.mxu0 %v1384
  %1418 = vmatprep.subr.bf16.mxu0 %v1387
  %1419 = vmatpush1.bf16.msra.mxu0 %v1386
  %1420 = vmatprep.subr.bf16.mxu0 %v1389
  %1421 = vmatpush1.bf16.msra.mxu0 %v1388
  %1422 = vmatprep.subr.bf16.mxu0 %v1391
  %1423 = vmatpush1.bf16.msra.mxu0 %v1390
  %1424 = vmatprep.subr.bf16.mxu0 %v1393
  %1425 = vmatpush1.bf16.msra.mxu0 %v1392
  %1426 = vmatprep.subr.bf16.mxu0 %v1395
  %1427 = vmatpush1.bf16.msra.mxu0 %v1394
  %1428 = vmatprep.subr.bf16.mxu0 0
  %1429 = vmatpush1.bf16.msra.mxu0 0
  %1430 = vmatprep.subr.bf16.mxu0 0
  %1431 = vmatpush1.bf16.msra.mxu0 0
  %1432 = vmatprep.subr.bf16.mxu0 0
  %1433 = vmatpush1.bf16.msra.mxu0 0
  %1434 = vmatprep.subr.bf16.mxu0 0
  %1435 = vmatpush1.bf16.msra.mxu0 0
  %1436 = vmatprep.subr.bf16.mxu0 0
  %1437 = vmatpush1.bf16.msra.mxu0 0
  %1438 = vmatprep.subr.bf16.mxu0 0
  %1439 = vmatpush1.bf16.msra.mxu0 0
  %1440 = vmatprep.subr.bf16.mxu0 0
  %1441 = vmatpush1.bf16.msra.mxu0 0
  %1442 = vmatprep.subr.bf16.mxu0 0
  %1443 = vmatpush1.bf16.msra.mxu0 0
  %1444 = vmatprep.mubr.bf16.mxu0 0
  %1445 = vmatmul.mubr.bf16.gmra.mrb[0].mxu0 %v1131
  %v1446 = vpop.f32.mrb[0].mxu0
  %v1447 = vadd.f32 %v1325, %v1446
  %v1448 = vpop.f32.mrb[0].mxu0
  %v1449 = vadd.f32 %v1329, %v1448
  %v1450 = vpop.f32.mrb[0].mxu0
  %v1451 = vadd.f32 %v1325, %v1450
  %v1452 = vpop.f32.mrb[0].mxu0
  %v1453 = vadd.f32 %v1329, %v1452
  %1454 = vmatprep.mubr.bf16.mxu0 0
  %1455 = vmatmul.mubr.bf16.gmra.mrb[0].mxu0 %v1132
  %v1456 = vpop.f32.mrb[0].mxu0
  %v1457 = vadd.f32 %v1325, %v1456
  %v1458 = vpop.f32.mrb[0].mxu0
  %v1459 = vadd.f32 %v1329, %v1458
  %v1460 = vpop.f32.mrb[0].mxu0
  %v1461 = vadd.f32 %v1325, %v1460
  %v1462 = vpop.f32.mrb[0].mxu0
  %v1463 = vadd.f32 %v1329, %v1462
  %1464 = vmatprep.mubr.bf16.mxu0 0
  %1465 = vmatmul.mubr.bf16.gmra.mrb[0].mxu0 %v1133
  %v1466 = vpop.f32.mrb[0].mxu0
  %v1467 = vadd.f32 %v1325, %v1466
  %v1468 = vpop.f32.mrb[0].mxu0
  %v1469 = vadd.f32 %v1329, %v1468
  %v1470 = vpop.f32.mrb[0].mxu0
  %v1471 = vadd.f32 %v1325, %v1470
  %v1472 = vpop.f32.mrb[0].mxu0
  %v1473 = vadd.f32 %v1329, %v1472
  %1474 = vmatprep.mubr.bf16.mxu0 0
  %1475 = vmatmul.mubr.bf16.gmra.mrb[0].mxu0 %v1134
  %v1476 = vpop.f32.mrb[0].mxu0
  %v1477 = vadd.f32 %v1325, %v1476
  %v1478 = vpop.f32.mrb[0].mxu0
  %v1479 = vadd.f32 %v1329, %v1478
  %v1480 = vpop.f32.mrb[0].mxu0
  %v1481 = vadd.f32 %v1325, %v1480
  %v1482 = vpop.f32.mrb[0].mxu0
  %v1483 = vadd.f32 %v1329, %v1482
  %1484 = vdwg.mxu0
  %v1485 = vadd.f32 %v1447, %v1316
  %v1486 = vadd.f32 %v1449, %v1318
  %1487 = vst [vmem:[#allocation2] sm:$0xff] %v1485
  %1488 = vst [vmem:[#allocation2 + $0x8] sm:$0xff] %v1486
  %v1489 = vadd.f32 %v1451, %v1312
  %v1490 = vadd.f32 %v1453, %v1314
  %1491 = vst [vmem:[%s401] sm:$0xff] %v1489
  %1492 = vst [vmem:[%s401 + $0x8] sm:$0xff] %v1490
  %v1493 = vadd.f32 %v1457, %v1306
  %v1494 = vadd.f32 %v1459, %v1308
  %1495 = vst [vmem:[%s406] sm:$0xff] %v1493
  %1496 = vst [vmem:[%s406 + $0x8] sm:$0xff] %v1494
  %v1497 = vadd.f32 %v1461, %v1302
  %v1498 = vadd.f32 %v1463, %v1304
  %1499 = vst [vmem:[%s411] sm:$0xff] %v1497
  %1500 = vst [vmem:[%s411 + $0x8] sm:$0xff] %v1498
  %v1501 = vadd.f32 %v1467, %v1296
  %v1502 = vadd.f32 %v1469, %v1298
  %1503 = vst [vmem:[%s416] sm:$0xff] %v1501
  %1504 = vst [vmem:[%s416 + $0x8] sm:$0xff] %v1502
  %v1505 = vadd.f32 %v1471, %v1292
  %v1506 = vadd.f32 %v1473, %v1294
  %1507 = vst [vmem:[%s421] sm:$0xff] %v1505
  %1508 = vst [vmem:[%s421 + $0x8] sm:$0xff] %v1506
  %v1509 = vadd.f32 %v1477, %v1286
  %v1510 = vadd.f32 %v1479, %v1288
  %1511 = vst [vmem:[%s426] sm:$0xff] %v1509
  %1512 = vst [vmem:[%s426 + $0x8] sm:$0xff] %v1510
  %v1513 = vadd.f32 %v1481, %v1282
  %v1514 = vadd.f32 %v1483, %v1284
  %1515 = vst [vmem:[%s431] sm:$0xff] %v1513
  %1516 = vst [vmem:[%s431 + $0x8] sm:$0xff] %v1514
  %v1517 = vld [vmem:[%s7] sm:$0xff]
  %v1518 = vld [vmem:[%s7 + $0x8] sm:$0xff]
  %v1519 = vld [vmem:[%s7 + $0x10] sm:$0xff]
  %v1520 = vld [vmem:[%s7 + $0x18] sm:$0xff]
  %v1521 = vld [vmem:[%s7 + $0x20] sm:$0xff]
  %v1522 = vld [vmem:[%s7 + $0x28] sm:$0xff]
  %v1523 = vld [vmem:[%s7 + $0x30] sm:$0xff]
  %v1524 = vld [vmem:[%s7 + $0x38] sm:$0xff]
  %v1525 = vld [vmem:[%s7 + $0x40] sm:$0xff]
  %v1526 = vld [vmem:[%s7 + $0x48] sm:$0xff]
  %v1527 = vld [vmem:[%s7 + $0x50] sm:$0xff]
  %v1528 = vld [vmem:[%s7 + $0x58] sm:$0xff]
  %v1529 = vld [vmem:[%s7 + $0x60] sm:$0xff]
  %v1530 = vld [vmem:[%s7 + $0x68] sm:$0xff]
  %v1531 = vld [vmem:[%s7 + $0x70] sm:$0xff]
  %v1532 = vld [vmem:[%s7 + $0x78] sm:$0xff]
  %1533 = vst [vmem:[#allocation4] sm:$0xff] 0.0
  %1534 = vst [vmem:[#allocation5] sm:$0xff] 0.0
  %v1535 = vld [vmem:[#allocation2] sm:$0xff]
  %v1536 = vld [vmem:[#allocation2 + $0x8] sm:$0xff]
  %v1537 = vld [vmem:[#allocation4] sm:$0xff]
  %v1538 = vpack.c.bf16 %v1537, %v1537
  %v1555 = vunpack.c.l.b16 %v1517
  %v1556 = vunpack.c.h.b16 %v1517
  %v1557 = vunpack.c.l.b16 %v1518
  %v1558 = vunpack.c.h.b16 %v1518
  %v1559 = vunpack.c.l.b16 %v1519
  %v1560 = vunpack.c.h.b16 %v1519
  %v1561 = vunpack.c.l.b16 %v1520
  %v1562 = vunpack.c.h.b16 %v1520
  %v1563 = vunpack.c.l.b16 %v1521
  %v1564 = vunpack.c.h.b16 %v1521
  %v1565 = vunpack.c.l.b16 %v1522
  %v1566 = vunpack.c.h.b16 %v1522
  %v1567 = vunpack.c.l.b16 %v1523
  %v1568 = vunpack.c.h.b16 %v1523
  %v1569 = vunpack.c.l.b16 %v1524
  %v1570 = vunpack.c.h.b16 %v1524
  %v1571 = vunpack.c.l.b16 %v1525
  %v1572 = vunpack.c.h.b16 %v1525
  %v1573 = vunpack.c.l.b16 %v1526
  %v1574 = vunpack.c.h.b16 %v1526
  %v1575 = vunpack.c.l.b16 %v1527
  %v1576 = vunpack.c.h.b16 %v1527
  %v1577 = vunpack.c.l.b16 %v1528
  %v1578 = vunpack.c.h.b16 %v1528
  %v1579 = vunpack.c.l.b16 %v1529
  %v1580 = vunpack.c.h.b16 %v1529
  %v1581 = vunpack.c.l.b16 %v1530
  %v1582 = vunpack.c.h.b16 %v1530
  %v1583 = vunpack.c.l.b16 %v1531
  %v1584 = vunpack.c.h.b16 %v1531
  %v1585 = vunpack.c.l.b16 %v1532
  %v1586 = vunpack.c.h.b16 %v1532
  %v1587 = vpack.c.b16 %v1557, %v1555
  %v1588 = vpack.c.b16 %v1558, %v1556
  %v1589 = vpack.c.b16 %v1561, %v1559
  %v1590 = vpack.c.b16 %v1562, %v1560
  %v1591 = vpack.c.b16 %v1565, %v1563
  %v1592 = vpack.c.b16 %v1566, %v1564
  %v1593 = vpack.c.b16 %v1569, %v1567
  %v1594 = vpack.c.b16 %v1570, %v1568
  %v1595 = vpack.c.b16 %v1573, %v1571
  %v1596 = vpack.c.b16 %v1574, %v1572
  %v1597 = vpack.c.b16 %v1577, %v1575
  %v1598 = vpack.c.b16 %v1578, %v1576
  %v1599 = vpack.c.b16 %v1581, %v1579
  %v1600 = vpack.c.b16 %v1582, %v1580
  %v1601 = vpack.c.b16 %v1585, %v1583
  %v1602 = vpack.c.b16 %v1586, %v1584
  %1619 = vmatprep.subr.bf16.mxu0 %v1588
  %1620 = vmatpush1.bf16.msra.mxu0 %v1587
  %1621 = vmatprep.subr.bf16.mxu0 %v1590
  %1622 = vmatpush1.bf16.msra.mxu0 %v1589
  %1623 = vmatprep.subr.bf16.mxu0 %v1592
  %1624 = vmatpush1.bf16.msra.mxu0 %v1591
  %1625 = vmatprep.subr.bf16.mxu0 %v1594
  %1626 = vmatpush1.bf16.msra.mxu0 %v1593
  %1627 = vmatprep.subr.bf16.mxu0 %v1596
  %1628 = vmatpush1.bf16.msra.mxu0 %v1595
  %1629 = vmatprep.subr.bf16.mxu0 %v1598
  %1630 = vmatpush1.bf16.msra.mxu0 %v1597
  %1631 = vmatprep.subr.bf16.mxu0 %v1600
  %1632 = vmatpush1.bf16.msra.mxu0 %v1599
  %1633 = vmatprep.subr.bf16.mxu0 %v1602
  %1634 = vmatpush1.bf16.msra.mxu0 %v1601
  %1635 = vmatprep.subr.bf16.mxu0 0
  %1636 = vmatpush1.bf16.msra.mxu0 0
  %1637 = vmatprep.subr.bf16.mxu0 0
  %1638 = vmatpush1.bf16.msra.mxu0 0
  %1639 = vmatprep.subr.bf16.mxu0 0
  %1640 = vmatpush1.bf16.msra.mxu0 0
  %1641 = vmatprep.subr.bf16.mxu0 0
  %1642 = vmatpush1.bf16.msra.mxu0 0
  %1643 = vmatprep.subr.bf16.mxu0 0
  %1644 = vmatpush1.bf16.msra.mxu0 0
  %1645 = vmatprep.subr.bf16.mxu0 0
  %1646 = vmatpush1.bf16.msra.mxu0 0
  %1647 = vmatprep.subr.bf16.mxu0 0
  %1648 = vmatpush1.bf16.msra.mxu0 0
  %1649 = vmatprep.subr.bf16.mxu0 0
  %1650 = vmatpush1.bf16.msra.mxu0 0
  %1651 = vmatprep.mubr.bf16.mxu0 0
  %1652 = vmatmul.mubr.bf16.gmra.mrb[0].mxu0 %v1538
  %v1653 = vpop.f32.mrb[0].mxu0
  %v1654 = vadd.f32 0.0, %v1653
  %v1655 = vpop.f32.mrb[0].mxu0
  %v1656 = vadd.f32 0.0, %v1655
  %v1657 = vpop.f32.mrb[0].mxu0
  %v1658 = vpop.f32.mrb[0].mxu0
  %1659 = vdwg.mxu0
  %v1660 = vadd.f32 %v1535, %v1654
  %v1661 = vadd.f32 %v1536, %v1656
  %v1662 = vxor.u32 %v1660, 2147483648
  %v1663 = vmul.f32 %v1662, 1.442695
  %v1664 = vpow.pop %v1663
  %v1665 = vadd.f32 %v1664, 1.0
  %v1666 = vrcp.pop %v1665
  %v1667 = vmul.f32 1.0, %v1666
  %v1668 = vtanh.pop %v1661
  %v1669 = vxor.u32 %v1661, 2147483648
  %v1670 = vmul.f32 %v1669, 1.442695
  %v1671 = vpow.pop %v1670
  %v1672 = vadd.f32 %v1671, 1.0
  %v1673 = vrcp.pop %v1672
  %v1674 = vmul.f32 1.0, %v1673
  %1675 = vrot.lane.b32.xlu0 %v1667, 64
  %v1676 = vpop.permute.xlu0 %1675
  %1677 = vrot.lane.b32.xlu0 %v1674, 64
  %v1678 = vpop.permute.xlu0 %1677
  %v1679 = vld [vmem:[#allocation5] sm:$0xff]
  %v1680 = vmul.f32 %v1676, %v1679
  %v1681 = vmul.f32 %v1667, %v1668
  %v1682 = vadd.f32 %v1680, %v1681
  %v1683 = vtanh.pop %v1682
  %v1684 = vmul.f32 %v1678, %v1683
  %1685 = vst [vmem:[#allocation4] sm:$0xff] %v1684
  %1686 = vst [vmem:[#allocation5] sm:$0xff] %v1682
  %1687 = vst [vmem:[#allocation3] sm:$0xff] %v1684
  %v1688 = vld [vmem:[%s401] sm:$0xff]
  %v1689 = vld [vmem:[%s401 + $0x8] sm:$0xff]
  %v1690 = vld [vmem:[#allocation4] sm:$0xff]
  %v1691 = vpack.c.bf16 %v1690, %v1690
  %1692 = vmatprep.subr.bf16.mxu0 %v1588
  %1693 = vmatpush1.bf16.msra.mxu0 %v1587
  %1694 = vmatprep.subr.bf16.mxu0 %v1590
  %1695 = vmatpush1.bf16.msra.mxu0 %v1589
  %1696 = vmatprep.subr.bf16.mxu0 %v1592
  %1697 = vmatpush1.bf16.msra.mxu0 %v1591
  %1698 = vmatprep.subr.bf16.mxu0 %v1594
  %1699 = vmatpush1.bf16.msra.mxu0 %v1593
  %1700 = vmatprep.subr.bf16.mxu0 %v1596
  %1701 = vmatpush1.bf16.msra.mxu0 %v1595
  %1702 = vmatprep.subr.bf16.mxu0 %v1598
  %1703 = vmatpush1.bf16.msra.mxu0 %v1597
  %1704 = vmatprep.subr.bf16.mxu0 %v1600
  %1705 = vmatpush1.bf16.msra.mxu0 %v1599
  %1706 = vmatprep.subr.bf16.mxu0 %v1602
  %1707 = vmatpush1.bf16.msra.mxu0 %v1601
  %1708 = vmatprep.subr.bf16.mxu0 0
  %1709 = vmatpush1.bf16.msra.mxu0 0
  %1710 = vmatprep.subr.bf16.mxu0 0
  %1711 = vmatpush1.bf16.msra.mxu0 0
  %1712 = vmatprep.subr.bf16.mxu0 0
  %1713 = vmatpush1.bf16.msra.mxu0 0
  %1714 = vmatprep.subr.bf16.mxu0 0
  %1715 = vmatpush1.bf16.msra.mxu0 0
  %1716 = vmatprep.subr.bf16.mxu0 0
  %1717 = vmatpush1.bf16.msra.mxu0 0
  %1718 = vmatprep.subr.bf16.mxu0 0
  %1719 = vmatpush1.bf16.msra.mxu0 0
  %1720 = vmatprep.subr.bf16.mxu0 0
  %1721 = vmatpush1.bf16.msra.mxu0 0
  %1722 = vmatprep.subr.bf16.mxu0 0
  %1723 = vmatpush1.bf16.msra.mxu0 0
  %1724 = vmatprep.mubr.bf16.mxu0 0
  %1725 = vmatmul.mubr.bf16.gmra.mrb[0].mxu0 %v1691
  %v1726 = vpop.f32.mrb[0].mxu0
  %v1727 = vadd.f32 0.0, %v1726
  %v1728 = vpop.f32.mrb[0].mxu0
  %v1729 = vadd.f32 0.0, %v1728
  %v1730 = vpop.f32.mrb[0].mxu0
  %v1731 = vpop.f32.mrb[0].mxu0
  %1732 = vdwg.mxu0
  %v1733 = vadd.f32 %v1688, %v1727
  %v1734 = vadd.f32 %v1689, %v1729
  %v1735 = vxor.u32 %v1733, 2147483648
  %v1736 = vmul.f32 %v1735, 1.442695
  %v1737 = vpow.pop %v1736
  %v1738 = vadd.f32 %v1737, 1.0
  %v1739 = vrcp.pop %v1738
  %v1740 = vmul.f32 1.0, %v1739
  %v1741 = vtanh.pop %v1734
  %v1742 = vxor.u32 %v1734, 2147483648
  %v1743 = vmul.f32 %v1742, 1.442695
  %v1744 = vpow.pop %v1743
  %v1745 = vadd.f32 %v1744, 1.0
  %v1746 = vrcp.pop %v1745
  %v1747 = vmul.f32 1.0, %v1746
  %1748 = vrot.lane.b32.xlu0 %v1740, 64
  %v1749 = vpop.permute.xlu0 %1748
  %1750 = vrot.lane.b32.xlu0 %v1747, 64
  %v1751 = vpop.permute.xlu0 %1750
  %v1752 = vld [vmem:[#allocation5] sm:$0xff]
  %v1753 = vmul.f32 %v1749, %v1752
  %v1754 = vmul.f32 %v1740, %v1741
  %v1755 = vadd.f32 %v1753, %v1754
  %v1756 = vtanh.pop %v1755
  %v1757 = vmul.f32 %v1751, %v1756
  %1758 = vst [vmem:[#allocation4] sm:$0xff] %v1757
  %1759 = vst [vmem:[#allocation5] sm:$0xff] %v1755
  %1760 = vst [vmem:[%s677] sm:$0xff] %v1757
  %v1761 = vld [vmem:[%s406] sm:$0xff]
  %v1762 = vld [vmem:[%s406 + $0x8] sm:$0xff]
  %v1763 = vld [vmem:[#allocation4] sm:$0xff]
  %v1764 = vpack.c.bf16 %v1763, %v1763
  %1765 = vmatprep.subr.bf16.mxu0 %v1588
  %1766 = vmatpush1.bf16.msra.mxu0 %v1587
  %1767 = vmatprep.subr.bf16.mxu0 %v1590
  %1768 = vmatpush1.bf16.msra.mxu0 %v1589
  %1769 = vmatprep.subr.bf16.mxu0 %v1592
  %1770 = vmatpush1.bf16.msra.mxu0 %v1591
  %1771 = vmatprep.subr.bf16.mxu0 %v1594
  %1772 = vmatpush1.bf16.msra.mxu0 %v1593
  %1773 = vmatprep.subr.bf16.mxu0 %v1596
  %1774 = vmatpush1.bf16.msra.mxu0 %v1595
  %1775 = vmatprep.subr.bf16.mxu0 %v1598
  %1776 = vmatpush1.bf16.msra.mxu0 %v1597
  %1777 = vmatprep.subr.bf16.mxu0 %v1600
  %1778 = vmatpush1.bf16.msra.mxu0 %v1599
  %1779 = vmatprep.subr.bf16.mxu0 %v1602
  %1780 = vmatpush1.bf16.msra.mxu0 %v1601
  %1781 = vmatprep.subr.bf16.mxu0 0
  %1782 = vmatpush1.bf16.msra.mxu0 0
  %1783 = vmatprep.subr.bf16.mxu0 0
  %1784 = vmatpush1.bf16.msra.mxu0 0
  %1785 = vmatprep.subr.bf16.mxu0 0
  %1786 = vmatpush1.bf16.msra.mxu0 0
  %1787 = vmatprep.subr.bf16.mxu0 0
  %1788 = vmatpush1.bf16.msra.mxu0 0
  %1789 = vmatprep.subr.bf16.mxu0 0
  %1790 = vmatpush1.bf16.msra.mxu0 0
  %1791 = vmatprep.subr.bf16.mxu0 0
  %1792 = vmatpush1.bf16.msra.mxu0 0
  %1793 = vmatprep.subr.bf16.mxu0 0
  %1794 = vmatpush1.bf16.msra.mxu0 0
  %1795 = vmatprep.subr.bf16.mxu0 0
  %1796 = vmatpush1.bf16.msra.mxu0 0
  %1797 = vmatprep.mubr.bf16.mxu0 0
  %1798 = vmatmul.mubr.bf16.gmra.mrb[0].mxu0 %v1764
  %v1799 = vpop.f32.mrb[0].mxu0
  %v1800 = vadd.f32 0.0, %v1799
  %v1801 = vpop.f32.mrb[0].mxu0
  %v1802 = vadd.f32 0.0, %v1801
  %v1803 = vpop.f32.mrb[0].mxu0
  %v1804 = vpop.f32.mrb[0].mxu0
  %1805 = vdwg.mxu0
  %v1806 = vadd.f32 %v1761, %v1800
  %v1807 = vadd.f32 %v1762, %v1802
  %v1808 = vxor.u32 %v1806, 2147483648
  %v1809 = vmul.f32 %v1808, 1.442695
  %v1810 = vpow.pop %v1809
  %v1811 = vadd.f32 %v1810, 1.0
  %v1812 = vrcp.pop %v1811
  %v1813 = vmul.f32 1.0, %v1812
  %v1814 = vtanh.pop %v1807
  %v1815 = vxor.u32 %v1807, 2147483648
  %v1816 = vmul.f32 %v1815, 1.442695
  %v1817 = vpow.pop %v1816
  %v1818 = vadd.f32 %v1817, 1.0
  %v1819 = vrcp.pop %v1818
  %v1820 = vmul.f32 1.0, %v1819
  %1821 = vrot.lane.b32.xlu0 %v1813, 64
  %v1822 = vpop.permute.xlu0 %1821
  %1823 = vrot.lane.b32.xlu0 %v1820, 64
  %v1824 = vpop.permute.xlu0 %1823
  %v1825 = vld [vmem:[#allocation5] sm:$0xff]
  %v1826 = vmul.f32 %v1822, %v1825
  %v1827 = vmul.f32 %v1813, %v1814
  %v1828 = vadd.f32 %v1826, %v1827
  %v1829 = vtanh.pop %v1828
  %v1830 = vmul.f32 %v1824, %v1829
  %1831 = vst [vmem:[#allocation4] sm:$0xff] %v1830
  %1832 = vst [vmem:[#allocation5] sm:$0xff] %v1828
  %1833 = vst [vmem:[%s751] sm:$0xff] %v1830
  %v1834 = vld [vmem:[%s411] sm:$0xff]
  %v1835 = vld [vmem:[%s411 + $0x8] sm:$0xff]
  %v1836 = vld [vmem:[#allocation4] sm:$0xff]
  %v1837 = vpack.c.bf16 %v1836, %v1836
  %1838 = vmatprep.subr.bf16.mxu0 %v1588
  %1839 = vmatpush1.bf16.msra.mxu0 %v1587
  %1840 = vmatprep.subr.bf16.mxu0 %v1590
  %1841 = vmatpush1.bf16.msra.mxu0 %v1589
  %1842 = vmatprep.subr.bf16.mxu0 %v1592
  %1843 = vmatpush1.bf16.msra.mxu0 %v1591
  %1844 = vmatprep.subr.bf16.mxu0 %v1594
  %1845 = vmatpush1.bf16.msra.mxu0 %v1593
  %1846 = vmatprep.subr.bf16.mxu0 %v1596
  %1847 = vmatpush1.bf16.msra.mxu0 %v1595
  %1848 = vmatprep.subr.bf16.mxu0 %v1598
  %1849 = vmatpush1.bf16.msra.mxu0 %v1597
  %1850 = vmatprep.subr.bf16.mxu0 %v1600
  %1851 = vmatpush1.bf16.msra.mxu0 %v1599
  %1852 = vmatprep.subr.bf16.mxu0 %v1602
  %1853 = vmatpush1.bf16.msra.mxu0 %v1601
  %1854 = vmatprep.subr.bf16.mxu0 0
  %1855 = vmatpush1.bf16.msra.mxu0 0
  %1856 = vmatprep.subr.bf16.mxu0 0
  %1857 = vmatpush1.bf16.msra.mxu0 0
  %1858 = vmatprep.subr.bf16.mxu0 0
  %1859 = vmatpush1.bf16.msra.mxu0 0
  %1860 = vmatprep.subr.bf16.mxu0 0
  %1861 = vmatpush1.bf16.msra.mxu0 0
  %1862 = vmatprep.subr.bf16.mxu0 0
  %1863 = vmatpush1.bf16.msra.mxu0 0
  %1864 = vmatprep.subr.bf16.mxu0 0
  %1865 = vmatpush1.bf16.msra.mxu0 0
  %1866 = vmatprep.subr.bf16.mxu0 0
  %1867 = vmatpush1.bf16.msra.mxu0 0
  %1868 = vmatprep.subr.bf16.mxu0 0
  %1869 = vmatpush1.bf16.msra.mxu0 0
  %1870 = vmatprep.mubr.bf16.mxu0 0
  %1871 = vmatmul.mubr.bf16.gmra.mrb[0].mxu0 %v1837
  %v1872 = vpop.f32.mrb[0].mxu0
  %v1873 = vadd.f32 0.0, %v1872
  %v1874 = vpop.f32.mrb[0].mxu0
  %v1875 = vadd.f32 0.0, %v1874
  %v1876 = vpop.f32.mrb[0].mxu0
  %v1877 = vpop.f32.mrb[0].mxu0
  %1878 = vdwg.mxu0
  %v1879 = vadd.f32 %v1834, %v1873
  %v1880 = vadd.f32 %v1835, %v1875
  %v1881 = vxor.u32 %v1879, 2147483648
  %v1882 = vmul.f32 %v1881, 1.442695
  %v1883 = vpow.pop %v1882
  %v1884 = vadd.f32 %v1883, 1.0
  %v1885 = vrcp.pop %v1884
  %v1886 = vmul.f32 1.0, %v1885
  %v1887 = vtanh.pop %v1880
  %v1888 = vxor.u32 %v1880, 2147483648
  %v1889 = vmul.f32 %v1888, 1.442695
  %v1890 = vpow.pop %v1889
  %v1891 = vadd.f32 %v1890, 1.0
  %v1892 = vrcp.pop %v1891
  %v1893 = vmul.f32 1.0, %v1892
  %1894 = vrot.lane.b32.xlu0 %v1886, 64
  %v1895 = vpop.permute.xlu0 %1894
  %1896 = vrot.lane.b32.xlu0 %v1893, 64
  %v1897 = vpop.permute.xlu0 %1896
  %v1898 = vld [vmem:[#allocation5] sm:$0xff]
  %v1899 = vmul.f32 %v1895, %v1898
  %v1900 = vmul.f32 %v1886, %v1887
  %v1901 = vadd.f32 %v1899, %v1900
  %v1902 = vtanh.pop %v1901
  %v1903 = vmul.f32 %v1897, %v1902
  %1904 = vst [vmem:[#allocation4] sm:$0xff] %v1903
  %1905 = vst [vmem:[#allocation5] sm:$0xff] %v1901
  %1906 = vst [vmem:[%s825] sm:$0xff] %v1903
  %v1907 = vld [vmem:[%s416] sm:$0xff]
  %v1908 = vld [vmem:[%s416 + $0x8] sm:$0xff]
  %v1909 = vld [vmem:[#allocation4] sm:$0xff]
  %v1910 = vpack.c.bf16 %v1909, %v1909
  %1911 = vmatprep.subr.bf16.mxu0 %v1588
  %1912 = vmatpush1.bf16.msra.mxu0 %v1587
  %1913 = vmatprep.subr.bf16.mxu0 %v1590
  %1914 = vmatpush1.bf16.msra.mxu0 %v1589
  %1915 = vmatprep.subr.bf16.mxu0 %v1592
  %1916 = vmatpush1.bf16.msra.mxu0 %v1591
  %1917 = vmatprep.subr.bf16.mxu0 %v1594
  %1918 = vmatpush1.bf16.msra.mxu0 %v1593
  %1919 = vmatprep.subr.bf16.mxu0 %v1596
  %1920 = vmatpush1.bf16.msra.mxu0 %v1595
  %1921 = vmatprep.subr.bf16.mxu0 %v1598
  %1922 = vmatpush1.bf16.msra.mxu0 %v1597
  %1923 = vmatprep.subr.bf16.mxu0 %v1600
  %1924 = vmatpush1.bf16.msra.mxu0 %v1599
  %1925 = vmatprep.subr.bf16.mxu0 %v1602
  %1926 = vmatpush1.bf16.msra.mxu0 %v1601
  %1927 = vmatprep.subr.bf16.mxu0 0
  %1928 = vmatpush1.bf16.msra.mxu0 0
  %1929 = vmatprep.subr.bf16.mxu0 0
  %1930 = vmatpush1.bf16.msra.mxu0 0
  %1931 = vmatprep.subr.bf16.mxu0 0
  %1932 = vmatpush1.bf16.msra.mxu0 0
  %1933 = vmatprep.subr.bf16.mxu0 0
  %1934 = vmatpush1.bf16.msra.mxu0 0
  %1935 = vmatprep.subr.bf16.mxu0 0
  %1936 = vmatpush1.bf16.msra.mxu0 0
  %1937 = vmatprep.subr.bf16.mxu0 0
  %1938 = vmatpush1.bf16.msra.mxu0 0
  %1939 = vmatprep.subr.bf16.mxu0 0
  %1940 = vmatpush1.bf16.msra.mxu0 0
  %1941 = vmatprep.subr.bf16.mxu0 0
  %1942 = vmatpush1.bf16.msra.mxu0 0
  %1943 = vmatprep.mubr.bf16.mxu0 0
  %1944 = vmatmul.mubr.bf16.gmra.mrb[0].mxu0 %v1910
  %v1945 = vpop.f32.mrb[0].mxu0
  %v1946 = vadd.f32 0.0, %v1945
  %v1947 = vpop.f32.mrb[0].mxu0
  %v1948 = vadd.f32 0.0, %v1947
  %v1949 = vpop.f32.mrb[0].mxu0
  %v1950 = vpop.f32.mrb[0].mxu0
  %1951 = vdwg.mxu0
  %v1952 = vadd.f32 %v1907, %v1946
  %v1953 = vadd.f32 %v1908, %v1948
  %v1954 = vxor.u32 %v1952, 2147483648
  %v1955 = vmul.f32 %v1954, 1.442695
  %v1956 = vpow.pop %v1955
  %v1957 = vadd.f32 %v1956, 1.0
  %v1958 = vrcp.pop %v1957
  %v1959 = vmul.f32 1.0, %v1958
  %v1960 = vtanh.pop %v1953
  %v1961 = vxor.u32 %v1953, 2147483648
  %v1962 = vmul.f32 %v1961, 1.442695
  %v1963 = vpow.pop %v1962
  %v1964 = vadd.f32 %v1963, 1.0
  %v1965 = vrcp.pop %v1964
  %v1966 = vmul.f32 1.0, %v1965
  %1967 = vrot.lane.b32.xlu0 %v1959, 64
  %v1968 = vpop.permute.xlu0 %1967
  %1969 = vrot.lane.b32.xlu0 %v1966, 64
  %v1970 = vpop.permute.xlu0 %1969
  %v1971 = vld [vmem:[#allocation5] sm:$0xff]
  %v1972 = vmul.f32 %v1968, %v1971
  %v1973 = vmul.f32 %v1959, %v1960
  %v1974 = vadd.f32 %v1972, %v1973
  %v1975 = vtanh.pop %v1974
  %v1976 = vmul.f32 %v1970, %v1975
  %1977 = vst [vmem:[#allocation4] sm:$0xff] %v1976
  %1978 = vst [vmem:[#allocation5] sm:$0xff] %v1974
  %1979 = vst [vmem:[%s899] sm:$0xff] %v1976
  %v1980 = vld [vmem:[%s421] sm:$0xff]
  %v1981 = vld [vmem:[%s421 + $0x8] sm:$0xff]
  %v1982 = vld [vmem:[#allocation4] sm:$0xff]
  %v1983 = vpack.c.bf16 %v1982, %v1982
  %1984 = vmatprep.subr.bf16.mxu0 %v1588
  %1985 = vmatpush1.bf16.msra.mxu0 %v1587
  %1986 = vmatprep.subr.bf16.mxu0 %v1590
  %1987 = vmatpush1.bf16.msra.mxu0 %v1589
  %1988 = vmatprep.subr.bf16.mxu0 %v1592
  %1989 = vmatpush1.bf16.msra.mxu0 %v1591
  %1990 = vmatprep.subr.bf16.mxu0 %v1594
  %1991 = vmatpush1.bf16.msra.mxu0 %v1593
  %1992 = vmatprep.subr.bf16.mxu0 %v1596
  %1993 = vmatpush1.bf16.msra.mxu0 %v1595
  %1994 = vmatprep.subr.bf16.mxu0 %v1598
  %1995 = vmatpush1.bf16.msra.mxu0 %v1597
  %1996 = vmatprep.subr.bf16.mxu0 %v1600
  %1997 = vmatpush1.bf16.msra.mxu0 %v1599
  %1998 = vmatprep.subr.bf16.mxu0 %v1602
  %1999 = vmatpush1.bf16.msra.mxu0 %v1601
  %2000 = vmatprep.subr.bf16.mxu0 0
  %2001 = vmatpush1.bf16.msra.mxu0 0
  %2002 = vmatprep.subr.bf16.mxu0 0
  %2003 = vmatpush1.bf16.msra.mxu0 0
  %2004 = vmatprep.subr.bf16.mxu0 0
  %2005 = vmatpush1.bf16.msra.mxu0 0
  %2006 = vmatprep.subr.bf16.mxu0 0
  %2007 = vmatpush1.bf16.msra.mxu0 0
  %2008 = vmatprep.subr.bf16.mxu0 0
  %2009 = vmatpush1.bf16.msra.mxu0 0
  %2010 = vmatprep.subr.bf16.mxu0 0
  %2011 = vmatpush1.bf16.msra.mxu0 0
  %2012 = vmatprep.subr.bf16.mxu0 0
  %2013 = vmatpush1.bf16.msra.mxu0 0
  %2014 = vmatprep.subr.bf16.mxu0 0
  %2015 = vmatpush1.bf16.msra.mxu0 0
  %2016 = vmatprep.mubr.bf16.mxu0 0
  %2017 = vmatmul.mubr.bf16.gmra.mrb[0].mxu0 %v1983
  %v2018 = vpop.f32.mrb[0].mxu0
  %v2019 = vadd.f32 0.0, %v2018
  %v2020 = vpop.f32.mrb[0].mxu0
  %v2021 = vadd.f32 0.0, %v2020
  %v2022 = vpop.f32.mrb[0].mxu0
  %v2023 = vpop.f32.mrb[0].mxu0
  %2024 = vdwg.mxu0
  %v2025 = vadd.f32 %v1980, %v2019
  %v2026 = vadd.f32 %v1981, %v2021
  %v2027 = vxor.u32 %v2025, 2147483648
  %v2028 = vmul.f32 %v2027, 1.442695
  %v2029 = vpow.pop %v2028
  %v2030 = vadd.f32 %v2029, 1.0
  %v2031 = vrcp.pop %v2030
  %v2032 = vmul.f32 1.0, %v2031
  %v2033 = vtanh.pop %v2026
  %v2034 = vxor.u32 %v2026, 2147483648
  %v2035 = vmul.f32 %v2034, 1.442695
  %v2036 = vpow.pop %v2035
  %v2037 = vadd.f32 %v2036, 1.0
  %v2038 = vrcp.pop %v2037
  %v2039 = vmul.f32 1.0, %v2038
  %2040 = vrot.lane.b32.xlu0 %v2032, 64
  %v2041 = vpop.permute.xlu0 %2040
  %2042 = vrot.lane.b32.xlu0 %v2039, 64
  %v2043 = vpop.permute.xlu0 %2042
  %v2044 = vld [vmem:[#allocation5] sm:$0xff]
  %v2045 = vmul.f32 %v2041, %v2044
  %v2046 = vmul.f32 %v2032, %v2033
  %v2047 = vadd.f32 %v2045, %v2046
  %v2048 = vtanh.pop %v2047
  %v2049 = vmul.f32 %v2043, %v2048
  %2050 = vst [vmem:[#allocation4] sm:$0xff] %v2049
  %2051 = vst [vmem:[#allocation5] sm:$0xff] %v2047
  %2052 = vst [vmem:[%s973] sm:$0xff] %v2049
  %v2053 = vld [vmem:[%s426] sm:$0xff]
  %v2054 = vld [vmem:[%s426 + $0x8] sm:$0xff]
  %v2055 = vld [vmem:[#allocation4] sm:$0xff]
  %v2056 = vpack.c.bf16 %v2055, %v2055
  %2057 = vmatprep.subr.bf16.mxu0 %v1588
  %2058 = vmatpush1.bf16.msra.mxu0 %v1587
  %2059 = vmatprep.subr.bf16.mxu0 %v1590
  %2060 = vmatpush1.bf16.msra.mxu0 %v1589
  %2061 = vmatprep.subr.bf16.mxu0 %v1592
  %2062 = vmatpush1.bf16.msra.mxu0 %v1591
  %2063 = vmatprep.subr.bf16.mxu0 %v1594
  %2064 = vmatpush1.bf16.msra.mxu0 %v1593
  %2065 = vmatprep.subr.bf16.mxu0 %v1596
  %2066 = vmatpush1.bf16.msra.mxu0 %v1595
  %2067 = vmatprep.subr.bf16.mxu0 %v1598
  %2068 = vmatpush1.bf16.msra.mxu0 %v1597
  %2069 = vmatprep.subr.bf16.mxu0 %v1600
  %2070 = vmatpush1.bf16.msra.mxu0 %v1599
  %2071 = vmatprep.subr.bf16.mxu0 %v1602
  %2072 = vmatpush1.bf16.msra.mxu0 %v1601
  %2073 = vmatprep.subr.bf16.mxu0 0
  %2074 = vmatpush1.bf16.msra.mxu0 0
  %2075 = vmatprep.subr.bf16.mxu0 0
  %2076 = vmatpush1.bf16.msra.mxu0 0
  %2077 = vmatprep.subr.bf16.mxu0 0
  %2078 = vmatpush1.bf16.msra.mxu0 0
  %2079 = vmatprep.subr.bf16.mxu0 0
  %2080 = vmatpush1.bf16.msra.mxu0 0
  %2081 = vmatprep.subr.bf16.mxu0 0
  %2082 = vmatpush1.bf16.msra.mxu0 0
  %2083 = vmatprep.subr.bf16.mxu0 0
  %2084 = vmatpush1.bf16.msra.mxu0 0
  %2085 = vmatprep.subr.bf16.mxu0 0
  %2086 = vmatpush1.bf16.msra.mxu0 0
  %2087 = vmatprep.subr.bf16.mxu0 0
  %2088 = vmatpush1.bf16.msra.mxu0 0
  %2089 = vmatprep.mubr.bf16.mxu0 0
  %2090 = vmatmul.mubr.bf16.gmra.mrb[0].mxu0 %v2056
  %v2091 = vpop.f32.mrb[0].mxu0
  %v2092 = vadd.f32 0.0, %v2091
  %v2093 = vpop.f32.mrb[0].mxu0
  %v2094 = vadd.f32 0.0, %v2093
  %v2095 = vpop.f32.mrb[0].mxu0
  %v2096 = vpop.f32.mrb[0].mxu0
  %2097 = vdwg.mxu0
  %v2098 = vadd.f32 %v2053, %v2092
  %v2099 = vadd.f32 %v2054, %v2094
  %v2100 = vxor.u32 %v2098, 2147483648
  %v2101 = vmul.f32 %v2100, 1.442695
  %v2102 = vpow.pop %v2101
  %v2103 = vadd.f32 %v2102, 1.0
  %v2104 = vrcp.pop %v2103
  %v2105 = vmul.f32 1.0, %v2104
  %v2106 = vtanh.pop %v2099
  %v2107 = vxor.u32 %v2099, 2147483648
  %v2108 = vmul.f32 %v2107, 1.442695
  %v2109 = vpow.pop %v2108
  %v2110 = vadd.f32 %v2109, 1.0
  %v2111 = vrcp.pop %v2110
  %v2112 = vmul.f32 1.0, %v2111
  %2113 = vrot.lane.b32.xlu0 %v2105, 64
  %v2114 = vpop.permute.xlu0 %2113
  %2115 = vrot.lane.b32.xlu0 %v2112, 64
  %v2116 = vpop.permute.xlu0 %2115
  %v2117 = vld [vmem:[#allocation5] sm:$0xff]
  %v2118 = vmul.f32 %v2114, %v2117
  %v2119 = vmul.f32 %v2105, %v2106
  %v2120 = vadd.f32 %v2118, %v2119
  %v2121 = vtanh.pop %v2120
  %v2122 = vmul.f32 %v2116, %v2121
  %2123 = vst [vmem:[#allocation4] sm:$0xff] %v2122
  %2124 = vst [vmem:[#allocation5] sm:$0xff] %v2120
  %2125 = vst [vmem:[%s1047] sm:$0xff] %v2122
  %v2126 = vld [vmem:[%s431] sm:$0xff]
  %v2127 = vld [vmem:[%s431 + $0x8] sm:$0xff]
  %v2128 = vld [vmem:[#allocation4] sm:$0xff]
  %v2129 = vpack.c.bf16 %v2128, %v2128
  %2130 = vmatprep.subr.bf16.mxu0 %v1588
  %2131 = vmatpush1.bf16.msra.mxu0 %v1587
  %2132 = vmatprep.subr.bf16.mxu0 %v1590
  %2133 = vmatpush1.bf16.msra.mxu0 %v1589
  %2134 = vmatprep.subr.bf16.mxu0 %v1592
  %2135 = vmatpush1.bf16.msra.mxu0 %v1591
  %2136 = vmatprep.subr.bf16.mxu0 %v1594
  %2137 = vmatpush1.bf16.msra.mxu0 %v1593
  %2138 = vmatprep.subr.bf16.mxu0 %v1596
  %2139 = vmatpush1.bf16.msra.mxu0 %v1595
  %2140 = vmatprep.subr.bf16.mxu0 %v1598
  %2141 = vmatpush1.bf16.msra.mxu0 %v1597
  %2142 = vmatprep.subr.bf16.mxu0 %v1600
  %2143 = vmatpush1.bf16.msra.mxu0 %v1599
  %2144 = vmatprep.subr.bf16.mxu0 %v1602
  %2145 = vmatpush1.bf16.msra.mxu0 %v1601
  %2146 = vmatprep.subr.bf16.mxu0 0
  %2147 = vmatpush1.bf16.msra.mxu0 0
  %2148 = vmatprep.subr.bf16.mxu0 0
  %2149 = vmatpush1.bf16.msra.mxu0 0
  %2150 = vmatprep.subr.bf16.mxu0 0
  %2151 = vmatpush1.bf16.msra.mxu0 0
  %2152 = vmatprep.subr.bf16.mxu0 0
  %2153 = vmatpush1.bf16.msra.mxu0 0
  %2154 = vmatprep.subr.bf16.mxu0 0
  %2155 = vmatpush1.bf16.msra.mxu0 0
  %2156 = vmatprep.subr.bf16.mxu0 0
  %2157 = vmatpush1.bf16.msra.mxu0 0
  %2158 = vmatprep.subr.bf16.mxu0 0
  %2159 = vmatpush1.bf16.msra.mxu0 0
  %2160 = vmatprep.subr.bf16.mxu0 0
  %2161 = vmatpush1.bf16.msra.mxu0 0
  %2162 = vmatprep.mubr.bf16.mxu0 0
  %2163 = vmatmul.mubr.bf16.gmra.mrb[0].mxu0 %v2129
  %v2164 = vpop.f32.mrb[0].mxu0
  %v2165 = vadd.f32 0.0, %v2164
  %v2166 = vpop.f32.mrb[0].mxu0
  %v2167 = vadd.f32 0.0, %v2166
  %v2168 = vpop.f32.mrb[0].mxu0
  %v2169 = vpop.f32.mrb[0].mxu0
  %2170 = vdwg.mxu0
  %v2171 = vadd.f32 %v2126, %v2165
  %v2172 = vadd.f32 %v2127, %v2167
  %v2173 = vxor.u32 %v2171, 2147483648
  %v2174 = vmul.f32 %v2173, 1.442695
  %v2175 = vpow.pop %v2174
  %v2176 = vadd.f32 %v2175, 1.0
  %v2177 = vrcp.pop %v2176
  %v2178 = vmul.f32 1.0, %v2177
  %v2179 = vtanh.pop %v2172
  %v2180 = vxor.u32 %v2172, 2147483648
  %v2181 = vmul.f32 %v2180, 1.442695
  %v2182 = vpow.pop %v2181
  %v2183 = vadd.f32 %v2182, 1.0
  %v2184 = vrcp.pop %v2183
  %v2185 = vmul.f32 1.0, %v2184
  %2186 = vrot.lane.b32.xlu0 %v2178, 64
  %v2187 = vpop.permute.xlu0 %2186
  %2188 = vrot.lane.b32.xlu0 %v2185, 64
  %v2189 = vpop.permute.xlu0 %2188
  %v2190 = vld [vmem:[#allocation5] sm:$0xff]
  %v2191 = vmul.f32 %v2187, %v2190
  %v2192 = vmul.f32 %v2178, %v2179
  %v2193 = vadd.f32 %v2191, %v2192
  %v2194 = vtanh.pop %v2193
  %v2195 = vmul.f32 %v2189, %v2194
  %2196 = vst [vmem:[#allocation4] sm:$0xff] %v2195
  %2197 = vst [vmem:[#allocation5] sm:$0xff] %v2193
  %2198 = vst [vmem:[%s1121] sm:$0xff] %v2195
  %v2199 = vld [vmem:[#allocation3] sm:$0xff]
  %v2200 = vld [vmem:[#allocation3 + $0x8] sm:$0xff]
  %v2201 = vld [vmem:[#allocation3 + $0x10] sm:$0xff]
  %v2202 = vld [vmem:[#allocation3 + $0x18] sm:$0xff]
  %v2203 = vld [vmem:[#allocation3 + $0x20] sm:$0xff]
  %v2204 = vld [vmem:[#allocation3 + $0x28] sm:$0xff]
  %v2205 = vld [vmem:[#allocation3 + $0x30] sm:$0xff]
  %v2206 = vld [vmem:[#allocation3 + $0x38] sm:$0xff]
  %v2207 = vadd.f32 %v2199, %v2200
  %v2208 = vadd.f32 %v2207, %v2201
  %v2209 = vadd.f32 %v2208, %v2202
  %v2210 = vadd.f32 %v2209, %v2203
  %v2211 = vadd.f32 %v2210, %v2204
  %v2212 = vadd.f32 %v2211, %v2205
  %v2213 = vadd.f32 %v2212, %v2206
  %v2214 = vmul.f32 %v2213, 0.125
  %2215 = vst [vmem:[%s9] sm:$0xff] %v2214
  // Predicated region
  $region38: #{bilstm_forward.2} parent=0 // pred_check
    _
  $region39: #{bilstm_forward.2} parent=0 // pred_check_branch
    %2217 = sbr.rel (0) target = $region41
  $region40: #{bilstm_forward.2} parent=0 // pred_region
    _
  $region41: #{bilstm_forward.2} parent=0 // pred_fallthru
    _
  // Predicated region
  $region42: #{bilstm_forward.2} parent=0 // pred_check
    _
  $region43: #{bilstm_forward.2} parent=0 // pred_check_branch
    %2219 = sbr.rel (0) target = $region45
  $region44: #{bilstm_forward.2} parent=0 // pred_region
    _
  $region45: #{bilstm_forward.2} parent=0 // pred_fallthru
    _

</llo_original>
